<compile_context>
chip_gen: v5e
topology: v5e:2x2
jax: 0.10.0
libtpu: 0.0.40
codegen_flags: <defaults>
</compile_context>

<pallas_src>
import jax
import jax.numpy as jnp
from jax.experimental import pallas as pl
from jax.experimental.pallas import tpu as pltpu

LANE = 128


def conv_bn_gelu_kernel(x_ref, w_ref, gamma_ref, beta_ref, o_ref, xpad_ref, patch_ref):
    # x_ref     : (N, H, W, Cin)        unpadded NHWC input          (VMEM)
    # w_ref     : (9*Cin, Cp)           im2col weight, Cout padded to Cp (lane-dense)
    # gamma_ref : (1, Cp)               BN scale (zero padded past Cout)
    # beta_ref  : (1, Cp)               BN shift (zero padded past Cout)
    # o_ref     : (N*H*W, Cp)           lane-dense output slab
    # xpad_ref  : (N, H+2, W+2, Cin)    scratch: halo-padded input
    # patch_ref : (N*H*W, 9*Cin)        scratch: im2col patch matrix
    N, H, W, Cin = x_ref.shape
    M, Cp = o_ref.shape

    # --- in-kernel halo (padding=1): no wrapper-side jnp.pad / extra HBM round trip ---
    xpad_ref[...] = jnp.zeros_like(xpad_ref)
    xpad_ref[:, 1:H + 1, 1:W + 1, :] = x_ref[...]

    # --- im2col: pack 9 shifted windows once, then one MXU matmul (K = 9*Cin) ---
    for dy in range(3):
        for dx in range(3):
            t = dy * 3 + dx
            patch_ref[:, t * Cin:(t + 1) * Cin] = (
                xpad_ref[:, dy:dy + H, dx:dx + W, :].reshape(M, Cin))

    acc = jnp.dot(patch_ref[...], w_ref[...], preferred_element_type=jnp.float32)
    # NOTE: conv bias intentionally omitted — training-mode BN subtracts the batch mean,
    # which cancels a constant per-channel bias exactly (identical output up to fp rounding).

    # --- BatchNorm2d (training mode): per-channel stats over all N*H*W rows,
    #     fused one-pass sum / sum-of-squares, biased variance, eps = 1e-3 ---
    inv_m = 1.0 / float(M)
    mean = jnp.sum(acc, axis=0, keepdims=True) * inv_m            # (1, Cp)
    ex2 = jnp.sum(acc * acc, axis=0, keepdims=True) * inv_m       # (1, Cp)
    var = ex2 - mean * mean
    inv = jax.lax.rsqrt(var + 0.001)
    scale = inv * gamma_ref[...]
    shift = beta_ref[...] - mean * scale
    y = acc * scale + shift

    # --- exact GELU (PyTorch nn.GELU default): 0.5*x*(1 + erf(x/sqrt(2))) ---
    # (kept exact to preserve module semantics; tanh-approx would change numerics)
    y = 0.5 * y * (1.0 + jax.lax.erf(y * 0.7071067811865476))

    o_ref[...] = y  # unmasked, lane-dense stores (Cp is a multiple of 128)


def _round_up(x, m):
    return (x + m - 1) // m * m


@jax.jit
def conv_bn_relu(x_nchw, w_oihw, b, gamma, beta):
    """Forward of ConvBNRelu. x_nchw: (N, Cin, H, W). Returns (N, Cout, H, W).

    `b` (conv bias) is accepted for API parity with nn.Conv2d but unused: training-mode
    BatchNorm cancels it exactly.
    """
    del b
    N, Cin, H, W = x_nchw.shape
    Cout = w_oihw.shape[0]
    Cp = _round_up(Cout, LANE)   # lane-dense channel axis inside the kernel
    M = N * H * W
    K = 9 * Cin

    # API-boundary layout glue (PyTorch NCHW/OIHW -> channels-last for the kernel).
    x_nhwc = jnp.transpose(x_nchw, (0, 2, 3, 1)).astype(jnp.float32)
    # im2col weight: row index = (dy*3+dx)*Cin + ci, matching the patch packing order.
    w_hwio = jnp.transpose(w_oihw, (2, 3, 1, 0)).astype(jnp.float32)   # (3, 3, Cin, Cout)
    w2 = jnp.pad(w_hwio.reshape(K, Cout), ((0, 0), (0, Cp - Cout)))
    g2 = jnp.pad(gamma.reshape(1, Cout).astype(jnp.float32), ((0, 0), (0, Cp - Cout)))
    be2 = jnp.pad(beta.reshape(1, Cout).astype(jnp.float32), ((0, 0), (0, Cp - Cout)))

    out2d = pl.pallas_call(
        conv_bn_gelu_kernel,
        out_shape=jax.ShapeDtypeStruct((M, Cp), jnp.float32),
        grid=(1,),  # whole problem resident in VMEM at these sizes -> single grid step
        in_specs=[
            pl.BlockSpec((N, H, W, Cin), lambda i: (0, 0, 0, 0)),
            pl.BlockSpec((K, Cp), lambda i: (0, 0)),
            pl.BlockSpec((1, Cp), lambda i: (0, 0)),
            pl.BlockSpec((1, Cp), lambda i: (0, 0)),
        ],
        out_specs=pl.BlockSpec((M, Cp), lambda i: (0, 0)),
        scratch_shapes=[
            pltpu.VMEM((N, H + 2, W + 2, Cin), jnp.float32),   # halo-padded input
            pltpu.VMEM((M, K), jnp.float32),                   # im2col patch matrix
        ],
        compiler_params=pltpu.CompilerParams(
            dimension_semantics=("arbitrary",)),
    )(x_nhwc, w2, g2, be2)

    # Slice off the channel padding and return NCHW (PyTorch layout).
    out_nhwc = out2d[:, :Cout].reshape(N, H, W, Cout)
    return jnp.transpose(out_nhwc, (0, 3, 1, 2))


if __name__ == "__main__":
    # Small shapes consistent with the module: x is NCHW.
    N, Cin, Cout, H, W = 2, 4, 8, 16, 16

    key = jax.random.PRNGKey(0)
    kx, kw, kb = jax.random.split(key, 3)

    x = jax.random.normal(kx, (N, Cin, H, W), dtype=jnp.float32)

    # Deterministic parameter init (shapes as nn.Conv2d(Cin, Cout, 3) / nn.BatchNorm2d(Cout)).
    fan_in = Cin * 3 * 3
    bound = 1.0 / jnp.sqrt(jnp.float32(fan_in))
    w = jax.random.uniform(kw, (Cout, Cin, 3, 3), minval=-bound, maxval=bound,
                           dtype=jnp.float32)
    b = jax.random.uniform(kb, (Cout,), minval=-bound, maxval=bound, dtype=jnp.float32)
    gamma = jnp.ones((Cout,), jnp.float32)   # BatchNorm2d default weight
    beta = jnp.zeros((Cout,), jnp.float32)   # BatchNorm2d default bias

    out = conv_bn_relu(x, w, b, gamma, beta)
    jax.block_until_ready(out)

    assert out.shape == (N, Cout, H, W), out.shape
    assert bool(jnp.all(jnp.isfinite(out)))
    print("KERNEL_OK")
</pallas_src>

<mosaic_0001>
module attributes {stable_mosaic.version = 11 : i64} {
  func.func @conv_bn_gelu_kernel(%arg0: i32, %arg1: memref<2x16x16x4xf32, #tpu.memory_space<vmem>>, %arg2: memref<36x128xf32, #tpu.memory_space<vmem>>, %arg3: memref<1x128xf32, #tpu.memory_space<vmem>>, %arg4: memref<1x128xf32, #tpu.memory_space<vmem>>, %arg5: memref<512x128xf32, #tpu.memory_space<vmem>>, %arg6: memref<2x18x18x4xf32, #tpu.memory_space<vmem>>, %arg7: memref<512x36xf32, #tpu.memory_space<vmem>>) attributes {dimension_semantics = [#tpu.dimension_semantics<arbitrary>], iteration_bounds = array<i64: 1>, scalar_prefetch = 0 : i64, scratch_operands = 2 : i64, tpu.core_type = #tpu.core_type<tc>, window_params = [{pipeline_mode = #tpu.pipeline_mode<synchronous>, transform_indices = @transform_0, window_bounds = array<i64: 2, 16, 16, 4>}, {pipeline_mode = #tpu.pipeline_mode<synchronous>, transform_indices = @transform_1, window_bounds = array<i64: 36, 128>}, {pipeline_mode = #tpu.pipeline_mode<synchronous>, transform_indices = @transform_2, window_bounds = array<i64: 1, 128>}, {pipeline_mode = #tpu.pipeline_mode<synchronous>, transform_indices = @transform_3, window_bounds = array<i64: 1, 128>}, {pipeline_mode = #tpu.pipeline_mode<synchronous>, transform_indices = @transform_4, window_bounds = array<i64: 512, 128>}]} {
    %cst = arith.constant 0.000000e+00 : f32
    %0 = vector.broadcast %cst : f32 to vector<2x18x18x4xf32>
    %c0 = arith.constant 0 : index
    %c0_0 = arith.constant 0 : index
    %c0_1 = arith.constant 0 : index
    %c0_2 = arith.constant 0 : index
    %1 = vector.load %arg6[%c0, %c0_0, %c0_1, %c0_2] : memref<2x18x18x4xf32, #tpu.memory_space<vmem>>, vector<2x18x18x4xf32>
    tpu.vector_store %arg6[%c0, %c0_0, %c0_1, %c0_2], %0 {strides = array<i32>} : memref<2x18x18x4xf32, #tpu.memory_space<vmem>>, vector<2x18x18x4xf32>,
    %c0_3 = arith.constant 0 : index
    %c0_4 = arith.constant 0 : index
    %c0_5 = arith.constant 0 : index
    %c0_6 = arith.constant 0 : index
    %2 = vector.load %arg1[%c0_3, %c0_4, %c0_5, %c0_6] : memref<2x16x16x4xf32, #tpu.memory_space<vmem>>, vector<2x16x16x4xf32>
    %c0_7 = arith.constant 0 : index
    %c1 = arith.constant 1 : index
    %c1_8 = arith.constant 1 : index
    %c0_9 = arith.constant 0 : index
    %3 = vector.load %arg6[%c0_7, %c1, %c1_8, %c0_9] : memref<2x18x18x4xf32, #tpu.memory_space<vmem>>, vector<2x16x16x4xf32>
    tpu.vector_store %arg6[%c0_7, %c1, %c1_8, %c0_9], %2 {strides = array<i32>} : memref<2x18x18x4xf32, #tpu.memory_space<vmem>>, vector<2x16x16x4xf32>,
    %c0_10 = arith.constant 0 : index
    %c0_11 = arith.constant 0 : index
    %c0_12 = arith.constant 0 : index
    %c0_13 = arith.constant 0 : index
    %4 = vector.load %arg6[%c0_10, %c0_11, %c0_12, %c0_13] : memref<2x18x18x4xf32, #tpu.memory_space<vmem>>, vector<2x16x16x4xf32>
    %5 = vector.shape_cast %4 : vector<2x16x16x4xf32> to vector<512x4xf32>
    %c0_14 = arith.constant 0 : index
    %c0_15 = arith.constant 0 : index
    %6 = vector.load %arg7[%c0_14, %c0_15] : memref<512x36xf32, #tpu.memory_space<vmem>>, vector<512x4xf32>
    tpu.vector_store %arg7[%c0_14, %c0_15], %5 {strides = array<i32>} : memref<512x36xf32, #tpu.memory_space<vmem>>, vector<512x4xf32>,
    %c0_16 = arith.constant 0 : index
    %c0_17 = arith.constant 0 : index
    %c1_18 = arith.constant 1 : index
    %c0_19 = arith.constant 0 : index
    %7 = vector.load %arg6[%c0_16, %c0_17, %c1_18, %c0_19] : memref<2x18x18x4xf32, #tpu.memory_space<vmem>>, vector<2x16x16x4xf32>
    %8 = vector.shape_cast %7 : vector<2x16x16x4xf32> to vector<512x4xf32>
    %c0_20 = arith.constant 0 : index
    %c4 = arith.constant 4 : index
    %9 = vector.load %arg7[%c0_20, %c4] : memref<512x36xf32, #tpu.memory_space<vmem>>, vector<512x4xf32>
    tpu.vector_store %arg7[%c0_20, %c4], %8 {strides = array<i32>} : memref<512x36xf32, #tpu.memory_space<vmem>>, vector<512x4xf32>,
    %c0_21 = arith.constant 0 : index
    %c0_22 = arith.constant 0 : index
    %c2 = arith.constant 2 : index
    %c0_23 = arith.constant 0 : index
    %10 = vector.load %arg6[%c0_21, %c0_22, %c2, %c0_23] : memref<2x18x18x4xf32, #tpu.memory_space<vmem>>, vector<2x16x16x4xf32>
    %11 = vector.shape_cast %10 : vector<2x16x16x4xf32> to vector<512x4xf32>
    %c0_24 = arith.constant 0 : index
    %c8 = arith.constant 8 : index
    %12 = vector.load %arg7[%c0_24, %c8] : memref<512x36xf32, #tpu.memory_space<vmem>>, vector<512x4xf32>
    tpu.vector_store %arg7[%c0_24, %c8], %11 {strides = array<i32>} : memref<512x36xf32, #tpu.memory_space<vmem>>, vector<512x4xf32>,
    %c0_25 = arith.constant 0 : index
    %c1_26 = arith.constant 1 : index
    %c0_27 = arith.constant 0 : index
    %c0_28 = arith.constant 0 : index
    %13 = vector.load %arg6[%c0_25, %c1_26, %c0_27, %c0_28] : memref<2x18x18x4xf32, #tpu.memory_space<vmem>>, vector<2x16x16x4xf32>
    %14 = vector.shape_cast %13 : vector<2x16x16x4xf32> to vector<512x4xf32>
    %c0_29 = arith.constant 0 : index
    %c12 = arith.constant 12 : index
    %15 = vector.load %arg7[%c0_29, %c12] : memref<512x36xf32, #tpu.memory_space<vmem>>, vector<512x4xf32>
    tpu.vector_store %arg7[%c0_29, %c12], %14 {strides = array<i32>} : memref<512x36xf32, #tpu.memory_space<vmem>>, vector<512x4xf32>,
    %c0_30 = arith.constant 0 : index
    %c1_31 = arith.constant 1 : index
    %c1_32 = arith.constant 1 : index
    %c0_33 = arith.constant 0 : index
    %16 = vector.load %arg6[%c0_30, %c1_31, %c1_32, %c0_33] : memref<2x18x18x4xf32, #tpu.memory_space<vmem>>, vector<2x16x16x4xf32>
    %17 = vector.shape_cast %16 : vector<2x16x16x4xf32> to vector<512x4xf32>
    %c0_34 = arith.constant 0 : index
    %c16 = arith.constant 16 : index
    %18 = vector.load %arg7[%c0_34, %c16] : memref<512x36xf32, #tpu.memory_space<vmem>>, vector<512x4xf32>
    tpu.vector_store %arg7[%c0_34, %c16], %17 {strides = array<i32>} : memref<512x36xf32, #tpu.memory_space<vmem>>, vector<512x4xf32>,
    %c0_35 = arith.constant 0 : index
    %c1_36 = arith.constant 1 : index
    %c2_37 = arith.constant 2 : index
    %c0_38 = arith.constant 0 : index
    %19 = vector.load %arg6[%c0_35, %c1_36, %c2_37, %c0_38] : memref<2x18x18x4xf32, #tpu.memory_space<vmem>>, vector<2x16x16x4xf32>
    %20 = vector.shape_cast %19 : vector<2x16x16x4xf32> to vector<512x4xf32>
    %c0_39 = arith.constant 0 : index
    %c20 = arith.constant 20 : index
    %21 = vector.load %arg7[%c0_39, %c20] : memref<512x36xf32, #tpu.memory_space<vmem>>, vector<512x4xf32>
    tpu.vector_store %arg7[%c0_39, %c20], %20 {strides = array<i32>} : memref<512x36xf32, #tpu.memory_space<vmem>>, vector<512x4xf32>,
    %c0_40 = arith.constant 0 : index
    %c2_41 = arith.constant 2 : index
    %c0_42 = arith.constant 0 : index
    %c0_43 = arith.constant 0 : index
    %22 = vector.load %arg6[%c0_40, %c2_41, %c0_42, %c0_43] : memref<2x18x18x4xf32, #tpu.memory_space<vmem>>, vector<2x16x16x4xf32>
    %23 = vector.shape_cast %22 : vector<2x16x16x4xf32> to vector<512x4xf32>
    %c0_44 = arith.constant 0 : index
    %c24 = arith.constant 24 : index
    %24 = vector.load %arg7[%c0_44, %c24] : memref<512x36xf32, #tpu.memory_space<vmem>>, vector<512x4xf32>
    tpu.vector_store %arg7[%c0_44, %c24], %23 {strides = array<i32>} : memref<512x36xf32, #tpu.memory_space<vmem>>, vector<512x4xf32>,
    %c0_45 = arith.constant 0 : index
    %c2_46 = arith.constant 2 : index
    %c1_47 = arith.constant 1 : index
    %c0_48 = arith.constant 0 : index
    %25 = vector.load %arg6[%c0_45, %c2_46, %c1_47, %c0_48] : memref<2x18x18x4xf32, #tpu.memory_space<vmem>>, vector<2x16x16x4xf32>
    %26 = vector.shape_cast %25 : vector<2x16x16x4xf32> to vector<512x4xf32>
    %c0_49 = arith.constant 0 : index
    %c28 = arith.constant 28 : index
    %27 = vector.load %arg7[%c0_49, %c28] : memref<512x36xf32, #tpu.memory_space<vmem>>, vector<512x4xf32>
    tpu.vector_store %arg7[%c0_49, %c28], %26 {strides = array<i32>} : memref<512x36xf32, #tpu.memory_space<vmem>>, vector<512x4xf32>,
    %c0_50 = arith.constant 0 : index
    %c2_51 = arith.constant 2 : index
    %c2_52 = arith.constant 2 : index
    %c0_53 = arith.constant 0 : index
    %28 = vector.load %arg6[%c0_50, %c2_51, %c2_52, %c0_53] : memref<2x18x18x4xf32, #tpu.memory_space<vmem>>, vector<2x16x16x4xf32>
    %29 = vector.shape_cast %28 : vector<2x16x16x4xf32> to vector<512x4xf32>
    %c0_54 = arith.constant 0 : index
    %c32 = arith.constant 32 : index
    %30 = vector.load %arg7[%c0_54, %c32] : memref<512x36xf32, #tpu.memory_space<vmem>>, vector<512x4xf32>
    tpu.vector_store %arg7[%c0_54, %c32], %29 {strides = array<i32>} : memref<512x36xf32, #tpu.memory_space<vmem>>, vector<512x4xf32>,
    %c0_55 = arith.constant 0 : index
    %c0_56 = arith.constant 0 : index
    %31 = vector.load %arg7[%c0_55, %c0_56] : memref<512x36xf32, #tpu.memory_space<vmem>>, vector<512x36xf32>
    %c0_57 = arith.constant 0 : index
    %c0_58 = arith.constant 0 : index
    %32 = vector.load %arg2[%c0_57, %c0_58] : memref<36x128xf32, #tpu.memory_space<vmem>>, vector<36x128xf32>
    %cst_59 = arith.constant dense<0.000000e+00> : vector<512x128xf32>
    %33 = tpu.matmul %31, %32, %cst_59 {dimension_numbers = #tpu.dot_dimension_numbers<[1], [0], [0], [1], [0, 0, 1, 1], [], []>} : vector<512x36xf32>, vector<36x128xf32>, vector<512x128xf32> -> vector<512x128xf32>
    %cst_60 = arith.constant dense<0.000000e+00> : vector<128xf32>
    %34 = vector.multi_reduction <add>, %33, %cst_60 [0] : vector<512x128xf32> to vector<128xf32>
    %35 = vector.shape_cast %34 : vector<128xf32> to vector<1x128xf32>
    %cst_61 = arith.constant 0.001953125 : f32
    %36 = vector.broadcast %cst_61 : f32 to vector<1x128xf32>
    %37 = arith.mulf %35, %36 : vector<1x128xf32>
    %38 = arith.mulf %33, %33 : vector<512x128xf32>
    %cst_62 = arith.constant dense<0.000000e+00> : vector<128xf32>
    %39 = vector.multi_reduction <add>, %38, %cst_62 [0] : vector<512x128xf32> to vector<128xf32>
    %40 = vector.shape_cast %39 : vector<128xf32> to vector<1x128xf32>
    %cst_63 = arith.constant 0.001953125 : f32
    %41 = vector.broadcast %cst_63 : f32 to vector<1x128xf32>
    %42 = arith.mulf %40, %41 : vector<1x128xf32>
    %43 = arith.mulf %37, %37 : vector<1x128xf32>
    %44 = arith.subf %42, %43 : vector<1x128xf32>
    %cst_64 = arith.constant 1.000000e-03 : f32
    %45 = vector.broadcast %cst_64 : f32 to vector<1x128xf32>
    %46 = arith.addf %44, %45 : vector<1x128xf32>
    %47 = math.rsqrt %46 : vector<1x128xf32>
    %c0_65 = arith.constant 0 : index
    %c0_66 = arith.constant 0 : index
    %48 = vector.load %arg3[%c0_65, %c0_66] : memref<1x128xf32, #tpu.memory_space<vmem>>, vector<1x128xf32>
    %49 = arith.mulf %47, %48 : vector<1x128xf32>
    %c0_67 = arith.constant 0 : index
    %c0_68 = arith.constant 0 : index
    %50 = vector.load %arg4[%c0_67, %c0_68] : memref<1x128xf32, #tpu.memory_space<vmem>>, vector<1x128xf32>
    %51 = arith.mulf %37, %49 : vector<1x128xf32>
    %52 = arith.subf %50, %51 : vector<1x128xf32>
    %53 = vector.broadcast %49 : vector<1x128xf32> to vector<512x128xf32>
    %54 = arith.mulf %33, %53 : vector<512x128xf32>
    %55 = vector.broadcast %52 : vector<1x128xf32> to vector<512x128xf32>
    %56 = arith.addf %54, %55 : vector<512x128xf32>
    %cst_69 = arith.constant 5.000000e-01 : f32
    %57 = vector.broadcast %cst_69 : f32 to vector<512x128xf32>
    %58 = arith.mulf %57, %56 : vector<512x128xf32>
    %cst_70 = arith.constant 0.707106769 : f32
    %59 = vector.broadcast %cst_70 : f32 to vector<512x128xf32>
    %60 = arith.mulf %56, %59 : vector<512x128xf32>
    %61 = math.erf %60 : vector<512x128xf32>
    %cst_71 = arith.constant 1.000000e+00 : f32
    %62 = vector.broadcast %cst_71 : f32 to vector<512x128xf32>
    %63 = arith.addf %62, %61 : vector<512x128xf32>
    %64 = arith.mulf %58, %63 : vector<512x128xf32>
    %c0_72 = arith.constant 0 : index
    %c0_73 = arith.constant 0 : index
    %65 = vector.load %arg5[%c0_72, %c0_73] : memref<512x128xf32, #tpu.memory_space<vmem>>, vector<512x128xf32>
    tpu.vector_store %arg5[%c0_72, %c0_73], %64 {strides = array<i32>} : memref<512x128xf32, #tpu.memory_space<vmem>>, vector<512x128xf32>,
    return
  }
  func.func @transform_0(%arg0: i32) -> (i32, i32, i32, i32) {
    %c0_i32 = arith.constant 0 : i32
    %c0_i32_0 = arith.constant 0 : i32
    %c0_i32_1 = arith.constant 0 : i32
    %c0_i32_2 = arith.constant 0 : i32
    %c0_i32_3 = arith.constant 0 : i32
    return %c0_i32, %c0_i32_0, %c0_i32_1, %c0_i32_2 : i32, i32, i32, i32
  }
  func.func @transform_1(%arg0: i32) -> (i32, i32) {
    %c0_i32 = arith.constant 0 : i32
    %c0_i32_0 = arith.constant 0 : i32
    %c0_i32_1 = arith.constant 0 : i32
    return %c0_i32, %c0_i32_0 : i32, i32
  }
  func.func @transform_2(%arg0: i32) -> (i32, i32) {
    %c0_i32 = arith.constant 0 : i32
    %c0_i32_0 = arith.constant 0 : i32
    %c0_i32_1 = arith.constant 0 : i32
    return %c0_i32, %c0_i32_0 : i32, i32
  }
  func.func @transform_3(%arg0: i32) -> (i32, i32) {
    %c0_i32 = arith.constant 0 : i32
    %c0_i32_0 = arith.constant 0 : i32
    %c0_i32_1 = arith.constant 0 : i32
    return %c0_i32, %c0_i32_0 : i32, i32
  }
  func.func @transform_4(%arg0: i32) -> (i32, i32) {
    %c0_i32 = arith.constant 0 : i32
    %c0_i32_0 = arith.constant 0 : i32
    %c0_i32_1 = arith.constant 0 : i32
    return %c0_i32, %c0_i32_0 : i32, i32
  }
}

</mosaic_0001>

<llo_original>
// kernel: conv_bn_relu.1
$region0: #{conv_bn_relu.1}
  #allocation0 [shape = 'u32[]', space=smem, size = 0x4, offset = 0x4, fixed_abs, tag = 'smem constant byte address 0x4 - core index']
  #allocation1 [shape = 'u32[72,128]{1,0:T(1,128)}', space=vmem, size = 0x9000, scoped, tag = 'internal scratch']
  #allocation2 [shape = 'f32[2,18,18,4]{3,2,1,0:T(8,128)}', space=vmem, size = 0x6c000, scoped, tag = 'scratch operand']
  #allocation3 [shape = 'f32[512,36]{1,0:T(8,128)}', space=vmem, size = 0x40000, scoped, tag = 'scratch operand']
  %s0 = inlined_call_operand.vmem [shape: f32[2,16,16,4], index: 0, kind: input, shape index: {}]
  %s1 = inlined_call_operand.vmem [shape: f32[36,128], index: 1, kind: input, shape index: {}]
  %s2 = inlined_call_operand.vmem [shape: f32[1,128], index: 2, kind: input, shape index: {}]
  %s3 = inlined_call_operand.vmem [shape: f32[1,128], index: 3, kind: input, shape index: {}]
  %s4 = inlined_call_operand.vmem [shape: f32[512,128], index: 4, kind: output, shape index: {}]
  %s5 = sld [smem:[#allocation0]]
  $region26: #{conv_bn_relu.1} parent=0
    _
  %s7 = ssub.s32 1, %s5
  %s8 = scalar_select 0, %s7, %s5
  // Predicated region
  $region2: #{conv_bn_relu.1} parent=0 // pred_check
    _
  $region3: #{conv_bn_relu.1} parent=0 // pred_check_branch
    %10 = sbr.rel (0) target = $region5
  $region4: #{conv_bn_relu.1} parent=0 // pred_region
    _
  $region5: #{conv_bn_relu.1} parent=0 // pred_fallthru
    _
  // Predicated region
  $region6: #{conv_bn_relu.1} parent=0 // pred_check
    _
  $region7: #{conv_bn_relu.1} parent=0 // pred_check_branch
    %12 = sbr.rel (0) target = $region9
  $region8: #{conv_bn_relu.1} parent=0 // pred_region
    _
  $region9: #{conv_bn_relu.1} parent=0 // pred_fallthru
    _
  // Predicated region
  $region10: #{conv_bn_relu.1} parent=0 // pred_check
    _
  $region11: #{conv_bn_relu.1} parent=0 // pred_check_branch
    %14 = sbr.rel (0) target = $region13
  $region12: #{conv_bn_relu.1} parent=0 // pred_region
    _
  $region13: #{conv_bn_relu.1} parent=0 // pred_fallthru
    _
  // Predicated region
  $region14: #{conv_bn_relu.1} parent=0 // pred_check
    _
  $region15: #{conv_bn_relu.1} parent=0 // pred_check_branch
    %16 = sbr.rel (0) target = $region17
  $region16: #{conv_bn_relu.1} parent=0 // pred_region
    _
  $region17: #{conv_bn_relu.1} parent=0 // pred_fallthru
    _
  %vm17 = vcmask 31744
  %18 = vst.msk [vmem:[#allocation2] sm:$0xff] %vm17, 0.0
  %19 = vst.msk [vmem:[#allocation2 + $0x8] sm:$0xff] %vm17, 0.0
  %vm20 = vcmask 25600
  %21 = vst.msk [vmem:[#allocation2 + $0x10] sm:$0x3] %vm20, 0.0
  %22 = vst.msk [vmem:[#allocation2 + $0x18] sm:$0xff] %vm17, 0.0
  %23 = vst.msk [vmem:[#allocation2 + $0x20] sm:$0xff] %vm17, 0.0
  %24 = vst.msk [vmem:[#allocation2 + $0x28] sm:$0x3] %vm20, 0.0
  %25 = vst.msk [vmem:[#allocation2 + $0x30] sm:$0xff] %vm17, 0.0
  %26 = vst.msk [vmem:[#allocation2 + $0x38] sm:$0xff] %vm17, 0.0
  %27 = vst.msk [vmem:[#allocation2 + $0x40] sm:$0x3] %vm20, 0.0
  %28 = vst.msk [vmem:[#allocation2 + $0x48] sm:$0xff] %vm17, 0.0
  %29 = vst.msk [vmem:[#allocation2 + $0x50] sm:$0xff] %vm17, 0.0
  %30 = vst.msk [vmem:[#allocation2 + $0x58] sm:$0x3] %vm20, 0.0
  %31 = vst.msk [vmem:[#allocation2 + $0x60] sm:$0xff] %vm17, 0.0
  %32 = vst.msk [vmem:[#allocation2 + $0x68] sm:$0xff] %vm17, 0.0
  %33 = vst.msk [vmem:[#allocation2 + $0x70] sm:$0x3] %vm20, 0.0
  %34 = vst.msk [vmem:[#allocation2 + $0x78] sm:$0xff] %vm17, 0.0
  %35 = vst.msk [vmem:[#allocation2 + $0x80] sm:$0xff] %vm17, 0.0
  %36 = vst.msk [vmem:[#allocation2 + $0x88] sm:$0x3] %vm20, 0.0
  %37 = vst.msk [vmem:[#allocation2 + $0x90] sm:$0xff] %vm17, 0.0
  %38 = vst.msk [vmem:[#allocation2 + $0x98] sm:$0xff] %vm17, 0.0
  %39 = vst.msk [vmem:[#allocation2 + $0xa0] sm:$0x3] %vm20, 0.0
  %40 = vst.msk [vmem:[#allocation2 + $0xa8] sm:$0xff] %vm17, 0.0
  %41 = vst.msk [vmem:[#allocation2 + $0xb0] sm:$0xff] %vm17, 0.0
  %42 = vst.msk [vmem:[#allocation2 + $0xb8] sm:$0x3] %vm20, 0.0
  %43 = vst.msk [vmem:[#allocation2 + $0xc0] sm:$0xff] %vm17, 0.0
  %44 = vst.msk [vmem:[#allocation2 + $0xc8] sm:$0xff] %vm17, 0.0
  %45 = vst.msk [vmem:[#allocation2 + $0xd0] sm:$0x3] %vm20, 0.0
  %46 = vst.msk [vmem:[#allocation2 + $0xd8] sm:$0xff] %vm17, 0.0
  %47 = vst.msk [vmem:[#allocation2 + $0xe0] sm:$0xff] %vm17, 0.0
  %48 = vst.msk [vmem:[#allocation2 + $0xe8] sm:$0x3] %vm20, 0.0
  %49 = vst.msk [vmem:[#allocation2 + $0xf0] sm:$0xff] %vm17, 0.0
  %50 = vst.msk [vmem:[#allocation2 + $0xf8] sm:$0xff] %vm17, 0.0
  %51 = vst.msk [vmem:[#allocation2 + $0x100] sm:$0x3] %vm20, 0.0
  %52 = vst.msk [vmem:[#allocation2 + $0x108] sm:$0xff] %vm17, 0.0
  %53 = vst.msk [vmem:[#allocation2 + $0x110] sm:$0xff] %vm17, 0.0
  %54 = vst.msk [vmem:[#allocation2 + $0x118] sm:$0x3] %vm20, 0.0
  %55 = vst.msk [vmem:[#allocation2 + $0x120] sm:$0xff] %vm17, 0.0
  %56 = vst.msk [vmem:[#allocation2 + $0x128] sm:$0xff] %vm17, 0.0
  %57 = vst.msk [vmem:[#allocation2 + $0x130] sm:$0x3] %vm20, 0.0
  %58 = vst.msk [vmem:[#allocation2 + $0x138] sm:$0xff] %vm17, 0.0
  %59 = vst.msk [vmem:[#allocation2 + $0x140] sm:$0xff] %vm17, 0.0
  %60 = vst.msk [vmem:[#allocation2 + $0x148] sm:$0x3] %vm20, 0.0
  %61 = vst.msk [vmem:[#allocation2 + $0x150] sm:$0xff] %vm17, 0.0
  %62 = vst.msk [vmem:[#allocation2 + $0x158] sm:$0xff] %vm17, 0.0
  %63 = vst.msk [vmem:[#allocation2 + $0x160] sm:$0x3] %vm20, 0.0
  %64 = vst.msk [vmem:[#allocation2 + $0x168] sm:$0xff] %vm17, 0.0
  %65 = vst.msk [vmem:[#allocation2 + $0x170] sm:$0xff] %vm17, 0.0
  %66 = vst.msk [vmem:[#allocation2 + $0x178] sm:$0x3] %vm20, 0.0
  %67 = vst.msk [vmem:[#allocation2 + $0x180] sm:$0xff] %vm17, 0.0
  %68 = vst.msk [vmem:[#allocation2 + $0x188] sm:$0xff] %vm17, 0.0
  %69 = vst.msk [vmem:[#allocation2 + $0x190] sm:$0x3] %vm20, 0.0
  %70 = vst.msk [vmem:[#allocation2 + $0x198] sm:$0xff] %vm17, 0.0
  %71 = vst.msk [vmem:[#allocation2 + $0x1a0] sm:$0xff] %vm17, 0.0
  %72 = vst.msk [vmem:[#allocation2 + $0x1a8] sm:$0x3] %vm20, 0.0
  %73 = vst.msk [vmem:[#allocation2 + $0x1b0] sm:$0xff] %vm17, 0.0
  %74 = vst.msk [vmem:[#allocation2 + $0x1b8] sm:$0xff] %vm17, 0.0
  %75 = vst.msk [vmem:[#allocation2 + $0x1c0] sm:$0x3] %vm20, 0.0
  %76 = vst.msk [vmem:[#allocation2 + $0x1c8] sm:$0xff] %vm17, 0.0
  %77 = vst.msk [vmem:[#allocation2 + $0x1d0] sm:$0xff] %vm17, 0.0
  %78 = vst.msk [vmem:[#allocation2 + $0x1d8] sm:$0x3] %vm20, 0.0
  %79 = vst.msk [vmem:[#allocation2 + $0x1e0] sm:$0xff] %vm17, 0.0
  %80 = vst.msk [vmem:[#allocation2 + $0x1e8] sm:$0xff] %vm17, 0.0
  %81 = vst.msk [vmem:[#allocation2 + $0x1f0] sm:$0x3] %vm20, 0.0
  %82 = vst.msk [vmem:[#allocation2 + $0x1f8] sm:$0xff] %vm17, 0.0
  %83 = vst.msk [vmem:[#allocation2 + $0x200] sm:$0xff] %vm17, 0.0
  %84 = vst.msk [vmem:[#allocation2 + $0x208] sm:$0x3] %vm20, 0.0
  %85 = vst.msk [vmem:[#allocation2 + $0x210] sm:$0xff] %vm17, 0.0
  %86 = vst.msk [vmem:[#allocation2 + $0x218] sm:$0xff] %vm17, 0.0
  %87 = vst.msk [vmem:[#allocation2 + $0x220] sm:$0x3] %vm20, 0.0
  %88 = vst.msk [vmem:[#allocation2 + $0x228] sm:$0xff] %vm17, 0.0
  %89 = vst.msk [vmem:[#allocation2 + $0x230] sm:$0xff] %vm17, 0.0
  %90 = vst.msk [vmem:[#allocation2 + $0x238] sm:$0x3] %vm20, 0.0
  %91 = vst.msk [vmem:[#allocation2 + $0x240] sm:$0xff] %vm17, 0.0
  %92 = vst.msk [vmem:[#allocation2 + $0x248] sm:$0xff] %vm17, 0.0
  %93 = vst.msk [vmem:[#allocation2 + $0x250] sm:$0x3] %vm20, 0.0
  %94 = vst.msk [vmem:[#allocation2 + $0x258] sm:$0xff] %vm17, 0.0
  %95 = vst.msk [vmem:[#allocation2 + $0x260] sm:$0xff] %vm17, 0.0
  %96 = vst.msk [vmem:[#allocation2 + $0x268] sm:$0x3] %vm20, 0.0
  %97 = vst.msk [vmem:[#allocation2 + $0x270] sm:$0xff] %vm17, 0.0
  %98 = vst.msk [vmem:[#allocation2 + $0x278] sm:$0xff] %vm17, 0.0
  %99 = vst.msk [vmem:[#allocation2 + $0x280] sm:$0x3] %vm20, 0.0
  %100 = vst.msk [vmem:[#allocation2 + $0x288] sm:$0xff] %vm17, 0.0
  %101 = vst.msk [vmem:[#allocation2 + $0x290] sm:$0xff] %vm17, 0.0
  %102 = vst.msk [vmem:[#allocation2 + $0x298] sm:$0x3] %vm20, 0.0
  %103 = vst.msk [vmem:[#allocation2 + $0x2a0] sm:$0xff] %vm17, 0.0
  %104 = vst.msk [vmem:[#allocation2 + $0x2a8] sm:$0xff] %vm17, 0.0
  %105 = vst.msk [vmem:[#allocation2 + $0x2b0] sm:$0x3] %vm20, 0.0
  %106 = vst.msk [vmem:[#allocation2 + $0x2b8] sm:$0xff] %vm17, 0.0
  %107 = vst.msk [vmem:[#allocation2 + $0x2c0] sm:$0xff] %vm17, 0.0
  %108 = vst.msk [vmem:[#allocation2 + $0x2c8] sm:$0x3] %vm20, 0.0
  %109 = vst.msk [vmem:[#allocation2 + $0x2d0] sm:$0xff] %vm17, 0.0
  %110 = vst.msk [vmem:[#allocation2 + $0x2d8] sm:$0xff] %vm17, 0.0
  %111 = vst.msk [vmem:[#allocation2 + $0x2e0] sm:$0x3] %vm20, 0.0
  %112 = vst.msk [vmem:[#allocation2 + $0x2e8] sm:$0xff] %vm17, 0.0
  %113 = vst.msk [vmem:[#allocation2 + $0x2f0] sm:$0xff] %vm17, 0.0
  %114 = vst.msk [vmem:[#allocation2 + $0x2f8] sm:$0x3] %vm20, 0.0
  %115 = vst.msk [vmem:[#allocation2 + $0x300] sm:$0xff] %vm17, 0.0
  %116 = vst.msk [vmem:[#allocation2 + $0x308] sm:$0xff] %vm17, 0.0
  %117 = vst.msk [vmem:[#allocation2 + $0x310] sm:$0x3] %vm20, 0.0
  %118 = vst.msk [vmem:[#allocation2 + $0x318] sm:$0xff] %vm17, 0.0
  %119 = vst.msk [vmem:[#allocation2 + $0x320] sm:$0xff] %vm17, 0.0
  %120 = vst.msk [vmem:[#allocation2 + $0x328] sm:$0x3] %vm20, 0.0
  %121 = vst.msk [vmem:[#allocation2 + $0x330] sm:$0xff] %vm17, 0.0
  %122 = vst.msk [vmem:[#allocation2 + $0x338] sm:$0xff] %vm17, 0.0
  %123 = vst.msk [vmem:[#allocation2 + $0x340] sm:$0x3] %vm20, 0.0
  %124 = vst.msk [vmem:[#allocation2 + $0x348] sm:$0xff] %vm17, 0.0
  %125 = vst.msk [vmem:[#allocation2 + $0x350] sm:$0xff] %vm17, 0.0
  %126 = vst.msk [vmem:[#allocation2 + $0x358] sm:$0x3] %vm20, 0.0
  %v127 = vld [vmem:[%s0] sm:$0xff]
  %v128 = vld [vmem:[%s0 + $0x8] sm:$0xff]
  %v129 = vld [vmem:[%s0 + $0x10] sm:$0xff]
  %v130 = vld [vmem:[%s0 + $0x18] sm:$0xff]
  %v131 = vld [vmem:[%s0 + $0x20] sm:$0xff]
  %v132 = vld [vmem:[%s0 + $0x28] sm:$0xff]
  %v133 = vld [vmem:[%s0 + $0x30] sm:$0xff]
  %v134 = vld [vmem:[%s0 + $0x38] sm:$0xff]
  %v135 = vld [vmem:[%s0 + $0x40] sm:$0xff]
  %v136 = vld [vmem:[%s0 + $0x48] sm:$0xff]
  %v137 = vld [vmem:[%s0 + $0x50] sm:$0xff]
  %v138 = vld [vmem:[%s0 + $0x58] sm:$0xff]
  %v139 = vld [vmem:[%s0 + $0x60] sm:$0xff]
  %v140 = vld [vmem:[%s0 + $0x68] sm:$0xff]
  %v141 = vld [vmem:[%s0 + $0x70] sm:$0xff]
  %v142 = vld [vmem:[%s0 + $0x78] sm:$0xff]
  %v143 = vld [vmem:[%s0 + $0x80] sm:$0xff]
  %v144 = vld [vmem:[%s0 + $0x88] sm:$0xff]
  %v145 = vld [vmem:[%s0 + $0x90] sm:$0xff]
  %v146 = vld [vmem:[%s0 + $0x98] sm:$0xff]
  %v147 = vld [vmem:[%s0 + $0xa0] sm:$0xff]
  %v148 = vld [vmem:[%s0 + $0xa8] sm:$0xff]
  %v149 = vld [vmem:[%s0 + $0xb0] sm:$0xff]
  %v150 = vld [vmem:[%s0 + $0xb8] sm:$0xff]
  %v151 = vld [vmem:[%s0 + $0xc0] sm:$0xff]
  %v152 = vld [vmem:[%s0 + $0xc8] sm:$0xff]
  %v153 = vld [vmem:[%s0 + $0xd0] sm:$0xff]
  %v154 = vld [vmem:[%s0 + $0xd8] sm:$0xff]
  %v155 = vld [vmem:[%s0 + $0xe0] sm:$0xff]
  %v156 = vld [vmem:[%s0 + $0xe8] sm:$0xff]
  %v157 = vld [vmem:[%s0 + $0xf0] sm:$0xff]
  %v158 = vld [vmem:[%s0 + $0xf8] sm:$0xff]
  %v159 = vld [vmem:[%s0 + $0x100] sm:$0xff]
  %v160 = vld [vmem:[%s0 + $0x108] sm:$0xff]
  %v161 = vld [vmem:[%s0 + $0x110] sm:$0xff]
  %v162 = vld [vmem:[%s0 + $0x118] sm:$0xff]
  %v163 = vld [vmem:[%s0 + $0x120] sm:$0xff]
  %v164 = vld [vmem:[%s0 + $0x128] sm:$0xff]
  %v165 = vld [vmem:[%s0 + $0x130] sm:$0xff]
  %v166 = vld [vmem:[%s0 + $0x138] sm:$0xff]
  %v167 = vld [vmem:[%s0 + $0x140] sm:$0xff]
  %v168 = vld [vmem:[%s0 + $0x148] sm:$0xff]
  %v169 = vld [vmem:[%s0 + $0x150] sm:$0xff]
  %v170 = vld [vmem:[%s0 + $0x158] sm:$0xff]
  %v171 = vld [vmem:[%s0 + $0x160] sm:$0xff]
  %v172 = vld [vmem:[%s0 + $0x168] sm:$0xff]
  %v173 = vld [vmem:[%s0 + $0x170] sm:$0xff]
  %v174 = vld [vmem:[%s0 + $0x178] sm:$0xff]
  %v175 = vld [vmem:[%s0 + $0x180] sm:$0xff]
  %v176 = vld [vmem:[%s0 + $0x188] sm:$0xff]
  %v177 = vld [vmem:[%s0 + $0x190] sm:$0xff]
  %v178 = vld [vmem:[%s0 + $0x198] sm:$0xff]
  %v179 = vld [vmem:[%s0 + $0x1a0] sm:$0xff]
  %v180 = vld [vmem:[%s0 + $0x1a8] sm:$0xff]
  %v181 = vld [vmem:[%s0 + $0x1b0] sm:$0xff]
  %v182 = vld [vmem:[%s0 + $0x1b8] sm:$0xff]
  %v183 = vld [vmem:[%s0 + $0x1c0] sm:$0xff]
  %v184 = vld [vmem:[%s0 + $0x1c8] sm:$0xff]
  %v185 = vld [vmem:[%s0 + $0x1d0] sm:$0xff]
  %v186 = vld [vmem:[%s0 + $0x1d8] sm:$0xff]
  %v187 = vld [vmem:[%s0 + $0x1e0] sm:$0xff]
  %v188 = vld [vmem:[%s0 + $0x1e8] sm:$0xff]
  %v189 = vld [vmem:[%s0 + $0x1f0] sm:$0xff]
  %v190 = vld [vmem:[%s0 + $0x1f8] sm:$0xff]
  %s191 = scalar_lea.vmem [#allocation2], 24
  %192 = vst.msk [vmem:[%s191 + $0x1] sm:$0xff] %vm17, %v127
  %193 = vst.msk [vmem:[%s191 + $0x9] sm:$0xff] %vm17, %v128
  %194 = vst.msk [vmem:[%s191 + $0x19] sm:$0xff] %vm17, %v129
  %195 = vst.msk [vmem:[%s191 + $0x21] sm:$0xff] %vm17, %v130
  %196 = vst.msk [vmem:[%s191 + $0x31] sm:$0xff] %vm17, %v131
  %197 = vst.msk [vmem:[%s191 + $0x39] sm:$0xff] %vm17, %v132
  %198 = vst.msk [vmem:[%s191 + $0x49] sm:$0xff] %vm17, %v133
  %199 = vst.msk [vmem:[%s191 + $0x51] sm:$0xff] %vm17, %v134
  %200 = vst.msk [vmem:[%s191 + $0x61] sm:$0xff] %vm17, %v135
  %201 = vst.msk [vmem:[%s191 + $0x69] sm:$0xff] %vm17, %v136
  %202 = vst.msk [vmem:[%s191 + $0x79] sm:$0xff] %vm17, %v137
  %203 = vst.msk [vmem:[%s191 + $0x81] sm:$0xff] %vm17, %v138
  %204 = vst.msk [vmem:[%s191 + $0x91] sm:$0xff] %vm17, %v139
  %205 = vst.msk [vmem:[%s191 + $0x99] sm:$0xff] %vm17, %v140
  %206 = vst.msk [vmem:[%s191 + $0xa9] sm:$0xff] %vm17, %v141
  %207 = vst.msk [vmem:[%s191 + $0xb1] sm:$0xff] %vm17, %v142
  %208 = vst.msk [vmem:[%s191 + $0xc1] sm:$0xff] %vm17, %v143
  %209 = vst.msk [vmem:[%s191 + $0xc9] sm:$0xff] %vm17, %v144
  %210 = vst.msk [vmem:[%s191 + $0xd9] sm:$0xff] %vm17, %v145
  %211 = vst.msk [vmem:[%s191 + $0xe1] sm:$0xff] %vm17, %v146
  %212 = vst.msk [vmem:[%s191 + $0xf1] sm:$0xff] %vm17, %v147
  %213 = vst.msk [vmem:[%s191 + $0xf9] sm:$0xff] %vm17, %v148
  %214 = vst.msk [vmem:[%s191 + $0x109] sm:$0xff] %vm17, %v149
  %215 = vst.msk [vmem:[%s191 + $0x111] sm:$0xff] %vm17, %v150
  %216 = vst.msk [vmem:[%s191 + $0x121] sm:$0xff] %vm17, %v151
  %217 = vst.msk [vmem:[%s191 + $0x129] sm:$0xff] %vm17, %v152
  %218 = vst.msk [vmem:[%s191 + $0x139] sm:$0xff] %vm17, %v153
  %219 = vst.msk [vmem:[%s191 + $0x141] sm:$0xff] %vm17, %v154
  %220 = vst.msk [vmem:[%s191 + $0x151] sm:$0xff] %vm17, %v155
  %221 = vst.msk [vmem:[%s191 + $0x159] sm:$0xff] %vm17, %v156
  %222 = vst.msk [vmem:[%s191 + $0x169] sm:$0xff] %vm17, %v157
  %223 = vst.msk [vmem:[%s191 + $0x171] sm:$0xff] %vm17, %v158
  %224 = vst.msk [vmem:[%s191 + $0x1b1] sm:$0xff] %vm17, %v159
  %225 = vst.msk [vmem:[%s191 + $0x1b9] sm:$0xff] %vm17, %v160
  %226 = vst.msk [vmem:[%s191 + $0x1c9] sm:$0xff] %vm17, %v161
  %227 = vst.msk [vmem:[%s191 + $0x1d1] sm:$0xff] %vm17, %v162
  %228 = vst.msk [vmem:[%s191 + $0x1e1] sm:$0xff] %vm17, %v163
  %229 = vst.msk [vmem:[%s191 + $0x1e9] sm:$0xff] %vm17, %v164
  %230 = vst.msk [vmem:[%s191 + $0x1f9] sm:$0xff] %vm17, %v165
  %231 = vst.msk [vmem:[%s191 + $0x201] sm:$0xff] %vm17, %v166
  %232 = vst.msk [vmem:[%s191 + $0x211] sm:$0xff] %vm17, %v167
  %233 = vst.msk [vmem:[%s191 + $0x219] sm:$0xff] %vm17, %v168
  %234 = vst.msk [vmem:[%s191 + $0x229] sm:$0xff] %vm17, %v169
  %235 = vst.msk [vmem:[%s191 + $0x231] sm:$0xff] %vm17, %v170
  %236 = vst.msk [vmem:[%s191 + $0x241] sm:$0xff] %vm17, %v171
  %237 = vst.msk [vmem:[%s191 + $0x249] sm:$0xff] %vm17, %v172
  %238 = vst.msk [vmem:[%s191 + $0x259] sm:$0xff] %vm17, %v173
  %239 = vst.msk [vmem:[%s191 + $0x261] sm:$0xff] %vm17, %v174
  %240 = vst.msk [vmem:[%s191 + $0x271] sm:$0xff] %vm17, %v175
  %241 = vst.msk [vmem:[%s191 + $0x279] sm:$0xff] %vm17, %v176
  %242 = vst.msk [vmem:[%s191 + $0x289] sm:$0xff] %vm17, %v177
  %243 = vst.msk [vmem:[%s191 + $0x291] sm:$0xff] %vm17, %v178
  %244 = vst.msk [vmem:[%s191 + $0x2a1] sm:$0xff] %vm17, %v179
  %245 = vst.msk [vmem:[%s191 + $0x2a9] sm:$0xff] %vm17, %v180
  %246 = vst.msk [vmem:[%s191 + $0x2b9] sm:$0xff] %vm17, %v181
  %247 = vst.msk [vmem:[%s191 + $0x2c1] sm:$0xff] %vm17, %v182
  %248 = vst.msk [vmem:[%s191 + $0x2d1] sm:$0xff] %vm17, %v183
  %249 = vst.msk [vmem:[%s191 + $0x2d9] sm:$0xff] %vm17, %v184
  %250 = vst.msk [vmem:[%s191 + $0x2e9] sm:$0xff] %vm17, %v185
  %251 = vst.msk [vmem:[%s191 + $0x2f1] sm:$0xff] %vm17, %v186
  %252 = vst.msk [vmem:[%s191 + $0x301] sm:$0xff] %vm17, %v187
  %253 = vst.msk [vmem:[%s191 + $0x309] sm:$0xff] %vm17, %v188
  %254 = vst.msk [vmem:[%s191 + $0x319] sm:$0xff] %vm17, %v189
  %255 = vst.msk [vmem:[%s191 + $0x321] sm:$0xff] %vm17, %v190
  %v256 = vld [vmem:[#allocation2] sm:$0xff]
  %v257 = vld [vmem:[#allocation2 + $0x8] sm:$0xff]
  %v258 = vld [vmem:[#allocation2 + $0x18] sm:$0xff]
  %v259 = vld [vmem:[#allocation2 + $0x20] sm:$0xff]
  %v260 = vld [vmem:[#allocation2 + $0x30] sm:$0xff]
  %v261 = vld [vmem:[#allocation2 + $0x38] sm:$0xff]
  %v262 = vld [vmem:[#allocation2 + $0x48] sm:$0xff]
  %v263 = vld [vmem:[#allocation2 + $0x50] sm:$0xff]
  %v264 = vld [vmem:[#allocation2 + $0x60] sm:$0xff]
  %v265 = vld [vmem:[#allocation2 + $0x68] sm:$0xff]
  %v266 = vld [vmem:[#allocation2 + $0x78] sm:$0xff]
  %v267 = vld [vmem:[#allocation2 + $0x80] sm:$0xff]
  %v268 = vld [vmem:[#allocation2 + $0x90] sm:$0xff]
  %v269 = vld [vmem:[#allocation2 + $0x98] sm:$0xff]
  %v270 = vld [vmem:[#allocation2 + $0xa8] sm:$0xff]
  %v271 = vld [vmem:[#allocation2 + $0xb0] sm:$0xff]
  %v272 = vld [vmem:[#allocation2 + $0xc0] sm:$0xff]
  %v273 = vld [vmem:[#allocation2 + $0xc8] sm:$0xff]
  %v274 = vld [vmem:[#allocation2 + $0xd8] sm:$0xff]
  %v275 = vld [vmem:[#allocation2 + $0xe0] sm:$0xff]
  %v276 = vld [vmem:[#allocation2 + $0xf0] sm:$0xff]
  %v277 = vld [vmem:[#allocation2 + $0xf8] sm:$0xff]
  %v278 = vld [vmem:[#allocation2 + $0x108] sm:$0xff]
  %v279 = vld [vmem:[#allocation2 + $0x110] sm:$0xff]
  %v280 = vld [vmem:[#allocation2 + $0x120] sm:$0xff]
  %v281 = vld [vmem:[#allocation2 + $0x128] sm:$0xff]
  %v282 = vld [vmem:[#allocation2 + $0x138] sm:$0xff]
  %v283 = vld [vmem:[#allocation2 + $0x140] sm:$0xff]
  %v284 = vld [vmem:[#allocation2 + $0x150] sm:$0xff]
  %v285 = vld [vmem:[#allocation2 + $0x158] sm:$0xff]
  %v286 = vld [vmem:[#allocation2 + $0x168] sm:$0xff]
  %v287 = vld [vmem:[#allocation2 + $0x170] sm:$0xff]
  %v288 = vld [vmem:[#allocation2 + $0x1b0] sm:$0xff]
  %v289 = vld [vmem:[#allocation2 + $0x1b8] sm:$0xff]
  %v290 = vld [vmem:[#allocation2 + $0x1c8] sm:$0xff]
  %v291 = vld [vmem:[#allocation2 + $0x1d0] sm:$0xff]
  %v292 = vld [vmem:[#allocation2 + $0x1e0] sm:$0xff]
  %v293 = vld [vmem:[#allocation2 + $0x1e8] sm:$0xff]
  %v294 = vld [vmem:[#allocation2 + $0x1f8] sm:$0xff]
  %v295 = vld [vmem:[#allocation2 + $0x200] sm:$0xff]
  %v296 = vld [vmem:[#allocation2 + $0x210] sm:$0xff]
  %v297 = vld [vmem:[#allocation2 + $0x218] sm:$0xff]
  %v298 = vld [vmem:[#allocation2 + $0x228] sm:$0xff]
  %v299 = vld [vmem:[#allocation2 + $0x230] sm:$0xff]
  %v300 = vld [vmem:[#allocation2 + $0x240] sm:$0xff]
  %v301 = vld [vmem:[#allocation2 + $0x248] sm:$0xff]
  %v302 = vld [vmem:[#allocation2 + $0x258] sm:$0xff]
  %v303 = vld [vmem:[#allocation2 + $0x260] sm:$0xff]
  %v304 = vld [vmem:[#allocation2 + $0x270] sm:$0xff]
  %v305 = vld [vmem:[#allocation2 + $0x278] sm:$0xff]
  %v306 = vld [vmem:[#allocation2 + $0x288] sm:$0xff]
  %v307 = vld [vmem:[#allocation2 + $0x290] sm:$0xff]
  %v308 = vld [vmem:[#allocation2 + $0x2a0] sm:$0xff]
  %v309 = vld [vmem:[#allocation2 + $0x2a8] sm:$0xff]
  %v310 = vld [vmem:[#allocation2 + $0x2b8] sm:$0xff]
  %v311 = vld [vmem:[#allocation2 + $0x2c0] sm:$0xff]
  %v312 = vld [vmem:[#allocation2 + $0x2d0] sm:$0xff]
  %v313 = vld [vmem:[#allocation2 + $0x2d8] sm:$0xff]
  %v314 = vld [vmem:[#allocation2 + $0x2e8] sm:$0xff]
  %v315 = vld [vmem:[#allocation2 + $0x2f0] sm:$0xff]
  %v316 = vld [vmem:[#allocation2 + $0x300] sm:$0xff]
  %v317 = vld [vmem:[#allocation2 + $0x308] sm:$0xff]
  %v318 = vld [vmem:[#allocation2 + $0x318] sm:$0xff]
  %v319 = vld [vmem:[#allocation2 + $0x320] sm:$0xff]
  %320 = vst.msk [vmem:[#allocation3] sm:$0xff] %vm17, %v256
  %321 = vst.msk [vmem:[#allocation3 + $0x8] sm:$0xff] %vm17, %v257
  %322 = vst.msk [vmem:[#allocation3 + $0x10] sm:$0xff] %vm17, %v258
  %323 = vst.msk [vmem:[#allocation3 + $0x18] sm:$0xff] %vm17, %v259
  %324 = vst.msk [vmem:[#allocation3 + $0x20] sm:$0xff] %vm17, %v260
  %325 = vst.msk [vmem:[#allocation3 + $0x28] sm:$0xff] %vm17, %v261
  %326 = vst.msk [vmem:[#allocation3 + $0x30] sm:$0xff] %vm17, %v262
  %327 = vst.msk [vmem:[#allocation3 + $0x38] sm:$0xff] %vm17, %v263
  %328 = vst.msk [vmem:[#allocation3 + $0x40] sm:$0xff] %vm17, %v264
  %329 = vst.msk [vmem:[#allocation3 + $0x48] sm:$0xff] %vm17, %v265
  %330 = vst.msk [vmem:[#allocation3 + $0x50] sm:$0xff] %vm17, %v266
  %331 = vst.msk [vmem:[#allocation3 + $0x58] sm:$0xff] %vm17, %v267
  %332 = vst.msk [vmem:[#allocation3 + $0x60] sm:$0xff] %vm17, %v268
  %333 = vst.msk [vmem:[#allocation3 + $0x68] sm:$0xff] %vm17, %v269
  %334 = vst.msk [vmem:[#allocation3 + $0x70] sm:$0xff] %vm17, %v270
  %335 = vst.msk [vmem:[#allocation3 + $0x78] sm:$0xff] %vm17, %v271
  %336 = vst.msk [vmem:[#allocation3 + $0x80] sm:$0xff] %vm17, %v272
  %337 = vst.msk [vmem:[#allocation3 + $0x88] sm:$0xff] %vm17, %v273
  %338 = vst.msk [vmem:[#allocation3 + $0x90] sm:$0xff] %vm17, %v274
  %339 = vst.msk [vmem:[#allocation3 + $0x98] sm:$0xff] %vm17, %v275
  %340 = vst.msk [vmem:[#allocation3 + $0xa0] sm:$0xff] %vm17, %v276
  %341 = vst.msk [vmem:[#allocation3 + $0xa8] sm:$0xff] %vm17, %v277
  %342 = vst.msk [vmem:[#allocation3 + $0xb0] sm:$0xff] %vm17, %v278
  %343 = vst.msk [vmem:[#allocation3 + $0xb8] sm:$0xff] %vm17, %v279
  %344 = vst.msk [vmem:[#allocation3 + $0xc0] sm:$0xff] %vm17, %v280
  %345 = vst.msk [vmem:[#allocation3 + $0xc8] sm:$0xff] %vm17, %v281
  %346 = vst.msk [vmem:[#allocation3 + $0xd0] sm:$0xff] %vm17, %v282
  %347 = vst.msk [vmem:[#allocation3 + $0xd8] sm:$0xff] %vm17, %v283
  %348 = vst.msk [vmem:[#allocation3 + $0xe0] sm:$0xff] %vm17, %v284
  %349 = vst.msk [vmem:[#allocation3 + $0xe8] sm:$0xff] %vm17, %v285
  %350 = vst.msk [vmem:[#allocation3 + $0xf0] sm:$0xff] %vm17, %v286
  %351 = vst.msk [vmem:[#allocation3 + $0xf8] sm:$0xff] %vm17, %v287
  %352 = vst.msk [vmem:[#allocation3 + $0x100] sm:$0xff] %vm17, %v288
  %353 = vst.msk [vmem:[#allocation3 + $0x108] sm:$0xff] %vm17, %v289
  %354 = vst.msk [vmem:[#allocation3 + $0x110] sm:$0xff] %vm17, %v290
  %355 = vst.msk [vmem:[#allocation3 + $0x118] sm:$0xff] %vm17, %v291
  %356 = vst.msk [vmem:[#allocation3 + $0x120] sm:$0xff] %vm17, %v292
  %357 = vst.msk [vmem:[#allocation3 + $0x128] sm:$0xff] %vm17, %v293
  %358 = vst.msk [vmem:[#allocation3 + $0x130] sm:$0xff] %vm17, %v294
  %359 = vst.msk [vmem:[#allocation3 + $0x138] sm:$0xff] %vm17, %v295
  %360 = vst.msk [vmem:[#allocation3 + $0x140] sm:$0xff] %vm17, %v296
  %361 = vst.msk [vmem:[#allocation3 + $0x148] sm:$0xff] %vm17, %v297
  %362 = vst.msk [vmem:[#allocation3 + $0x150] sm:$0xff] %vm17, %v298
  %363 = vst.msk [vmem:[#allocation3 + $0x158] sm:$0xff] %vm17, %v299
  %364 = vst.msk [vmem:[#allocation3 + $0x160] sm:$0xff] %vm17, %v300
  %365 = vst.msk [vmem:[#allocation3 + $0x168] sm:$0xff] %vm17, %v301
  %366 = vst.msk [vmem:[#allocation3 + $0x170] sm:$0xff] %vm17, %v302
  %367 = vst.msk [vmem:[#allocation3 + $0x178] sm:$0xff] %vm17, %v303
  %368 = vst.msk [vmem:[#allocation3 + $0x180] sm:$0xff] %vm17, %v304
  %369 = vst.msk [vmem:[#allocation3 + $0x188] sm:$0xff] %vm17, %v305
  %370 = vst.msk [vmem:[#allocation3 + $0x190] sm:$0xff] %vm17, %v306
  %371 = vst.msk [vmem:[#allocation3 + $0x198] sm:$0xff] %vm17, %v307
  %372 = vst.msk [vmem:[#allocation3 + $0x1a0] sm:$0xff] %vm17, %v308
  %373 = vst.msk [vmem:[#allocation3 + $0x1a8] sm:$0xff] %vm17, %v309
  %374 = vst.msk [vmem:[#allocation3 + $0x1b0] sm:$0xff] %vm17, %v310
  %375 = vst.msk [vmem:[#allocation3 + $0x1b8] sm:$0xff] %vm17, %v311
  %376 = vst.msk [vmem:[#allocation3 + $0x1c0] sm:$0xff] %vm17, %v312
  %377 = vst.msk [vmem:[#allocation3 + $0x1c8] sm:$0xff] %vm17, %v313
  %378 = vst.msk [vmem:[#allocation3 + $0x1d0] sm:$0xff] %vm17, %v314
  %379 = vst.msk [vmem:[#allocation3 + $0x1d8] sm:$0xff] %vm17, %v315
  %380 = vst.msk [vmem:[#allocation3 + $0x1e0] sm:$0xff] %vm17, %v316
  %381 = vst.msk [vmem:[#allocation3 + $0x1e8] sm:$0xff] %vm17, %v317
  %382 = vst.msk [vmem:[#allocation3 + $0x1f0] sm:$0xff] %vm17, %v318
  %383 = vst.msk [vmem:[#allocation3 + $0x1f8] sm:$0xff] %vm17, %v319
  %v384 = vld [vmem:[#allocation2 + $0x1] sm:$0xff]
  %v385 = vld [vmem:[#allocation2 + $0x9] sm:$0xff]
  %v386 = vld [vmem:[#allocation2 + $0x19] sm:$0xff]
  %v387 = vld [vmem:[#allocation2 + $0x21] sm:$0xff]
  %v388 = vld [vmem:[#allocation2 + $0x31] sm:$0xff]
  %v389 = vld [vmem:[#allocation2 + $0x39] sm:$0xff]
  %v390 = vld [vmem:[#allocation2 + $0x49] sm:$0xff]
  %v391 = vld [vmem:[#allocation2 + $0x51] sm:$0xff]
  %v392 = vld [vmem:[#allocation2 + $0x61] sm:$0xff]
  %v393 = vld [vmem:[#allocation2 + $0x69] sm:$0xff]
  %v394 = vld [vmem:[#allocation2 + $0x79] sm:$0xff]
  %v395 = vld [vmem:[#allocation2 + $0x81] sm:$0xff]
  %v396 = vld [vmem:[#allocation2 + $0x91] sm:$0xff]
  %v397 = vld [vmem:[#allocation2 + $0x99] sm:$0xff]
  %v398 = vld [vmem:[#allocation2 + $0xa9] sm:$0xff]
  %v399 = vld [vmem:[#allocation2 + $0xb1] sm:$0xff]
  %v400 = vld [vmem:[#allocation2 + $0xc1] sm:$0xff]
  %v401 = vld [vmem:[#allocation2 + $0xc9] sm:$0xff]
  %v402 = vld [vmem:[#allocation2 + $0xd9] sm:$0xff]
  %v403 = vld [vmem:[#allocation2 + $0xe1] sm:$0xff]
  %v404 = vld [vmem:[#allocation2 + $0xf1] sm:$0xff]
  %v405 = vld [vmem:[#allocation2 + $0xf9] sm:$0xff]
  %v406 = vld [vmem:[#allocation2 + $0x109] sm:$0xff]
  %v407 = vld [vmem:[#allocation2 + $0x111] sm:$0xff]
  %v408 = vld [vmem:[#allocation2 + $0x121] sm:$0xff]
  %v409 = vld [vmem:[#allocation2 + $0x129] sm:$0xff]
  %v410 = vld [vmem:[#allocation2 + $0x139] sm:$0xff]
  %v411 = vld [vmem:[#allocation2 + $0x141] sm:$0xff]
  %v412 = vld [vmem:[#allocation2 + $0x151] sm:$0xff]
  %v413 = vld [vmem:[#allocation2 + $0x159] sm:$0xff]
  %v414 = vld [vmem:[#allocation2 + $0x169] sm:$0xff]
  %v415 = vld [vmem:[#allocation2 + $0x171] sm:$0xff]
  %v416 = vld [vmem:[#allocation2 + $0x1b1] sm:$0xff]
  %v417 = vld [vmem:[#allocation2 + $0x1b9] sm:$0xff]
  %v418 = vld [vmem:[#allocation2 + $0x1c9] sm:$0xff]
  %v419 = vld [vmem:[#allocation2 + $0x1d1] sm:$0xff]
  %v420 = vld [vmem:[#allocation2 + $0x1e1] sm:$0xff]
  %v421 = vld [vmem:[#allocation2 + $0x1e9] sm:$0xff]
  %v422 = vld [vmem:[#allocation2 + $0x1f9] sm:$0xff]
  %v423 = vld [vmem:[#allocation2 + $0x201] sm:$0xff]
  %v424 = vld [vmem:[#allocation2 + $0x211] sm:$0xff]
  %v425 = vld [vmem:[#allocation2 + $0x219] sm:$0xff]
  %v426 = vld [vmem:[#allocation2 + $0x229] sm:$0xff]
  %v427 = vld [vmem:[#allocation2 + $0x231] sm:$0xff]
  %v428 = vld [vmem:[#allocation2 + $0x241] sm:$0xff]
  %v429 = vld [vmem:[#allocation2 + $0x249] sm:$0xff]
  %v430 = vld [vmem:[#allocation2 + $0x259] sm:$0xff]
  %v431 = vld [vmem:[#allocation2 + $0x261] sm:$0xff]
  %v432 = vld [vmem:[#allocation2 + $0x271] sm:$0xff]
  %v433 = vld [vmem:[#allocation2 + $0x279] sm:$0xff]
  %v434 = vld [vmem:[#allocation2 + $0x289] sm:$0xff]
  %v435 = vld [vmem:[#allocation2 + $0x291] sm:$0xff]
  %v436 = vld [vmem:[#allocation2 + $0x2a1] sm:$0xff]
  %v437 = vld [vmem:[#allocation2 + $0x2a9] sm:$0xff]
  %v438 = vld [vmem:[#allocation2 + $0x2b9] sm:$0xff]
  %v439 = vld [vmem:[#allocation2 + $0x2c1] sm:$0xff]
  %v440 = vld [vmem:[#allocation2 + $0x2d1] sm:$0xff]
  %v441 = vld [vmem:[#allocation2 + $0x2d9] sm:$0xff]
  %v442 = vld [vmem:[#allocation2 + $0x2e9] sm:$0xff]
  %v443 = vld [vmem:[#allocation2 + $0x2f1] sm:$0xff]
  %v444 = vld [vmem:[#allocation2 + $0x301] sm:$0xff]
  %v445 = vld [vmem:[#allocation2 + $0x309] sm:$0xff]
  %v446 = vld [vmem:[#allocation2 + $0x319] sm:$0xff]
  %v447 = vld [vmem:[#allocation2 + $0x321] sm:$0xff]
  %512 = vrot.lane.b32.xlu0 %v384, 4
  %v513 = vpop.permute.xlu0 %512
  %514 = vrot.lane.b32.xlu0 %v385, 4
  %v515 = vpop.permute.xlu0 %514
  %516 = vrot.lane.b32.xlu0 %v386, 4
  %v517 = vpop.permute.xlu0 %516
  %518 = vrot.lane.b32.xlu0 %v387, 4
  %v519 = vpop.permute.xlu0 %518
  %520 = vrot.lane.b32.xlu0 %v388, 4
  %v521 = vpop.permute.xlu0 %520
  %522 = vrot.lane.b32.xlu0 %v389, 4
  %v523 = vpop.permute.xlu0 %522
  %524 = vrot.lane.b32.xlu0 %v390, 4
  %v525 = vpop.permute.xlu0 %524
  %526 = vrot.lane.b32.xlu0 %v391, 4
  %v527 = vpop.permute.xlu0 %526
  %528 = vrot.lane.b32.xlu0 %v392, 4
  %v529 = vpop.permute.xlu0 %528
  %530 = vrot.lane.b32.xlu0 %v393, 4
  %v531 = vpop.permute.xlu0 %530
  %532 = vrot.lane.b32.xlu0 %v394, 4
  %v533 = vpop.permute.xlu0 %532
  %534 = vrot.lane.b32.xlu0 %v395, 4
  %v535 = vpop.permute.xlu0 %534
  %536 = vrot.lane.b32.xlu0 %v396, 4
  %v537 = vpop.permute.xlu0 %536
  %538 = vrot.lane.b32.xlu0 %v397, 4
  %v539 = vpop.permute.xlu0 %538
  %540 = vrot.lane.b32.xlu0 %v398, 4
  %v541 = vpop.permute.xlu0 %540
  %542 = vrot.lane.b32.xlu0 %v399, 4
  %v543 = vpop.permute.xlu0 %542
  %544 = vrot.lane.b32.xlu0 %v400, 4
  %v545 = vpop.permute.xlu0 %544
  %546 = vrot.lane.b32.xlu0 %v401, 4
  %v547 = vpop.permute.xlu0 %546
  %548 = vrot.lane.b32.xlu0 %v402, 4
  %v549 = vpop.permute.xlu0 %548
  %550 = vrot.lane.b32.xlu0 %v403, 4
  %v551 = vpop.permute.xlu0 %550
  %552 = vrot.lane.b32.xlu0 %v404, 4
  %v553 = vpop.permute.xlu0 %552
  %554 = vrot.lane.b32.xlu0 %v405, 4
  %v555 = vpop.permute.xlu0 %554
  %556 = vrot.lane.b32.xlu0 %v406, 4
  %v557 = vpop.permute.xlu0 %556
  %558 = vrot.lane.b32.xlu0 %v407, 4
  %v559 = vpop.permute.xlu0 %558
  %560 = vrot.lane.b32.xlu0 %v408, 4
  %v561 = vpop.permute.xlu0 %560
  %562 = vrot.lane.b32.xlu0 %v409, 4
  %v563 = vpop.permute.xlu0 %562
  %564 = vrot.lane.b32.xlu0 %v410, 4
  %v565 = vpop.permute.xlu0 %564
  %566 = vrot.lane.b32.xlu0 %v411, 4
  %v567 = vpop.permute.xlu0 %566
  %568 = vrot.lane.b32.xlu0 %v412, 4
  %v569 = vpop.permute.xlu0 %568
  %570 = vrot.lane.b32.xlu0 %v413, 4
  %v571 = vpop.permute.xlu0 %570
  %572 = vrot.lane.b32.xlu0 %v414, 4
  %v573 = vpop.permute.xlu0 %572
  %574 = vrot.lane.b32.xlu0 %v415, 4
  %v575 = vpop.permute.xlu0 %574
  %576 = vrot.lane.b32.xlu0 %v416, 4
  %v577 = vpop.permute.xlu0 %576
  %578 = vrot.lane.b32.xlu0 %v417, 4
  %v579 = vpop.permute.xlu0 %578
  %580 = vrot.lane.b32.xlu0 %v418, 4
  %v581 = vpop.permute.xlu0 %580
  %582 = vrot.lane.b32.xlu0 %v419, 4
  %v583 = vpop.permute.xlu0 %582
  %584 = vrot.lane.b32.xlu0 %v420, 4
  %v585 = vpop.permute.xlu0 %584
  %586 = vrot.lane.b32.xlu0 %v421, 4
  %v587 = vpop.permute.xlu0 %586
  %588 = vrot.lane.b32.xlu0 %v422, 4
  %v589 = vpop.permute.xlu0 %588
  %590 = vrot.lane.b32.xlu0 %v423, 4
  %v591 = vpop.permute.xlu0 %590
  %592 = vrot.lane.b32.xlu0 %v424, 4
  %v593 = vpop.permute.xlu0 %592
  %594 = vrot.lane.b32.xlu0 %v425, 4
  %v595 = vpop.permute.xlu0 %594
  %596 = vrot.lane.b32.xlu0 %v426, 4
  %v597 = vpop.permute.xlu0 %596
  %598 = vrot.lane.b32.xlu0 %v427, 4
  %v599 = vpop.permute.xlu0 %598
  %600 = vrot.lane.b32.xlu0 %v428, 4
  %v601 = vpop.permute.xlu0 %600
  %602 = vrot.lane.b32.xlu0 %v429, 4
  %v603 = vpop.permute.xlu0 %602
  %604 = vrot.lane.b32.xlu0 %v430, 4
  %v605 = vpop.permute.xlu0 %604
  %606 = vrot.lane.b32.xlu0 %v431, 4
  %v607 = vpop.permute.xlu0 %606
  %608 = vrot.lane.b32.xlu0 %v432, 4
  %v609 = vpop.permute.xlu0 %608
  %610 = vrot.lane.b32.xlu0 %v433, 4
  %v611 = vpop.permute.xlu0 %610
  %612 = vrot.lane.b32.xlu0 %v434, 4
  %v613 = vpop.permute.xlu0 %612
  %614 = vrot.lane.b32.xlu0 %v435, 4
  %v615 = vpop.permute.xlu0 %614
  %616 = vrot.lane.b32.xlu0 %v436, 4
  %v617 = vpop.permute.xlu0 %616
  %618 = vrot.lane.b32.xlu0 %v437, 4
  %v619 = vpop.permute.xlu0 %618
  %620 = vrot.lane.b32.xlu0 %v438, 4
  %v621 = vpop.permute.xlu0 %620
  %622 = vrot.lane.b32.xlu0 %v439, 4
  %v623 = vpop.permute.xlu0 %622
  %624 = vrot.lane.b32.xlu0 %v440, 4
  %v625 = vpop.permute.xlu0 %624
  %626 = vrot.lane.b32.xlu0 %v441, 4
  %v627 = vpop.permute.xlu0 %626
  %628 = vrot.lane.b32.xlu0 %v442, 4
  %v629 = vpop.permute.xlu0 %628
  %630 = vrot.lane.b32.xlu0 %v443, 4
  %v631 = vpop.permute.xlu0 %630
  %632 = vrot.lane.b32.xlu0 %v444, 4
  %v633 = vpop.permute.xlu0 %632
  %634 = vrot.lane.b32.xlu0 %v445, 4
  %v635 = vpop.permute.xlu0 %634
  %636 = vrot.lane.b32.xlu0 %v446, 4
  %v637 = vpop.permute.xlu0 %636
  %638 = vrot.lane.b32.xlu0 %v447, 4
  %v639 = vpop.permute.xlu0 %638
  %vm704 = vcmask 64544
  %705 = vst.msk [vmem:[#allocation3] sm:$0xff] %vm704, %v513
  %706 = vst.msk [vmem:[#allocation3 + $0x8] sm:$0xff] %vm704, %v515
  %707 = vst.msk [vmem:[#allocation3 + $0x10] sm:$0xff] %vm704, %v517
  %708 = vst.msk [vmem:[#allocation3 + $0x18] sm:$0xff] %vm704, %v519
  %709 = vst.msk [vmem:[#allocation3 + $0x20] sm:$0xff] %vm704, %v521
  %710 = vst.msk [vmem:[#allocation3 + $0x28] sm:$0xff] %vm704, %v523
  %711 = vst.msk [vmem:[#allocation3 + $0x30] sm:$0xff] %vm704, %v525
  %712 = vst.msk [vmem:[#allocation3 + $0x38] sm:$0xff] %vm704, %v527
  %713 = vst.msk [vmem:[#allocation3 + $0x40] sm:$0xff] %vm704, %v529
  %714 = vst.msk [vmem:[#allocation3 + $0x48] sm:$0xff] %vm704, %v531
  %715 = vst.msk [vmem:[#allocation3 + $0x50] sm:$0xff] %vm704, %v533
  %716 = vst.msk [vmem:[#allocation3 + $0x58] sm:$0xff] %vm704, %v535
  %717 = vst.msk [vmem:[#allocation3 + $0x60] sm:$0xff] %vm704, %v537
  %718 = vst.msk [vmem:[#allocation3 + $0x68] sm:$0xff] %vm704, %v539
  %719 = vst.msk [vmem:[#allocation3 + $0x70] sm:$0xff] %vm704, %v541
  %720 = vst.msk [vmem:[#allocation3 + $0x78] sm:$0xff] %vm704, %v543
  %721 = vst.msk [vmem:[#allocation3 + $0x80] sm:$0xff] %vm704, %v545
  %722 = vst.msk [vmem:[#allocation3 + $0x88] sm:$0xff] %vm704, %v547
  %723 = vst.msk [vmem:[#allocation3 + $0x90] sm:$0xff] %vm704, %v549
  %724 = vst.msk [vmem:[#allocation3 + $0x98] sm:$0xff] %vm704, %v551
  %725 = vst.msk [vmem:[#allocation3 + $0xa0] sm:$0xff] %vm704, %v553
  %726 = vst.msk [vmem:[#allocation3 + $0xa8] sm:$0xff] %vm704, %v555
  %727 = vst.msk [vmem:[#allocation3 + $0xb0] sm:$0xff] %vm704, %v557
  %728 = vst.msk [vmem:[#allocation3 + $0xb8] sm:$0xff] %vm704, %v559
  %729 = vst.msk [vmem:[#allocation3 + $0xc0] sm:$0xff] %vm704, %v561
  %730 = vst.msk [vmem:[#allocation3 + $0xc8] sm:$0xff] %vm704, %v563
  %731 = vst.msk [vmem:[#allocation3 + $0xd0] sm:$0xff] %vm704, %v565
  %732 = vst.msk [vmem:[#allocation3 + $0xd8] sm:$0xff] %vm704, %v567
  %733 = vst.msk [vmem:[#allocation3 + $0xe0] sm:$0xff] %vm704, %v569
  %734 = vst.msk [vmem:[#allocation3 + $0xe8] sm:$0xff] %vm704, %v571
  %735 = vst.msk [vmem:[#allocation3 + $0xf0] sm:$0xff] %vm704, %v573
  %736 = vst.msk [vmem:[#allocation3 + $0xf8] sm:$0xff] %vm704, %v575
  %737 = vst.msk [vmem:[#allocation3 + $0x100] sm:$0xff] %vm704, %v577
  %738 = vst.msk [vmem:[#allocation3 + $0x108] sm:$0xff] %vm704, %v579
  %739 = vst.msk [vmem:[#allocation3 + $0x110] sm:$0xff] %vm704, %v581
  %740 = vst.msk [vmem:[#allocation3 + $0x118] sm:$0xff] %vm704, %v583
  %741 = vst.msk [vmem:[#allocation3 + $0x120] sm:$0xff] %vm704, %v585
  %742 = vst.msk [vmem:[#allocation3 + $0x128] sm:$0xff] %vm704, %v587
  %743 = vst.msk [vmem:[#allocation3 + $0x130] sm:$0xff] %vm704, %v589
  %744 = vst.msk [vmem:[#allocation3 + $0x138] sm:$0xff] %vm704, %v591
  %745 = vst.msk [vmem:[#allocation3 + $0x140] sm:$0xff] %vm704, %v593
  %746 = vst.msk [vmem:[#allocation3 + $0x148] sm:$0xff] %vm704, %v595
  %747 = vst.msk [vmem:[#allocation3 + $0x150] sm:$0xff] %vm704, %v597
  %748 = vst.msk [vmem:[#allocation3 + $0x158] sm:$0xff] %vm704, %v599
  %749 = vst.msk [vmem:[#allocation3 + $0x160] sm:$0xff] %vm704, %v601
  %750 = vst.msk [vmem:[#allocation3 + $0x168] sm:$0xff] %vm704, %v603
  %751 = vst.msk [vmem:[#allocation3 + $0x170] sm:$0xff] %vm704, %v605
  %752 = vst.msk [vmem:[#allocation3 + $0x178] sm:$0xff] %vm704, %v607
  %753 = vst.msk [vmem:[#allocation3 + $0x180] sm:$0xff] %vm704, %v609
  %754 = vst.msk [vmem:[#allocation3 + $0x188] sm:$0xff] %vm704, %v611
  %755 = vst.msk [vmem:[#allocation3 + $0x190] sm:$0xff] %vm704, %v613
  %756 = vst.msk [vmem:[#allocation3 + $0x198] sm:$0xff] %vm704, %v615
  %757 = vst.msk [vmem:[#allocation3 + $0x1a0] sm:$0xff] %vm704, %v617
  %758 = vst.msk [vmem:[#allocation3 + $0x1a8] sm:$0xff] %vm704, %v619
  %759 = vst.msk [vmem:[#allocation3 + $0x1b0] sm:$0xff] %vm704, %v621
  %760 = vst.msk [vmem:[#allocation3 + $0x1b8] sm:$0xff] %vm704, %v623
  %761 = vst.msk [vmem:[#allocation3 + $0x1c0] sm:$0xff] %vm704, %v625
  %762 = vst.msk [vmem:[#allocation3 + $0x1c8] sm:$0xff] %vm704, %v627
  %763 = vst.msk [vmem:[#allocation3 + $0x1d0] sm:$0xff] %vm704, %v629
  %764 = vst.msk [vmem:[#allocation3 + $0x1d8] sm:$0xff] %vm704, %v631
  %765 = vst.msk [vmem:[#allocation3 + $0x1e0] sm:$0xff] %vm704, %v633
  %766 = vst.msk [vmem:[#allocation3 + $0x1e8] sm:$0xff] %vm704, %v635
  %767 = vst.msk [vmem:[#allocation3 + $0x1f0] sm:$0xff] %vm704, %v637
  %768 = vst.msk [vmem:[#allocation3 + $0x1f8] sm:$0xff] %vm704, %v639
  %v769 = vld [vmem:[#allocation2 + $0x2] sm:$0xff]
  %v770 = vld [vmem:[#allocation2 + $0xa] sm:$0xff]
  %v771 = vld [vmem:[#allocation2 + $0x1a] sm:$0xff]
  %v772 = vld [vmem:[#allocation2 + $0x22] sm:$0xff]
  %v773 = vld [vmem:[#allocation2 + $0x32] sm:$0xff]
  %v774 = vld [vmem:[#allocation2 + $0x3a] sm:$0xff]
  %v775 = vld [vmem:[#allocation2 + $0x4a] sm:$0xff]
  %v776 = vld [vmem:[#allocation2 + $0x52] sm:$0xff]
  %v777 = vld [vmem:[#allocation2 + $0x62] sm:$0xff]
  %v778 = vld [vmem:[#allocation2 + $0x6a] sm:$0xff]
  %v779 = vld [vmem:[#allocation2 + $0x7a] sm:$0xff]
  %v780 = vld [vmem:[#allocation2 + $0x82] sm:$0xff]
  %v781 = vld [vmem:[#allocation2 + $0x92] sm:$0xff]
  %v782 = vld [vmem:[#allocation2 + $0x9a] sm:$0xff]
  %v783 = vld [vmem:[#allocation2 + $0xaa] sm:$0xff]
  %v784 = vld [vmem:[#allocation2 + $0xb2] sm:$0xff]
  %v785 = vld [vmem:[#allocation2 + $0xc2] sm:$0xff]
  %v786 = vld [vmem:[#allocation2 + $0xca] sm:$0xff]
  %v787 = vld [vmem:[#allocation2 + $0xda] sm:$0xff]
  %v788 = vld [vmem:[#allocation2 + $0xe2] sm:$0xff]
  %v789 = vld [vmem:[#allocation2 + $0xf2] sm:$0xff]
  %v790 = vld [vmem:[#allocation2 + $0xfa] sm:$0xff]
  %v791 = vld [vmem:[#allocation2 + $0x10a] sm:$0xff]
  %v792 = vld [vmem:[#allocation2 + $0x112] sm:$0xff]
  %v793 = vld [vmem:[#allocation2 + $0x122] sm:$0xff]
  %v794 = vld [vmem:[#allocation2 + $0x12a] sm:$0xff]
  %v795 = vld [vmem:[#allocation2 + $0x13a] sm:$0xff]
  %v796 = vld [vmem:[#allocation2 + $0x142] sm:$0xff]
  %v797 = vld [vmem:[#allocation2 + $0x152] sm:$0xff]
  %v798 = vld [vmem:[#allocation2 + $0x15a] sm:$0xff]
  %v799 = vld [vmem:[#allocation2 + $0x16a] sm:$0xff]
  %v800 = vld [vmem:[#allocation2 + $0x172] sm:$0xff]
  %v801 = vld [vmem:[#allocation2 + $0x1b2] sm:$0xff]
  %v802 = vld [vmem:[#allocation2 + $0x1ba] sm:$0xff]
  %v803 = vld [vmem:[#allocation2 + $0x1ca] sm:$0xff]
  %v804 = vld [vmem:[#allocation2 + $0x1d2] sm:$0xff]
  %v805 = vld [vmem:[#allocation2 + $0x1e2] sm:$0xff]
  %v806 = vld [vmem:[#allocation2 + $0x1ea] sm:$0xff]
  %v807 = vld [vmem:[#allocation2 + $0x1fa] sm:$0xff]
  %v808 = vld [vmem:[#allocation2 + $0x202] sm:$0xff]
  %v809 = vld [vmem:[#allocation2 + $0x212] sm:$0xff]
  %v810 = vld [vmem:[#allocation2 + $0x21a] sm:$0xff]
  %v811 = vld [vmem:[#allocation2 + $0x22a] sm:$0xff]
  %v812 = vld [vmem:[#allocation2 + $0x232] sm:$0xff]
  %v813 = vld [vmem:[#allocation2 + $0x242] sm:$0xff]
  %v814 = vld [vmem:[#allocation2 + $0x24a] sm:$0xff]
  %v815 = vld [vmem:[#allocation2 + $0x25a] sm:$0xff]
  %v816 = vld [vmem:[#allocation2 + $0x262] sm:$0xff]
  %v817 = vld [vmem:[#allocation2 + $0x272] sm:$0xff]
  %v818 = vld [vmem:[#allocation2 + $0x27a] sm:$0xff]
  %v819 = vld [vmem:[#allocation2 + $0x28a] sm:$0xff]
  %v820 = vld [vmem:[#allocation2 + $0x292] sm:$0xff]
  %v821 = vld [vmem:[#allocation2 + $0x2a2] sm:$0xff]
  %v822 = vld [vmem:[#allocation2 + $0x2aa] sm:$0xff]
  %v823 = vld [vmem:[#allocation2 + $0x2ba] sm:$0xff]
  %v824 = vld [vmem:[#allocation2 + $0x2c2] sm:$0xff]
  %v825 = vld [vmem:[#allocation2 + $0x2d2] sm:$0xff]
  %v826 = vld [vmem:[#allocation2 + $0x2da] sm:$0xff]
  %v827 = vld [vmem:[#allocation2 + $0x2ea] sm:$0xff]
  %v828 = vld [vmem:[#allocation2 + $0x2f2] sm:$0xff]
  %v829 = vld [vmem:[#allocation2 + $0x302] sm:$0xff]
  %v830 = vld [vmem:[#allocation2 + $0x30a] sm:$0xff]
  %v831 = vld [vmem:[#allocation2 + $0x31a] sm:$0xff]
  %v832 = vld [vmem:[#allocation2 + $0x322] sm:$0xff]
  %897 = vrot.lane.b32.xlu0 %v769, 8
  %v898 = vpop.permute.xlu0 %897
  %899 = vrot.lane.b32.xlu0 %v770, 8
  %v900 = vpop.permute.xlu0 %899
  %901 = vrot.lane.b32.xlu0 %v771, 8
  %v902 = vpop.permute.xlu0 %901
  %903 = vrot.lane.b32.xlu0 %v772, 8
  %v904 = vpop.permute.xlu0 %903
  %905 = vrot.lane.b32.xlu0 %v773, 8
  %v906 = vpop.permute.xlu0 %905
  %907 = vrot.lane.b32.xlu0 %v774, 8
  %v908 = vpop.permute.xlu0 %907
  %909 = vrot.lane.b32.xlu0 %v775, 8
  %v910 = vpop.permute.xlu0 %909
  %911 = vrot.lane.b32.xlu0 %v776, 8
  %v912 = vpop.permute.xlu0 %911
  %913 = vrot.lane.b32.xlu0 %v777, 8
  %v914 = vpop.permute.xlu0 %913
  %915 = vrot.lane.b32.xlu0 %v778, 8
  %v916 = vpop.permute.xlu0 %915
  %917 = vrot.lane.b32.xlu0 %v779, 8
  %v918 = vpop.permute.xlu0 %917
  %919 = vrot.lane.b32.xlu0 %v780, 8
  %v920 = vpop.permute.xlu0 %919
  %921 = vrot.lane.b32.xlu0 %v781, 8
  %v922 = vpop.permute.xlu0 %921
  %923 = vrot.lane.b32.xlu0 %v782, 8
  %v924 = vpop.permute.xlu0 %923
  %925 = vrot.lane.b32.xlu0 %v783, 8
  %v926 = vpop.permute.xlu0 %925
  %927 = vrot.lane.b32.xlu0 %v784, 8
  %v928 = vpop.permute.xlu0 %927
  %929 = vrot.lane.b32.xlu0 %v785, 8
  %v930 = vpop.permute.xlu0 %929
  %931 = vrot.lane.b32.xlu0 %v786, 8
  %v932 = vpop.permute.xlu0 %931
  %933 = vrot.lane.b32.xlu0 %v787, 8
  %v934 = vpop.permute.xlu0 %933
  %935 = vrot.lane.b32.xlu0 %v788, 8
  %v936 = vpop.permute.xlu0 %935
  %937 = vrot.lane.b32.xlu0 %v789, 8
  %v938 = vpop.permute.xlu0 %937
  %939 = vrot.lane.b32.xlu0 %v790, 8
  %v940 = vpop.permute.xlu0 %939
  %941 = vrot.lane.b32.xlu0 %v791, 8
  %v942 = vpop.permute.xlu0 %941
  %943 = vrot.lane.b32.xlu0 %v792, 8
  %v944 = vpop.permute.xlu0 %943
  %945 = vrot.lane.b32.xlu0 %v793, 8
  %v946 = vpop.permute.xlu0 %945
  %947 = vrot.lane.b32.xlu0 %v794, 8
  %v948 = vpop.permute.xlu0 %947
  %949 = vrot.lane.b32.xlu0 %v795, 8
  %v950 = vpop.permute.xlu0 %949
  %951 = vrot.lane.b32.xlu0 %v796, 8
  %v952 = vpop.permute.xlu0 %951
  %953 = vrot.lane.b32.xlu0 %v797, 8
  %v954 = vpop.permute.xlu0 %953
  %955 = vrot.lane.b32.xlu0 %v798, 8
  %v956 = vpop.permute.xlu0 %955
  %957 = vrot.lane.b32.xlu0 %v799, 8
  %v958 = vpop.permute.xlu0 %957
  %959 = vrot.lane.b32.xlu0 %v800, 8
  %v960 = vpop.permute.xlu0 %959
  %961 = vrot.lane.b32.xlu0 %v801, 8
  %v962 = vpop.permute.xlu0 %961
  %963 = vrot.lane.b32.xlu0 %v802, 8
  %v964 = vpop.permute.xlu0 %963
  %965 = vrot.lane.b32.xlu0 %v803, 8
  %v966 = vpop.permute.xlu0 %965
  %967 = vrot.lane.b32.xlu0 %v804, 8
  %v968 = vpop.permute.xlu0 %967
  %969 = vrot.lane.b32.xlu0 %v805, 8
  %v970 = vpop.permute.xlu0 %969
  %971 = vrot.lane.b32.xlu0 %v806, 8
  %v972 = vpop.permute.xlu0 %971
  %973 = vrot.lane.b32.xlu0 %v807, 8
  %v974 = vpop.permute.xlu0 %973
  %975 = vrot.lane.b32.xlu0 %v808, 8
  %v976 = vpop.permute.xlu0 %975
  %977 = vrot.lane.b32.xlu0 %v809, 8
  %v978 = vpop.permute.xlu0 %977
  %979 = vrot.lane.b32.xlu0 %v810, 8
  %v980 = vpop.permute.xlu0 %979
  %981 = vrot.lane.b32.xlu0 %v811, 8
  %v982 = vpop.permute.xlu0 %981
  %983 = vrot.lane.b32.xlu0 %v812, 8
  %v984 = vpop.permute.xlu0 %983
  %985 = vrot.lane.b32.xlu0 %v813, 8
  %v986 = vpop.permute.xlu0 %985
  %987 = vrot.lane.b32.xlu0 %v814, 8
  %v988 = vpop.permute.xlu0 %987
  %989 = vrot.lane.b32.xlu0 %v815, 8
  %v990 = vpop.permute.xlu0 %989
  %991 = vrot.lane.b32.xlu0 %v816, 8
  %v992 = vpop.permute.xlu0 %991
  %993 = vrot.lane.b32.xlu0 %v817, 8
  %v994 = vpop.permute.xlu0 %993
  %995 = vrot.lane.b32.xlu0 %v818, 8
  %v996 = vpop.permute.xlu0 %995
  %997 = vrot.lane.b32.xlu0 %v819, 8
  %v998 = vpop.permute.xlu0 %997
  %999 = vrot.lane.b32.xlu0 %v820, 8
  %v1000 = vpop.permute.xlu0 %999
  %1001 = vrot.lane.b32.xlu0 %v821, 8
  %v1002 = vpop.permute.xlu0 %1001
  %1003 = vrot.lane.b32.xlu0 %v822, 8
  %v1004 = vpop.permute.xlu0 %1003
  %1005 = vrot.lane.b32.xlu0 %v823, 8
  %v1006 = vpop.permute.xlu0 %1005
  %1007 = vrot.lane.b32.xlu0 %v824, 8
  %v1008 = vpop.permute.xlu0 %1007
  %1009 = vrot.lane.b32.xlu0 %v825, 8
  %v1010 = vpop.permute.xlu0 %1009
  %1011 = vrot.lane.b32.xlu0 %v826, 8
  %v1012 = vpop.permute.xlu0 %1011
  %1013 = vrot.lane.b32.xlu0 %v827, 8
  %v1014 = vpop.permute.xlu0 %1013
  %1015 = vrot.lane.b32.xlu0 %v828, 8
  %v1016 = vpop.permute.xlu0 %1015
  %1017 = vrot.lane.b32.xlu0 %v829, 8
  %v1018 = vpop.permute.xlu0 %1017
  %1019 = vrot.lane.b32.xlu0 %v830, 8
  %v1020 = vpop.permute.xlu0 %1019
  %1021 = vrot.lane.b32.xlu0 %v831, 8
  %v1022 = vpop.permute.xlu0 %1021
  %1023 = vrot.lane.b32.xlu0 %v832, 8
  %v1024 = vpop.permute.xlu0 %1023
  %vm1089 = vcmask 97344
  %1090 = vst.msk [vmem:[#allocation3] sm:$0xff] %vm1089, %v898
  %1091 = vst.msk [vmem:[#allocation3 + $0x8] sm:$0xff] %vm1089, %v900
  %1092 = vst.msk [vmem:[#allocation3 + $0x10] sm:$0xff] %vm1089, %v902
  %1093 = vst.msk [vmem:[#allocation3 + $0x18] sm:$0xff] %vm1089, %v904
  %1094 = vst.msk [vmem:[#allocation3 + $0x20] sm:$0xff] %vm1089, %v906
  %1095 = vst.msk [vmem:[#allocation3 + $0x28] sm:$0xff] %vm1089, %v908
  %1096 = vst.msk [vmem:[#allocation3 + $0x30] sm:$0xff] %vm1089, %v910
  %1097 = vst.msk [vmem:[#allocation3 + $0x38] sm:$0xff] %vm1089, %v912
  %1098 = vst.msk [vmem:[#allocation3 + $0x40] sm:$0xff] %vm1089, %v914
  %1099 = vst.msk [vmem:[#allocation3 + $0x48] sm:$0xff] %vm1089, %v916
  %1100 = vst.msk [vmem:[#allocation3 + $0x50] sm:$0xff] %vm1089, %v918
  %1101 = vst.msk [vmem:[#allocation3 + $0x58] sm:$0xff] %vm1089, %v920
  %1102 = vst.msk [vmem:[#allocation3 + $0x60] sm:$0xff] %vm1089, %v922
  %1103 = vst.msk [vmem:[#allocation3 + $0x68] sm:$0xff] %vm1089, %v924
  %1104 = vst.msk [vmem:[#allocation3 + $0x70] sm:$0xff] %vm1089, %v926
  %1105 = vst.msk [vmem:[#allocation3 + $0x78] sm:$0xff] %vm1089, %v928
  %1106 = vst.msk [vmem:[#allocation3 + $0x80] sm:$0xff] %vm1089, %v930
  %1107 = vst.msk [vmem:[#allocation3 + $0x88] sm:$0xff] %vm1089, %v932
  %1108 = vst.msk [vmem:[#allocation3 + $0x90] sm:$0xff] %vm1089, %v934
  %1109 = vst.msk [vmem:[#allocation3 + $0x98] sm:$0xff] %vm1089, %v936
  %1110 = vst.msk [vmem:[#allocation3 + $0xa0] sm:$0xff] %vm1089, %v938
  %1111 = vst.msk [vmem:[#allocation3 + $0xa8] sm:$0xff] %vm1089, %v940
  %1112 = vst.msk [vmem:[#allocation3 + $0xb0] sm:$0xff] %vm1089, %v942
  %1113 = vst.msk [vmem:[#allocation3 + $0xb8] sm:$0xff] %vm1089, %v944
  %1114 = vst.msk [vmem:[#allocation3 + $0xc0] sm:$0xff] %vm1089, %v946
  %1115 = vst.msk [vmem:[#allocation3 + $0xc8] sm:$0xff] %vm1089, %v948
  %1116 = vst.msk [vmem:[#allocation3 + $0xd0] sm:$0xff] %vm1089, %v950
  %1117 = vst.msk [vmem:[#allocation3 + $0xd8] sm:$0xff] %vm1089, %v952
  %1118 = vst.msk [vmem:[#allocation3 + $0xe0] sm:$0xff] %vm1089, %v954
  %1119 = vst.msk [vmem:[#allocation3 + $0xe8] sm:$0xff] %vm1089, %v956
  %1120 = vst.msk [vmem:[#allocation3 + $0xf0] sm:$0xff] %vm1089, %v958
  %1121 = vst.msk [vmem:[#allocation3 + $0xf8] sm:$0xff] %vm1089, %v960
  %1122 = vst.msk [vmem:[#allocation3 + $0x100] sm:$0xff] %vm1089, %v962
  %1123 = vst.msk [vmem:[#allocation3 + $0x108] sm:$0xff] %vm1089, %v964
  %1124 = vst.msk [vmem:[#allocation3 + $0x110] sm:$0xff] %vm1089, %v966
  %1125 = vst.msk [vmem:[#allocation3 + $0x118] sm:$0xff] %vm1089, %v968
  %1126 = vst.msk [vmem:[#allocation3 + $0x120] sm:$0xff] %vm1089, %v970
  %1127 = vst.msk [vmem:[#allocation3 + $0x128] sm:$0xff] %vm1089, %v972
  %1128 = vst.msk [vmem:[#allocation3 + $0x130] sm:$0xff] %vm1089, %v974
  %1129 = vst.msk [vmem:[#allocation3 + $0x138] sm:$0xff] %vm1089, %v976
  %1130 = vst.msk [vmem:[#allocation3 + $0x140] sm:$0xff] %vm1089, %v978
  %1131 = vst.msk [vmem:[#allocation3 + $0x148] sm:$0xff] %vm1089, %v980
  %1132 = vst.msk [vmem:[#allocation3 + $0x150] sm:$0xff] %vm1089, %v982
  %1133 = vst.msk [vmem:[#allocation3 + $0x158] sm:$0xff] %vm1089, %v984
  %1134 = vst.msk [vmem:[#allocation3 + $0x160] sm:$0xff] %vm1089, %v986
  %1135 = vst.msk [vmem:[#allocation3 + $0x168] sm:$0xff] %vm1089, %v988
  %1136 = vst.msk [vmem:[#allocation3 + $0x170] sm:$0xff] %vm1089, %v990
  %1137 = vst.msk [vmem:[#allocation3 + $0x178] sm:$0xff] %vm1089, %v992
  %1138 = vst.msk [vmem:[#allocation3 + $0x180] sm:$0xff] %vm1089, %v994
  %1139 = vst.msk [vmem:[#allocation3 + $0x188] sm:$0xff] %vm1089, %v996
  %1140 = vst.msk [vmem:[#allocation3 + $0x190] sm:$0xff] %vm1089, %v998
  %1141 = vst.msk [vmem:[#allocation3 + $0x198] sm:$0xff] %vm1089, %v1000
  %1142 = vst.msk [vmem:[#allocation3 + $0x1a0] sm:$0xff] %vm1089, %v1002
  %1143 = vst.msk [vmem:[#allocation3 + $0x1a8] sm:$0xff] %vm1089, %v1004
  %1144 = vst.msk [vmem:[#allocation3 + $0x1b0] sm:$0xff] %vm1089, %v1006
  %1145 = vst.msk [vmem:[#allocation3 + $0x1b8] sm:$0xff] %vm1089, %v1008
  %1146 = vst.msk [vmem:[#allocation3 + $0x1c0] sm:$0xff] %vm1089, %v1010
  %1147 = vst.msk [vmem:[#allocation3 + $0x1c8] sm:$0xff] %vm1089, %v1012
  %1148 = vst.msk [vmem:[#allocation3 + $0x1d0] sm:$0xff] %vm1089, %v1014
  %1149 = vst.msk [vmem:[#allocation3 + $0x1d8] sm:$0xff] %vm1089, %v1016
  %1150 = vst.msk [vmem:[#allocation3 + $0x1e0] sm:$0xff] %vm1089, %v1018
  %1151 = vst.msk [vmem:[#allocation3 + $0x1e8] sm:$0xff] %vm1089, %v1020
  %1152 = vst.msk [vmem:[#allocation3 + $0x1f0] sm:$0xff] %vm1089, %v1022
  %1153 = vst.msk [vmem:[#allocation3 + $0x1f8] sm:$0xff] %vm1089, %v1024
  %v1154 = vld [vmem:[%s191] sm:$0xff]
  %v1155 = vld [vmem:[%s191 + $0x8] sm:$0xff]
  %v1156 = vld [vmem:[%s191 + $0x18] sm:$0xff]
  %v1157 = vld [vmem:[%s191 + $0x20] sm:$0xff]
  %v1158 = vld [vmem:[%s191 + $0x30] sm:$0xff]
  %v1159 = vld [vmem:[%s191 + $0x38] sm:$0xff]
  %v1160 = vld [vmem:[%s191 + $0x48] sm:$0xff]
  %v1161 = vld [vmem:[%s191 + $0x50] sm:$0xff]
  %v1162 = vld [vmem:[%s191 + $0x60] sm:$0xff]
  %v1163 = vld [vmem:[%s191 + $0x68] sm:$0xff]
  %v1164 = vld [vmem:[%s191 + $0x78] sm:$0xff]
  %v1165 = vld [vmem:[%s191 + $0x80] sm:$0xff]
  %v1166 = vld [vmem:[%s191 + $0x90] sm:$0xff]
  %v1167 = vld [vmem:[%s191 + $0x98] sm:$0xff]
  %v1168 = vld [vmem:[%s191 + $0xa8] sm:$0xff]
  %v1169 = vld [vmem:[%s191 + $0xb0] sm:$0xff]
  %v1170 = vld [vmem:[%s191 + $0xc0] sm:$0xff]
  %v1171 = vld [vmem:[%s191 + $0xc8] sm:$0xff]
  %v1172 = vld [vmem:[%s191 + $0xd8] sm:$0xff]
  %v1173 = vld [vmem:[%s191 + $0xe0] sm:$0xff]
  %v1174 = vld [vmem:[%s191 + $0xf0] sm:$0xff]
  %v1175 = vld [vmem:[%s191 + $0xf8] sm:$0xff]
  %v1176 = vld [vmem:[%s191 + $0x108] sm:$0xff]
  %v1177 = vld [vmem:[%s191 + $0x110] sm:$0xff]
  %v1178 = vld [vmem:[%s191 + $0x120] sm:$0xff]
  %v1179 = vld [vmem:[%s191 + $0x128] sm:$0xff]
  %v1180 = vld [vmem:[%s191 + $0x138] sm:$0xff]
  %v1181 = vld [vmem:[%s191 + $0x140] sm:$0xff]
  %v1182 = vld [vmem:[%s191 + $0x150] sm:$0xff]
  %v1183 = vld [vmem:[%s191 + $0x158] sm:$0xff]
  %v1184 = vld [vmem:[%s191 + $0x168] sm:$0xff]
  %v1185 = vld [vmem:[%s191 + $0x170] sm:$0xff]
  %v1186 = vld [vmem:[%s191 + $0x1b0] sm:$0xff]
  %v1187 = vld [vmem:[%s191 + $0x1b8] sm:$0xff]
  %v1188 = vld [vmem:[%s191 + $0x1c8] sm:$0xff]
  %v1189 = vld [vmem:[%s191 + $0x1d0] sm:$0xff]
  %v1190 = vld [vmem:[%s191 + $0x1e0] sm:$0xff]
  %v1191 = vld [vmem:[%s191 + $0x1e8] sm:$0xff]
  %v1192 = vld [vmem:[%s191 + $0x1f8] sm:$0xff]
  %v1193 = vld [vmem:[%s191 + $0x200] sm:$0xff]
  %v1194 = vld [vmem:[%s191 + $0x210] sm:$0xff]
  %v1195 = vld [vmem:[%s191 + $0x218] sm:$0xff]
  %v1196 = vld [vmem:[%s191 + $0x228] sm:$0xff]
  %v1197 = vld [vmem:[%s191 + $0x230] sm:$0xff]
  %v1198 = vld [vmem:[%s191 + $0x240] sm:$0xff]
  %v1199 = vld [vmem:[%s191 + $0x248] sm:$0xff]
  %v1200 = vld [vmem:[%s191 + $0x258] sm:$0xff]
  %v1201 = vld [vmem:[%s191 + $0x260] sm:$0xff]
  %v1202 = vld [vmem:[%s191 + $0x270] sm:$0xff]
  %v1203 = vld [vmem:[%s191 + $0x278] sm:$0xff]
  %v1204 = vld [vmem:[%s191 + $0x288] sm:$0xff]
  %v1205 = vld [vmem:[%s191 + $0x290] sm:$0xff]
  %v1206 = vld [vmem:[%s191 + $0x2a0] sm:$0xff]
  %v1207 = vld [vmem:[%s191 + $0x2a8] sm:$0xff]
  %v1208 = vld [vmem:[%s191 + $0x2b8] sm:$0xff]
  %v1209 = vld [vmem:[%s191 + $0x2c0] sm:$0xff]
  %v1210 = vld [vmem:[%s191 + $0x2d0] sm:$0xff]
  %v1211 = vld [vmem:[%s191 + $0x2d8] sm:$0xff]
  %v1212 = vld [vmem:[%s191 + $0x2e8] sm:$0xff]
  %v1213 = vld [vmem:[%s191 + $0x2f0] sm:$0xff]
  %v1214 = vld [vmem:[%s191 + $0x300] sm:$0xff]
  %v1215 = vld [vmem:[%s191 + $0x308] sm:$0xff]
  %v1216 = vld [vmem:[%s191 + $0x318] sm:$0xff]
  %v1217 = vld [vmem:[%s191 + $0x320] sm:$0xff]
  %1282 = vrot.lane.b32.xlu0 %v1154, 12
  %v1283 = vpop.permute.xlu0 %1282
  %1284 = vrot.lane.b32.xlu0 %v1155, 12
  %v1285 = vpop.permute.xlu0 %1284
  %1286 = vrot.lane.b32.xlu0 %v1156, 12
  %v1287 = vpop.permute.xlu0 %1286
  %1288 = vrot.lane.b32.xlu0 %v1157, 12
  %v1289 = vpop.permute.xlu0 %1288
  %1290 = vrot.lane.b32.xlu0 %v1158, 12
  %v1291 = vpop.permute.xlu0 %1290
  %1292 = vrot.lane.b32.xlu0 %v1159, 12
  %v1293 = vpop.permute.xlu0 %1292
  %1294 = vrot.lane.b32.xlu0 %v1160, 12
  %v1295 = vpop.permute.xlu0 %1294
  %1296 = vrot.lane.b32.xlu0 %v1161, 12
  %v1297 = vpop.permute.xlu0 %1296
  %1298 = vrot.lane.b32.xlu0 %v1162, 12
  %v1299 = vpop.permute.xlu0 %1298
  %1300 = vrot.lane.b32.xlu0 %v1163, 12
  %v1301 = vpop.permute.xlu0 %1300
  %1302 = vrot.lane.b32.xlu0 %v1164, 12
  %v1303 = vpop.permute.xlu0 %1302
  %1304 = vrot.lane.b32.xlu0 %v1165, 12
  %v1305 = vpop.permute.xlu0 %1304
  %1306 = vrot.lane.b32.xlu0 %v1166, 12
  %v1307 = vpop.permute.xlu0 %1306
  %1308 = vrot.lane.b32.xlu0 %v1167, 12
  %v1309 = vpop.permute.xlu0 %1308
  %1310 = vrot.lane.b32.xlu0 %v1168, 12
  %v1311 = vpop.permute.xlu0 %1310
  %1312 = vrot.lane.b32.xlu0 %v1169, 12
  %v1313 = vpop.permute.xlu0 %1312
  %1314 = vrot.lane.b32.xlu0 %v1170, 12
  %v1315 = vpop.permute.xlu0 %1314
  %1316 = vrot.lane.b32.xlu0 %v1171, 12
  %v1317 = vpop.permute.xlu0 %1316
  %1318 = vrot.lane.b32.xlu0 %v1172, 12
  %v1319 = vpop.permute.xlu0 %1318
  %1320 = vrot.lane.b32.xlu0 %v1173, 12
  %v1321 = vpop.permute.xlu0 %1320
  %1322 = vrot.lane.b32.xlu0 %v1174, 12
  %v1323 = vpop.permute.xlu0 %1322
  %1324 = vrot.lane.b32.xlu0 %v1175, 12
  %v1325 = vpop.permute.xlu0 %1324
  %1326 = vrot.lane.b32.xlu0 %v1176, 12
  %v1327 = vpop.permute.xlu0 %1326
  %1328 = vrot.lane.b32.xlu0 %v1177, 12
  %v1329 = vpop.permute.xlu0 %1328
  %1330 = vrot.lane.b32.xlu0 %v1178, 12
  %v1331 = vpop.permute.xlu0 %1330
  %1332 = vrot.lane.b32.xlu0 %v1179, 12
  %v1333 = vpop.permute.xlu0 %1332
  %1334 = vrot.lane.b32.xlu0 %v1180, 12
  %v1335 = vpop.permute.xlu0 %1334
  %1336 = vrot.lane.b32.xlu0 %v1181, 12
  %v1337 = vpop.permute.xlu0 %1336
  %1338 = vrot.lane.b32.xlu0 %v1182, 12
  %v1339 = vpop.permute.xlu0 %1338
  %1340 = vrot.lane.b32.xlu0 %v1183, 12
  %v1341 = vpop.permute.xlu0 %1340
  %1342 = vrot.lane.b32.xlu0 %v1184, 12
  %v1343 = vpop.permute.xlu0 %1342
  %1344 = vrot.lane.b32.xlu0 %v1185, 12
  %v1345 = vpop.permute.xlu0 %1344
  %1346 = vrot.lane.b32.xlu0 %v1186, 12
  %v1347 = vpop.permute.xlu0 %1346
  %1348 = vrot.lane.b32.xlu0 %v1187, 12
  %v1349 = vpop.permute.xlu0 %1348
  %1350 = vrot.lane.b32.xlu0 %v1188, 12
  %v1351 = vpop.permute.xlu0 %1350
  %1352 = vrot.lane.b32.xlu0 %v1189, 12
  %v1353 = vpop.permute.xlu0 %1352
  %1354 = vrot.lane.b32.xlu0 %v1190, 12
  %v1355 = vpop.permute.xlu0 %1354
  %1356 = vrot.lane.b32.xlu0 %v1191, 12
  %v1357 = vpop.permute.xlu0 %1356
  %1358 = vrot.lane.b32.xlu0 %v1192, 12
  %v1359 = vpop.permute.xlu0 %1358
  %1360 = vrot.lane.b32.xlu0 %v1193, 12
  %v1361 = vpop.permute.xlu0 %1360
  %1362 = vrot.lane.b32.xlu0 %v1194, 12
  %v1363 = vpop.permute.xlu0 %1362
  %1364 = vrot.lane.b32.xlu0 %v1195, 12
  %v1365 = vpop.permute.xlu0 %1364
  %1366 = vrot.lane.b32.xlu0 %v1196, 12
  %v1367 = vpop.permute.xlu0 %1366
  %1368 = vrot.lane.b32.xlu0 %v1197, 12
  %v1369 = vpop.permute.xlu0 %1368
  %1370 = vrot.lane.b32.xlu0 %v1198, 12
  %v1371 = vpop.permute.xlu0 %1370
  %1372 = vrot.lane.b32.xlu0 %v1199, 12
  %v1373 = vpop.permute.xlu0 %1372
  %1374 = vrot.lane.b32.xlu0 %v1200, 12
  %v1375 = vpop.permute.xlu0 %1374
  %1376 = vrot.lane.b32.xlu0 %v1201, 12
  %v1377 = vpop.permute.xlu0 %1376
  %1378 = vrot.lane.b32.xlu0 %v1202, 12
  %v1379 = vpop.permute.xlu0 %1378
  %1380 = vrot.lane.b32.xlu0 %v1203, 12
  %v1381 = vpop.permute.xlu0 %1380
  %1382 = vrot.lane.b32.xlu0 %v1204, 12
  %v1383 = vpop.permute.xlu0 %1382
  %1384 = vrot.lane.b32.xlu0 %v1205, 12
  %v1385 = vpop.permute.xlu0 %1384
  %1386 = vrot.lane.b32.xlu0 %v1206, 12
  %v1387 = vpop.permute.xlu0 %1386
  %1388 = vrot.lane.b32.xlu0 %v1207, 12
  %v1389 = vpop.permute.xlu0 %1388
  %1390 = vrot.lane.b32.xlu0 %v1208, 12
  %v1391 = vpop.permute.xlu0 %1390
  %1392 = vrot.lane.b32.xlu0 %v1209, 12
  %v1393 = vpop.permute.xlu0 %1392
  %1394 = vrot.lane.b32.xlu0 %v1210, 12
  %v1395 = vpop.permute.xlu0 %1394
  %1396 = vrot.lane.b32.xlu0 %v1211, 12
  %v1397 = vpop.permute.xlu0 %1396
  %1398 = vrot.lane.b32.xlu0 %v1212, 12
  %v1399 = vpop.permute.xlu0 %1398
  %1400 = vrot.lane.b32.xlu0 %v1213, 12
  %v1401 = vpop.permute.xlu0 %1400
  %1402 = vrot.lane.b32.xlu0 %v1214, 12
  %v1403 = vpop.permute.xlu0 %1402
  %1404 = vrot.lane.b32.xlu0 %v1215, 12
  %v1405 = vpop.permute.xlu0 %1404
  %1406 = vrot.lane.b32.xlu0 %v1216, 12
  %v1407 = vpop.permute.xlu0 %1406
  %1408 = vrot.lane.b32.xlu0 %v1217, 12
  %v1409 = vpop.permute.xlu0 %1408
  %vm1474 = vcmask 130144
  %1475 = vst.msk [vmem:[#allocation3] sm:$0xff] %vm1474, %v1283
  %1476 = vst.msk [vmem:[#allocation3 + $0x8] sm:$0xff] %vm1474, %v1285
  %1477 = vst.msk [vmem:[#allocation3 + $0x10] sm:$0xff] %vm1474, %v1287
  %1478 = vst.msk [vmem:[#allocation3 + $0x18] sm:$0xff] %vm1474, %v1289
  %1479 = vst.msk [vmem:[#allocation3 + $0x20] sm:$0xff] %vm1474, %v1291
  %1480 = vst.msk [vmem:[#allocation3 + $0x28] sm:$0xff] %vm1474, %v1293
  %1481 = vst.msk [vmem:[#allocation3 + $0x30] sm:$0xff] %vm1474, %v1295
  %1482 = vst.msk [vmem:[#allocation3 + $0x38] sm:$0xff] %vm1474, %v1297
  %1483 = vst.msk [vmem:[#allocation3 + $0x40] sm:$0xff] %vm1474, %v1299
  %1484 = vst.msk [vmem:[#allocation3 + $0x48] sm:$0xff] %vm1474, %v1301
  %1485 = vst.msk [vmem:[#allocation3 + $0x50] sm:$0xff] %vm1474, %v1303
  %1486 = vst.msk [vmem:[#allocation3 + $0x58] sm:$0xff] %vm1474, %v1305
  %1487 = vst.msk [vmem:[#allocation3 + $0x60] sm:$0xff] %vm1474, %v1307
  %1488 = vst.msk [vmem:[#allocation3 + $0x68] sm:$0xff] %vm1474, %v1309
  %1489 = vst.msk [vmem:[#allocation3 + $0x70] sm:$0xff] %vm1474, %v1311
  %1490 = vst.msk [vmem:[#allocation3 + $0x78] sm:$0xff] %vm1474, %v1313
  %1491 = vst.msk [vmem:[#allocation3 + $0x80] sm:$0xff] %vm1474, %v1315
  %1492 = vst.msk [vmem:[#allocation3 + $0x88] sm:$0xff] %vm1474, %v1317
  %1493 = vst.msk [vmem:[#allocation3 + $0x90] sm:$0xff] %vm1474, %v1319
  %1494 = vst.msk [vmem:[#allocation3 + $0x98] sm:$0xff] %vm1474, %v1321
  %1495 = vst.msk [vmem:[#allocation3 + $0xa0] sm:$0xff] %vm1474, %v1323
  %1496 = vst.msk [vmem:[#allocation3 + $0xa8] sm:$0xff] %vm1474, %v1325
  %1497 = vst.msk [vmem:[#allocation3 + $0xb0] sm:$0xff] %vm1474, %v1327
  %1498 = vst.msk [vmem:[#allocation3 + $0xb8] sm:$0xff] %vm1474, %v1329
  %1499 = vst.msk [vmem:[#allocation3 + $0xc0] sm:$0xff] %vm1474, %v1331
  %1500 = vst.msk [vmem:[#allocation3 + $0xc8] sm:$0xff] %vm1474, %v1333
  %1501 = vst.msk [vmem:[#allocation3 + $0xd0] sm:$0xff] %vm1474, %v1335
  %1502 = vst.msk [vmem:[#allocation3 + $0xd8] sm:$0xff] %vm1474, %v1337
  %1503 = vst.msk [vmem:[#allocation3 + $0xe0] sm:$0xff] %vm1474, %v1339
  %1504 = vst.msk [vmem:[#allocation3 + $0xe8] sm:$0xff] %vm1474, %v1341
  %1505 = vst.msk [vmem:[#allocation3 + $0xf0] sm:$0xff] %vm1474, %v1343
  %1506 = vst.msk [vmem:[#allocation3 + $0xf8] sm:$0xff] %vm1474, %v1345
  %1507 = vst.msk [vmem:[#allocation3 + $0x100] sm:$0xff] %vm1474, %v1347
  %1508 = vst.msk [vmem:[#allocation3 + $0x108] sm:$0xff] %vm1474, %v1349
  %1509 = vst.msk [vmem:[#allocation3 + $0x110] sm:$0xff] %vm1474, %v1351
  %1510 = vst.msk [vmem:[#allocation3 + $0x118] sm:$0xff] %vm1474, %v1353
  %1511 = vst.msk [vmem:[#allocation3 + $0x120] sm:$0xff] %vm1474, %v1355
  %1512 = vst.msk [vmem:[#allocation3 + $0x128] sm:$0xff] %vm1474, %v1357
  %1513 = vst.msk [vmem:[#allocation3 + $0x130] sm:$0xff] %vm1474, %v1359
  %1514 = vst.msk [vmem:[#allocation3 + $0x138] sm:$0xff] %vm1474, %v1361
  %1515 = vst.msk [vmem:[#allocation3 + $0x140] sm:$0xff] %vm1474, %v1363
  %1516 = vst.msk [vmem:[#allocation3 + $0x148] sm:$0xff] %vm1474, %v1365
  %1517 = vst.msk [vmem:[#allocation3 + $0x150] sm:$0xff] %vm1474, %v1367
  %1518 = vst.msk [vmem:[#allocation3 + $0x158] sm:$0xff] %vm1474, %v1369
  %1519 = vst.msk [vmem:[#allocation3 + $0x160] sm:$0xff] %vm1474, %v1371
  %1520 = vst.msk [vmem:[#allocation3 + $0x168] sm:$0xff] %vm1474, %v1373
  %1521 = vst.msk [vmem:[#allocation3 + $0x170] sm:$0xff] %vm1474, %v1375
  %1522 = vst.msk [vmem:[#allocation3 + $0x178] sm:$0xff] %vm1474, %v1377
  %1523 = vst.msk [vmem:[#allocation3 + $0x180] sm:$0xff] %vm1474, %v1379
  %1524 = vst.msk [vmem:[#allocation3 + $0x188] sm:$0xff] %vm1474, %v1381
  %1525 = vst.msk [vmem:[#allocation3 + $0x190] sm:$0xff] %vm1474, %v1383
  %1526 = vst.msk [vmem:[#allocation3 + $0x198] sm:$0xff] %vm1474, %v1385
  %1527 = vst.msk [vmem:[#allocation3 + $0x1a0] sm:$0xff] %vm1474, %v1387
  %1528 = vst.msk [vmem:[#allocation3 + $0x1a8] sm:$0xff] %vm1474, %v1389
  %1529 = vst.msk [vmem:[#allocation3 + $0x1b0] sm:$0xff] %vm1474, %v1391
  %1530 = vst.msk [vmem:[#allocation3 + $0x1b8] sm:$0xff] %vm1474, %v1393
  %1531 = vst.msk [vmem:[#allocation3 + $0x1c0] sm:$0xff] %vm1474, %v1395
  %1532 = vst.msk [vmem:[#allocation3 + $0x1c8] sm:$0xff] %vm1474, %v1397
  %1533 = vst.msk [vmem:[#allocation3 + $0x1d0] sm:$0xff] %vm1474, %v1399
  %1534 = vst.msk [vmem:[#allocation3 + $0x1d8] sm:$0xff] %vm1474, %v1401
  %1535 = vst.msk [vmem:[#allocation3 + $0x1e0] sm:$0xff] %vm1474, %v1403
  %1536 = vst.msk [vmem:[#allocation3 + $0x1e8] sm:$0xff] %vm1474, %v1405
  %1537 = vst.msk [vmem:[#allocation3 + $0x1f0] sm:$0xff] %vm1474, %v1407
  %1538 = vst.msk [vmem:[#allocation3 + $0x1f8] sm:$0xff] %vm1474, %v1409
  %v1539 = vld [vmem:[%s191 + $0x1] sm:$0xff]
  %v1540 = vld [vmem:[%s191 + $0x9] sm:$0xff]
  %v1541 = vld [vmem:[%s191 + $0x19] sm:$0xff]
  %v1542 = vld [vmem:[%s191 + $0x21] sm:$0xff]
  %v1543 = vld [vmem:[%s191 + $0x31] sm:$0xff]
  %v1544 = vld [vmem:[%s191 + $0x39] sm:$0xff]
  %v1545 = vld [vmem:[%s191 + $0x49] sm:$0xff]
  %v1546 = vld [vmem:[%s191 + $0x51] sm:$0xff]
  %v1547 = vld [vmem:[%s191 + $0x61] sm:$0xff]
  %v1548 = vld [vmem:[%s191 + $0x69] sm:$0xff]
  %v1549 = vld [vmem:[%s191 + $0x79] sm:$0xff]
  %v1550 = vld [vmem:[%s191 + $0x81] sm:$0xff]
  %v1551 = vld [vmem:[%s191 + $0x91] sm:$0xff]
  %v1552 = vld [vmem:[%s191 + $0x99] sm:$0xff]
  %v1553 = vld [vmem:[%s191 + $0xa9] sm:$0xff]
  %v1554 = vld [vmem:[%s191 + $0xb1] sm:$0xff]
  %v1555 = vld [vmem:[%s191 + $0xc1] sm:$0xff]
  %v1556 = vld [vmem:[%s191 + $0xc9] sm:$0xff]
  %v1557 = vld [vmem:[%s191 + $0xd9] sm:$0xff]
  %v1558 = vld [vmem:[%s191 + $0xe1] sm:$0xff]
  %v1559 = vld [vmem:[%s191 + $0xf1] sm:$0xff]
  %v1560 = vld [vmem:[%s191 + $0xf9] sm:$0xff]
  %v1561 = vld [vmem:[%s191 + $0x109] sm:$0xff]
  %v1562 = vld [vmem:[%s191 + $0x111] sm:$0xff]
  %v1563 = vld [vmem:[%s191 + $0x121] sm:$0xff]
  %v1564 = vld [vmem:[%s191 + $0x129] sm:$0xff]
  %v1565 = vld [vmem:[%s191 + $0x139] sm:$0xff]
  %v1566 = vld [vmem:[%s191 + $0x141] sm:$0xff]
  %v1567 = vld [vmem:[%s191 + $0x151] sm:$0xff]
  %v1568 = vld [vmem:[%s191 + $0x159] sm:$0xff]
  %v1569 = vld [vmem:[%s191 + $0x169] sm:$0xff]
  %v1570 = vld [vmem:[%s191 + $0x171] sm:$0xff]
  %v1571 = vld [vmem:[%s191 + $0x1b1] sm:$0xff]
  %v1572 = vld [vmem:[%s191 + $0x1b9] sm:$0xff]
  %v1573 = vld [vmem:[%s191 + $0x1c9] sm:$0xff]
  %v1574 = vld [vmem:[%s191 + $0x1d1] sm:$0xff]
  %v1575 = vld [vmem:[%s191 + $0x1e1] sm:$0xff]
  %v1576 = vld [vmem:[%s191 + $0x1e9] sm:$0xff]
  %v1577 = vld [vmem:[%s191 + $0x1f9] sm:$0xff]
  %v1578 = vld [vmem:[%s191 + $0x201] sm:$0xff]
  %v1579 = vld [vmem:[%s191 + $0x211] sm:$0xff]
  %v1580 = vld [vmem:[%s191 + $0x219] sm:$0xff]
  %v1581 = vld [vmem:[%s191 + $0x229] sm:$0xff]
  %v1582 = vld [vmem:[%s191 + $0x231] sm:$0xff]
  %v1583 = vld [vmem:[%s191 + $0x241] sm:$0xff]
  %v1584 = vld [vmem:[%s191 + $0x249] sm:$0xff]
  %v1585 = vld [vmem:[%s191 + $0x259] sm:$0xff]
  %v1586 = vld [vmem:[%s191 + $0x261] sm:$0xff]
  %v1587 = vld [vmem:[%s191 + $0x271] sm:$0xff]
  %v1588 = vld [vmem:[%s191 + $0x279] sm:$0xff]
  %v1589 = vld [vmem:[%s191 + $0x289] sm:$0xff]
  %v1590 = vld [vmem:[%s191 + $0x291] sm:$0xff]
  %v1591 = vld [vmem:[%s191 + $0x2a1] sm:$0xff]
  %v1592 = vld [vmem:[%s191 + $0x2a9] sm:$0xff]
  %v1593 = vld [vmem:[%s191 + $0x2b9] sm:$0xff]
  %v1594 = vld [vmem:[%s191 + $0x2c1] sm:$0xff]
  %v1595 = vld [vmem:[%s191 + $0x2d1] sm:$0xff]
  %v1596 = vld [vmem:[%s191 + $0x2d9] sm:$0xff]
  %v1597 = vld [vmem:[%s191 + $0x2e9] sm:$0xff]
  %v1598 = vld [vmem:[%s191 + $0x2f1] sm:$0xff]
  %v1599 = vld [vmem:[%s191 + $0x301] sm:$0xff]
  %v1600 = vld [vmem:[%s191 + $0x309] sm:$0xff]
  %v1601 = vld [vmem:[%s191 + $0x319] sm:$0xff]
  %v1602 = vld [vmem:[%s191 + $0x321] sm:$0xff]
  %1667 = vrot.lane.b32.xlu0 %v1539, 16
  %v1668 = vpop.permute.xlu0 %1667
  %1669 = vrot.lane.b32.xlu0 %v1540, 16
  %v1670 = vpop.permute.xlu0 %1669
  %1671 = vrot.lane.b32.xlu0 %v1541, 16
  %v1672 = vpop.permute.xlu0 %1671
  %1673 = vrot.lane.b32.xlu0 %v1542, 16
  %v1674 = vpop.permute.xlu0 %1673
  %1675 = vrot.lane.b32.xlu0 %v1543, 16
  %v1676 = vpop.permute.xlu0 %1675
  %1677 = vrot.lane.b32.xlu0 %v1544, 16
  %v1678 = vpop.permute.xlu0 %1677
  %1679 = vrot.lane.b32.xlu0 %v1545, 16
  %v1680 = vpop.permute.xlu0 %1679
  %1681 = vrot.lane.b32.xlu0 %v1546, 16
  %v1682 = vpop.permute.xlu0 %1681
  %1683 = vrot.lane.b32.xlu0 %v1547, 16
  %v1684 = vpop.permute.xlu0 %1683
  %1685 = vrot.lane.b32.xlu0 %v1548, 16
  %v1686 = vpop.permute.xlu0 %1685
  %1687 = vrot.lane.b32.xlu0 %v1549, 16
  %v1688 = vpop.permute.xlu0 %1687
  %1689 = vrot.lane.b32.xlu0 %v1550, 16
  %v1690 = vpop.permute.xlu0 %1689
  %1691 = vrot.lane.b32.xlu0 %v1551, 16
  %v1692 = vpop.permute.xlu0 %1691
  %1693 = vrot.lane.b32.xlu0 %v1552, 16
  %v1694 = vpop.permute.xlu0 %1693
  %1695 = vrot.lane.b32.xlu0 %v1553, 16
  %v1696 = vpop.permute.xlu0 %1695
  %1697 = vrot.lane.b32.xlu0 %v1554, 16
  %v1698 = vpop.permute.xlu0 %1697
  %1699 = vrot.lane.b32.xlu0 %v1555, 16
  %v1700 = vpop.permute.xlu0 %1699
  %1701 = vrot.lane.b32.xlu0 %v1556, 16
  %v1702 = vpop.permute.xlu0 %1701
  %1703 = vrot.lane.b32.xlu0 %v1557, 16
  %v1704 = vpop.permute.xlu0 %1703
  %1705 = vrot.lane.b32.xlu0 %v1558, 16
  %v1706 = vpop.permute.xlu0 %1705
  %1707 = vrot.lane.b32.xlu0 %v1559, 16
  %v1708 = vpop.permute.xlu0 %1707
  %1709 = vrot.lane.b32.xlu0 %v1560, 16
  %v1710 = vpop.permute.xlu0 %1709
  %1711 = vrot.lane.b32.xlu0 %v1561, 16
  %v1712 = vpop.permute.xlu0 %1711
  %1713 = vrot.lane.b32.xlu0 %v1562, 16
  %v1714 = vpop.permute.xlu0 %1713
  %1715 = vrot.lane.b32.xlu0 %v1563, 16
  %v1716 = vpop.permute.xlu0 %1715
  %1717 = vrot.lane.b32.xlu0 %v1564, 16
  %v1718 = vpop.permute.xlu0 %1717
  %1719 = vrot.lane.b32.xlu0 %v1565, 16
  %v1720 = vpop.permute.xlu0 %1719
  %1721 = vrot.lane.b32.xlu0 %v1566, 16
  %v1722 = vpop.permute.xlu0 %1721
  %1723 = vrot.lane.b32.xlu0 %v1567, 16
  %v1724 = vpop.permute.xlu0 %1723
  %1725 = vrot.lane.b32.xlu0 %v1568, 16
  %v1726 = vpop.permute.xlu0 %1725
  %1727 = vrot.lane.b32.xlu0 %v1569, 16
  %v1728 = vpop.permute.xlu0 %1727
  %1729 = vrot.lane.b32.xlu0 %v1570, 16
  %v1730 = vpop.permute.xlu0 %1729
  %1731 = vrot.lane.b32.xlu0 %v1571, 16
  %v1732 = vpop.permute.xlu0 %1731
  %1733 = vrot.lane.b32.xlu0 %v1572, 16
  %v1734 = vpop.permute.xlu0 %1733
  %1735 = vrot.lane.b32.xlu0 %v1573, 16
  %v1736 = vpop.permute.xlu0 %1735
  %1737 = vrot.lane.b32.xlu0 %v1574, 16
  %v1738 = vpop.permute.xlu0 %1737
  %1739 = vrot.lane.b32.xlu0 %v1575, 16
  %v1740 = vpop.permute.xlu0 %1739
  %1741 = vrot.lane.b32.xlu0 %v1576, 16
  %v1742 = vpop.permute.xlu0 %1741
  %1743 = vrot.lane.b32.xlu0 %v1577, 16
  %v1744 = vpop.permute.xlu0 %1743
  %1745 = vrot.lane.b32.xlu0 %v1578, 16
  %v1746 = vpop.permute.xlu0 %1745
  %1747 = vrot.lane.b32.xlu0 %v1579, 16
  %v1748 = vpop.permute.xlu0 %1747
  %1749 = vrot.lane.b32.xlu0 %v1580, 16
  %v1750 = vpop.permute.xlu0 %1749
  %1751 = vrot.lane.b32.xlu0 %v1581, 16
  %v1752 = vpop.permute.xlu0 %1751
  %1753 = vrot.lane.b32.xlu0 %v1582, 16
  %v1754 = vpop.permute.xlu0 %1753
  %1755 = vrot.lane.b32.xlu0 %v1583, 16
  %v1756 = vpop.permute.xlu0 %1755
  %1757 = vrot.lane.b32.xlu0 %v1584, 16
  %v1758 = vpop.permute.xlu0 %1757
  %1759 = vrot.lane.b32.xlu0 %v1585, 16
  %v1760 = vpop.permute.xlu0 %1759
  %1761 = vrot.lane.b32.xlu0 %v1586, 16
  %v1762 = vpop.permute.xlu0 %1761
  %1763 = vrot.lane.b32.xlu0 %v1587, 16
  %v1764 = vpop.permute.xlu0 %1763
  %1765 = vrot.lane.b32.xlu0 %v1588, 16
  %v1766 = vpop.permute.xlu0 %1765
  %1767 = vrot.lane.b32.xlu0 %v1589, 16
  %v1768 = vpop.permute.xlu0 %1767
  %1769 = vrot.lane.b32.xlu0 %v1590, 16
  %v1770 = vpop.permute.xlu0 %1769
  %1771 = vrot.lane.b32.xlu0 %v1591, 16
  %v1772 = vpop.permute.xlu0 %1771
  %1773 = vrot.lane.b32.xlu0 %v1592, 16
  %v1774 = vpop.permute.xlu0 %1773
  %1775 = vrot.lane.b32.xlu0 %v1593, 16
  %v1776 = vpop.permute.xlu0 %1775
  %1777 = vrot.lane.b32.xlu0 %v1594, 16
  %v1778 = vpop.permute.xlu0 %1777
  %1779 = vrot.lane.b32.xlu0 %v1595, 16
  %v1780 = vpop.permute.xlu0 %1779
  %1781 = vrot.lane.b32.xlu0 %v1596, 16
  %v1782 = vpop.permute.xlu0 %1781
  %1783 = vrot.lane.b32.xlu0 %v1597, 16
  %v1784 = vpop.permute.xlu0 %1783
  %1785 = vrot.lane.b32.xlu0 %v1598, 16
  %v1786 = vpop.permute.xlu0 %1785
  %1787 = vrot.lane.b32.xlu0 %v1599, 16
  %v1788 = vpop.permute.xlu0 %1787
  %1789 = vrot.lane.b32.xlu0 %v1600, 16
  %v1790 = vpop.permute.xlu0 %1789
  %1791 = vrot.lane.b32.xlu0 %v1601, 16
  %v1792 = vpop.permute.xlu0 %1791
  %1793 = vrot.lane.b32.xlu0 %v1602, 16
  %v1794 = vpop.permute.xlu0 %1793
  %vm1859 = vcmask 162944
  %1860 = vst.msk [vmem:[#allocation3] sm:$0xff] %vm1859, %v1668
  %1861 = vst.msk [vmem:[#allocation3 + $0x8] sm:$0xff] %vm1859, %v1670
  %1862 = vst.msk [vmem:[#allocation3 + $0x10] sm:$0xff] %vm1859, %v1672
  %1863 = vst.msk [vmem:[#allocation3 + $0x18] sm:$0xff] %vm1859, %v1674
  %1864 = vst.msk [vmem:[#allocation3 + $0x20] sm:$0xff] %vm1859, %v1676
  %1865 = vst.msk [vmem:[#allocation3 + $0x28] sm:$0xff] %vm1859, %v1678
  %1866 = vst.msk [vmem:[#allocation3 + $0x30] sm:$0xff] %vm1859, %v1680
  %1867 = vst.msk [vmem:[#allocation3 + $0x38] sm:$0xff] %vm1859, %v1682
  %1868 = vst.msk [vmem:[#allocation3 + $0x40] sm:$0xff] %vm1859, %v1684
  %1869 = vst.msk [vmem:[#allocation3 + $0x48] sm:$0xff] %vm1859, %v1686
  %1870 = vst.msk [vmem:[#allocation3 + $0x50] sm:$0xff] %vm1859, %v1688
  %1871 = vst.msk [vmem:[#allocation3 + $0x58] sm:$0xff] %vm1859, %v1690
  %1872 = vst.msk [vmem:[#allocation3 + $0x60] sm:$0xff] %vm1859, %v1692
  %1873 = vst.msk [vmem:[#allocation3 + $0x68] sm:$0xff] %vm1859, %v1694
  %1874 = vst.msk [vmem:[#allocation3 + $0x70] sm:$0xff] %vm1859, %v1696
  %1875 = vst.msk [vmem:[#allocation3 + $0x78] sm:$0xff] %vm1859, %v1698
  %1876 = vst.msk [vmem:[#allocation3 + $0x80] sm:$0xff] %vm1859, %v1700
  %1877 = vst.msk [vmem:[#allocation3 + $0x88] sm:$0xff] %vm1859, %v1702
  %1878 = vst.msk [vmem:[#allocation3 + $0x90] sm:$0xff] %vm1859, %v1704
  %1879 = vst.msk [vmem:[#allocation3 + $0x98] sm:$0xff] %vm1859, %v1706
  %1880 = vst.msk [vmem:[#allocation3 + $0xa0] sm:$0xff] %vm1859, %v1708
  %1881 = vst.msk [vmem:[#allocation3 + $0xa8] sm:$0xff] %vm1859, %v1710
  %1882 = vst.msk [vmem:[#allocation3 + $0xb0] sm:$0xff] %vm1859, %v1712
  %1883 = vst.msk [vmem:[#allocation3 + $0xb8] sm:$0xff] %vm1859, %v1714
  %1884 = vst.msk [vmem:[#allocation3 + $0xc0] sm:$0xff] %vm1859, %v1716
  %1885 = vst.msk [vmem:[#allocation3 + $0xc8] sm:$0xff] %vm1859, %v1718
  %1886 = vst.msk [vmem:[#allocation3 + $0xd0] sm:$0xff] %vm1859, %v1720
  %1887 = vst.msk [vmem:[#allocation3 + $0xd8] sm:$0xff] %vm1859, %v1722
  %1888 = vst.msk [vmem:[#allocation3 + $0xe0] sm:$0xff] %vm1859, %v1724
  %1889 = vst.msk [vmem:[#allocation3 + $0xe8] sm:$0xff] %vm1859, %v1726
  %1890 = vst.msk [vmem:[#allocation3 + $0xf0] sm:$0xff] %vm1859, %v1728
  %1891 = vst.msk [vmem:[#allocation3 + $0xf8] sm:$0xff] %vm1859, %v1730
  %1892 = vst.msk [vmem:[#allocation3 + $0x100] sm:$0xff] %vm1859, %v1732
  %1893 = vst.msk [vmem:[#allocation3 + $0x108] sm:$0xff] %vm1859, %v1734
  %1894 = vst.msk [vmem:[#allocation3 + $0x110] sm:$0xff] %vm1859, %v1736
  %1895 = vst.msk [vmem:[#allocation3 + $0x118] sm:$0xff] %vm1859, %v1738
  %1896 = vst.msk [vmem:[#allocation3 + $0x120] sm:$0xff] %vm1859, %v1740
  %1897 = vst.msk [vmem:[#allocation3 + $0x128] sm:$0xff] %vm1859, %v1742
  %1898 = vst.msk [vmem:[#allocation3 + $0x130] sm:$0xff] %vm1859, %v1744
  %1899 = vst.msk [vmem:[#allocation3 + $0x138] sm:$0xff] %vm1859, %v1746
  %1900 = vst.msk [vmem:[#allocation3 + $0x140] sm:$0xff] %vm1859, %v1748
  %1901 = vst.msk [vmem:[#allocation3 + $0x148] sm:$0xff] %vm1859, %v1750
  %1902 = vst.msk [vmem:[#allocation3 + $0x150] sm:$0xff] %vm1859, %v1752
  %1903 = vst.msk [vmem:[#allocation3 + $0x158] sm:$0xff] %vm1859, %v1754
  %1904 = vst.msk [vmem:[#allocation3 + $0x160] sm:$0xff] %vm1859, %v1756
  %1905 = vst.msk [vmem:[#allocation3 + $0x168] sm:$0xff] %vm1859, %v1758
  %1906 = vst.msk [vmem:[#allocation3 + $0x170] sm:$0xff] %vm1859, %v1760
  %1907 = vst.msk [vmem:[#allocation3 + $0x178] sm:$0xff] %vm1859, %v1762
  %1908 = vst.msk [vmem:[#allocation3 + $0x180] sm:$0xff] %vm1859, %v1764
  %1909 = vst.msk [vmem:[#allocation3 + $0x188] sm:$0xff] %vm1859, %v1766
  %1910 = vst.msk [vmem:[#allocation3 + $0x190] sm:$0xff] %vm1859, %v1768
  %1911 = vst.msk [vmem:[#allocation3 + $0x198] sm:$0xff] %vm1859, %v1770
  %1912 = vst.msk [vmem:[#allocation3 + $0x1a0] sm:$0xff] %vm1859, %v1772
  %1913 = vst.msk [vmem:[#allocation3 + $0x1a8] sm:$0xff] %vm1859, %v1774
  %1914 = vst.msk [vmem:[#allocation3 + $0x1b0] sm:$0xff] %vm1859, %v1776
  %1915 = vst.msk [vmem:[#allocation3 + $0x1b8] sm:$0xff] %vm1859, %v1778
  %1916 = vst.msk [vmem:[#allocation3 + $0x1c0] sm:$0xff] %vm1859, %v1780
  %1917 = vst.msk [vmem:[#allocation3 + $0x1c8] sm:$0xff] %vm1859, %v1782
  %1918 = vst.msk [vmem:[#allocation3 + $0x1d0] sm:$0xff] %vm1859, %v1784
  %1919 = vst.msk [vmem:[#allocation3 + $0x1d8] sm:$0xff] %vm1859, %v1786
  %1920 = vst.msk [vmem:[#allocation3 + $0x1e0] sm:$0xff] %vm1859, %v1788
  %1921 = vst.msk [vmem:[#allocation3 + $0x1e8] sm:$0xff] %vm1859, %v1790
  %1922 = vst.msk [vmem:[#allocation3 + $0x1f0] sm:$0xff] %vm1859, %v1792
  %1923 = vst.msk [vmem:[#allocation3 + $0x1f8] sm:$0xff] %vm1859, %v1794
  %v1924 = vld [vmem:[%s191 + $0x2] sm:$0xff]
  %v1925 = vld [vmem:[%s191 + $0xa] sm:$0xff]
  %v1926 = vld [vmem:[%s191 + $0x1a] sm:$0xff]
  %v1927 = vld [vmem:[%s191 + $0x22] sm:$0xff]
  %v1928 = vld [vmem:[%s191 + $0x32] sm:$0xff]
  %v1929 = vld [vmem:[%s191 + $0x3a] sm:$0xff]
  %v1930 = vld [vmem:[%s191 + $0x4a] sm:$0xff]
  %v1931 = vld [vmem:[%s191 + $0x52] sm:$0xff]
  %v1932 = vld [vmem:[%s191 + $0x62] sm:$0xff]
  %v1933 = vld [vmem:[%s191 + $0x6a] sm:$0xff]
  %v1934 = vld [vmem:[%s191 + $0x7a] sm:$0xff]
  %v1935 = vld [vmem:[%s191 + $0x82] sm:$0xff]
  %v1936 = vld [vmem:[%s191 + $0x92] sm:$0xff]
  %v1937 = vld [vmem:[%s191 + $0x9a] sm:$0xff]
  %v1938 = vld [vmem:[%s191 + $0xaa] sm:$0xff]
  %v1939 = vld [vmem:[%s191 + $0xb2] sm:$0xff]
  %v1940 = vld [vmem:[%s191 + $0xc2] sm:$0xff]
  %v1941 = vld [vmem:[%s191 + $0xca] sm:$0xff]
  %v1942 = vld [vmem:[%s191 + $0xda] sm:$0xff]
  %v1943 = vld [vmem:[%s191 + $0xe2] sm:$0xff]
  %v1944 = vld [vmem:[%s191 + $0xf2] sm:$0xff]
  %v1945 = vld [vmem:[%s191 + $0xfa] sm:$0xff]
  %v1946 = vld [vmem:[%s191 + $0x10a] sm:$0xff]
  %v1947 = vld [vmem:[%s191 + $0x112] sm:$0xff]
  %v1948 = vld [vmem:[%s191 + $0x122] sm:$0xff]
  %v1949 = vld [vmem:[%s191 + $0x12a] sm:$0xff]
  %v1950 = vld [vmem:[%s191 + $0x13a] sm:$0xff]
  %v1951 = vld [vmem:[%s191 + $0x142] sm:$0xff]
  %v1952 = vld [vmem:[%s191 + $0x152] sm:$0xff]
  %v1953 = vld [vmem:[%s191 + $0x15a] sm:$0xff]
  %v1954 = vld [vmem:[%s191 + $0x16a] sm:$0xff]
  %v1955 = vld [vmem:[%s191 + $0x172] sm:$0xff]
  %v1956 = vld [vmem:[%s191 + $0x1b2] sm:$0xff]
  %v1957 = vld [vmem:[%s191 + $0x1ba] sm:$0xff]
  %v1958 = vld [vmem:[%s191 + $0x1ca] sm:$0xff]
  %v1959 = vld [vmem:[%s191 + $0x1d2] sm:$0xff]
  %v1960 = vld [vmem:[%s191 + $0x1e2] sm:$0xff]
  %v1961 = vld [vmem:[%s191 + $0x1ea] sm:$0xff]
  %v1962 = vld [vmem:[%s191 + $0x1fa] sm:$0xff]
  %v1963 = vld [vmem:[%s191 + $0x202] sm:$0xff]
  %v1964 = vld [vmem:[%s191 + $0x212] sm:$0xff]
  %v1965 = vld [vmem:[%s191 + $0x21a] sm:$0xff]
  %v1966 = vld [vmem:[%s191 + $0x22a] sm:$0xff]
  %v1967 = vld [vmem:[%s191 + $0x232] sm:$0xff]
  %v1968 = vld [vmem:[%s191 + $0x242] sm:$0xff]
  %v1969 = vld [vmem:[%s191 + $0x24a] sm:$0xff]
  %v1970 = vld [vmem:[%s191 + $0x25a] sm:$0xff]
  %v1971 = vld [vmem:[%s191 + $0x262] sm:$0xff]
  %v1972 = vld [vmem:[%s191 + $0x272] sm:$0xff]
  %v1973 = vld [vmem:[%s191 + $0x27a] sm:$0xff]
  %v1974 = vld [vmem:[%s191 + $0x28a] sm:$0xff]
  %v1975 = vld [vmem:[%s191 + $0x292] sm:$0xff]
  %v1976 = vld [vmem:[%s191 + $0x2a2] sm:$0xff]
  %v1977 = vld [vmem:[%s191 + $0x2aa] sm:$0xff]
  %v1978 = vld [vmem:[%s191 + $0x2ba] sm:$0xff]
  %v1979 = vld [vmem:[%s191 + $0x2c2] sm:$0xff]
  %v1980 = vld [vmem:[%s191 + $0x2d2] sm:$0xff]
  %v1981 = vld [vmem:[%s191 + $0x2da] sm:$0xff]
  %v1982 = vld [vmem:[%s191 + $0x2ea] sm:$0xff]
  %v1983 = vld [vmem:[%s191 + $0x2f2] sm:$0xff]
  %v1984 = vld [vmem:[%s191 + $0x302] sm:$0xff]
  %v1985 = vld [vmem:[%s191 + $0x30a] sm:$0xff]
  %v1986 = vld [vmem:[%s191 + $0x31a] sm:$0xff]
  %v1987 = vld [vmem:[%s191 + $0x322] sm:$0xff]
  %2052 = vrot.lane.b32.xlu0 %v1924, 20
  %v2053 = vpop.permute.xlu0 %2052
  %2054 = vrot.lane.b32.xlu0 %v1925, 20
  %v2055 = vpop.permute.xlu0 %2054
  %2056 = vrot.lane.b32.xlu0 %v1926, 20
  %v2057 = vpop.permute.xlu0 %2056
  %2058 = vrot.lane.b32.xlu0 %v1927, 20
  %v2059 = vpop.permute.xlu0 %2058
  %2060 = vrot.lane.b32.xlu0 %v1928, 20
  %v2061 = vpop.permute.xlu0 %2060
  %2062 = vrot.lane.b32.xlu0 %v1929, 20
  %v2063 = vpop.permute.xlu0 %2062
  %2064 = vrot.lane.b32.xlu0 %v1930, 20
  %v2065 = vpop.permute.xlu0 %2064
  %2066 = vrot.lane.b32.xlu0 %v1931, 20
  %v2067 = vpop.permute.xlu0 %2066
  %2068 = vrot.lane.b32.xlu0 %v1932, 20
  %v2069 = vpop.permute.xlu0 %2068
  %2070 = vrot.lane.b32.xlu0 %v1933, 20
  %v2071 = vpop.permute.xlu0 %2070
  %2072 = vrot.lane.b32.xlu0 %v1934, 20
  %v2073 = vpop.permute.xlu0 %2072
  %2074 = vrot.lane.b32.xlu0 %v1935, 20
  %v2075 = vpop.permute.xlu0 %2074
  %2076 = vrot.lane.b32.xlu0 %v1936, 20
  %v2077 = vpop.permute.xlu0 %2076
  %2078 = vrot.lane.b32.xlu0 %v1937, 20
  %v2079 = vpop.permute.xlu0 %2078
  %2080 = vrot.lane.b32.xlu0 %v1938, 20
  %v2081 = vpop.permute.xlu0 %2080
  %2082 = vrot.lane.b32.xlu0 %v1939, 20
  %v2083 = vpop.permute.xlu0 %2082
  %2084 = vrot.lane.b32.xlu0 %v1940, 20
  %v2085 = vpop.permute.xlu0 %2084
  %2086 = vrot.lane.b32.xlu0 %v1941, 20
  %v2087 = vpop.permute.xlu0 %2086
  %2088 = vrot.lane.b32.xlu0 %v1942, 20
  %v2089 = vpop.permute.xlu0 %2088
  %2090 = vrot.lane.b32.xlu0 %v1943, 20
  %v2091 = vpop.permute.xlu0 %2090
  %2092 = vrot.lane.b32.xlu0 %v1944, 20
  %v2093 = vpop.permute.xlu0 %2092
  %2094 = vrot.lane.b32.xlu0 %v1945, 20
  %v2095 = vpop.permute.xlu0 %2094
  %2096 = vrot.lane.b32.xlu0 %v1946, 20
  %v2097 = vpop.permute.xlu0 %2096
  %2098 = vrot.lane.b32.xlu0 %v1947, 20
  %v2099 = vpop.permute.xlu0 %2098
  %2100 = vrot.lane.b32.xlu0 %v1948, 20
  %v2101 = vpop.permute.xlu0 %2100
  %2102 = vrot.lane.b32.xlu0 %v1949, 20
  %v2103 = vpop.permute.xlu0 %2102
  %2104 = vrot.lane.b32.xlu0 %v1950, 20
  %v2105 = vpop.permute.xlu0 %2104
  %2106 = vrot.lane.b32.xlu0 %v1951, 20
  %v2107 = vpop.permute.xlu0 %2106
  %2108 = vrot.lane.b32.xlu0 %v1952, 20
  %v2109 = vpop.permute.xlu0 %2108
  %2110 = vrot.lane.b32.xlu0 %v1953, 20
  %v2111 = vpop.permute.xlu0 %2110
  %2112 = vrot.lane.b32.xlu0 %v1954, 20
  %v2113 = vpop.permute.xlu0 %2112
  %2114 = vrot.lane.b32.xlu0 %v1955, 20
  %v2115 = vpop.permute.xlu0 %2114
  %2116 = vrot.lane.b32.xlu0 %v1956, 20
  %v2117 = vpop.permute.xlu0 %2116
  %2118 = vrot.lane.b32.xlu0 %v1957, 20
  %v2119 = vpop.permute.xlu0 %2118
  %2120 = vrot.lane.b32.xlu0 %v1958, 20
  %v2121 = vpop.permute.xlu0 %2120
  %2122 = vrot.lane.b32.xlu0 %v1959, 20
  %v2123 = vpop.permute.xlu0 %2122
  %2124 = vrot.lane.b32.xlu0 %v1960, 20
  %v2125 = vpop.permute.xlu0 %2124
  %2126 = vrot.lane.b32.xlu0 %v1961, 20
  %v2127 = vpop.permute.xlu0 %2126
  %2128 = vrot.lane.b32.xlu0 %v1962, 20
  %v2129 = vpop.permute.xlu0 %2128
  %2130 = vrot.lane.b32.xlu0 %v1963, 20
  %v2131 = vpop.permute.xlu0 %2130
  %2132 = vrot.lane.b32.xlu0 %v1964, 20
  %v2133 = vpop.permute.xlu0 %2132
  %2134 = vrot.lane.b32.xlu0 %v1965, 20
  %v2135 = vpop.permute.xlu0 %2134
  %2136 = vrot.lane.b32.xlu0 %v1966, 20
  %v2137 = vpop.permute.xlu0 %2136
  %2138 = vrot.lane.b32.xlu0 %v1967, 20
  %v2139 = vpop.permute.xlu0 %2138
  %2140 = vrot.lane.b32.xlu0 %v1968, 20
  %v2141 = vpop.permute.xlu0 %2140
  %2142 = vrot.lane.b32.xlu0 %v1969, 20
  %v2143 = vpop.permute.xlu0 %2142
  %2144 = vrot.lane.b32.xlu0 %v1970, 20
  %v2145 = vpop.permute.xlu0 %2144
  %2146 = vrot.lane.b32.xlu0 %v1971, 20
  %v2147 = vpop.permute.xlu0 %2146
  %2148 = vrot.lane.b32.xlu0 %v1972, 20
  %v2149 = vpop.permute.xlu0 %2148
  %2150 = vrot.lane.b32.xlu0 %v1973, 20
  %v2151 = vpop.permute.xlu0 %2150
  %2152 = vrot.lane.b32.xlu0 %v1974, 20
  %v2153 = vpop.permute.xlu0 %2152
  %2154 = vrot.lane.b32.xlu0 %v1975, 20
  %v2155 = vpop.permute.xlu0 %2154
  %2156 = vrot.lane.b32.xlu0 %v1976, 20
  %v2157 = vpop.permute.xlu0 %2156
  %2158 = vrot.lane.b32.xlu0 %v1977, 20
  %v2159 = vpop.permute.xlu0 %2158
  %2160 = vrot.lane.b32.xlu0 %v1978, 20
  %v2161 = vpop.permute.xlu0 %2160
  %2162 = vrot.lane.b32.xlu0 %v1979, 20
  %v2163 = vpop.permute.xlu0 %2162
  %2164 = vrot.lane.b32.xlu0 %v1980, 20
  %v2165 = vpop.permute.xlu0 %2164
  %2166 = vrot.lane.b32.xlu0 %v1981, 20
  %v2167 = vpop.permute.xlu0 %2166
  %2168 = vrot.lane.b32.xlu0 %v1982, 20
  %v2169 = vpop.permute.xlu0 %2168
  %2170 = vrot.lane.b32.xlu0 %v1983, 20
  %v2171 = vpop.permute.xlu0 %2170
  %2172 = vrot.lane.b32.xlu0 %v1984, 20
  %v2173 = vpop.permute.xlu0 %2172
  %2174 = vrot.lane.b32.xlu0 %v1985, 20
  %v2175 = vpop.permute.xlu0 %2174
  %2176 = vrot.lane.b32.xlu0 %v1986, 20
  %v2177 = vpop.permute.xlu0 %2176
  %2178 = vrot.lane.b32.xlu0 %v1987, 20
  %v2179 = vpop.permute.xlu0 %2178
  %vm2244 = vcmask 195744
  %2245 = vst.msk [vmem:[#allocation3] sm:$0xff] %vm2244, %v2053
  %2246 = vst.msk [vmem:[#allocation3 + $0x8] sm:$0xff] %vm2244, %v2055
  %2247 = vst.msk [vmem:[#allocation3 + $0x10] sm:$0xff] %vm2244, %v2057
  %2248 = vst.msk [vmem:[#allocation3 + $0x18] sm:$0xff] %vm2244, %v2059
  %2249 = vst.msk [vmem:[#allocation3 + $0x20] sm:$0xff] %vm2244, %v2061
  %2250 = vst.msk [vmem:[#allocation3 + $0x28] sm:$0xff] %vm2244, %v2063
  %2251 = vst.msk [vmem:[#allocation3 + $0x30] sm:$0xff] %vm2244, %v2065
  %2252 = vst.msk [vmem:[#allocation3 + $0x38] sm:$0xff] %vm2244, %v2067
  %2253 = vst.msk [vmem:[#allocation3 + $0x40] sm:$0xff] %vm2244, %v2069
  %2254 = vst.msk [vmem:[#allocation3 + $0x48] sm:$0xff] %vm2244, %v2071
  %2255 = vst.msk [vmem:[#allocation3 + $0x50] sm:$0xff] %vm2244, %v2073
  %2256 = vst.msk [vmem:[#allocation3 + $0x58] sm:$0xff] %vm2244, %v2075
  %2257 = vst.msk [vmem:[#allocation3 + $0x60] sm:$0xff] %vm2244, %v2077
  %2258 = vst.msk [vmem:[#allocation3 + $0x68] sm:$0xff] %vm2244, %v2079
  %2259 = vst.msk [vmem:[#allocation3 + $0x70] sm:$0xff] %vm2244, %v2081
  %2260 = vst.msk [vmem:[#allocation3 + $0x78] sm:$0xff] %vm2244, %v2083
  %2261 = vst.msk [vmem:[#allocation3 + $0x80] sm:$0xff] %vm2244, %v2085
  %2262 = vst.msk [vmem:[#allocation3 + $0x88] sm:$0xff] %vm2244, %v2087
  %2263 = vst.msk [vmem:[#allocation3 + $0x90] sm:$0xff] %vm2244, %v2089
  %2264 = vst.msk [vmem:[#allocation3 + $0x98] sm:$0xff] %vm2244, %v2091
  %2265 = vst.msk [vmem:[#allocation3 + $0xa0] sm:$0xff] %vm2244, %v2093
  %2266 = vst.msk [vmem:[#allocation3 + $0xa8] sm:$0xff] %vm2244, %v2095
  %2267 = vst.msk [vmem:[#allocation3 + $0xb0] sm:$0xff] %vm2244, %v2097
  %2268 = vst.msk [vmem:[#allocation3 + $0xb8] sm:$0xff] %vm2244, %v2099
  %2269 = vst.msk [vmem:[#allocation3 + $0xc0] sm:$0xff] %vm2244, %v2101
  %2270 = vst.msk [vmem:[#allocation3 + $0xc8] sm:$0xff] %vm2244, %v2103
  %2271 = vst.msk [vmem:[#allocation3 + $0xd0] sm:$0xff] %vm2244, %v2105
  %2272 = vst.msk [vmem:[#allocation3 + $0xd8] sm:$0xff] %vm2244, %v2107
  %2273 = vst.msk [vmem:[#allocation3 + $0xe0] sm:$0xff] %vm2244, %v2109
  %2274 = vst.msk [vmem:[#allocation3 + $0xe8] sm:$0xff] %vm2244, %v2111
  %2275 = vst.msk [vmem:[#allocation3 + $0xf0] sm:$0xff] %vm2244, %v2113
  %2276 = vst.msk [vmem:[#allocation3 + $0xf8] sm:$0xff] %vm2244, %v2115
  %2277 = vst.msk [vmem:[#allocation3 + $0x100] sm:$0xff] %vm2244, %v2117
  %2278 = vst.msk [vmem:[#allocation3 + $0x108] sm:$0xff] %vm2244, %v2119
  %2279 = vst.msk [vmem:[#allocation3 + $0x110] sm:$0xff] %vm2244, %v2121
  %2280 = vst.msk [vmem:[#allocation3 + $0x118] sm:$0xff] %vm2244, %v2123
  %2281 = vst.msk [vmem:[#allocation3 + $0x120] sm:$0xff] %vm2244, %v2125
  %2282 = vst.msk [vmem:[#allocation3 + $0x128] sm:$0xff] %vm2244, %v2127
  %2283 = vst.msk [vmem:[#allocation3 + $0x130] sm:$0xff] %vm2244, %v2129
  %2284 = vst.msk [vmem:[#allocation3 + $0x138] sm:$0xff] %vm2244, %v2131
  %2285 = vst.msk [vmem:[#allocation3 + $0x140] sm:$0xff] %vm2244, %v2133
  %2286 = vst.msk [vmem:[#allocation3 + $0x148] sm:$0xff] %vm2244, %v2135
  %2287 = vst.msk [vmem:[#allocation3 + $0x150] sm:$0xff] %vm2244, %v2137
  %2288 = vst.msk [vmem:[#allocation3 + $0x158] sm:$0xff] %vm2244, %v2139
  %2289 = vst.msk [vmem:[#allocation3 + $0x160] sm:$0xff] %vm2244, %v2141
  %2290 = vst.msk [vmem:[#allocation3 + $0x168] sm:$0xff] %vm2244, %v2143
  %2291 = vst.msk [vmem:[#allocation3 + $0x170] sm:$0xff] %vm2244, %v2145
  %2292 = vst.msk [vmem:[#allocation3 + $0x178] sm:$0xff] %vm2244, %v2147
  %2293 = vst.msk [vmem:[#allocation3 + $0x180] sm:$0xff] %vm2244, %v2149
  %2294 = vst.msk [vmem:[#allocation3 + $0x188] sm:$0xff] %vm2244, %v2151
  %2295 = vst.msk [vmem:[#allocation3 + $0x190] sm:$0xff] %vm2244, %v2153
  %2296 = vst.msk [vmem:[#allocation3 + $0x198] sm:$0xff] %vm2244, %v2155
  %2297 = vst.msk [vmem:[#allocation3 + $0x1a0] sm:$0xff] %vm2244, %v2157
  %2298 = vst.msk [vmem:[#allocation3 + $0x1a8] sm:$0xff] %vm2244, %v2159
  %2299 = vst.msk [vmem:[#allocation3 + $0x1b0] sm:$0xff] %vm2244, %v2161
  %2300 = vst.msk [vmem:[#allocation3 + $0x1b8] sm:$0xff] %vm2244, %v2163
  %2301 = vst.msk [vmem:[#allocation3 + $0x1c0] sm:$0xff] %vm2244, %v2165
  %2302 = vst.msk [vmem:[#allocation3 + $0x1c8] sm:$0xff] %vm2244, %v2167
  %2303 = vst.msk [vmem:[#allocation3 + $0x1d0] sm:$0xff] %vm2244, %v2169
  %2304 = vst.msk [vmem:[#allocation3 + $0x1d8] sm:$0xff] %vm2244, %v2171
  %2305 = vst.msk [vmem:[#allocation3 + $0x1e0] sm:$0xff] %vm2244, %v2173
  %2306 = vst.msk [vmem:[#allocation3 + $0x1e8] sm:$0xff] %vm2244, %v2175
  %2307 = vst.msk [vmem:[#allocation3 + $0x1f0] sm:$0xff] %vm2244, %v2177
  %2308 = vst.msk [vmem:[#allocation3 + $0x1f8] sm:$0xff] %vm2244, %v2179
  %s2309 = scalar_lea.vmem [#allocation2], 48
  %v2310 = vld [vmem:[%s2309] sm:$0xff]
  %v2311 = vld [vmem:[%s2309 + $0x8] sm:$0xff]
  %v2312 = vld [vmem:[%s2309 + $0x18] sm:$0xff]
  %v2313 = vld [vmem:[%s2309 + $0x20] sm:$0xff]
  %v2314 = vld [vmem:[%s2309 + $0x30] sm:$0xff]
  %v2315 = vld [vmem:[%s2309 + $0x38] sm:$0xff]
  %v2316 = vld [vmem:[%s2309 + $0x48] sm:$0xff]
  %v2317 = vld [vmem:[%s2309 + $0x50] sm:$0xff]
  %v2318 = vld [vmem:[%s2309 + $0x60] sm:$0xff]
  %v2319 = vld [vmem:[%s2309 + $0x68] sm:$0xff]
  %v2320 = vld [vmem:[%s2309 + $0x78] sm:$0xff]
  %v2321 = vld [vmem:[%s2309 + $0x80] sm:$0xff]
  %v2322 = vld [vmem:[%s2309 + $0x90] sm:$0xff]
  %v2323 = vld [vmem:[%s2309 + $0x98] sm:$0xff]
  %v2324 = vld [vmem:[%s2309 + $0xa8] sm:$0xff]
  %v2325 = vld [vmem:[%s2309 + $0xb0] sm:$0xff]
  %v2326 = vld [vmem:[%s2309 + $0xc0] sm:$0xff]
  %v2327 = vld [vmem:[%s2309 + $0xc8] sm:$0xff]
  %v2328 = vld [vmem:[%s2309 + $0xd8] sm:$0xff]
  %v2329 = vld [vmem:[%s2309 + $0xe0] sm:$0xff]
  %v2330 = vld [vmem:[%s2309 + $0xf0] sm:$0xff]
  %v2331 = vld [vmem:[%s2309 + $0xf8] sm:$0xff]
  %v2332 = vld [vmem:[%s2309 + $0x108] sm:$0xff]
  %v2333 = vld [vmem:[%s2309 + $0x110] sm:$0xff]
  %v2334 = vld [vmem:[%s2309 + $0x120] sm:$0xff]
  %v2335 = vld [vmem:[%s2309 + $0x128] sm:$0xff]
  %v2336 = vld [vmem:[%s2309 + $0x138] sm:$0xff]
  %v2337 = vld [vmem:[%s2309 + $0x140] sm:$0xff]
  %v2338 = vld [vmem:[%s2309 + $0x150] sm:$0xff]
  %v2339 = vld [vmem:[%s2309 + $0x158] sm:$0xff]
  %v2340 = vld [vmem:[%s2309 + $0x168] sm:$0xff]
  %v2341 = vld [vmem:[%s2309 + $0x170] sm:$0xff]
  %v2342 = vld [vmem:[%s2309 + $0x1b0] sm:$0xff]
  %v2343 = vld [vmem:[%s2309 + $0x1b8] sm:$0xff]
  %v2344 = vld [vmem:[%s2309 + $0x1c8] sm:$0xff]
  %v2345 = vld [vmem:[%s2309 + $0x1d0] sm:$0xff]
  %v2346 = vld [vmem:[%s2309 + $0x1e0] sm:$0xff]
  %v2347 = vld [vmem:[%s2309 + $0x1e8] sm:$0xff]
  %v2348 = vld [vmem:[%s2309 + $0x1f8] sm:$0xff]
  %v2349 = vld [vmem:[%s2309 + $0x200] sm:$0xff]
  %v2350 = vld [vmem:[%s2309 + $0x210] sm:$0xff]
  %v2351 = vld [vmem:[%s2309 + $0x218] sm:$0xff]
  %v2352 = vld [vmem:[%s2309 + $0x228] sm:$0xff]
  %v2353 = vld [vmem:[%s2309 + $0x230] sm:$0xff]
  %v2354 = vld [vmem:[%s2309 + $0x240] sm:$0xff]
  %v2355 = vld [vmem:[%s2309 + $0x248] sm:$0xff]
  %v2356 = vld [vmem:[%s2309 + $0x258] sm:$0xff]
  %v2357 = vld [vmem:[%s2309 + $0x260] sm:$0xff]
  %v2358 = vld [vmem:[%s2309 + $0x270] sm:$0xff]
  %v2359 = vld [vmem:[%s2309 + $0x278] sm:$0xff]
  %v2360 = vld [vmem:[%s2309 + $0x288] sm:$0xff]
  %v2361 = vld [vmem:[%s2309 + $0x290] sm:$0xff]
  %v2362 = vld [vmem:[%s2309 + $0x2a0] sm:$0xff]
  %v2363 = vld [vmem:[%s2309 + $0x2a8] sm:$0xff]
  %v2364 = vld [vmem:[%s2309 + $0x2b8] sm:$0xff]
  %v2365 = vld [vmem:[%s2309 + $0x2c0] sm:$0xff]
  %v2366 = vld [vmem:[%s2309 + $0x2d0] sm:$0xff]
  %v2367 = vld [vmem:[%s2309 + $0x2d8] sm:$0xff]
  %v2368 = vld [vmem:[%s2309 + $0x2e8] sm:$0xff]
  %v2369 = vld [vmem:[%s2309 + $0x2f0] sm:$0xff]
  %v2370 = vld [vmem:[%s2309 + $0x300] sm:$0xff]
  %v2371 = vld [vmem:[%s2309 + $0x308] sm:$0xff]
  %v2372 = vld [vmem:[%s2309 + $0x318] sm:$0xff]
  %v2373 = vld [vmem:[%s2309 + $0x320] sm:$0xff]
  %2438 = vrot.lane.b32.xlu0 %v2310, 24
  %v2439 = vpop.permute.xlu0 %2438
  %2440 = vrot.lane.b32.xlu0 %v2311, 24
  %v2441 = vpop.permute.xlu0 %2440
  %2442 = vrot.lane.b32.xlu0 %v2312, 24
  %v2443 = vpop.permute.xlu0 %2442
  %2444 = vrot.lane.b32.xlu0 %v2313, 24
  %v2445 = vpop.permute.xlu0 %2444
  %2446 = vrot.lane.b32.xlu0 %v2314, 24
  %v2447 = vpop.permute.xlu0 %2446
  %2448 = vrot.lane.b32.xlu0 %v2315, 24
  %v2449 = vpop.permute.xlu0 %2448
  %2450 = vrot.lane.b32.xlu0 %v2316, 24
  %v2451 = vpop.permute.xlu0 %2450
  %2452 = vrot.lane.b32.xlu0 %v2317, 24
  %v2453 = vpop.permute.xlu0 %2452
  %2454 = vrot.lane.b32.xlu0 %v2318, 24
  %v2455 = vpop.permute.xlu0 %2454
  %2456 = vrot.lane.b32.xlu0 %v2319, 24
  %v2457 = vpop.permute.xlu0 %2456
  %2458 = vrot.lane.b32.xlu0 %v2320, 24
  %v2459 = vpop.permute.xlu0 %2458
  %2460 = vrot.lane.b32.xlu0 %v2321, 24
  %v2461 = vpop.permute.xlu0 %2460
  %2462 = vrot.lane.b32.xlu0 %v2322, 24
  %v2463 = vpop.permute.xlu0 %2462
  %2464 = vrot.lane.b32.xlu0 %v2323, 24
  %v2465 = vpop.permute.xlu0 %2464
  %2466 = vrot.lane.b32.xlu0 %v2324, 24
  %v2467 = vpop.permute.xlu0 %2466
  %2468 = vrot.lane.b32.xlu0 %v2325, 24
  %v2469 = vpop.permute.xlu0 %2468
  %2470 = vrot.lane.b32.xlu0 %v2326, 24
  %v2471 = vpop.permute.xlu0 %2470
  %2472 = vrot.lane.b32.xlu0 %v2327, 24
  %v2473 = vpop.permute.xlu0 %2472
  %2474 = vrot.lane.b32.xlu0 %v2328, 24
  %v2475 = vpop.permute.xlu0 %2474
  %2476 = vrot.lane.b32.xlu0 %v2329, 24
  %v2477 = vpop.permute.xlu0 %2476
  %2478 = vrot.lane.b32.xlu0 %v2330, 24
  %v2479 = vpop.permute.xlu0 %2478
  %2480 = vrot.lane.b32.xlu0 %v2331, 24
  %v2481 = vpop.permute.xlu0 %2480
  %2482 = vrot.lane.b32.xlu0 %v2332, 24
  %v2483 = vpop.permute.xlu0 %2482
  %2484 = vrot.lane.b32.xlu0 %v2333, 24
  %v2485 = vpop.permute.xlu0 %2484
  %2486 = vrot.lane.b32.xlu0 %v2334, 24
  %v2487 = vpop.permute.xlu0 %2486
  %2488 = vrot.lane.b32.xlu0 %v2335, 24
  %v2489 = vpop.permute.xlu0 %2488
  %2490 = vrot.lane.b32.xlu0 %v2336, 24
  %v2491 = vpop.permute.xlu0 %2490
  %2492 = vrot.lane.b32.xlu0 %v2337, 24
  %v2493 = vpop.permute.xlu0 %2492
  %2494 = vrot.lane.b32.xlu0 %v2338, 24
  %v2495 = vpop.permute.xlu0 %2494
  %2496 = vrot.lane.b32.xlu0 %v2339, 24
  %v2497 = vpop.permute.xlu0 %2496
  %2498 = vrot.lane.b32.xlu0 %v2340, 24
  %v2499 = vpop.permute.xlu0 %2498
  %2500 = vrot.lane.b32.xlu0 %v2341, 24
  %v2501 = vpop.permute.xlu0 %2500
  %2502 = vrot.lane.b32.xlu0 %v2342, 24
  %v2503 = vpop.permute.xlu0 %2502
  %2504 = vrot.lane.b32.xlu0 %v2343, 24
  %v2505 = vpop.permute.xlu0 %2504
  %2506 = vrot.lane.b32.xlu0 %v2344, 24
  %v2507 = vpop.permute.xlu0 %2506
  %2508 = vrot.lane.b32.xlu0 %v2345, 24
  %v2509 = vpop.permute.xlu0 %2508
  %2510 = vrot.lane.b32.xlu0 %v2346, 24
  %v2511 = vpop.permute.xlu0 %2510
  %2512 = vrot.lane.b32.xlu0 %v2347, 24
  %v2513 = vpop.permute.xlu0 %2512
  %2514 = vrot.lane.b32.xlu0 %v2348, 24
  %v2515 = vpop.permute.xlu0 %2514
  %2516 = vrot.lane.b32.xlu0 %v2349, 24
  %v2517 = vpop.permute.xlu0 %2516
  %2518 = vrot.lane.b32.xlu0 %v2350, 24
  %v2519 = vpop.permute.xlu0 %2518
  %2520 = vrot.lane.b32.xlu0 %v2351, 24
  %v2521 = vpop.permute.xlu0 %2520
  %2522 = vrot.lane.b32.xlu0 %v2352, 24
  %v2523 = vpop.permute.xlu0 %2522
  %2524 = vrot.lane.b32.xlu0 %v2353, 24
  %v2525 = vpop.permute.xlu0 %2524
  %2526 = vrot.lane.b32.xlu0 %v2354, 24
  %v2527 = vpop.permute.xlu0 %2526
  %2528 = vrot.lane.b32.xlu0 %v2355, 24
  %v2529 = vpop.permute.xlu0 %2528
  %2530 = vrot.lane.b32.xlu0 %v2356, 24
  %v2531 = vpop.permute.xlu0 %2530
  %2532 = vrot.lane.b32.xlu0 %v2357, 24
  %v2533 = vpop.permute.xlu0 %2532
  %2534 = vrot.lane.b32.xlu0 %v2358, 24
  %v2535 = vpop.permute.xlu0 %2534
  %2536 = vrot.lane.b32.xlu0 %v2359, 24
  %v2537 = vpop.permute.xlu0 %2536
  %2538 = vrot.lane.b32.xlu0 %v2360, 24
  %v2539 = vpop.permute.xlu0 %2538
  %2540 = vrot.lane.b32.xlu0 %v2361, 24
  %v2541 = vpop.permute.xlu0 %2540
  %2542 = vrot.lane.b32.xlu0 %v2362, 24
  %v2543 = vpop.permute.xlu0 %2542
  %2544 = vrot.lane.b32.xlu0 %v2363, 24
  %v2545 = vpop.permute.xlu0 %2544
  %2546 = vrot.lane.b32.xlu0 %v2364, 24
  %v2547 = vpop.permute.xlu0 %2546
  %2548 = vrot.lane.b32.xlu0 %v2365, 24
  %v2549 = vpop.permute.xlu0 %2548
  %2550 = vrot.lane.b32.xlu0 %v2366, 24
  %v2551 = vpop.permute.xlu0 %2550
  %2552 = vrot.lane.b32.xlu0 %v2367, 24
  %v2553 = vpop.permute.xlu0 %2552
  %2554 = vrot.lane.b32.xlu0 %v2368, 24
  %v2555 = vpop.permute.xlu0 %2554
  %2556 = vrot.lane.b32.xlu0 %v2369, 24
  %v2557 = vpop.permute.xlu0 %2556
  %2558 = vrot.lane.b32.xlu0 %v2370, 24
  %v2559 = vpop.permute.xlu0 %2558
  %2560 = vrot.lane.b32.xlu0 %v2371, 24
  %v2561 = vpop.permute.xlu0 %2560
  %2562 = vrot.lane.b32.xlu0 %v2372, 24
  %v2563 = vpop.permute.xlu0 %2562
  %2564 = vrot.lane.b32.xlu0 %v2373, 24
  %v2565 = vpop.permute.xlu0 %2564
  %vm2630 = vcmask 228544
  %2631 = vst.msk [vmem:[#allocation3] sm:$0xff] %vm2630, %v2439
  %2632 = vst.msk [vmem:[#allocation3 + $0x8] sm:$0xff] %vm2630, %v2441
  %2633 = vst.msk [vmem:[#allocation3 + $0x10] sm:$0xff] %vm2630, %v2443
  %2634 = vst.msk [vmem:[#allocation3 + $0x18] sm:$0xff] %vm2630, %v2445
  %2635 = vst.msk [vmem:[#allocation3 + $0x20] sm:$0xff] %vm2630, %v2447
  %2636 = vst.msk [vmem:[#allocation3 + $0x28] sm:$0xff] %vm2630, %v2449
  %2637 = vst.msk [vmem:[#allocation3 + $0x30] sm:$0xff] %vm2630, %v2451
  %2638 = vst.msk [vmem:[#allocation3 + $0x38] sm:$0xff] %vm2630, %v2453
  %2639 = vst.msk [vmem:[#allocation3 + $0x40] sm:$0xff] %vm2630, %v2455
  %2640 = vst.msk [vmem:[#allocation3 + $0x48] sm:$0xff] %vm2630, %v2457
  %2641 = vst.msk [vmem:[#allocation3 + $0x50] sm:$0xff] %vm2630, %v2459
  %2642 = vst.msk [vmem:[#allocation3 + $0x58] sm:$0xff] %vm2630, %v2461
  %2643 = vst.msk [vmem:[#allocation3 + $0x60] sm:$0xff] %vm2630, %v2463
  %2644 = vst.msk [vmem:[#allocation3 + $0x68] sm:$0xff] %vm2630, %v2465
  %2645 = vst.msk [vmem:[#allocation3 + $0x70] sm:$0xff] %vm2630, %v2467
  %2646 = vst.msk [vmem:[#allocation3 + $0x78] sm:$0xff] %vm2630, %v2469
  %2647 = vst.msk [vmem:[#allocation3 + $0x80] sm:$0xff] %vm2630, %v2471
  %2648 = vst.msk [vmem:[#allocation3 + $0x88] sm:$0xff] %vm2630, %v2473
  %2649 = vst.msk [vmem:[#allocation3 + $0x90] sm:$0xff] %vm2630, %v2475
  %2650 = vst.msk [vmem:[#allocation3 + $0x98] sm:$0xff] %vm2630, %v2477
  %2651 = vst.msk [vmem:[#allocation3 + $0xa0] sm:$0xff] %vm2630, %v2479
  %2652 = vst.msk [vmem:[#allocation3 + $0xa8] sm:$0xff] %vm2630, %v2481
  %2653 = vst.msk [vmem:[#allocation3 + $0xb0] sm:$0xff] %vm2630, %v2483
  %2654 = vst.msk [vmem:[#allocation3 + $0xb8] sm:$0xff] %vm2630, %v2485
  %2655 = vst.msk [vmem:[#allocation3 + $0xc0] sm:$0xff] %vm2630, %v2487
  %2656 = vst.msk [vmem:[#allocation3 + $0xc8] sm:$0xff] %vm2630, %v2489
  %2657 = vst.msk [vmem:[#allocation3 + $0xd0] sm:$0xff] %vm2630, %v2491
  %2658 = vst.msk [vmem:[#allocation3 + $0xd8] sm:$0xff] %vm2630, %v2493
  %2659 = vst.msk [vmem:[#allocation3 + $0xe0] sm:$0xff] %vm2630, %v2495
  %2660 = vst.msk [vmem:[#allocation3 + $0xe8] sm:$0xff] %vm2630, %v2497
  %2661 = vst.msk [vmem:[#allocation3 + $0xf0] sm:$0xff] %vm2630, %v2499
  %2662 = vst.msk [vmem:[#allocation3 + $0xf8] sm:$0xff] %vm2630, %v2501
  %2663 = vst.msk [vmem:[#allocation3 + $0x100] sm:$0xff] %vm2630, %v2503
  %2664 = vst.msk [vmem:[#allocation3 + $0x108] sm:$0xff] %vm2630, %v2505
  %2665 = vst.msk [vmem:[#allocation3 + $0x110] sm:$0xff] %vm2630, %v2507
  %2666 = vst.msk [vmem:[#allocation3 + $0x118] sm:$0xff] %vm2630, %v2509
  %2667 = vst.msk [vmem:[#allocation3 + $0x120] sm:$0xff] %vm2630, %v2511
  %2668 = vst.msk [vmem:[#allocation3 + $0x128] sm:$0xff] %vm2630, %v2513
  %2669 = vst.msk [vmem:[#allocation3 + $0x130] sm:$0xff] %vm2630, %v2515
  %2670 = vst.msk [vmem:[#allocation3 + $0x138] sm:$0xff] %vm2630, %v2517
  %2671 = vst.msk [vmem:[#allocation3 + $0x140] sm:$0xff] %vm2630, %v2519
  %2672 = vst.msk [vmem:[#allocation3 + $0x148] sm:$0xff] %vm2630, %v2521
  %2673 = vst.msk [vmem:[#allocation3 + $0x150] sm:$0xff] %vm2630, %v2523
  %2674 = vst.msk [vmem:[#allocation3 + $0x158] sm:$0xff] %vm2630, %v2525
  %2675 = vst.msk [vmem:[#allocation3 + $0x160] sm:$0xff] %vm2630, %v2527
  %2676 = vst.msk [vmem:[#allocation3 + $0x168] sm:$0xff] %vm2630, %v2529
  %2677 = vst.msk [vmem:[#allocation3 + $0x170] sm:$0xff] %vm2630, %v2531
  %2678 = vst.msk [vmem:[#allocation3 + $0x178] sm:$0xff] %vm2630, %v2533
  %2679 = vst.msk [vmem:[#allocation3 + $0x180] sm:$0xff] %vm2630, %v2535
  %2680 = vst.msk [vmem:[#allocation3 + $0x188] sm:$0xff] %vm2630, %v2537
  %2681 = vst.msk [vmem:[#allocation3 + $0x190] sm:$0xff] %vm2630, %v2539
  %2682 = vst.msk [vmem:[#allocation3 + $0x198] sm:$0xff] %vm2630, %v2541
  %2683 = vst.msk [vmem:[#allocation3 + $0x1a0] sm:$0xff] %vm2630, %v2543
  %2684 = vst.msk [vmem:[#allocation3 + $0x1a8] sm:$0xff] %vm2630, %v2545
  %2685 = vst.msk [vmem:[#allocation3 + $0x1b0] sm:$0xff] %vm2630, %v2547
  %2686 = vst.msk [vmem:[#allocation3 + $0x1b8] sm:$0xff] %vm2630, %v2549
  %2687 = vst.msk [vmem:[#allocation3 + $0x1c0] sm:$0xff] %vm2630, %v2551
  %2688 = vst.msk [vmem:[#allocation3 + $0x1c8] sm:$0xff] %vm2630, %v2553
  %2689 = vst.msk [vmem:[#allocation3 + $0x1d0] sm:$0xff] %vm2630, %v2555
  %2690 = vst.msk [vmem:[#allocation3 + $0x1d8] sm:$0xff] %vm2630, %v2557
  %2691 = vst.msk [vmem:[#allocation3 + $0x1e0] sm:$0xff] %vm2630, %v2559
  %2692 = vst.msk [vmem:[#allocation3 + $0x1e8] sm:$0xff] %vm2630, %v2561
  %2693 = vst.msk [vmem:[#allocation3 + $0x1f0] sm:$0xff] %vm2630, %v2563
  %2694 = vst.msk [vmem:[#allocation3 + $0x1f8] sm:$0xff] %vm2630, %v2565
  %v2695 = vld [vmem:[%s2309 + $0x1] sm:$0xff]
  %v2696 = vld [vmem:[%s2309 + $0x9] sm:$0xff]
  %v2697 = vld [vmem:[%s2309 + $0x19] sm:$0xff]
  %v2698 = vld [vmem:[%s2309 + $0x21] sm:$0xff]
  %v2699 = vld [vmem:[%s2309 + $0x31] sm:$0xff]
  %v2700 = vld [vmem:[%s2309 + $0x39] sm:$0xff]
  %v2701 = vld [vmem:[%s2309 + $0x49] sm:$0xff]
  %v2702 = vld [vmem:[%s2309 + $0x51] sm:$0xff]
  %v2703 = vld [vmem:[%s2309 + $0x61] sm:$0xff]
  %v2704 = vld [vmem:[%s2309 + $0x69] sm:$0xff]
  %v2705 = vld [vmem:[%s2309 + $0x79] sm:$0xff]
  %v2706 = vld [vmem:[%s2309 + $0x81] sm:$0xff]
  %v2707 = vld [vmem:[%s2309 + $0x91] sm:$0xff]
  %v2708 = vld [vmem:[%s2309 + $0x99] sm:$0xff]
  %v2709 = vld [vmem:[%s2309 + $0xa9] sm:$0xff]
  %v2710 = vld [vmem:[%s2309 + $0xb1] sm:$0xff]
  %v2711 = vld [vmem:[%s2309 + $0xc1] sm:$0xff]
  %v2712 = vld [vmem:[%s2309 + $0xc9] sm:$0xff]
  %v2713 = vld [vmem:[%s2309 + $0xd9] sm:$0xff]
  %v2714 = vld [vmem:[%s2309 + $0xe1] sm:$0xff]
  %v2715 = vld [vmem:[%s2309 + $0xf1] sm:$0xff]
  %v2716 = vld [vmem:[%s2309 + $0xf9] sm:$0xff]
  %v2717 = vld [vmem:[%s2309 + $0x109] sm:$0xff]
  %v2718 = vld [vmem:[%s2309 + $0x111] sm:$0xff]
  %v2719 = vld [vmem:[%s2309 + $0x121] sm:$0xff]
  %v2720 = vld [vmem:[%s2309 + $0x129] sm:$0xff]
  %v2721 = vld [vmem:[%s2309 + $0x139] sm:$0xff]
  %v2722 = vld [vmem:[%s2309 + $0x141] sm:$0xff]
  %v2723 = vld [vmem:[%s2309 + $0x151] sm:$0xff]
  %v2724 = vld [vmem:[%s2309 + $0x159] sm:$0xff]
  %v2725 = vld [vmem:[%s2309 + $0x169] sm:$0xff]
  %v2726 = vld [vmem:[%s2309 + $0x171] sm:$0xff]
  %v2727 = vld [vmem:[%s2309 + $0x1b1] sm:$0xff]
  %v2728 = vld [vmem:[%s2309 + $0x1b9] sm:$0xff]
  %v2729 = vld [vmem:[%s2309 + $0x1c9] sm:$0xff]
  %v2730 = vld [vmem:[%s2309 + $0x1d1] sm:$0xff]
  %v2731 = vld [vmem:[%s2309 + $0x1e1] sm:$0xff]
  %v2732 = vld [vmem:[%s2309 + $0x1e9] sm:$0xff]
  %v2733 = vld [vmem:[%s2309 + $0x1f9] sm:$0xff]
  %v2734 = vld [vmem:[%s2309 + $0x201] sm:$0xff]
  %v2735 = vld [vmem:[%s2309 + $0x211] sm:$0xff]
  %v2736 = vld [vmem:[%s2309 + $0x219] sm:$0xff]
  %v2737 = vld [vmem:[%s2309 + $0x229] sm:$0xff]
  %v2738 = vld [vmem:[%s2309 + $0x231] sm:$0xff]
  %v2739 = vld [vmem:[%s2309 + $0x241] sm:$0xff]
  %v2740 = vld [vmem:[%s2309 + $0x249] sm:$0xff]
  %v2741 = vld [vmem:[%s2309 + $0x259] sm:$0xff]
  %v2742 = vld [vmem:[%s2309 + $0x261] sm:$0xff]
  %v2743 = vld [vmem:[%s2309 + $0x271] sm:$0xff]
  %v2744 = vld [vmem:[%s2309 + $0x279] sm:$0xff]
  %v2745 = vld [vmem:[%s2309 + $0x289] sm:$0xff]
  %v2746 = vld [vmem:[%s2309 + $0x291] sm:$0xff]
  %v2747 = vld [vmem:[%s2309 + $0x2a1] sm:$0xff]
  %v2748 = vld [vmem:[%s2309 + $0x2a9] sm:$0xff]
  %v2749 = vld [vmem:[%s2309 + $0x2b9] sm:$0xff]
  %v2750 = vld [vmem:[%s2309 + $0x2c1] sm:$0xff]
  %v2751 = vld [vmem:[%s2309 + $0x2d1] sm:$0xff]
  %v2752 = vld [vmem:[%s2309 + $0x2d9] sm:$0xff]
  %v2753 = vld [vmem:[%s2309 + $0x2e9] sm:$0xff]
  %v2754 = vld [vmem:[%s2309 + $0x2f1] sm:$0xff]
  %v2755 = vld [vmem:[%s2309 + $0x301] sm:$0xff]
  %v2756 = vld [vmem:[%s2309 + $0x309] sm:$0xff]
  %v2757 = vld [vmem:[%s2309 + $0x319] sm:$0xff]
  %v2758 = vld [vmem:[%s2309 + $0x321] sm:$0xff]
  %2823 = vrot.lane.b32.xlu0 %v2695, 28
  %v2824 = vpop.permute.xlu0 %2823
  %2825 = vrot.lane.b32.xlu0 %v2696, 28
  %v2826 = vpop.permute.xlu0 %2825
  %2827 = vrot.lane.b32.xlu0 %v2697, 28
  %v2828 = vpop.permute.xlu0 %2827
  %2829 = vrot.lane.b32.xlu0 %v2698, 28
  %v2830 = vpop.permute.xlu0 %2829
  %2831 = vrot.lane.b32.xlu0 %v2699, 28
  %v2832 = vpop.permute.xlu0 %2831
  %2833 = vrot.lane.b32.xlu0 %v2700, 28
  %v2834 = vpop.permute.xlu0 %2833
  %2835 = vrot.lane.b32.xlu0 %v2701, 28
  %v2836 = vpop.permute.xlu0 %2835
  %2837 = vrot.lane.b32.xlu0 %v2702, 28
  %v2838 = vpop.permute.xlu0 %2837
  %2839 = vrot.lane.b32.xlu0 %v2703, 28
  %v2840 = vpop.permute.xlu0 %2839
  %2841 = vrot.lane.b32.xlu0 %v2704, 28
  %v2842 = vpop.permute.xlu0 %2841
  %2843 = vrot.lane.b32.xlu0 %v2705, 28
  %v2844 = vpop.permute.xlu0 %2843
  %2845 = vrot.lane.b32.xlu0 %v2706, 28
  %v2846 = vpop.permute.xlu0 %2845
  %2847 = vrot.lane.b32.xlu0 %v2707, 28
  %v2848 = vpop.permute.xlu0 %2847
  %2849 = vrot.lane.b32.xlu0 %v2708, 28
  %v2850 = vpop.permute.xlu0 %2849
  %2851 = vrot.lane.b32.xlu0 %v2709, 28
  %v2852 = vpop.permute.xlu0 %2851
  %2853 = vrot.lane.b32.xlu0 %v2710, 28
  %v2854 = vpop.permute.xlu0 %2853
  %2855 = vrot.lane.b32.xlu0 %v2711, 28
  %v2856 = vpop.permute.xlu0 %2855
  %2857 = vrot.lane.b32.xlu0 %v2712, 28
  %v2858 = vpop.permute.xlu0 %2857
  %2859 = vrot.lane.b32.xlu0 %v2713, 28
  %v2860 = vpop.permute.xlu0 %2859
  %2861 = vrot.lane.b32.xlu0 %v2714, 28
  %v2862 = vpop.permute.xlu0 %2861
  %2863 = vrot.lane.b32.xlu0 %v2715, 28
  %v2864 = vpop.permute.xlu0 %2863
  %2865 = vrot.lane.b32.xlu0 %v2716, 28
  %v2866 = vpop.permute.xlu0 %2865
  %2867 = vrot.lane.b32.xlu0 %v2717, 28
  %v2868 = vpop.permute.xlu0 %2867
  %2869 = vrot.lane.b32.xlu0 %v2718, 28
  %v2870 = vpop.permute.xlu0 %2869
  %2871 = vrot.lane.b32.xlu0 %v2719, 28
  %v2872 = vpop.permute.xlu0 %2871
  %2873 = vrot.lane.b32.xlu0 %v2720, 28
  %v2874 = vpop.permute.xlu0 %2873
  %2875 = vrot.lane.b32.xlu0 %v2721, 28
  %v2876 = vpop.permute.xlu0 %2875
  %2877 = vrot.lane.b32.xlu0 %v2722, 28
  %v2878 = vpop.permute.xlu0 %2877
  %2879 = vrot.lane.b32.xlu0 %v2723, 28
  %v2880 = vpop.permute.xlu0 %2879
  %2881 = vrot.lane.b32.xlu0 %v2724, 28
  %v2882 = vpop.permute.xlu0 %2881
  %2883 = vrot.lane.b32.xlu0 %v2725, 28
  %v2884 = vpop.permute.xlu0 %2883
  %2885 = vrot.lane.b32.xlu0 %v2726, 28
  %v2886 = vpop.permute.xlu0 %2885
  %2887 = vrot.lane.b32.xlu0 %v2727, 28
  %v2888 = vpop.permute.xlu0 %2887
  %2889 = vrot.lane.b32.xlu0 %v2728, 28
  %v2890 = vpop.permute.xlu0 %2889
  %2891 = vrot.lane.b32.xlu0 %v2729, 28
  %v2892 = vpop.permute.xlu0 %2891
  %2893 = vrot.lane.b32.xlu0 %v2730, 28
  %v2894 = vpop.permute.xlu0 %2893
  %2895 = vrot.lane.b32.xlu0 %v2731, 28
  %v2896 = vpop.permute.xlu0 %2895
  %2897 = vrot.lane.b32.xlu0 %v2732, 28
  %v2898 = vpop.permute.xlu0 %2897
  %2899 = vrot.lane.b32.xlu0 %v2733, 28
  %v2900 = vpop.permute.xlu0 %2899
  %2901 = vrot.lane.b32.xlu0 %v2734, 28
  %v2902 = vpop.permute.xlu0 %2901
  %2903 = vrot.lane.b32.xlu0 %v2735, 28
  %v2904 = vpop.permute.xlu0 %2903
  %2905 = vrot.lane.b32.xlu0 %v2736, 28
  %v2906 = vpop.permute.xlu0 %2905
  %2907 = vrot.lane.b32.xlu0 %v2737, 28
  %v2908 = vpop.permute.xlu0 %2907
  %2909 = vrot.lane.b32.xlu0 %v2738, 28
  %v2910 = vpop.permute.xlu0 %2909
  %2911 = vrot.lane.b32.xlu0 %v2739, 28
  %v2912 = vpop.permute.xlu0 %2911
  %2913 = vrot.lane.b32.xlu0 %v2740, 28
  %v2914 = vpop.permute.xlu0 %2913
  %2915 = vrot.lane.b32.xlu0 %v2741, 28
  %v2916 = vpop.permute.xlu0 %2915
  %2917 = vrot.lane.b32.xlu0 %v2742, 28
  %v2918 = vpop.permute.xlu0 %2917
  %2919 = vrot.lane.b32.xlu0 %v2743, 28
  %v2920 = vpop.permute.xlu0 %2919
  %2921 = vrot.lane.b32.xlu0 %v2744, 28
  %v2922 = vpop.permute.xlu0 %2921
  %2923 = vrot.lane.b32.xlu0 %v2745, 28
  %v2924 = vpop.permute.xlu0 %2923
  %2925 = vrot.lane.b32.xlu0 %v2746, 28
  %v2926 = vpop.permute.xlu0 %2925
  %2927 = vrot.lane.b32.xlu0 %v2747, 28
  %v2928 = vpop.permute.xlu0 %2927
  %2929 = vrot.lane.b32.xlu0 %v2748, 28
  %v2930 = vpop.permute.xlu0 %2929
  %2931 = vrot.lane.b32.xlu0 %v2749, 28
  %v2932 = vpop.permute.xlu0 %2931
  %2933 = vrot.lane.b32.xlu0 %v2750, 28
  %v2934 = vpop.permute.xlu0 %2933
  %2935 = vrot.lane.b32.xlu0 %v2751, 28
  %v2936 = vpop.permute.xlu0 %2935
  %2937 = vrot.lane.b32.xlu0 %v2752, 28
  %v2938 = vpop.permute.xlu0 %2937
  %2939 = vrot.lane.b32.xlu0 %v2753, 28
  %v2940 = vpop.permute.xlu0 %2939
  %2941 = vrot.lane.b32.xlu0 %v2754, 28
  %v2942 = vpop.permute.xlu0 %2941
  %2943 = vrot.lane.b32.xlu0 %v2755, 28
  %v2944 = vpop.permute.xlu0 %2943
  %2945 = vrot.lane.b32.xlu0 %v2756, 28
  %v2946 = vpop.permute.xlu0 %2945
  %2947 = vrot.lane.b32.xlu0 %v2757, 28
  %v2948 = vpop.permute.xlu0 %2947
  %2949 = vrot.lane.b32.xlu0 %v2758, 28
  %v2950 = vpop.permute.xlu0 %2949
  %vm3015 = vcmask 261344
  %3016 = vst.msk [vmem:[#allocation3] sm:$0xff] %vm3015, %v2824
  %3017 = vst.msk [vmem:[#allocation3 + $0x8] sm:$0xff] %vm3015, %v2826
  %3018 = vst.msk [vmem:[#allocation3 + $0x10] sm:$0xff] %vm3015, %v2828
  %3019 = vst.msk [vmem:[#allocation3 + $0x18] sm:$0xff] %vm3015, %v2830
  %3020 = vst.msk [vmem:[#allocation3 + $0x20] sm:$0xff] %vm3015, %v2832
  %3021 = vst.msk [vmem:[#allocation3 + $0x28] sm:$0xff] %vm3015, %v2834
  %3022 = vst.msk [vmem:[#allocation3 + $0x30] sm:$0xff] %vm3015, %v2836
  %3023 = vst.msk [vmem:[#allocation3 + $0x38] sm:$0xff] %vm3015, %v2838
  %3024 = vst.msk [vmem:[#allocation3 + $0x40] sm:$0xff] %vm3015, %v2840
  %3025 = vst.msk [vmem:[#allocation3 + $0x48] sm:$0xff] %vm3015, %v2842
  %3026 = vst.msk [vmem:[#allocation3 + $0x50] sm:$0xff] %vm3015, %v2844
  %3027 = vst.msk [vmem:[#allocation3 + $0x58] sm:$0xff] %vm3015, %v2846
  %3028 = vst.msk [vmem:[#allocation3 + $0x60] sm:$0xff] %vm3015, %v2848
  %3029 = vst.msk [vmem:[#allocation3 + $0x68] sm:$0xff] %vm3015, %v2850
  %3030 = vst.msk [vmem:[#allocation3 + $0x70] sm:$0xff] %vm3015, %v2852
  %3031 = vst.msk [vmem:[#allocation3 + $0x78] sm:$0xff] %vm3015, %v2854
  %3032 = vst.msk [vmem:[#allocation3 + $0x80] sm:$0xff] %vm3015, %v2856
  %3033 = vst.msk [vmem:[#allocation3 + $0x88] sm:$0xff] %vm3015, %v2858
  %3034 = vst.msk [vmem:[#allocation3 + $0x90] sm:$0xff] %vm3015, %v2860
  %3035 = vst.msk [vmem:[#allocation3 + $0x98] sm:$0xff] %vm3015, %v2862
  %3036 = vst.msk [vmem:[#allocation3 + $0xa0] sm:$0xff] %vm3015, %v2864
  %3037 = vst.msk [vmem:[#allocation3 + $0xa8] sm:$0xff] %vm3015, %v2866
  %3038 = vst.msk [vmem:[#allocation3 + $0xb0] sm:$0xff] %vm3015, %v2868
  %3039 = vst.msk [vmem:[#allocation3 + $0xb8] sm:$0xff] %vm3015, %v2870
  %3040 = vst.msk [vmem:[#allocation3 + $0xc0] sm:$0xff] %vm3015, %v2872
  %3041 = vst.msk [vmem:[#allocation3 + $0xc8] sm:$0xff] %vm3015, %v2874
  %3042 = vst.msk [vmem:[#allocation3 + $0xd0] sm:$0xff] %vm3015, %v2876
  %3043 = vst.msk [vmem:[#allocation3 + $0xd8] sm:$0xff] %vm3015, %v2878
  %3044 = vst.msk [vmem:[#allocation3 + $0xe0] sm:$0xff] %vm3015, %v2880
  %3045 = vst.msk [vmem:[#allocation3 + $0xe8] sm:$0xff] %vm3015, %v2882
  %3046 = vst.msk [vmem:[#allocation3 + $0xf0] sm:$0xff] %vm3015, %v2884
  %3047 = vst.msk [vmem:[#allocation3 + $0xf8] sm:$0xff] %vm3015, %v2886
  %3048 = vst.msk [vmem:[#allocation3 + $0x100] sm:$0xff] %vm3015, %v2888
  %3049 = vst.msk [vmem:[#allocation3 + $0x108] sm:$0xff] %vm3015, %v2890
  %3050 = vst.msk [vmem:[#allocation3 + $0x110] sm:$0xff] %vm3015, %v2892
  %3051 = vst.msk [vmem:[#allocation3 + $0x118] sm:$0xff] %vm3015, %v2894
  %3052 = vst.msk [vmem:[#allocation3 + $0x120] sm:$0xff] %vm3015, %v2896
  %3053 = vst.msk [vmem:[#allocation3 + $0x128] sm:$0xff] %vm3015, %v2898
  %3054 = vst.msk [vmem:[#allocation3 + $0x130] sm:$0xff] %vm3015, %v2900
  %3055 = vst.msk [vmem:[#allocation3 + $0x138] sm:$0xff] %vm3015, %v2902
  %3056 = vst.msk [vmem:[#allocation3 + $0x140] sm:$0xff] %vm3015, %v2904
  %3057 = vst.msk [vmem:[#allocation3 + $0x148] sm:$0xff] %vm3015, %v2906
  %3058 = vst.msk [vmem:[#allocation3 + $0x150] sm:$0xff] %vm3015, %v2908
  %3059 = vst.msk [vmem:[#allocation3 + $0x158] sm:$0xff] %vm3015, %v2910
  %3060 = vst.msk [vmem:[#allocation3 + $0x160] sm:$0xff] %vm3015, %v2912
  %3061 = vst.msk [vmem:[#allocation3 + $0x168] sm:$0xff] %vm3015, %v2914
  %3062 = vst.msk [vmem:[#allocation3 + $0x170] sm:$0xff] %vm3015, %v2916
  %3063 = vst.msk [vmem:[#allocation3 + $0x178] sm:$0xff] %vm3015, %v2918
  %3064 = vst.msk [vmem:[#allocation3 + $0x180] sm:$0xff] %vm3015, %v2920
  %3065 = vst.msk [vmem:[#allocation3 + $0x188] sm:$0xff] %vm3015, %v2922
  %3066 = vst.msk [vmem:[#allocation3 + $0x190] sm:$0xff] %vm3015, %v2924
  %3067 = vst.msk [vmem:[#allocation3 + $0x198] sm:$0xff] %vm3015, %v2926
  %3068 = vst.msk [vmem:[#allocation3 + $0x1a0] sm:$0xff] %vm3015, %v2928
  %3069 = vst.msk [vmem:[#allocation3 + $0x1a8] sm:$0xff] %vm3015, %v2930
  %3070 = vst.msk [vmem:[#allocation3 + $0x1b0] sm:$0xff] %vm3015, %v2932
  %3071 = vst.msk [vmem:[#allocation3 + $0x1b8] sm:$0xff] %vm3015, %v2934
  %3072 = vst.msk [vmem:[#allocation3 + $0x1c0] sm:$0xff] %vm3015, %v2936
  %3073 = vst.msk [vmem:[#allocation3 + $0x1c8] sm:$0xff] %vm3015, %v2938
  %3074 = vst.msk [vmem:[#allocation3 + $0x1d0] sm:$0xff] %vm3015, %v2940
  %3075 = vst.msk [vmem:[#allocation3 + $0x1d8] sm:$0xff] %vm3015, %v2942
  %3076 = vst.msk [vmem:[#allocation3 + $0x1e0] sm:$0xff] %vm3015, %v2944
  %3077 = vst.msk [vmem:[#allocation3 + $0x1e8] sm:$0xff] %vm3015, %v2946
  %3078 = vst.msk [vmem:[#allocation3 + $0x1f0] sm:$0xff] %vm3015, %v2948
  %3079 = vst.msk [vmem:[#allocation3 + $0x1f8] sm:$0xff] %vm3015, %v2950
  %v3080 = vld [vmem:[%s2309 + $0x2] sm:$0xff]
  %v3081 = vld [vmem:[%s2309 + $0xa] sm:$0xff]
  %v3082 = vld [vmem:[%s2309 + $0x1a] sm:$0xff]
  %v3083 = vld [vmem:[%s2309 + $0x22] sm:$0xff]
  %v3084 = vld [vmem:[%s2309 + $0x32] sm:$0xff]
  %v3085 = vld [vmem:[%s2309 + $0x3a] sm:$0xff]
  %v3086 = vld [vmem:[%s2309 + $0x4a] sm:$0xff]
  %v3087 = vld [vmem:[%s2309 + $0x52] sm:$0xff]
  %v3088 = vld [vmem:[%s2309 + $0x62] sm:$0xff]
  %v3089 = vld [vmem:[%s2309 + $0x6a] sm:$0xff]
  %v3090 = vld [vmem:[%s2309 + $0x7a] sm:$0xff]
  %v3091 = vld [vmem:[%s2309 + $0x82] sm:$0xff]
  %v3092 = vld [vmem:[%s2309 + $0x92] sm:$0xff]
  %v3093 = vld [vmem:[%s2309 + $0x9a] sm:$0xff]
  %v3094 = vld [vmem:[%s2309 + $0xaa] sm:$0xff]
  %v3095 = vld [vmem:[%s2309 + $0xb2] sm:$0xff]
  %v3096 = vld [vmem:[%s2309 + $0xc2] sm:$0xff]
  %v3097 = vld [vmem:[%s2309 + $0xca] sm:$0xff]
  %v3098 = vld [vmem:[%s2309 + $0xda] sm:$0xff]
  %v3099 = vld [vmem:[%s2309 + $0xe2] sm:$0xff]
  %v3100 = vld [vmem:[%s2309 + $0xf2] sm:$0xff]
  %v3101 = vld [vmem:[%s2309 + $0xfa] sm:$0xff]
  %v3102 = vld [vmem:[%s2309 + $0x10a] sm:$0xff]
  %v3103 = vld [vmem:[%s2309 + $0x112] sm:$0xff]
  %v3104 = vld [vmem:[%s2309 + $0x122] sm:$0xff]
  %v3105 = vld [vmem:[%s2309 + $0x12a] sm:$0xff]
  %v3106 = vld [vmem:[%s2309 + $0x13a] sm:$0xff]
  %v3107 = vld [vmem:[%s2309 + $0x142] sm:$0xff]
  %v3108 = vld [vmem:[%s2309 + $0x152] sm:$0xff]
  %v3109 = vld [vmem:[%s2309 + $0x15a] sm:$0xff]
  %v3110 = vld [vmem:[%s2309 + $0x16a] sm:$0xff]
  %v3111 = vld [vmem:[%s2309 + $0x172] sm:$0xff]
  %v3112 = vld [vmem:[%s2309 + $0x1b2] sm:$0xff]
  %v3113 = vld [vmem:[%s2309 + $0x1ba] sm:$0xff]
  %v3114 = vld [vmem:[%s2309 + $0x1ca] sm:$0xff]
  %v3115 = vld [vmem:[%s2309 + $0x1d2] sm:$0xff]
  %v3116 = vld [vmem:[%s2309 + $0x1e2] sm:$0xff]
  %v3117 = vld [vmem:[%s2309 + $0x1ea] sm:$0xff]
  %v3118 = vld [vmem:[%s2309 + $0x1fa] sm:$0xff]
  %v3119 = vld [vmem:[%s2309 + $0x202] sm:$0xff]
  %v3120 = vld [vmem:[%s2309 + $0x212] sm:$0xff]
  %v3121 = vld [vmem:[%s2309 + $0x21a] sm:$0xff]
  %v3122 = vld [vmem:[%s2309 + $0x22a] sm:$0xff]
  %v3123 = vld [vmem:[%s2309 + $0x232] sm:$0xff]
  %v3124 = vld [vmem:[%s2309 + $0x242] sm:$0xff]
  %v3125 = vld [vmem:[%s2309 + $0x24a] sm:$0xff]
  %v3126 = vld [vmem:[%s2309 + $0x25a] sm:$0xff]
  %v3127 = vld [vmem:[%s2309 + $0x262] sm:$0xff]
  %v3128 = vld [vmem:[%s2309 + $0x272] sm:$0xff]
  %v3129 = vld [vmem:[%s2309 + $0x27a] sm:$0xff]
  %v3130 = vld [vmem:[%s2309 + $0x28a] sm:$0xff]
  %v3131 = vld [vmem:[%s2309 + $0x292] sm:$0xff]
  %v3132 = vld [vmem:[%s2309 + $0x2a2] sm:$0xff]
  %v3133 = vld [vmem:[%s2309 + $0x2aa] sm:$0xff]
  %v3134 = vld [vmem:[%s2309 + $0x2ba] sm:$0xff]
  %v3135 = vld [vmem:[%s2309 + $0x2c2] sm:$0xff]
  %v3136 = vld [vmem:[%s2309 + $0x2d2] sm:$0xff]
  %v3137 = vld [vmem:[%s2309 + $0x2da] sm:$0xff]
  %v3138 = vld [vmem:[%s2309 + $0x2ea] sm:$0xff]
  %v3139 = vld [vmem:[%s2309 + $0x2f2] sm:$0xff]
  %v3140 = vld [vmem:[%s2309 + $0x302] sm:$0xff]
  %v3141 = vld [vmem:[%s2309 + $0x30a] sm:$0xff]
  %v3142 = vld [vmem:[%s2309 + $0x31a] sm:$0xff]
  %v3143 = vld [vmem:[%s2309 + $0x322] sm:$0xff]
  %3208 = vrot.lane.b32.xlu0 %v3080, 32
  %v3209 = vpop.permute.xlu0 %3208
  %3210 = vrot.lane.b32.xlu0 %v3081, 32
  %v3211 = vpop.permute.xlu0 %3210
  %3212 = vrot.lane.b32.xlu0 %v3082, 32
  %v3213 = vpop.permute.xlu0 %3212
  %3214 = vrot.lane.b32.xlu0 %v3083, 32
  %v3215 = vpop.permute.xlu0 %3214
  %3216 = vrot.lane.b32.xlu0 %v3084, 32
  %v3217 = vpop.permute.xlu0 %3216
  %3218 = vrot.lane.b32.xlu0 %v3085, 32
  %v3219 = vpop.permute.xlu0 %3218
  %3220 = vrot.lane.b32.xlu0 %v3086, 32
  %v3221 = vpop.permute.xlu0 %3220
  %3222 = vrot.lane.b32.xlu0 %v3087, 32
  %v3223 = vpop.permute.xlu0 %3222
  %3224 = vrot.lane.b32.xlu0 %v3088, 32
  %v3225 = vpop.permute.xlu0 %3224
  %3226 = vrot.lane.b32.xlu0 %v3089, 32
  %v3227 = vpop.permute.xlu0 %3226
  %3228 = vrot.lane.b32.xlu0 %v3090, 32
  %v3229 = vpop.permute.xlu0 %3228
  %3230 = vrot.lane.b32.xlu0 %v3091, 32
  %v3231 = vpop.permute.xlu0 %3230
  %3232 = vrot.lane.b32.xlu0 %v3092, 32
  %v3233 = vpop.permute.xlu0 %3232
  %3234 = vrot.lane.b32.xlu0 %v3093, 32
  %v3235 = vpop.permute.xlu0 %3234
  %3236 = vrot.lane.b32.xlu0 %v3094, 32
  %v3237 = vpop.permute.xlu0 %3236
  %3238 = vrot.lane.b32.xlu0 %v3095, 32
  %v3239 = vpop.permute.xlu0 %3238
  %3240 = vrot.lane.b32.xlu0 %v3096, 32
  %v3241 = vpop.permute.xlu0 %3240
  %3242 = vrot.lane.b32.xlu0 %v3097, 32
  %v3243 = vpop.permute.xlu0 %3242
  %3244 = vrot.lane.b32.xlu0 %v3098, 32
  %v3245 = vpop.permute.xlu0 %3244
  %3246 = vrot.lane.b32.xlu0 %v3099, 32
  %v3247 = vpop.permute.xlu0 %3246
  %3248 = vrot.lane.b32.xlu0 %v3100, 32
  %v3249 = vpop.permute.xlu0 %3248
  %3250 = vrot.lane.b32.xlu0 %v3101, 32
  %v3251 = vpop.permute.xlu0 %3250
  %3252 = vrot.lane.b32.xlu0 %v3102, 32
  %v3253 = vpop.permute.xlu0 %3252
  %3254 = vrot.lane.b32.xlu0 %v3103, 32
  %v3255 = vpop.permute.xlu0 %3254
  %3256 = vrot.lane.b32.xlu0 %v3104, 32
  %v3257 = vpop.permute.xlu0 %3256
  %3258 = vrot.lane.b32.xlu0 %v3105, 32
  %v3259 = vpop.permute.xlu0 %3258
  %3260 = vrot.lane.b32.xlu0 %v3106, 32
  %v3261 = vpop.permute.xlu0 %3260
  %3262 = vrot.lane.b32.xlu0 %v3107, 32
  %v3263 = vpop.permute.xlu0 %3262
  %3264 = vrot.lane.b32.xlu0 %v3108, 32
  %v3265 = vpop.permute.xlu0 %3264
  %3266 = vrot.lane.b32.xlu0 %v3109, 32
  %v3267 = vpop.permute.xlu0 %3266
  %3268 = vrot.lane.b32.xlu0 %v3110, 32
  %v3269 = vpop.permute.xlu0 %3268
  %3270 = vrot.lane.b32.xlu0 %v3111, 32
  %v3271 = vpop.permute.xlu0 %3270
  %3272 = vrot.lane.b32.xlu0 %v3112, 32
  %v3273 = vpop.permute.xlu0 %3272
  %3274 = vrot.lane.b32.xlu0 %v3113, 32
  %v3275 = vpop.permute.xlu0 %3274
  %3276 = vrot.lane.b32.xlu0 %v3114, 32
  %v3277 = vpop.permute.xlu0 %3276
  %3278 = vrot.lane.b32.xlu0 %v3115, 32
  %v3279 = vpop.permute.xlu0 %3278
  %3280 = vrot.lane.b32.xlu0 %v3116, 32
  %v3281 = vpop.permute.xlu0 %3280
  %3282 = vrot.lane.b32.xlu0 %v3117, 32
  %v3283 = vpop.permute.xlu0 %3282
  %3284 = vrot.lane.b32.xlu0 %v3118, 32
  %v3285 = vpop.permute.xlu0 %3284
  %3286 = vrot.lane.b32.xlu0 %v3119, 32
  %v3287 = vpop.permute.xlu0 %3286
  %3288 = vrot.lane.b32.xlu0 %v3120, 32
  %v3289 = vpop.permute.xlu0 %3288
  %3290 = vrot.lane.b32.xlu0 %v3121, 32
  %v3291 = vpop.permute.xlu0 %3290
  %3292 = vrot.lane.b32.xlu0 %v3122, 32
  %v3293 = vpop.permute.xlu0 %3292
  %3294 = vrot.lane.b32.xlu0 %v3123, 32
  %v3295 = vpop.permute.xlu0 %3294
  %3296 = vrot.lane.b32.xlu0 %v3124, 32
  %v3297 = vpop.permute.xlu0 %3296
  %3298 = vrot.lane.b32.xlu0 %v3125, 32
  %v3299 = vpop.permute.xlu0 %3298
  %3300 = vrot.lane.b32.xlu0 %v3126, 32
  %v3301 = vpop.permute.xlu0 %3300
  %3302 = vrot.lane.b32.xlu0 %v3127, 32
  %v3303 = vpop.permute.xlu0 %3302
  %3304 = vrot.lane.b32.xlu0 %v3128, 32
  %v3305 = vpop.permute.xlu0 %3304
  %3306 = vrot.lane.b32.xlu0 %v3129, 32
  %v3307 = vpop.permute.xlu0 %3306
  %3308 = vrot.lane.b32.xlu0 %v3130, 32
  %v3309 = vpop.permute.xlu0 %3308
  %3310 = vrot.lane.b32.xlu0 %v3131, 32
  %v3311 = vpop.permute.xlu0 %3310
  %3312 = vrot.lane.b32.xlu0 %v3132, 32
  %v3313 = vpop.permute.xlu0 %3312
  %3314 = vrot.lane.b32.xlu0 %v3133, 32
  %v3315 = vpop.permute.xlu0 %3314
  %3316 = vrot.lane.b32.xlu0 %v3134, 32
  %v3317 = vpop.permute.xlu0 %3316
  %3318 = vrot.lane.b32.xlu0 %v3135, 32
  %v3319 = vpop.permute.xlu0 %3318
  %3320 = vrot.lane.b32.xlu0 %v3136, 32
  %v3321 = vpop.permute.xlu0 %3320
  %3322 = vrot.lane.b32.xlu0 %v3137, 32
  %v3323 = vpop.permute.xlu0 %3322
  %3324 = vrot.lane.b32.xlu0 %v3138, 32
  %v3325 = vpop.permute.xlu0 %3324
  %3326 = vrot.lane.b32.xlu0 %v3139, 32
  %v3327 = vpop.permute.xlu0 %3326
  %3328 = vrot.lane.b32.xlu0 %v3140, 32
  %v3329 = vpop.permute.xlu0 %3328
  %3330 = vrot.lane.b32.xlu0 %v3141, 32
  %v3331 = vpop.permute.xlu0 %3330
  %3332 = vrot.lane.b32.xlu0 %v3142, 32
  %v3333 = vpop.permute.xlu0 %3332
  %3334 = vrot.lane.b32.xlu0 %v3143, 32
  %v3335 = vpop.permute.xlu0 %3334
  %vm3400 = vcmask 294144
  %3401 = vst.msk [vmem:[#allocation3] sm:$0xff] %vm3400, %v3209
  %3402 = vst.msk [vmem:[#allocation3 + $0x8] sm:$0xff] %vm3400, %v3211
  %3403 = vst.msk [vmem:[#allocation3 + $0x10] sm:$0xff] %vm3400, %v3213
  %3404 = vst.msk [vmem:[#allocation3 + $0x18] sm:$0xff] %vm3400, %v3215
  %3405 = vst.msk [vmem:[#allocation3 + $0x20] sm:$0xff] %vm3400, %v3217
  %3406 = vst.msk [vmem:[#allocation3 + $0x28] sm:$0xff] %vm3400, %v3219
  %3407 = vst.msk [vmem:[#allocation3 + $0x30] sm:$0xff] %vm3400, %v3221
  %3408 = vst.msk [vmem:[#allocation3 + $0x38] sm:$0xff] %vm3400, %v3223
  %3409 = vst.msk [vmem:[#allocation3 + $0x40] sm:$0xff] %vm3400, %v3225
  %3410 = vst.msk [vmem:[#allocation3 + $0x48] sm:$0xff] %vm3400, %v3227
  %3411 = vst.msk [vmem:[#allocation3 + $0x50] sm:$0xff] %vm3400, %v3229
  %3412 = vst.msk [vmem:[#allocation3 + $0x58] sm:$0xff] %vm3400, %v3231
  %3413 = vst.msk [vmem:[#allocation3 + $0x60] sm:$0xff] %vm3400, %v3233
  %3414 = vst.msk [vmem:[#allocation3 + $0x68] sm:$0xff] %vm3400, %v3235
  %3415 = vst.msk [vmem:[#allocation3 + $0x70] sm:$0xff] %vm3400, %v3237
  %3416 = vst.msk [vmem:[#allocation3 + $0x78] sm:$0xff] %vm3400, %v3239
  %3417 = vst.msk [vmem:[#allocation3 + $0x80] sm:$0xff] %vm3400, %v3241
  %3418 = vst.msk [vmem:[#allocation3 + $0x88] sm:$0xff] %vm3400, %v3243
  %3419 = vst.msk [vmem:[#allocation3 + $0x90] sm:$0xff] %vm3400, %v3245
  %3420 = vst.msk [vmem:[#allocation3 + $0x98] sm:$0xff] %vm3400, %v3247
  %3421 = vst.msk [vmem:[#allocation3 + $0xa0] sm:$0xff] %vm3400, %v3249
  %3422 = vst.msk [vmem:[#allocation3 + $0xa8] sm:$0xff] %vm3400, %v3251
  %3423 = vst.msk [vmem:[#allocation3 + $0xb0] sm:$0xff] %vm3400, %v3253
  %3424 = vst.msk [vmem:[#allocation3 + $0xb8] sm:$0xff] %vm3400, %v3255
  %3425 = vst.msk [vmem:[#allocation3 + $0xc0] sm:$0xff] %vm3400, %v3257
  %3426 = vst.msk [vmem:[#allocation3 + $0xc8] sm:$0xff] %vm3400, %v3259
  %3427 = vst.msk [vmem:[#allocation3 + $0xd0] sm:$0xff] %vm3400, %v3261
  %3428 = vst.msk [vmem:[#allocation3 + $0xd8] sm:$0xff] %vm3400, %v3263
  %3429 = vst.msk [vmem:[#allocation3 + $0xe0] sm:$0xff] %vm3400, %v3265
  %3430 = vst.msk [vmem:[#allocation3 + $0xe8] sm:$0xff] %vm3400, %v3267
  %3431 = vst.msk [vmem:[#allocation3 + $0xf0] sm:$0xff] %vm3400, %v3269
  %3432 = vst.msk [vmem:[#allocation3 + $0xf8] sm:$0xff] %vm3400, %v3271
  %3433 = vst.msk [vmem:[#allocation3 + $0x100] sm:$0xff] %vm3400, %v3273
  %3434 = vst.msk [vmem:[#allocation3 + $0x108] sm:$0xff] %vm3400, %v3275
  %3435 = vst.msk [vmem:[#allocation3 + $0x110] sm:$0xff] %vm3400, %v3277
  %3436 = vst.msk [vmem:[#allocation3 + $0x118] sm:$0xff] %vm3400, %v3279
  %3437 = vst.msk [vmem:[#allocation3 + $0x120] sm:$0xff] %vm3400, %v3281
  %3438 = vst.msk [vmem:[#allocation3 + $0x128] sm:$0xff] %vm3400, %v3283
  %3439 = vst.msk [vmem:[#allocation3 + $0x130] sm:$0xff] %vm3400, %v3285
  %3440 = vst.msk [vmem:[#allocation3 + $0x138] sm:$0xff] %vm3400, %v3287
  %3441 = vst.msk [vmem:[#allocation3 + $0x140] sm:$0xff] %vm3400, %v3289
  %3442 = vst.msk [vmem:[#allocation3 + $0x148] sm:$0xff] %vm3400, %v3291
  %3443 = vst.msk [vmem:[#allocation3 + $0x150] sm:$0xff] %vm3400, %v3293
  %3444 = vst.msk [vmem:[#allocation3 + $0x158] sm:$0xff] %vm3400, %v3295
  %3445 = vst.msk [vmem:[#allocation3 + $0x160] sm:$0xff] %vm3400, %v3297
  %3446 = vst.msk [vmem:[#allocation3 + $0x168] sm:$0xff] %vm3400, %v3299
  %3447 = vst.msk [vmem:[#allocation3 + $0x170] sm:$0xff] %vm3400, %v3301
  %3448 = vst.msk [vmem:[#allocation3 + $0x178] sm:$0xff] %vm3400, %v3303
  %3449 = vst.msk [vmem:[#allocation3 + $0x180] sm:$0xff] %vm3400, %v3305
  %3450 = vst.msk [vmem:[#allocation3 + $0x188] sm:$0xff] %vm3400, %v3307
  %3451 = vst.msk [vmem:[#allocation3 + $0x190] sm:$0xff] %vm3400, %v3309
  %3452 = vst.msk [vmem:[#allocation3 + $0x198] sm:$0xff] %vm3400, %v3311
  %3453 = vst.msk [vmem:[#allocation3 + $0x1a0] sm:$0xff] %vm3400, %v3313
  %3454 = vst.msk [vmem:[#allocation3 + $0x1a8] sm:$0xff] %vm3400, %v3315
  %3455 = vst.msk [vmem:[#allocation3 + $0x1b0] sm:$0xff] %vm3400, %v3317
  %3456 = vst.msk [vmem:[#allocation3 + $0x1b8] sm:$0xff] %vm3400, %v3319
  %3457 = vst.msk [vmem:[#allocation3 + $0x1c0] sm:$0xff] %vm3400, %v3321
  %3458 = vst.msk [vmem:[#allocation3 + $0x1c8] sm:$0xff] %vm3400, %v3323
  %3459 = vst.msk [vmem:[#allocation3 + $0x1d0] sm:$0xff] %vm3400, %v3325
  %3460 = vst.msk [vmem:[#allocation3 + $0x1d8] sm:$0xff] %vm3400, %v3327
  %3461 = vst.msk [vmem:[#allocation3 + $0x1e0] sm:$0xff] %vm3400, %v3329
  %3462 = vst.msk [vmem:[#allocation3 + $0x1e8] sm:$0xff] %vm3400, %v3331
  %3463 = vst.msk [vmem:[#allocation3 + $0x1f0] sm:$0xff] %vm3400, %v3333
  %3464 = vst.msk [vmem:[#allocation3 + $0x1f8] sm:$0xff] %vm3400, %v3335
  %v3465 = vld [vmem:[#allocation3] sm:$0xff]
  %v3466 = vld [vmem:[#allocation3 + $0x8] sm:$0xff]
  %v3467 = vld [vmem:[#allocation3 + $0x10] sm:$0xff]
  %v3468 = vld [vmem:[#allocation3 + $0x18] sm:$0xff]
  %v3469 = vld [vmem:[#allocation3 + $0x20] sm:$0xff]
  %v3470 = vld [vmem:[#allocation3 + $0x28] sm:$0xff]
  %v3471 = vld [vmem:[#allocation3 + $0x30] sm:$0xff]
  %v3472 = vld [vmem:[#allocation3 + $0x38] sm:$0xff]
  %v3473 = vld [vmem:[#allocation3 + $0x40] sm:$0xff]
  %v3474 = vld [vmem:[#allocation3 + $0x48] sm:$0xff]
  %v3475 = vld [vmem:[#allocation3 + $0x50] sm:$0xff]
  %v3476 = vld [vmem:[#allocation3 + $0x58] sm:$0xff]
  %v3477 = vld [vmem:[#allocation3 + $0x60] sm:$0xff]
  %v3478 = vld [vmem:[#allocation3 + $0x68] sm:$0xff]
  %v3479 = vld [vmem:[#allocation3 + $0x70] sm:$0xff]
  %v3480 = vld [vmem:[#allocation3 + $0x78] sm:$0xff]
  %v3481 = vld [vmem:[#allocation3 + $0x80] sm:$0xff]
  %v3482 = vld [vmem:[#allocation3 + $0x88] sm:$0xff]
  %v3483 = vld [vmem:[#allocation3 + $0x90] sm:$0xff]
  %v3484 = vld [vmem:[#allocation3 + $0x98] sm:$0xff]
  %v3485 = vld [vmem:[#allocation3 + $0xa0] sm:$0xff]
  %v3486 = vld [vmem:[#allocation3 + $0xa8] sm:$0xff]
  %v3487 = vld [vmem:[#allocation3 + $0xb0] sm:$0xff]
  %v3488 = vld [vmem:[#allocation3 + $0xb8] sm:$0xff]
  %v3489 = vld [vmem:[#allocation3 + $0xc0] sm:$0xff]
  %v3490 = vld [vmem:[#allocation3 + $0xc8] sm:$0xff]
  %v3491 = vld [vmem:[#allocation3 + $0xd0] sm:$0xff]
  %v3492 = vld [vmem:[#allocation3 + $0xd8] sm:$0xff]
  %v3493 = vld [vmem:[#allocation3 + $0xe0] sm:$0xff]
  %v3494 = vld [vmem:[#allocation3 + $0xe8] sm:$0xff]
  %v3495 = vld [vmem:[#allocation3 + $0xf0] sm:$0xff]
  %v3496 = vld [vmem:[#allocation3 + $0xf8] sm:$0xff]
  %v3497 = vld [vmem:[#allocation3 + $0x100] sm:$0xff]
  %v3498 = vld [vmem:[#allocation3 + $0x108] sm:$0xff]
  %v3499 = vld [vmem:[#allocation3 + $0x110] sm:$0xff]
  %v3500 = vld [vmem:[#allocation3 + $0x118] sm:$0xff]
  %v3501 = vld [vmem:[#allocation3 + $0x120] sm:$0xff]
  %v3502 = vld [vmem:[#allocation3 + $0x128] sm:$0xff]
  %v3503 = vld [vmem:[#allocation3 + $0x130] sm:$0xff]
  %v3504 = vld [vmem:[#allocation3 + $0x138] sm:$0xff]
  %v3505 = vld [vmem:[#allocation3 + $0x140] sm:$0xff]
  %v3506 = vld [vmem:[#allocation3 + $0x148] sm:$0xff]
  %v3507 = vld [vmem:[#allocation3 + $0x150] sm:$0xff]
  %v3508 = vld [vmem:[#allocation3 + $0x158] sm:$0xff]
  %v3509 = vld [vmem:[#allocation3 + $0x160] sm:$0xff]
  %v3510 = vld [vmem:[#allocation3 + $0x168] sm:$0xff]
  %v3511 = vld [vmem:[#allocation3 + $0x170] sm:$0xff]
  %v3512 = vld [vmem:[#allocation3 + $0x178] sm:$0xff]
  %v3513 = vld [vmem:[#allocation3 + $0x180] sm:$0xff]
  %v3514 = vld [vmem:[#allocation3 + $0x188] sm:$0xff]
  %v3515 = vld [vmem:[#allocation3 + $0x190] sm:$0xff]
  %v3516 = vld [vmem:[#allocation3 + $0x198] sm:$0xff]
  %v3517 = vld [vmem:[#allocation3 + $0x1a0] sm:$0xff]
  %v3518 = vld [vmem:[#allocation3 + $0x1a8] sm:$0xff]
  %v3519 = vld [vmem:[#allocation3 + $0x1b0] sm:$0xff]
  %v3520 = vld [vmem:[#allocation3 + $0x1b8] sm:$0xff]
  %v3521 = vld [vmem:[#allocation3 + $0x1c0] sm:$0xff]
  %v3522 = vld [vmem:[#allocation3 + $0x1c8] sm:$0xff]
  %v3523 = vld [vmem:[#allocation3 + $0x1d0] sm:$0xff]
  %v3524 = vld [vmem:[#allocation3 + $0x1d8] sm:$0xff]
  %v3525 = vld [vmem:[#allocation3 + $0x1e0] sm:$0xff]
  %v3526 = vld [vmem:[#allocation3 + $0x1e8] sm:$0xff]
  %v3527 = vld [vmem:[#allocation3 + $0x1f0] sm:$0xff]
  %v3528 = vld [vmem:[#allocation3 + $0x1f8] sm:$0xff]
  %v3529 = vld [vmem:[%s1] sm:$0xff]
  %v3530 = vld [vmem:[%s1 + $0x8] sm:$0xff]
  %v3531 = vld [vmem:[%s1 + $0x10] sm:$0xff]
  %v3532 = vld [vmem:[%s1 + $0x18] sm:$0xff]
  %v3533 = vld [vmem:[%s1 + $0x20] sm:$0xf]
  %vm3534 = vcmask 293888
  %v3536 = vsel %vm3534, %v3465, 0
  %v3539 = vsel %vm3534, %v3466, 0
  %v3542 = vsel %vm3534, %v3467, 0
  %v3545 = vsel %vm3534, %v3468, 0
  %v3548 = vsel %vm3534, %v3469, 0
  %v3551 = vsel %vm3534, %v3470, 0
  %v3554 = vsel %vm3534, %v3471, 0
  %v3557 = vsel %vm3534, %v3472, 0
  %v3560 = vsel %vm3534, %v3473, 0
  %v3563 = vsel %vm3534, %v3474, 0
  %v3566 = vsel %vm3534, %v3475, 0
  %v3569 = vsel %vm3534, %v3476, 0
  %v3572 = vsel %vm3534, %v3477, 0
  %v3575 = vsel %vm3534, %v3478, 0
  %v3578 = vsel %vm3534, %v3479, 0
  %v3581 = vsel %vm3534, %v3480, 0
  %v3584 = vsel %vm3534, %v3481, 0
  %v3587 = vsel %vm3534, %v3482, 0
  %v3590 = vsel %vm3534, %v3483, 0
  %v3593 = vsel %vm3534, %v3484, 0
  %v3596 = vsel %vm3534, %v3485, 0
  %v3599 = vsel %vm3534, %v3486, 0
  %v3602 = vsel %vm3534, %v3487, 0
  %v3605 = vsel %vm3534, %v3488, 0
  %v3608 = vsel %vm3534, %v3489, 0
  %v3611 = vsel %vm3534, %v3490, 0
  %v3614 = vsel %vm3534, %v3491, 0
  %v3617 = vsel %vm3534, %v3492, 0
  %v3620 = vsel %vm3534, %v3493, 0
  %v3623 = vsel %vm3534, %v3494, 0
  %v3626 = vsel %vm3534, %v3495, 0
  %v3629 = vsel %vm3534, %v3496, 0
  %v3632 = vsel %vm3534, %v3497, 0
  %v3635 = vsel %vm3534, %v3498, 0
  %v3638 = vsel %vm3534, %v3499, 0
  %v3641 = vsel %vm3534, %v3500, 0
  %v3644 = vsel %vm3534, %v3501, 0
  %v3647 = vsel %vm3534, %v3502, 0
  %v3650 = vsel %vm3534, %v3503, 0
  %v3653 = vsel %vm3534, %v3504, 0
  %v3656 = vsel %vm3534, %v3505, 0
  %v3659 = vsel %vm3534, %v3506, 0
  %v3662 = vsel %vm3534, %v3507, 0
  %v3665 = vsel %vm3534, %v3508, 0
  %v3668 = vsel %vm3534, %v3509, 0
  %v3671 = vsel %vm3534, %v3510, 0
  %v3674 = vsel %vm3534, %v3511, 0
  %v3677 = vsel %vm3534, %v3512, 0
  %v3680 = vsel %vm3534, %v3513, 0
  %v3683 = vsel %vm3534, %v3514, 0
  %v3686 = vsel %vm3534, %v3515, 0
  %v3689 = vsel %vm3534, %v3516, 0
  %v3692 = vsel %vm3534, %v3517, 0
  %v3695 = vsel %vm3534, %v3518, 0
  %v3698 = vsel %vm3534, %v3519, 0
  %v3701 = vsel %vm3534, %v3520, 0
  %v3704 = vsel %vm3534, %v3521, 0
  %v3707 = vsel %vm3534, %v3522, 0
  %v3710 = vsel %vm3534, %v3523, 0
  %v3713 = vsel %vm3534, %v3524, 0
  %v3716 = vsel %vm3534, %v3525, 0
  %v3719 = vsel %vm3534, %v3526, 0
  %v3722 = vsel %vm3534, %v3527, 0
  %v3725 = vsel %vm3534, %v3528, 0
  %vm3727 = vcmask 1043456
  %v3729 = vsel %vm3727, %v3533, 0
  %3731 = vmatpush.msra.mxu0 0.0
  %3732 = vmatpush.msra.mxu0 0.0
  %3733 = vmatpush.msra.mxu0 0.0
  %3734 = vmatpush.msra.mxu0 0.0
  %3735 = vmatpush.msra.mxu0 0.0
  %3736 = vmatpush.msra.mxu0 0.0
  %3737 = vmatpush.msra.mxu0 0.0
  %3738 = vmatpush.msra.mxu0 0.0
  %3739 = vmatpush.msra.mxu0 0.0
  %3740 = vmatpush.msra.mxu0 0.0
  %3741 = vmatpush.msra.mxu0 0.0
  %3742 = vmatpush.msra.mxu0 %v3729
  %3743 = vmatpush.msra.mxu0 %v3532
  %3744 = vmatpush.msra.mxu0 %v3531
  %3745 = vmatpush.msra.mxu0 %v3530
  %3746 = vmatpush.msra.mxu0 %v3529
  %3747 = vmatmul.f32.gmra.mxu0 %v3536
  %v3748 = vpop.f32.mrf.mxu0
  %v3749 = vadd.f32 0.0, %v3748
  %3750 = vmatmul.f32.gmra.mxu0 %v3539
  %v3751 = vpop.f32.mrf.mxu0
  %v3752 = vadd.f32 0.0, %v3751
  %3753 = vmatmul.f32.gmra.mxu0 %v3542
  %v3754 = vpop.f32.mrf.mxu0
  %v3755 = vadd.f32 0.0, %v3754
  %3756 = vmatmul.f32.gmra.mxu0 %v3545
  %v3757 = vpop.f32.mrf.mxu0
  %v3758 = vadd.f32 0.0, %v3757
  %3759 = vmatmul.f32.gmra.mxu0 %v3548
  %v3760 = vpop.f32.mrf.mxu0
  %v3761 = vadd.f32 0.0, %v3760
  %3762 = vmatmul.f32.gmra.mxu0 %v3551
  %v3763 = vpop.f32.mrf.mxu0
  %v3764 = vadd.f32 0.0, %v3763
  %3765 = vmatmul.f32.gmra.mxu0 %v3554
  %v3766 = vpop.f32.mrf.mxu0
  %v3767 = vadd.f32 0.0, %v3766
  %3768 = vmatmul.f32.gmra.mxu0 %v3557
  %v3769 = vpop.f32.mrf.mxu0
  %v3770 = vadd.f32 0.0, %v3769
  %3771 = vmatmul.f32.gmra.mxu0 %v3560
  %v3772 = vpop.f32.mrf.mxu0
  %v3773 = vadd.f32 0.0, %v3772
  %3774 = vmatmul.f32.gmra.mxu0 %v3563
  %v3775 = vpop.f32.mrf.mxu0
  %v3776 = vadd.f32 0.0, %v3775
  %3777 = vmatmul.f32.gmra.mxu0 %v3566
  %v3778 = vpop.f32.mrf.mxu0
  %v3779 = vadd.f32 0.0, %v3778
  %3780 = vmatmul.f32.gmra.mxu0 %v3569
  %v3781 = vpop.f32.mrf.mxu0
  %v3782 = vadd.f32 0.0, %v3781
  %3783 = vmatmul.f32.gmra.mxu0 %v3572
  %v3784 = vpop.f32.mrf.mxu0
  %v3785 = vadd.f32 0.0, %v3784
  %3786 = vmatmul.f32.gmra.mxu0 %v3575
  %v3787 = vpop.f32.mrf.mxu0
  %v3788 = vadd.f32 0.0, %v3787
  %3789 = vmatmul.f32.gmra.mxu0 %v3578
  %v3790 = vpop.f32.mrf.mxu0
  %v3791 = vadd.f32 0.0, %v3790
  %3792 = vmatmul.f32.gmra.mxu0 %v3581
  %v3793 = vpop.f32.mrf.mxu0
  %v3794 = vadd.f32 0.0, %v3793
  %3795 = vmatmul.f32.gmra.mxu0 %v3584
  %v3796 = vpop.f32.mrf.mxu0
  %v3797 = vadd.f32 0.0, %v3796
  %3798 = vmatmul.f32.gmra.mxu0 %v3587
  %v3799 = vpop.f32.mrf.mxu0
  %v3800 = vadd.f32 0.0, %v3799
  %3801 = vmatmul.f32.gmra.mxu0 %v3590
  %v3802 = vpop.f32.mrf.mxu0
  %v3803 = vadd.f32 0.0, %v3802
  %3804 = vmatmul.f32.gmra.mxu0 %v3593
  %v3805 = vpop.f32.mrf.mxu0
  %v3806 = vadd.f32 0.0, %v3805
  %3807 = vmatmul.f32.gmra.mxu0 %v3596
  %v3808 = vpop.f32.mrf.mxu0
  %v3809 = vadd.f32 0.0, %v3808
  %3810 = vmatmul.f32.gmra.mxu0 %v3599
  %v3811 = vpop.f32.mrf.mxu0
  %v3812 = vadd.f32 0.0, %v3811
  %3813 = vmatmul.f32.gmra.mxu0 %v3602
  %v3814 = vpop.f32.mrf.mxu0
  %v3815 = vadd.f32 0.0, %v3814
  %3816 = vmatmul.f32.gmra.mxu0 %v3605
  %v3817 = vpop.f32.mrf.mxu0
  %v3818 = vadd.f32 0.0, %v3817
  %3819 = vmatmul.f32.gmra.mxu0 %v3608
  %v3820 = vpop.f32.mrf.mxu0
  %v3821 = vadd.f32 0.0, %v3820
  %3822 = vmatmul.f32.gmra.mxu0 %v3611
  %v3823 = vpop.f32.mrf.mxu0
  %v3824 = vadd.f32 0.0, %v3823
  %3825 = vmatmul.f32.gmra.mxu0 %v3614
  %v3826 = vpop.f32.mrf.mxu0
  %v3827 = vadd.f32 0.0, %v3826
  %3828 = vmatmul.f32.gmra.mxu0 %v3617
  %v3829 = vpop.f32.mrf.mxu0
  %v3830 = vadd.f32 0.0, %v3829
  %3831 = vmatmul.f32.gmra.mxu0 %v3620
  %v3832 = vpop.f32.mrf.mxu0
  %v3833 = vadd.f32 0.0, %v3832
  %3834 = vmatmul.f32.gmra.mxu0 %v3623
  %v3835 = vpop.f32.mrf.mxu0
  %v3836 = vadd.f32 0.0, %v3835
  %3837 = vmatmul.f32.gmra.mxu0 %v3626
  %v3838 = vpop.f32.mrf.mxu0
  %v3839 = vadd.f32 0.0, %v3838
  %3840 = vmatmul.f32.gmra.mxu0 %v3629
  %v3841 = vpop.f32.mrf.mxu0
  %v3842 = vadd.f32 0.0, %v3841
  %3843 = vmatmul.f32.gmra.mxu0 %v3632
  %v3844 = vpop.f32.mrf.mxu0
  %v3845 = vadd.f32 0.0, %v3844
  %3846 = vmatmul.f32.gmra.mxu0 %v3635
  %v3847 = vpop.f32.mrf.mxu0
  %v3848 = vadd.f32 0.0, %v3847
  %3849 = vmatmul.f32.gmra.mxu0 %v3638
  %v3850 = vpop.f32.mrf.mxu0
  %v3851 = vadd.f32 0.0, %v3850
  %3852 = vmatmul.f32.gmra.mxu0 %v3641
  %v3853 = vpop.f32.mrf.mxu0
  %v3854 = vadd.f32 0.0, %v3853
  %3855 = vmatmul.f32.gmra.mxu0 %v3644
  %v3856 = vpop.f32.mrf.mxu0
  %v3857 = vadd.f32 0.0, %v3856
  %3858 = vmatmul.f32.gmra.mxu0 %v3647
  %v3859 = vpop.f32.mrf.mxu0
  %v3860 = vadd.f32 0.0, %v3859
  %3861 = vmatmul.f32.gmra.mxu0 %v3650
  %v3862 = vpop.f32.mrf.mxu0
  %v3863 = vadd.f32 0.0, %v3862
  %3864 = vmatmul.f32.gmra.mxu0 %v3653
  %v3865 = vpop.f32.mrf.mxu0
  %v3866 = vadd.f32 0.0, %v3865
  %3867 = vmatmul.f32.gmra.mxu0 %v3656
  %v3868 = vpop.f32.mrf.mxu0
  %v3869 = vadd.f32 0.0, %v3868
  %3870 = vmatmul.f32.gmra.mxu0 %v3659
  %v3871 = vpop.f32.mrf.mxu0
  %v3872 = vadd.f32 0.0, %v3871
  %3873 = vmatmul.f32.gmra.mxu0 %v3662
  %v3874 = vpop.f32.mrf.mxu0
  %v3875 = vadd.f32 0.0, %v3874
  %3876 = vmatmul.f32.gmra.mxu0 %v3665
  %v3877 = vpop.f32.mrf.mxu0
  %v3878 = vadd.f32 0.0, %v3877
  %3879 = vmatmul.f32.gmra.mxu0 %v3668
  %v3880 = vpop.f32.mrf.mxu0
  %v3881 = vadd.f32 0.0, %v3880
  %3882 = vmatmul.f32.gmra.mxu0 %v3671
  %v3883 = vpop.f32.mrf.mxu0
  %v3884 = vadd.f32 0.0, %v3883
  %3885 = vmatmul.f32.gmra.mxu0 %v3674
  %v3886 = vpop.f32.mrf.mxu0
  %v3887 = vadd.f32 0.0, %v3886
  %3888 = vmatmul.f32.gmra.mxu0 %v3677
  %v3889 = vpop.f32.mrf.mxu0
  %v3890 = vadd.f32 0.0, %v3889
  %3891 = vmatmul.f32.gmra.mxu0 %v3680
  %v3892 = vpop.f32.mrf.mxu0
  %v3893 = vadd.f32 0.0, %v3892
  %3894 = vmatmul.f32.gmra.mxu0 %v3683
  %v3895 = vpop.f32.mrf.mxu0
  %v3896 = vadd.f32 0.0, %v3895
  %3897 = vmatmul.f32.gmra.mxu0 %v3686
  %v3898 = vpop.f32.mrf.mxu0
  %v3899 = vadd.f32 0.0, %v3898
  %3900 = vmatmul.f32.gmra.mxu0 %v3689
  %v3901 = vpop.f32.mrf.mxu0
  %v3902 = vadd.f32 0.0, %v3901
  %3903 = vmatmul.f32.gmra.mxu0 %v3692
  %v3904 = vpop.f32.mrf.mxu0
  %v3905 = vadd.f32 0.0, %v3904
  %3906 = vmatmul.f32.gmra.mxu0 %v3695
  %v3907 = vpop.f32.mrf.mxu0
  %v3908 = vadd.f32 0.0, %v3907
  %3909 = vmatmul.f32.gmra.mxu0 %v3698
  %v3910 = vpop.f32.mrf.mxu0
  %v3911 = vadd.f32 0.0, %v3910
  %3912 = vmatmul.f32.gmra.mxu0 %v3701
  %v3913 = vpop.f32.mrf.mxu0
  %v3914 = vadd.f32 0.0, %v3913
  %3915 = vmatmul.f32.gmra.mxu0 %v3704
  %v3916 = vpop.f32.mrf.mxu0
  %v3917 = vadd.f32 0.0, %v3916
  %3918 = vmatmul.f32.gmra.mxu0 %v3707
  %v3919 = vpop.f32.mrf.mxu0
  %v3920 = vadd.f32 0.0, %v3919
  %3921 = vmatmul.f32.gmra.mxu0 %v3710
  %v3922 = vpop.f32.mrf.mxu0
  %v3923 = vadd.f32 0.0, %v3922
  %3924 = vmatmul.f32.gmra.mxu0 %v3713
  %v3925 = vpop.f32.mrf.mxu0
  %v3926 = vadd.f32 0.0, %v3925
  %3927 = vmatmul.f32.gmra.mxu0 %v3716
  %v3928 = vpop.f32.mrf.mxu0
  %v3929 = vadd.f32 0.0, %v3928
  %3930 = vmatmul.f32.gmra.mxu0 %v3719
  %v3931 = vpop.f32.mrf.mxu0
  %v3932 = vadd.f32 0.0, %v3931
  %3933 = vmatmul.f32.gmra.mxu0 %v3722
  %v3934 = vpop.f32.mrf.mxu0
  %v3935 = vadd.f32 0.0, %v3934
  %3936 = vmatmul.f32.gmra.mxu0 %v3725
  %v3937 = vpop.f32.mrf.mxu0
  %v3938 = vadd.f32 0.0, %v3937
  %3939 = vdwg.mxu0
  %v3940 = vadd.f32 %v3749, %v3752
  %v3941 = vadd.f32 %v3940, %v3755
  %v3942 = vadd.f32 %v3941, %v3758
  %v3943 = vadd.f32 %v3942, %v3761
  %v3944 = vadd.f32 %v3943, %v3764
  %v3945 = vadd.f32 %v3944, %v3767
  %v3946 = vadd.f32 %v3945, %v3770
  %v3947 = vadd.f32 %v3946, %v3773
  %v3948 = vadd.f32 %v3947, %v3776
  %v3949 = vadd.f32 %v3948, %v3779
  %v3950 = vadd.f32 %v3949, %v3782
  %v3951 = vadd.f32 %v3950, %v3785
  %v3952 = vadd.f32 %v3951, %v3788
  %v3953 = vadd.f32 %v3952, %v3791
  %v3954 = vadd.f32 %v3953, %v3794
  %v3955 = vadd.f32 %v3954, %v3797
  %v3956 = vadd.f32 %v3955, %v3800
  %v3957 = vadd.f32 %v3956, %v3803
  %v3958 = vadd.f32 %v3957, %v3806
  %v3959 = vadd.f32 %v3958, %v3809
  %v3960 = vadd.f32 %v3959, %v3812
  %v3961 = vadd.f32 %v3960, %v3815
  %v3962 = vadd.f32 %v3961, %v3818
  %v3963 = vadd.f32 %v3962, %v3821
  %v3964 = vadd.f32 %v3963, %v3824
  %v3965 = vadd.f32 %v3964, %v3827
  %v3966 = vadd.f32 %v3965, %v3830
  %v3967 = vadd.f32 %v3966, %v3833
  %v3968 = vadd.f32 %v3967, %v3836
  %v3969 = vadd.f32 %v3968, %v3839
  %v3970 = vadd.f32 %v3969, %v3842
  %v3971 = vadd.f32 %v3970, %v3845
  %v3972 = vadd.f32 %v3971, %v3848
  %v3973 = vadd.f32 %v3972, %v3851
  %v3974 = vadd.f32 %v3973, %v3854
  %v3975 = vadd.f32 %v3974, %v3857
  %v3976 = vadd.f32 %v3975, %v3860
  %v3977 = vadd.f32 %v3976, %v3863
  %v3978 = vadd.f32 %v3977, %v3866
  %v3979 = vadd.f32 %v3978, %v3869
  %v3980 = vadd.f32 %v3979, %v3872
  %v3981 = vadd.f32 %v3980, %v3875
  %v3982 = vadd.f32 %v3981, %v3878
  %v3983 = vadd.f32 %v3982, %v3881
  %v3984 = vadd.f32 %v3983, %v3884
  %v3985 = vadd.f32 %v3984, %v3887
  %v3986 = vadd.f32 %v3985, %v3890
  %v3987 = vadd.f32 %v3986, %v3893
  %v3988 = vadd.f32 %v3987, %v3896
  %v3989 = vadd.f32 %v3988, %v3899
  %v3990 = vadd.f32 %v3989, %v3902
  %v3991 = vadd.f32 %v3990, %v3905
  %v3992 = vadd.f32 %v3991, %v3908
  %v3993 = vadd.f32 %v3992, %v3911
  %v3994 = vadd.f32 %v3993, %v3914
  %v3995 = vadd.f32 %v3994, %v3917
  %v3996 = vadd.f32 %v3995, %v3920
  %v3997 = vadd.f32 %v3996, %v3923
  %v3998 = vadd.f32 %v3997, %v3926
  %v3999 = vadd.f32 %v3998, %v3929
  %v4000 = vadd.f32 %v3999, %v3932
  %v4001 = vadd.f32 %v4000, %v3935
  %v4002 = vadd.f32 %v4001, %v3938
  %v4003 = vrot.slane %v4002, 4
  %v4004 = vadd.f32 %v4002, %v4003
  %v4005 = vrot.slane %v4004, 2
  %v4006 = vadd.f32 %v4004, %v4005
  %v4007 = vrot.slane %v4006, 1
  %v4008 = vadd.f32 %v4006, %v4007
  %v4009 = vmul.f32 %v4008, 0.001953125
  %v4010 = vmul.f32 %v3749, %v3749
  %v4011 = vmul.f32 %v3752, %v3752
  %v4012 = vmul.f32 %v3755, %v3755
  %v4013 = vmul.f32 %v3758, %v3758
  %v4014 = vmul.f32 %v3761, %v3761
  %v4015 = vmul.f32 %v3764, %v3764
  %v4016 = vmul.f32 %v3767, %v3767
  %v4017 = vmul.f32 %v3770, %v3770
  %v4018 = vmul.f32 %v3773, %v3773
  %v4019 = vmul.f32 %v3776, %v3776
  %v4020 = vmul.f32 %v3779, %v3779
  %v4021 = vmul.f32 %v3782, %v3782
  %v4022 = vmul.f32 %v3785, %v3785
  %v4023 = vmul.f32 %v3788, %v3788
  %v4024 = vmul.f32 %v3791, %v3791
  %v4025 = vmul.f32 %v3794, %v3794
  %v4026 = vmul.f32 %v3797, %v3797
  %v4027 = vmul.f32 %v3800, %v3800
  %v4028 = vmul.f32 %v3803, %v3803
  %v4029 = vmul.f32 %v3806, %v3806
  %v4030 = vmul.f32 %v3809, %v3809
  %v4031 = vmul.f32 %v3812, %v3812
  %v4032 = vmul.f32 %v3815, %v3815
  %v4033 = vmul.f32 %v3818, %v3818
  %v4034 = vmul.f32 %v3821, %v3821
  %v4035 = vmul.f32 %v3824, %v3824
  %v4036 = vmul.f32 %v3827, %v3827
  %v4037 = vmul.f32 %v3830, %v3830
  %v4038 = vmul.f32 %v3833, %v3833
  %v4039 = vmul.f32 %v3836, %v3836
  %v4040 = vmul.f32 %v3839, %v3839
  %v4041 = vmul.f32 %v3842, %v3842
  %v4042 = vmul.f32 %v3845, %v3845
  %v4043 = vmul.f32 %v3848, %v3848
  %v4044 = vmul.f32 %v3851, %v3851
  %v4045 = vmul.f32 %v3854, %v3854
  %v4046 = vmul.f32 %v3857, %v3857
  %v4047 = vmul.f32 %v3860, %v3860
  %v4048 = vmul.f32 %v3863, %v3863
  %v4049 = vmul.f32 %v3866, %v3866
  %v4050 = vmul.f32 %v3869, %v3869
  %v4051 = vmul.f32 %v3872, %v3872
  %v4052 = vmul.f32 %v3875, %v3875
  %v4053 = vmul.f32 %v3878, %v3878
  %v4054 = vmul.f32 %v3881, %v3881
  %v4055 = vmul.f32 %v3884, %v3884
  %v4056 = vmul.f32 %v3887, %v3887
  %v4057 = vmul.f32 %v3890, %v3890
  %v4058 = vmul.f32 %v3893, %v3893
  %v4059 = vmul.f32 %v3896, %v3896
  %v4060 = vmul.f32 %v3899, %v3899
  %v4061 = vmul.f32 %v3902, %v3902
  %v4062 = vmul.f32 %v3905, %v3905
  %v4063 = vmul.f32 %v3908, %v3908
  %v4064 = vmul.f32 %v3911, %v3911
  %v4065 = vmul.f32 %v3914, %v3914
  %v4066 = vmul.f32 %v3917, %v3917
  %v4067 = vmul.f32 %v3920, %v3920
  %v4068 = vmul.f32 %v3923, %v3923
  %v4069 = vmul.f32 %v3926, %v3926
  %v4070 = vmul.f32 %v3929, %v3929
  %v4071 = vmul.f32 %v3932, %v3932
  %v4072 = vmul.f32 %v3935, %v3935
  %v4073 = vmul.f32 %v3938, %v3938
  %v4074 = vadd.f32 %v4010, %v4011
  %v4075 = vadd.f32 %v4074, %v4012
  %v4076 = vadd.f32 %v4075, %v4013
  %v4077 = vadd.f32 %v4076, %v4014
  %v4078 = vadd.f32 %v4077, %v4015
  %v4079 = vadd.f32 %v4078, %v4016
  %v4080 = vadd.f32 %v4079, %v4017
  %v4081 = vadd.f32 %v4080, %v4018
  %v4082 = vadd.f32 %v4081, %v4019
  %v4083 = vadd.f32 %v4082, %v4020
  %v4084 = vadd.f32 %v4083, %v4021
  %v4085 = vadd.f32 %v4084, %v4022
  %v4086 = vadd.f32 %v4085, %v4023
  %v4087 = vadd.f32 %v4086, %v4024
  %v4088 = vadd.f32 %v4087, %v4025
  %v4089 = vadd.f32 %v4088, %v4026
  %v4090 = vadd.f32 %v4089, %v4027
  %v4091 = vadd.f32 %v4090, %v4028
  %v4092 = vadd.f32 %v4091, %v4029
  %v4093 = vadd.f32 %v4092, %v4030
  %v4094 = vadd.f32 %v4093, %v4031
  %v4095 = vadd.f32 %v4094, %v4032
  %v4096 = vadd.f32 %v4095, %v4033
  %v4097 = vadd.f32 %v4096, %v4034
  %v4098 = vadd.f32 %v4097, %v4035
  %v4099 = vadd.f32 %v4098, %v4036
  %v4100 = vadd.f32 %v4099, %v4037
  %v4101 = vadd.f32 %v4100, %v4038
  %v4102 = vadd.f32 %v4101, %v4039
  %v4103 = vadd.f32 %v4102, %v4040
  %v4104 = vadd.f32 %v4103, %v4041
  %v4105 = vadd.f32 %v4104, %v4042
  %v4106 = vadd.f32 %v4105, %v4043
  %v4107 = vadd.f32 %v4106, %v4044
  %v4108 = vadd.f32 %v4107, %v4045
  %v4109 = vadd.f32 %v4108, %v4046
  %v4110 = vadd.f32 %v4109, %v4047
  %v4111 = vadd.f32 %v4110, %v4048
  %v4112 = vadd.f32 %v4111, %v4049
  %v4113 = vadd.f32 %v4112, %v4050
  %v4114 = vadd.f32 %v4113, %v4051
  %v4115 = vadd.f32 %v4114, %v4052
  %v4116 = vadd.f32 %v4115, %v4053
  %v4117 = vadd.f32 %v4116, %v4054
  %v4118 = vadd.f32 %v4117, %v4055
  %v4119 = vadd.f32 %v4118, %v4056
  %v4120 = vadd.f32 %v4119, %v4057
  %v4121 = vadd.f32 %v4120, %v4058
  %v4122 = vadd.f32 %v4121, %v4059
  %v4123 = vadd.f32 %v4122, %v4060
  %v4124 = vadd.f32 %v4123, %v4061
  %v4125 = vadd.f32 %v4124, %v4062
  %v4126 = vadd.f32 %v4125, %v4063
  %v4127 = vadd.f32 %v4126, %v4064
  %v4128 = vadd.f32 %v4127, %v4065
  %v4129 = vadd.f32 %v4128, %v4066
  %v4130 = vadd.f32 %v4129, %v4067
  %v4131 = vadd.f32 %v4130, %v4068
  %v4132 = vadd.f32 %v4131, %v4069
  %v4133 = vadd.f32 %v4132, %v4070
  %v4134 = vadd.f32 %v4133, %v4071
  %v4135 = vadd.f32 %v4134, %v4072
  %v4136 = vadd.f32 %v4135, %v4073
  %v4137 = vrot.slane %v4136, 4
  %v4138 = vadd.f32 %v4136, %v4137
  %v4139 = vrot.slane %v4138, 2
  %v4140 = vadd.f32 %v4138, %v4139
  %v4141 = vrot.slane %v4140, 1
  %v4142 = vadd.f32 %v4140, %v4141
  %v4143 = vmul.f32 %v4142, 0.001953125
  %v4144 = vmul.f32 %v4009, %v4009
  %v4145 = vsub.f32 %v4143, %v4144
  %v4146 = vadd.f32 %v4145, 0.001
  %v4147 = vrsqrt.pop %v4146
  %v4148 = vmul.f32 %v4147, %v4146
  %v4149 = vmul.f32 %v4148, %v4147
  %v4150 = vmul.f32 0.5, %v4149
  %v4151 = vsub.f32 1.5, %v4150
  %v4152 = vmul.f32 %v4147, %v4151
  %vm4153 = vweird.f32 %v4146
  %vm4154 = vweird.f32 %v4147
  %vm4155 = vmor %vm4153, %vm4154
  %v4156 = vsel %vm4155, %v4147, %v4152
  %v4157 = vld [vmem:[%s2] sm:$0x1]
  %v4158 = vmul.f32 %v4156, %v4157
  %v4159 = vld [vmem:[%s3] sm:$0x1]
  %v4160 = vmul.f32 %v4009, %v4158
  %v4161 = vsub.f32 %v4159, %v4160
  %v4162 = vperm.slane %v4158, 0
  %v4163 = vmul.f32 %v3749, %v4162
  %v4164 = vmul.f32 %v3752, %v4162
  %v4165 = vmul.f32 %v3755, %v4162
  %v4166 = vmul.f32 %v3758, %v4162
  %v4167 = vmul.f32 %v3761, %v4162
  %v4168 = vmul.f32 %v3764, %v4162
  %v4169 = vmul.f32 %v3767, %v4162
  %v4170 = vmul.f32 %v3770, %v4162
  %v4171 = vmul.f32 %v3773, %v4162
  %v4172 = vmul.f32 %v3776, %v4162
  %v4173 = vmul.f32 %v3779, %v4162
  %v4174 = vmul.f32 %v3782, %v4162
  %v4175 = vmul.f32 %v3785, %v4162
  %v4176 = vmul.f32 %v3788, %v4162
  %v4177 = vmul.f32 %v3791, %v4162
  %v4178 = vmul.f32 %v3794, %v4162
  %v4179 = vmul.f32 %v3797, %v4162
  %v4180 = vmul.f32 %v3800, %v4162
  %v4181 = vmul.f32 %v3803, %v4162
  %v4182 = vmul.f32 %v3806, %v4162
  %v4183 = vmul.f32 %v3809, %v4162
  %v4184 = vmul.f32 %v3812, %v4162
  %v4185 = vmul.f32 %v3815, %v4162
  %v4186 = vmul.f32 %v3818, %v4162
  %v4187 = vmul.f32 %v3821, %v4162
  %v4188 = vmul.f32 %v3824, %v4162
  %v4189 = vmul.f32 %v3827, %v4162
  %v4190 = vmul.f32 %v3830, %v4162
  %v4191 = vmul.f32 %v3833, %v4162
  %v4192 = vmul.f32 %v3836, %v4162
  %v4193 = vmul.f32 %v3839, %v4162
  %v4194 = vmul.f32 %v3842, %v4162
  %v4195 = vmul.f32 %v3845, %v4162
  %v4196 = vmul.f32 %v3848, %v4162
  %v4197 = vmul.f32 %v3851, %v4162
  %v4198 = vmul.f32 %v3854, %v4162
  %v4199 = vmul.f32 %v3857, %v4162
  %v4200 = vmul.f32 %v3860, %v4162
  %v4201 = vmul.f32 %v3863, %v4162
  %v4202 = vmul.f32 %v3866, %v4162
  %v4203 = vmul.f32 %v3869, %v4162
  %v4204 = vmul.f32 %v3872, %v4162
  %v4205 = vmul.f32 %v3875, %v4162
  %v4206 = vmul.f32 %v3878, %v4162
  %v4207 = vmul.f32 %v3881, %v4162
  %v4208 = vmul.f32 %v3884, %v4162
  %v4209 = vmul.f32 %v3887, %v4162
  %v4210 = vmul.f32 %v3890, %v4162
  %v4211 = vmul.f32 %v3893, %v4162
  %v4212 = vmul.f32 %v3896, %v4162
  %v4213 = vmul.f32 %v3899, %v4162
  %v4214 = vmul.f32 %v3902, %v4162
  %v4215 = vmul.f32 %v3905, %v4162
  %v4216 = vmul.f32 %v3908, %v4162
  %v4217 = vmul.f32 %v3911, %v4162
  %v4218 = vmul.f32 %v3914, %v4162
  %v4219 = vmul.f32 %v3917, %v4162
  %v4220 = vmul.f32 %v3920, %v4162
  %v4221 = vmul.f32 %v3923, %v4162
  %v4222 = vmul.f32 %v3926, %v4162
  %v4223 = vmul.f32 %v3929, %v4162
  %v4224 = vmul.f32 %v3932, %v4162
  %v4225 = vmul.f32 %v3935, %v4162
  %v4226 = vmul.f32 %v3938, %v4162
  %v4228 = vperm.slane %v4161, 0
  %v4230 = vadd.f32 %v4163, %v4228
  %v4231 = vadd.f32 %v4164, %v4228
  %v4232 = vadd.f32 %v4165, %v4228
  %v4233 = vadd.f32 %v4166, %v4228
  %v4234 = vadd.f32 %v4167, %v4228
  %v4235 = vadd.f32 %v4168, %v4228
  %v4236 = vadd.f32 %v4169, %v4228
  %v4237 = vadd.f32 %v4170, %v4228
  %v4238 = vadd.f32 %v4171, %v4228
  %v4239 = vadd.f32 %v4172, %v4228
  %v4240 = vadd.f32 %v4173, %v4228
  %v4241 = vadd.f32 %v4174, %v4228
  %v4242 = vadd.f32 %v4175, %v4228
  %v4243 = vadd.f32 %v4176, %v4228
  %v4244 = vadd.f32 %v4177, %v4228
  %v4245 = vadd.f32 %v4178, %v4228
  %v4246 = vadd.f32 %v4179, %v4228
  %v4247 = vadd.f32 %v4180, %v4228
  %v4248 = vadd.f32 %v4181, %v4228
  %v4249 = vadd.f32 %v4182, %v4228
  %v4250 = vadd.f32 %v4183, %v4228
  %v4251 = vadd.f32 %v4184, %v4228
  %v4252 = vadd.f32 %v4185, %v4228
  %v4253 = vadd.f32 %v4186, %v4228
  %v4254 = vadd.f32 %v4187, %v4228
  %v4255 = vadd.f32 %v4188, %v4228
  %v4256 = vadd.f32 %v4189, %v4228
  %v4257 = vadd.f32 %v4190, %v4228
  %v4258 = vadd.f32 %v4191, %v4228
  %v4259 = vadd.f32 %v4192, %v4228
  %v4260 = vadd.f32 %v4193, %v4228
  %v4261 = vadd.f32 %v4194, %v4228
  %v4262 = vadd.f32 %v4195, %v4228
  %v4263 = vadd.f32 %v4196, %v4228
  %v4264 = vadd.f32 %v4197, %v4228
  %v4265 = vadd.f32 %v4198, %v4228
  %v4266 = vadd.f32 %v4199, %v4228
  %v4267 = vadd.f32 %v4200, %v4228
  %v4268 = vadd.f32 %v4201, %v4228
  %v4269 = vadd.f32 %v4202, %v4228
  %v4270 = vadd.f32 %v4203, %v4228
  %v4271 = vadd.f32 %v4204, %v4228
  %v4272 = vadd.f32 %v4205, %v4228
  %v4273 = vadd.f32 %v4206, %v4228
  %v4274 = vadd.f32 %v4207, %v4228
  %v4275 = vadd.f32 %v4208, %v4228
  %v4276 = vadd.f32 %v4209, %v4228
  %v4277 = vadd.f32 %v4210, %v4228
  %v4278 = vadd.f32 %v4211, %v4228
  %v4279 = vadd.f32 %v4212, %v4228
  %v4280 = vadd.f32 %v4213, %v4228
  %v4281 = vadd.f32 %v4214, %v4228
  %v4282 = vadd.f32 %v4215, %v4228
  %v4283 = vadd.f32 %v4216, %v4228
  %v4284 = vadd.f32 %v4217, %v4228
  %v4285 = vadd.f32 %v4218, %v4228
  %v4286 = vadd.f32 %v4219, %v4228
  %v4287 = vadd.f32 %v4220, %v4228
  %v4288 = vadd.f32 %v4221, %v4228
  %v4289 = vadd.f32 %v4222, %v4228
  %v4290 = vadd.f32 %v4223, %v4228
  %v4291 = vadd.f32 %v4224, %v4228
  %v4292 = vadd.f32 %v4225, %v4228
  %v4293 = vadd.f32 %v4226, %v4228
  %v4294 = vmul.f32 %v4230, 0.5
  %v4295 = vmul.f32 %v4231, 0.5
  %v4296 = vmul.f32 %v4232, 0.5
  %v4297 = vmul.f32 %v4233, 0.5
  %v4298 = vmul.f32 %v4234, 0.5
  %v4299 = vmul.f32 %v4235, 0.5
  %v4300 = vmul.f32 %v4236, 0.5
  %v4301 = vmul.f32 %v4237, 0.5
  %v4302 = vmul.f32 %v4238, 0.5
  %v4303 = vmul.f32 %v4239, 0.5
  %v4304 = vmul.f32 %v4240, 0.5
  %v4305 = vmul.f32 %v4241, 0.5
  %v4306 = vmul.f32 %v4242, 0.5
  %v4307 = vmul.f32 %v4243, 0.5
  %v4308 = vmul.f32 %v4244, 0.5
  %v4309 = vmul.f32 %v4245, 0.5
  %v4310 = vmul.f32 %v4246, 0.5
  %v4311 = vmul.f32 %v4247, 0.5
  %v4312 = vmul.f32 %v4248, 0.5
  %v4313 = vmul.f32 %v4249, 0.5
  %v4314 = vmul.f32 %v4250, 0.5
  %v4315 = vmul.f32 %v4251, 0.5
  %v4316 = vmul.f32 %v4252, 0.5
  %v4317 = vmul.f32 %v4253, 0.5
  %v4318 = vmul.f32 %v4254, 0.5
  %v4319 = vmul.f32 %v4255, 0.5
  %v4320 = vmul.f32 %v4256, 0.5
  %v4321 = vmul.f32 %v4257, 0.5
  %v4322 = vmul.f32 %v4258, 0.5
  %v4323 = vmul.f32 %v4259, 0.5
  %v4324 = vmul.f32 %v4260, 0.5
  %v4325 = vmul.f32 %v4261, 0.5
  %v4326 = vmul.f32 %v4262, 0.5
  %v4327 = vmul.f32 %v4263, 0.5
  %v4328 = vmul.f32 %v4264, 0.5
  %v4329 = vmul.f32 %v4265, 0.5
  %v4330 = vmul.f32 %v4266, 0.5
  %v4331 = vmul.f32 %v4267, 0.5
  %v4332 = vmul.f32 %v4268, 0.5
  %v4333 = vmul.f32 %v4269, 0.5
  %v4334 = vmul.f32 %v4270, 0.5
  %v4335 = vmul.f32 %v4271, 0.5
  %v4336 = vmul.f32 %v4272, 0.5
  %v4337 = vmul.f32 %v4273, 0.5
  %v4338 = vmul.f32 %v4274, 0.5
  %v4339 = vmul.f32 %v4275, 0.5
  %v4340 = vmul.f32 %v4276, 0.5
  %v4341 = vmul.f32 %v4277, 0.5
  %v4342 = vmul.f32 %v4278, 0.5
  %v4343 = vmul.f32 %v4279, 0.5
  %v4344 = vmul.f32 %v4280, 0.5
  %v4345 = vmul.f32 %v4281, 0.5
  %v4346 = vmul.f32 %v4282, 0.5
  %v4347 = vmul.f32 %v4283, 0.5
  %v4348 = vmul.f32 %v4284, 0.5
  %v4349 = vmul.f32 %v4285, 0.5
  %v4350 = vmul.f32 %v4286, 0.5
  %v4351 = vmul.f32 %v4287, 0.5
  %v4352 = vmul.f32 %v4288, 0.5
  %v4353 = vmul.f32 %v4289, 0.5
  %v4354 = vmul.f32 %v4290, 0.5
  %v4355 = vmul.f32 %v4291, 0.5
  %v4356 = vmul.f32 %v4292, 0.5
  %v4357 = vmul.f32 %v4293, 0.5
  %v4358 = vmul.f32 %v4230, 0.70710677
  %v4359 = vmul.f32 %v4231, 0.70710677
  %v4360 = vmul.f32 %v4232, 0.70710677
  %v4361 = vmul.f32 %v4233, 0.70710677
  %v4362 = vmul.f32 %v4234, 0.70710677
  %v4363 = vmul.f32 %v4235, 0.70710677
  %v4364 = vmul.f32 %v4236, 0.70710677
  %v4365 = vmul.f32 %v4237, 0.70710677
  %v4366 = vmul.f32 %v4238, 0.70710677
  %v4367 = vmul.f32 %v4239, 0.70710677
  %v4368 = vmul.f32 %v4240, 0.70710677
  %v4369 = vmul.f32 %v4241, 0.70710677
  %v4370 = vmul.f32 %v4242, 0.70710677
  %v4371 = vmul.f32 %v4243, 0.70710677
  %v4372 = vmul.f32 %v4244, 0.70710677
  %v4373 = vmul.f32 %v4245, 0.70710677
  %v4374 = vmul.f32 %v4246, 0.70710677
  %v4375 = vmul.f32 %v4247, 0.70710677
  %v4376 = vmul.f32 %v4248, 0.70710677
  %v4377 = vmul.f32 %v4249, 0.70710677
  %v4378 = vmul.f32 %v4250, 0.70710677
  %v4379 = vmul.f32 %v4251, 0.70710677
  %v4380 = vmul.f32 %v4252, 0.70710677
  %v4381 = vmul.f32 %v4253, 0.70710677
  %v4382 = vmul.f32 %v4254, 0.70710677
  %v4383 = vmul.f32 %v4255, 0.70710677
  %v4384 = vmul.f32 %v4256, 0.70710677
  %v4385 = vmul.f32 %v4257, 0.70710677
  %v4386 = vmul.f32 %v4258, 0.70710677
  %v4387 = vmul.f32 %v4259, 0.70710677
  %v4388 = vmul.f32 %v4260, 0.70710677
  %v4389 = vmul.f32 %v4261, 0.70710677
  %v4390 = vmul.f32 %v4262, 0.70710677
  %v4391 = vmul.f32 %v4263, 0.70710677
  %v4392 = vmul.f32 %v4264, 0.70710677
  %v4393 = vmul.f32 %v4265, 0.70710677
  %v4394 = vmul.f32 %v4266, 0.70710677
  %v4395 = vmul.f32 %v4267, 0.70710677
  %v4396 = vmul.f32 %v4268, 0.70710677
  %v4397 = vmul.f32 %v4269, 0.70710677
  %v4398 = vmul.f32 %v4270, 0.70710677
  %v4399 = vmul.f32 %v4271, 0.70710677
  %v4400 = vmul.f32 %v4272, 0.70710677
  %v4401 = vmul.f32 %v4273, 0.70710677
  %v4402 = vmul.f32 %v4274, 0.70710677
  %v4403 = vmul.f32 %v4275, 0.70710677
  %v4404 = vmul.f32 %v4276, 0.70710677
  %v4405 = vmul.f32 %v4277, 0.70710677
  %v4406 = vmul.f32 %v4278, 0.70710677
  %v4407 = vmul.f32 %v4279, 0.70710677
  %v4408 = vmul.f32 %v4280, 0.70710677
  %v4409 = vmul.f32 %v4281, 0.70710677
  %v4410 = vmul.f32 %v4282, 0.70710677
  %v4411 = vmul.f32 %v4283, 0.70710677
  %v4412 = vmul.f32 %v4284, 0.70710677
  %v4413 = vmul.f32 %v4285, 0.70710677
  %v4414 = vmul.f32 %v4286, 0.70710677
  %v4415 = vmul.f32 %v4287, 0.70710677
  %v4416 = vmul.f32 %v4288, 0.70710677
  %v4417 = vmul.f32 %v4289, 0.70710677
  %v4418 = vmul.f32 %v4290, 0.70710677
  %v4419 = vmul.f32 %v4291, 0.70710677
  %v4420 = vmul.f32 %v4292, 0.70710677
  %v4421 = vmul.f32 %v4293, 0.70710677
  %v4422 = vmul.f32 %v4358, %v4358
  %v4423 = vmin.f32 16.0, %v4422
  %v4424 = vmul.f32 %v4423, 2.1237322e-06
  %v4425 = vadd.f32 %v4424, 0.00028619796
  %v4426 = vmul.f32 %v4423, %v4425
  %v4427 = vadd.f32 %v4426, 0.0036580483
  %v4428 = vmul.f32 %v4423, %v4427
  %v4429 = vadd.f32 %v4428, 0.05243302
  %v4430 = vmul.f32 %v4423, %v4429
  %v4431 = vadd.f32 %v4430, 0.18741608
  %v4432 = vmul.f32 %v4423, %v4431
  %v4433 = vadd.f32 %v4432, 1.1283791
  %v4434 = vmul.f32 %v4358, %v4433
  %v4435 = vmul.f32 %v4423, 3.8918573e-05
  %v4436 = vadd.f32 %v4435, 0.001143296
  %v4437 = vmul.f32 %v4423, %v4436
  %v4438 = vadd.f32 %v4437, 0.014752088
  %v4439 = vmul.f32 %v4423, %v4438
  %v4440 = vadd.f32 %v4439, 0.112945676
  %v4441 = vmul.f32 %v4423, %v4440
  %v4442 = vadd.f32 %v4441, 0.4994258
  %v4443 = vmul.f32 %v4423, %v4442
  %v4444 = vadd.f32 %v4443, 1.0
  %v4445 = vrcp.pop %v4444
  %v4446 = vmul.f32 %v4444, %v4445
  %v4447 = vsub.f32 1.0, %v4446
  %v4448 = vmul.f32 %v4445, %v4447
  %v4449 = vadd.f32 %v4445, %v4448
  %vm4450 = vweird.f32 %v4444
  %vm4451 = vweird.f32 %v4445
  %vm4452 = vmor %vm4450, %vm4451
  %v4453 = vsel %vm4452, %v4445, %v4449
  %v4454 = vand.u32 2147483647, %v4444
  %vm4455 = vcmp.eq.f32.partialorder %v4454, 8.507059e+37
  %v4456 = vand.u32 %v4444, 2147483648
  %v4457 = vor.u32 1.1754944e-38, %v4456
  %v4458 = vsel %vm4455, %v4457, %v4453
  %v4459 = vmul.f32 %v4434, %v4458
  %v4460 = vmin.f32 %v4459, 1.0
  %v4461 = vmax.f32 %v4460, -1.0
  %v4462 = vmul.f32 %v4359, %v4359
  %v4463 = vmin.f32 16.0, %v4462
  %v4464 = vmul.f32 %v4463, 2.1237322e-06
  %v4465 = vadd.f32 %v4464, 0.00028619796
  %v4466 = vmul.f32 %v4463, %v4465
  %v4467 = vadd.f32 %v4466, 0.0036580483
  %v4468 = vmul.f32 %v4463, %v4467
  %v4469 = vadd.f32 %v4468, 0.05243302
  %v4470 = vmul.f32 %v4463, %v4469
  %v4471 = vadd.f32 %v4470, 0.18741608
  %v4472 = vmul.f32 %v4463, %v4471
  %v4473 = vadd.f32 %v4472, 1.1283791
  %v4474 = vmul.f32 %v4359, %v4473
  %v4475 = vmul.f32 %v4463, 3.8918573e-05
  %v4476 = vadd.f32 %v4475, 0.001143296
  %v4477 = vmul.f32 %v4463, %v4476
  %v4478 = vadd.f32 %v4477, 0.014752088
  %v4479 = vmul.f32 %v4463, %v4478
  %v4480 = vadd.f32 %v4479, 0.112945676
  %v4481 = vmul.f32 %v4463, %v4480
  %v4482 = vadd.f32 %v4481, 0.4994258
  %v4483 = vmul.f32 %v4463, %v4482
  %v4484 = vadd.f32 %v4483, 1.0
  %v4485 = vrcp.pop %v4484
  %v4486 = vmul.f32 %v4484, %v4485
  %v4487 = vsub.f32 1.0, %v4486
  %v4488 = vmul.f32 %v4485, %v4487
  %v4489 = vadd.f32 %v4485, %v4488
  %vm4490 = vweird.f32 %v4484
  %vm4491 = vweird.f32 %v4485
  %vm4492 = vmor %vm4490, %vm4491
  %v4493 = vsel %vm4492, %v4485, %v4489
  %v4494 = vand.u32 2147483647, %v4484
  %vm4495 = vcmp.eq.f32.partialorder %v4494, 8.507059e+37
  %v4496 = vand.u32 %v4484, 2147483648
  %v4497 = vor.u32 1.1754944e-38, %v4496
  %v4498 = vsel %vm4495, %v4497, %v4493
  %v4499 = vmul.f32 %v4474, %v4498
  %v4500 = vmin.f32 %v4499, 1.0
  %v4501 = vmax.f32 %v4500, -1.0
  %v4502 = vmul.f32 %v4360, %v4360
  %v4503 = vmin.f32 16.0, %v4502
  %v4504 = vmul.f32 %v4503, 2.1237322e-06
  %v4505 = vadd.f32 %v4504, 0.00028619796
  %v4506 = vmul.f32 %v4503, %v4505
  %v4507 = vadd.f32 %v4506, 0.0036580483
  %v4508 = vmul.f32 %v4503, %v4507
  %v4509 = vadd.f32 %v4508, 0.05243302
  %v4510 = vmul.f32 %v4503, %v4509
  %v4511 = vadd.f32 %v4510, 0.18741608
  %v4512 = vmul.f32 %v4503, %v4511
  %v4513 = vadd.f32 %v4512, 1.1283791
  %v4514 = vmul.f32 %v4360, %v4513
  %v4515 = vmul.f32 %v4503, 3.8918573e-05
  %v4516 = vadd.f32 %v4515, 0.001143296
  %v4517 = vmul.f32 %v4503, %v4516
  %v4518 = vadd.f32 %v4517, 0.014752088
  %v4519 = vmul.f32 %v4503, %v4518
  %v4520 = vadd.f32 %v4519, 0.112945676
  %v4521 = vmul.f32 %v4503, %v4520
  %v4522 = vadd.f32 %v4521, 0.4994258
  %v4523 = vmul.f32 %v4503, %v4522
  %v4524 = vadd.f32 %v4523, 1.0
  %v4525 = vrcp.pop %v4524
  %v4526 = vmul.f32 %v4524, %v4525
  %v4527 = vsub.f32 1.0, %v4526
  %v4528 = vmul.f32 %v4525, %v4527
  %v4529 = vadd.f32 %v4525, %v4528
  %vm4530 = vweird.f32 %v4524
  %vm4531 = vweird.f32 %v4525
  %vm4532 = vmor %vm4530, %vm4531
  %v4533 = vsel %vm4532, %v4525, %v4529
  %v4534 = vand.u32 2147483647, %v4524
  %vm4535 = vcmp.eq.f32.partialorder %v4534, 8.507059e+37
  %v4536 = vand.u32 %v4524, 2147483648
  %v4537 = vor.u32 1.1754944e-38, %v4536
  %v4538 = vsel %vm4535, %v4537, %v4533
  %v4539 = vmul.f32 %v4514, %v4538
  %v4540 = vmin.f32 %v4539, 1.0
  %v4541 = vmax.f32 %v4540, -1.0
  %v4542 = vmul.f32 %v4361, %v4361
  %v4543 = vmin.f32 16.0, %v4542
  %v4544 = vmul.f32 %v4543, 2.1237322e-06
  %v4545 = vadd.f32 %v4544, 0.00028619796
  %v4546 = vmul.f32 %v4543, %v4545
  %v4547 = vadd.f32 %v4546, 0.0036580483
  %v4548 = vmul.f32 %v4543, %v4547
  %v4549 = vadd.f32 %v4548, 0.05243302
  %v4550 = vmul.f32 %v4543, %v4549
  %v4551 = vadd.f32 %v4550, 0.18741608
  %v4552 = vmul.f32 %v4543, %v4551
  %v4553 = vadd.f32 %v4552, 1.1283791
  %v4554 = vmul.f32 %v4361, %v4553
  %v4555 = vmul.f32 %v4543, 3.8918573e-05
  %v4556 = vadd.f32 %v4555, 0.001143296
  %v4557 = vmul.f32 %v4543, %v4556
  %v4558 = vadd.f32 %v4557, 0.014752088
  %v4559 = vmul.f32 %v4543, %v4558
  %v4560 = vadd.f32 %v4559, 0.112945676
  %v4561 = vmul.f32 %v4543, %v4560
  %v4562 = vadd.f32 %v4561, 0.4994258
  %v4563 = vmul.f32 %v4543, %v4562
  %v4564 = vadd.f32 %v4563, 1.0
  %v4565 = vrcp.pop %v4564
  %v4566 = vmul.f32 %v4564, %v4565
  %v4567 = vsub.f32 1.0, %v4566
  %v4568 = vmul.f32 %v4565, %v4567
  %v4569 = vadd.f32 %v4565, %v4568
  %vm4570 = vweird.f32 %v4564
  %vm4571 = vweird.f32 %v4565
  %vm4572 = vmor %vm4570, %vm4571
  %v4573 = vsel %vm4572, %v4565, %v4569
  %v4574 = vand.u32 2147483647, %v4564
  %vm4575 = vcmp.eq.f32.partialorder %v4574, 8.507059e+37
  %v4576 = vand.u32 %v4564, 2147483648
  %v4577 = vor.u32 1.1754944e-38, %v4576
  %v4578 = vsel %vm4575, %v4577, %v4573
  %v4579 = vmul.f32 %v4554, %v4578
  %v4580 = vmin.f32 %v4579, 1.0
  %v4581 = vmax.f32 %v4580, -1.0
  %v4582 = vmul.f32 %v4362, %v4362
  %v4583 = vmin.f32 16.0, %v4582
  %v4584 = vmul.f32 %v4583, 2.1237322e-06
  %v4585 = vadd.f32 %v4584, 0.00028619796
  %v4586 = vmul.f32 %v4583, %v4585
  %v4587 = vadd.f32 %v4586, 0.0036580483
  %v4588 = vmul.f32 %v4583, %v4587
  %v4589 = vadd.f32 %v4588, 0.05243302
  %v4590 = vmul.f32 %v4583, %v4589
  %v4591 = vadd.f32 %v4590, 0.18741608
  %v4592 = vmul.f32 %v4583, %v4591
  %v4593 = vadd.f32 %v4592, 1.1283791
  %v4594 = vmul.f32 %v4362, %v4593
  %v4595 = vmul.f32 %v4583, 3.8918573e-05
  %v4596 = vadd.f32 %v4595, 0.001143296
  %v4597 = vmul.f32 %v4583, %v4596
  %v4598 = vadd.f32 %v4597, 0.014752088
  %v4599 = vmul.f32 %v4583, %v4598
  %v4600 = vadd.f32 %v4599, 0.112945676
  %v4601 = vmul.f32 %v4583, %v4600
  %v4602 = vadd.f32 %v4601, 0.4994258
  %v4603 = vmul.f32 %v4583, %v4602
  %v4604 = vadd.f32 %v4603, 1.0
  %v4605 = vrcp.pop %v4604
  %v4606 = vmul.f32 %v4604, %v4605
  %v4607 = vsub.f32 1.0, %v4606
  %v4608 = vmul.f32 %v4605, %v4607
  %v4609 = vadd.f32 %v4605, %v4608
  %vm4610 = vweird.f32 %v4604
  %vm4611 = vweird.f32 %v4605
  %vm4612 = vmor %vm4610, %vm4611
  %v4613 = vsel %vm4612, %v4605, %v4609
  %v4614 = vand.u32 2147483647, %v4604
  %vm4615 = vcmp.eq.f32.partialorder %v4614, 8.507059e+37
  %v4616 = vand.u32 %v4604, 2147483648
  %v4617 = vor.u32 1.1754944e-38, %v4616
  %v4618 = vsel %vm4615, %v4617, %v4613
  %v4619 = vmul.f32 %v4594, %v4618
  %v4620 = vmin.f32 %v4619, 1.0
  %v4621 = vmax.f32 %v4620, -1.0
  %v4622 = vmul.f32 %v4363, %v4363
  %v4623 = vmin.f32 16.0, %v4622
  %v4624 = vmul.f32 %v4623, 2.1237322e-06
  %v4625 = vadd.f32 %v4624, 0.00028619796
  %v4626 = vmul.f32 %v4623, %v4625
  %v4627 = vadd.f32 %v4626, 0.0036580483
  %v4628 = vmul.f32 %v4623, %v4627
  %v4629 = vadd.f32 %v4628, 0.05243302
  %v4630 = vmul.f32 %v4623, %v4629
  %v4631 = vadd.f32 %v4630, 0.18741608
  %v4632 = vmul.f32 %v4623, %v4631
  %v4633 = vadd.f32 %v4632, 1.1283791
  %v4634 = vmul.f32 %v4363, %v4633
  %v4635 = vmul.f32 %v4623, 3.8918573e-05
  %v4636 = vadd.f32 %v4635, 0.001143296
  %v4637 = vmul.f32 %v4623, %v4636
  %v4638 = vadd.f32 %v4637, 0.014752088
  %v4639 = vmul.f32 %v4623, %v4638
  %v4640 = vadd.f32 %v4639, 0.112945676
  %v4641 = vmul.f32 %v4623, %v4640
  %v4642 = vadd.f32 %v4641, 0.4994258
  %v4643 = vmul.f32 %v4623, %v4642
  %v4644 = vadd.f32 %v4643, 1.0
  %v4645 = vrcp.pop %v4644
  %v4646 = vmul.f32 %v4644, %v4645
  %v4647 = vsub.f32 1.0, %v4646
  %v4648 = vmul.f32 %v4645, %v4647
  %v4649 = vadd.f32 %v4645, %v4648
  %vm4650 = vweird.f32 %v4644
  %vm4651 = vweird.f32 %v4645
  %vm4652 = vmor %vm4650, %vm4651
  %v4653 = vsel %vm4652, %v4645, %v4649
  %v4654 = vand.u32 2147483647, %v4644
  %vm4655 = vcmp.eq.f32.partialorder %v4654, 8.507059e+37
  %v4656 = vand.u32 %v4644, 2147483648
  %v4657 = vor.u32 1.1754944e-38, %v4656
  %v4658 = vsel %vm4655, %v4657, %v4653
  %v4659 = vmul.f32 %v4634, %v4658
  %v4660 = vmin.f32 %v4659, 1.0
  %v4661 = vmax.f32 %v4660, -1.0
  %v4662 = vmul.f32 %v4364, %v4364
  %v4663 = vmin.f32 16.0, %v4662
  %v4664 = vmul.f32 %v4663, 2.1237322e-06
  %v4665 = vadd.f32 %v4664, 0.00028619796
  %v4666 = vmul.f32 %v4663, %v4665
  %v4667 = vadd.f32 %v4666, 0.0036580483
  %v4668 = vmul.f32 %v4663, %v4667
  %v4669 = vadd.f32 %v4668, 0.05243302
  %v4670 = vmul.f32 %v4663, %v4669
  %v4671 = vadd.f32 %v4670, 0.18741608
  %v4672 = vmul.f32 %v4663, %v4671
  %v4673 = vadd.f32 %v4672, 1.1283791
  %v4674 = vmul.f32 %v4364, %v4673
  %v4675 = vmul.f32 %v4663, 3.8918573e-05
  %v4676 = vadd.f32 %v4675, 0.001143296
  %v4677 = vmul.f32 %v4663, %v4676
  %v4678 = vadd.f32 %v4677, 0.014752088
  %v4679 = vmul.f32 %v4663, %v4678
  %v4680 = vadd.f32 %v4679, 0.112945676
  %v4681 = vmul.f32 %v4663, %v4680
  %v4682 = vadd.f32 %v4681, 0.4994258
  %v4683 = vmul.f32 %v4663, %v4682
  %v4684 = vadd.f32 %v4683, 1.0
  %v4685 = vrcp.pop %v4684
  %v4686 = vmul.f32 %v4684, %v4685
  %v4687 = vsub.f32 1.0, %v4686
  %v4688 = vmul.f32 %v4685, %v4687
  %v4689 = vadd.f32 %v4685, %v4688
  %vm4690 = vweird.f32 %v4684
  %vm4691 = vweird.f32 %v4685
  %vm4692 = vmor %vm4690, %vm4691
  %v4693 = vsel %vm4692, %v4685, %v4689
  %v4694 = vand.u32 2147483647, %v4684
  %vm4695 = vcmp.eq.f32.partialorder %v4694, 8.507059e+37
  %v4696 = vand.u32 %v4684, 2147483648
  %v4697 = vor.u32 1.1754944e-38, %v4696
  %v4698 = vsel %vm4695, %v4697, %v4693
  %v4699 = vmul.f32 %v4674, %v4698
  %v4700 = vmin.f32 %v4699, 1.0
  %v4701 = vmax.f32 %v4700, -1.0
  %v4702 = vmul.f32 %v4365, %v4365
  %v4703 = vmin.f32 16.0, %v4702
  %v4704 = vmul.f32 %v4703, 2.1237322e-06
  %v4705 = vadd.f32 %v4704, 0.00028619796
  %v4706 = vmul.f32 %v4703, %v4705
  %v4707 = vadd.f32 %v4706, 0.0036580483
  %v4708 = vmul.f32 %v4703, %v4707
  %v4709 = vadd.f32 %v4708, 0.05243302
  %v4710 = vmul.f32 %v4703, %v4709
  %v4711 = vadd.f32 %v4710, 0.18741608
  %v4712 = vmul.f32 %v4703, %v4711
  %v4713 = vadd.f32 %v4712, 1.1283791
  %v4714 = vmul.f32 %v4365, %v4713
  %v4715 = vmul.f32 %v4703, 3.8918573e-05
  %v4716 = vadd.f32 %v4715, 0.001143296
  %v4717 = vmul.f32 %v4703, %v4716
  %v4718 = vadd.f32 %v4717, 0.014752088
  %v4719 = vmul.f32 %v4703, %v4718
  %v4720 = vadd.f32 %v4719, 0.112945676
  %v4721 = vmul.f32 %v4703, %v4720
  %v4722 = vadd.f32 %v4721, 0.4994258
  %v4723 = vmul.f32 %v4703, %v4722
  %v4724 = vadd.f32 %v4723, 1.0
  %v4725 = vrcp.pop %v4724
  %v4726 = vmul.f32 %v4724, %v4725
  %v4727 = vsub.f32 1.0, %v4726
  %v4728 = vmul.f32 %v4725, %v4727
  %v4729 = vadd.f32 %v4725, %v4728
  %vm4730 = vweird.f32 %v4724
  %vm4731 = vweird.f32 %v4725
  %vm4732 = vmor %vm4730, %vm4731
  %v4733 = vsel %vm4732, %v4725, %v4729
  %v4734 = vand.u32 2147483647, %v4724
  %vm4735 = vcmp.eq.f32.partialorder %v4734, 8.507059e+37
  %v4736 = vand.u32 %v4724, 2147483648
  %v4737 = vor.u32 1.1754944e-38, %v4736
  %v4738 = vsel %vm4735, %v4737, %v4733
  %v4739 = vmul.f32 %v4714, %v4738
  %v4740 = vmin.f32 %v4739, 1.0
  %v4741 = vmax.f32 %v4740, -1.0
  %v4742 = vmul.f32 %v4366, %v4366
  %v4743 = vmin.f32 16.0, %v4742
  %v4744 = vmul.f32 %v4743, 2.1237322e-06
  %v4745 = vadd.f32 %v4744, 0.00028619796
  %v4746 = vmul.f32 %v4743, %v4745
  %v4747 = vadd.f32 %v4746, 0.0036580483
  %v4748 = vmul.f32 %v4743, %v4747
  %v4749 = vadd.f32 %v4748, 0.05243302
  %v4750 = vmul.f32 %v4743, %v4749
  %v4751 = vadd.f32 %v4750, 0.18741608
  %v4752 = vmul.f32 %v4743, %v4751
  %v4753 = vadd.f32 %v4752, 1.1283791
  %v4754 = vmul.f32 %v4366, %v4753
  %v4755 = vmul.f32 %v4743, 3.8918573e-05
  %v4756 = vadd.f32 %v4755, 0.001143296
  %v4757 = vmul.f32 %v4743, %v4756
  %v4758 = vadd.f32 %v4757, 0.014752088
  %v4759 = vmul.f32 %v4743, %v4758
  %v4760 = vadd.f32 %v4759, 0.112945676
  %v4761 = vmul.f32 %v4743, %v4760
  %v4762 = vadd.f32 %v4761, 0.4994258
  %v4763 = vmul.f32 %v4743, %v4762
  %v4764 = vadd.f32 %v4763, 1.0
  %v4765 = vrcp.pop %v4764
  %v4766 = vmul.f32 %v4764, %v4765
  %v4767 = vsub.f32 1.0, %v4766
  %v4768 = vmul.f32 %v4765, %v4767
  %v4769 = vadd.f32 %v4765, %v4768
  %vm4770 = vweird.f32 %v4764
  %vm4771 = vweird.f32 %v4765
  %vm4772 = vmor %vm4770, %vm4771
  %v4773 = vsel %vm4772, %v4765, %v4769
  %v4774 = vand.u32 2147483647, %v4764
  %vm4775 = vcmp.eq.f32.partialorder %v4774, 8.507059e+37
  %v4776 = vand.u32 %v4764, 2147483648
  %v4777 = vor.u32 1.1754944e-38, %v4776
  %v4778 = vsel %vm4775, %v4777, %v4773
  %v4779 = vmul.f32 %v4754, %v4778
  %v4780 = vmin.f32 %v4779, 1.0
  %v4781 = vmax.f32 %v4780, -1.0
  %v4782 = vmul.f32 %v4367, %v4367
  %v4783 = vmin.f32 16.0, %v4782
  %v4784 = vmul.f32 %v4783, 2.1237322e-06
  %v4785 = vadd.f32 %v4784, 0.00028619796
  %v4786 = vmul.f32 %v4783, %v4785
  %v4787 = vadd.f32 %v4786, 0.0036580483
  %v4788 = vmul.f32 %v4783, %v4787
  %v4789 = vadd.f32 %v4788, 0.05243302
  %v4790 = vmul.f32 %v4783, %v4789
  %v4791 = vadd.f32 %v4790, 0.18741608
  %v4792 = vmul.f32 %v4783, %v4791
  %v4793 = vadd.f32 %v4792, 1.1283791
  %v4794 = vmul.f32 %v4367, %v4793
  %v4795 = vmul.f32 %v4783, 3.8918573e-05
  %v4796 = vadd.f32 %v4795, 0.001143296
  %v4797 = vmul.f32 %v4783, %v4796
  %v4798 = vadd.f32 %v4797, 0.014752088
  %v4799 = vmul.f32 %v4783, %v4798
  %v4800 = vadd.f32 %v4799, 0.112945676
  %v4801 = vmul.f32 %v4783, %v4800
  %v4802 = vadd.f32 %v4801, 0.4994258
  %v4803 = vmul.f32 %v4783, %v4802
  %v4804 = vadd.f32 %v4803, 1.0
  %v4805 = vrcp.pop %v4804
  %v4806 = vmul.f32 %v4804, %v4805
  %v4807 = vsub.f32 1.0, %v4806
  %v4808 = vmul.f32 %v4805, %v4807
  %v4809 = vadd.f32 %v4805, %v4808
  %vm4810 = vweird.f32 %v4804
  %vm4811 = vweird.f32 %v4805
  %vm4812 = vmor %vm4810, %vm4811
  %v4813 = vsel %vm4812, %v4805, %v4809
  %v4814 = vand.u32 2147483647, %v4804
  %vm4815 = vcmp.eq.f32.partialorder %v4814, 8.507059e+37
  %v4816 = vand.u32 %v4804, 2147483648
  %v4817 = vor.u32 1.1754944e-38, %v4816
  %v4818 = vsel %vm4815, %v4817, %v4813
  %v4819 = vmul.f32 %v4794, %v4818
  %v4820 = vmin.f32 %v4819, 1.0
  %v4821 = vmax.f32 %v4820, -1.0
  %v4822 = vmul.f32 %v4368, %v4368
  %v4823 = vmin.f32 16.0, %v4822
  %v4824 = vmul.f32 %v4823, 2.1237322e-06
  %v4825 = vadd.f32 %v4824, 0.00028619796
  %v4826 = vmul.f32 %v4823, %v4825
  %v4827 = vadd.f32 %v4826, 0.0036580483
  %v4828 = vmul.f32 %v4823, %v4827
  %v4829 = vadd.f32 %v4828, 0.05243302
  %v4830 = vmul.f32 %v4823, %v4829
  %v4831 = vadd.f32 %v4830, 0.18741608
  %v4832 = vmul.f32 %v4823, %v4831
  %v4833 = vadd.f32 %v4832, 1.1283791
  %v4834 = vmul.f32 %v4368, %v4833
  %v4835 = vmul.f32 %v4823, 3.8918573e-05
  %v4836 = vadd.f32 %v4835, 0.001143296
  %v4837 = vmul.f32 %v4823, %v4836
  %v4838 = vadd.f32 %v4837, 0.014752088
  %v4839 = vmul.f32 %v4823, %v4838
  %v4840 = vadd.f32 %v4839, 0.112945676
  %v4841 = vmul.f32 %v4823, %v4840
  %v4842 = vadd.f32 %v4841, 0.4994258
  %v4843 = vmul.f32 %v4823, %v4842
  %v4844 = vadd.f32 %v4843, 1.0
  %v4845 = vrcp.pop %v4844
  %v4846 = vmul.f32 %v4844, %v4845
  %v4847 = vsub.f32 1.0, %v4846
  %v4848 = vmul.f32 %v4845, %v4847
  %v4849 = vadd.f32 %v4845, %v4848
  %vm4850 = vweird.f32 %v4844
  %vm4851 = vweird.f32 %v4845
  %vm4852 = vmor %vm4850, %vm4851
  %v4853 = vsel %vm4852, %v4845, %v4849
  %v4854 = vand.u32 2147483647, %v4844
  %vm4855 = vcmp.eq.f32.partialorder %v4854, 8.507059e+37
  %v4856 = vand.u32 %v4844, 2147483648
  %v4857 = vor.u32 1.1754944e-38, %v4856
  %v4858 = vsel %vm4855, %v4857, %v4853
  %v4859 = vmul.f32 %v4834, %v4858
  %v4860 = vmin.f32 %v4859, 1.0
  %v4861 = vmax.f32 %v4860, -1.0
  %v4862 = vmul.f32 %v4369, %v4369
  %v4863 = vmin.f32 16.0, %v4862
  %v4864 = vmul.f32 %v4863, 2.1237322e-06
  %v4865 = vadd.f32 %v4864, 0.00028619796
  %v4866 = vmul.f32 %v4863, %v4865
  %v4867 = vadd.f32 %v4866, 0.0036580483
  %v4868 = vmul.f32 %v4863, %v4867
  %v4869 = vadd.f32 %v4868, 0.05243302
  %v4870 = vmul.f32 %v4863, %v4869
  %v4871 = vadd.f32 %v4870, 0.18741608
  %v4872 = vmul.f32 %v4863, %v4871
  %v4873 = vadd.f32 %v4872, 1.1283791
  %v4874 = vmul.f32 %v4369, %v4873
  %v4875 = vmul.f32 %v4863, 3.8918573e-05
  %v4876 = vadd.f32 %v4875, 0.001143296
  %v4877 = vmul.f32 %v4863, %v4876
  %v4878 = vadd.f32 %v4877, 0.014752088
  %v4879 = vmul.f32 %v4863, %v4878
  %v4880 = vadd.f32 %v4879, 0.112945676
  %v4881 = vmul.f32 %v4863, %v4880
  %v4882 = vadd.f32 %v4881, 0.4994258
  %v4883 = vmul.f32 %v4863, %v4882
  %v4884 = vadd.f32 %v4883, 1.0
  %v4885 = vrcp.pop %v4884
  %v4886 = vmul.f32 %v4884, %v4885
  %v4887 = vsub.f32 1.0, %v4886
  %v4888 = vmul.f32 %v4885, %v4887
  %v4889 = vadd.f32 %v4885, %v4888
  %vm4890 = vweird.f32 %v4884
  %vm4891 = vweird.f32 %v4885
  %vm4892 = vmor %vm4890, %vm4891
  %v4893 = vsel %vm4892, %v4885, %v4889
  %v4894 = vand.u32 2147483647, %v4884
  %vm4895 = vcmp.eq.f32.partialorder %v4894, 8.507059e+37
  %v4896 = vand.u32 %v4884, 2147483648
  %v4897 = vor.u32 1.1754944e-38, %v4896
  %v4898 = vsel %vm4895, %v4897, %v4893
  %v4899 = vmul.f32 %v4874, %v4898
  %v4900 = vmin.f32 %v4899, 1.0
  %v4901 = vmax.f32 %v4900, -1.0
  %v4902 = vmul.f32 %v4370, %v4370
  %v4903 = vmin.f32 16.0, %v4902
  %v4904 = vmul.f32 %v4903, 2.1237322e-06
  %v4905 = vadd.f32 %v4904, 0.00028619796
  %v4906 = vmul.f32 %v4903, %v4905
  %v4907 = vadd.f32 %v4906, 0.0036580483
  %v4908 = vmul.f32 %v4903, %v4907
  %v4909 = vadd.f32 %v4908, 0.05243302
  %v4910 = vmul.f32 %v4903, %v4909
  %v4911 = vadd.f32 %v4910, 0.18741608
  %v4912 = vmul.f32 %v4903, %v4911
  %v4913 = vadd.f32 %v4912, 1.1283791
  %v4914 = vmul.f32 %v4370, %v4913
  %v4915 = vmul.f32 %v4903, 3.8918573e-05
  %v4916 = vadd.f32 %v4915, 0.001143296
  %v4917 = vmul.f32 %v4903, %v4916
  %v4918 = vadd.f32 %v4917, 0.014752088
  %v4919 = vmul.f32 %v4903, %v4918
  %v4920 = vadd.f32 %v4919, 0.112945676
  %v4921 = vmul.f32 %v4903, %v4920
  %v4922 = vadd.f32 %v4921, 0.4994258
  %v4923 = vmul.f32 %v4903, %v4922
  %v4924 = vadd.f32 %v4923, 1.0
  %v4925 = vrcp.pop %v4924
  %v4926 = vmul.f32 %v4924, %v4925
  %v4927 = vsub.f32 1.0, %v4926
  %v4928 = vmul.f32 %v4925, %v4927
  %v4929 = vadd.f32 %v4925, %v4928
  %vm4930 = vweird.f32 %v4924
  %vm4931 = vweird.f32 %v4925
  %vm4932 = vmor %vm4930, %vm4931
  %v4933 = vsel %vm4932, %v4925, %v4929
  %v4934 = vand.u32 2147483647, %v4924
  %vm4935 = vcmp.eq.f32.partialorder %v4934, 8.507059e+37
  %v4936 = vand.u32 %v4924, 2147483648
  %v4937 = vor.u32 1.1754944e-38, %v4936
  %v4938 = vsel %vm4935, %v4937, %v4933
  %v4939 = vmul.f32 %v4914, %v4938
  %v4940 = vmin.f32 %v4939, 1.0
  %v4941 = vmax.f32 %v4940, -1.0
  %v4942 = vmul.f32 %v4371, %v4371
  %v4943 = vmin.f32 16.0, %v4942
  %v4944 = vmul.f32 %v4943, 2.1237322e-06
  %v4945 = vadd.f32 %v4944, 0.00028619796
  %v4946 = vmul.f32 %v4943, %v4945
  %v4947 = vadd.f32 %v4946, 0.0036580483
  %v4948 = vmul.f32 %v4943, %v4947
  %v4949 = vadd.f32 %v4948, 0.05243302
  %v4950 = vmul.f32 %v4943, %v4949
  %v4951 = vadd.f32 %v4950, 0.18741608
  %v4952 = vmul.f32 %v4943, %v4951
  %v4953 = vadd.f32 %v4952, 1.1283791
  %v4954 = vmul.f32 %v4371, %v4953
  %v4955 = vmul.f32 %v4943, 3.8918573e-05
  %v4956 = vadd.f32 %v4955, 0.001143296
  %v4957 = vmul.f32 %v4943, %v4956
  %v4958 = vadd.f32 %v4957, 0.014752088
  %v4959 = vmul.f32 %v4943, %v4958
  %v4960 = vadd.f32 %v4959, 0.112945676
  %v4961 = vmul.f32 %v4943, %v4960
  %v4962 = vadd.f32 %v4961, 0.4994258
  %v4963 = vmul.f32 %v4943, %v4962
  %v4964 = vadd.f32 %v4963, 1.0
  %v4965 = vrcp.pop %v4964
  %v4966 = vmul.f32 %v4964, %v4965
  %v4967 = vsub.f32 1.0, %v4966
  %v4968 = vmul.f32 %v4965, %v4967
  %v4969 = vadd.f32 %v4965, %v4968
  %vm4970 = vweird.f32 %v4964
  %vm4971 = vweird.f32 %v4965
  %vm4972 = vmor %vm4970, %vm4971
  %v4973 = vsel %vm4972, %v4965, %v4969
  %v4974 = vand.u32 2147483647, %v4964
  %vm4975 = vcmp.eq.f32.partialorder %v4974, 8.507059e+37
  %v4976 = vand.u32 %v4964, 2147483648
  %v4977 = vor.u32 1.1754944e-38, %v4976
  %v4978 = vsel %vm4975, %v4977, %v4973
  %v4979 = vmul.f32 %v4954, %v4978
  %v4980 = vmin.f32 %v4979, 1.0
  %v4981 = vmax.f32 %v4980, -1.0
  %v4982 = vmul.f32 %v4372, %v4372
  %v4983 = vmin.f32 16.0, %v4982
  %v4984 = vmul.f32 %v4983, 2.1237322e-06
  %v4985 = vadd.f32 %v4984, 0.00028619796
  %v4986 = vmul.f32 %v4983, %v4985
  %v4987 = vadd.f32 %v4986, 0.0036580483
  %v4988 = vmul.f32 %v4983, %v4987
  %v4989 = vadd.f32 %v4988, 0.05243302
  %v4990 = vmul.f32 %v4983, %v4989
  %v4991 = vadd.f32 %v4990, 0.18741608
  %v4992 = vmul.f32 %v4983, %v4991
  %v4993 = vadd.f32 %v4992, 1.1283791
  %v4994 = vmul.f32 %v4372, %v4993
  %v4995 = vmul.f32 %v4983, 3.8918573e-05
  %v4996 = vadd.f32 %v4995, 0.001143296
  %v4997 = vmul.f32 %v4983, %v4996
  %v4998 = vadd.f32 %v4997, 0.014752088
  %v4999 = vmul.f32 %v4983, %v4998
  %v5000 = vadd.f32 %v4999, 0.112945676
  %v5001 = vmul.f32 %v4983, %v5000
  %v5002 = vadd.f32 %v5001, 0.4994258
  %v5003 = vmul.f32 %v4983, %v5002
  %v5004 = vadd.f32 %v5003, 1.0
  %v5005 = vrcp.pop %v5004
  %v5006 = vmul.f32 %v5004, %v5005
  %v5007 = vsub.f32 1.0, %v5006
  %v5008 = vmul.f32 %v5005, %v5007
  %v5009 = vadd.f32 %v5005, %v5008
  %vm5010 = vweird.f32 %v5004
  %vm5011 = vweird.f32 %v5005
  %vm5012 = vmor %vm5010, %vm5011
  %v5013 = vsel %vm5012, %v5005, %v5009
  %v5014 = vand.u32 2147483647, %v5004
  %vm5015 = vcmp.eq.f32.partialorder %v5014, 8.507059e+37
  %v5016 = vand.u32 %v5004, 2147483648
  %v5017 = vor.u32 1.1754944e-38, %v5016
  %v5018 = vsel %vm5015, %v5017, %v5013
  %v5019 = vmul.f32 %v4994, %v5018
  %v5020 = vmin.f32 %v5019, 1.0
  %v5021 = vmax.f32 %v5020, -1.0
  %v5022 = vmul.f32 %v4373, %v4373
  %v5023 = vmin.f32 16.0, %v5022
  %v5024 = vmul.f32 %v5023, 2.1237322e-06
  %v5025 = vadd.f32 %v5024, 0.00028619796
  %v5026 = vmul.f32 %v5023, %v5025
  %v5027 = vadd.f32 %v5026, 0.0036580483
  %v5028 = vmul.f32 %v5023, %v5027
  %v5029 = vadd.f32 %v5028, 0.05243302
  %v5030 = vmul.f32 %v5023, %v5029
  %v5031 = vadd.f32 %v5030, 0.18741608
  %v5032 = vmul.f32 %v5023, %v5031
  %v5033 = vadd.f32 %v5032, 1.1283791
  %v5034 = vmul.f32 %v4373, %v5033
  %v5035 = vmul.f32 %v5023, 3.8918573e-05
  %v5036 = vadd.f32 %v5035, 0.001143296
  %v5037 = vmul.f32 %v5023, %v5036
  %v5038 = vadd.f32 %v5037, 0.014752088
  %v5039 = vmul.f32 %v5023, %v5038
  %v5040 = vadd.f32 %v5039, 0.112945676
  %v5041 = vmul.f32 %v5023, %v5040
  %v5042 = vadd.f32 %v5041, 0.4994258
  %v5043 = vmul.f32 %v5023, %v5042
  %v5044 = vadd.f32 %v5043, 1.0
  %v5045 = vrcp.pop %v5044
  %v5046 = vmul.f32 %v5044, %v5045
  %v5047 = vsub.f32 1.0, %v5046
  %v5048 = vmul.f32 %v5045, %v5047
  %v5049 = vadd.f32 %v5045, %v5048
  %vm5050 = vweird.f32 %v5044
  %vm5051 = vweird.f32 %v5045
  %vm5052 = vmor %vm5050, %vm5051
  %v5053 = vsel %vm5052, %v5045, %v5049
  %v5054 = vand.u32 2147483647, %v5044
  %vm5055 = vcmp.eq.f32.partialorder %v5054, 8.507059e+37
  %v5056 = vand.u32 %v5044, 2147483648
  %v5057 = vor.u32 1.1754944e-38, %v5056
  %v5058 = vsel %vm5055, %v5057, %v5053
  %v5059 = vmul.f32 %v5034, %v5058
  %v5060 = vmin.f32 %v5059, 1.0
  %v5061 = vmax.f32 %v5060, -1.0
  %v5062 = vmul.f32 %v4374, %v4374
  %v5063 = vmin.f32 16.0, %v5062
  %v5064 = vmul.f32 %v5063, 2.1237322e-06
  %v5065 = vadd.f32 %v5064, 0.00028619796
  %v5066 = vmul.f32 %v5063, %v5065
  %v5067 = vadd.f32 %v5066, 0.0036580483
  %v5068 = vmul.f32 %v5063, %v5067
  %v5069 = vadd.f32 %v5068, 0.05243302
  %v5070 = vmul.f32 %v5063, %v5069
  %v5071 = vadd.f32 %v5070, 0.18741608
  %v5072 = vmul.f32 %v5063, %v5071
  %v5073 = vadd.f32 %v5072, 1.1283791
  %v5074 = vmul.f32 %v4374, %v5073
  %v5075 = vmul.f32 %v5063, 3.8918573e-05
  %v5076 = vadd.f32 %v5075, 0.001143296
  %v5077 = vmul.f32 %v5063, %v5076
  %v5078 = vadd.f32 %v5077, 0.014752088
  %v5079 = vmul.f32 %v5063, %v5078
  %v5080 = vadd.f32 %v5079, 0.112945676
  %v5081 = vmul.f32 %v5063, %v5080
  %v5082 = vadd.f32 %v5081, 0.4994258
  %v5083 = vmul.f32 %v5063, %v5082
  %v5084 = vadd.f32 %v5083, 1.0
  %v5085 = vrcp.pop %v5084
  %v5086 = vmul.f32 %v5084, %v5085
  %v5087 = vsub.f32 1.0, %v5086
  %v5088 = vmul.f32 %v5085, %v5087
  %v5089 = vadd.f32 %v5085, %v5088
  %vm5090 = vweird.f32 %v5084
  %vm5091 = vweird.f32 %v5085
  %vm5092 = vmor %vm5090, %vm5091
  %v5093 = vsel %vm5092, %v5085, %v5089
  %v5094 = vand.u32 2147483647, %v5084
  %vm5095 = vcmp.eq.f32.partialorder %v5094, 8.507059e+37
  %v5096 = vand.u32 %v5084, 2147483648
  %v5097 = vor.u32 1.1754944e-38, %v5096
  %v5098 = vsel %vm5095, %v5097, %v5093
  %v5099 = vmul.f32 %v5074, %v5098
  %v5100 = vmin.f32 %v5099, 1.0
  %v5101 = vmax.f32 %v5100, -1.0
  %v5102 = vmul.f32 %v4375, %v4375
  %v5103 = vmin.f32 16.0, %v5102
  %v5104 = vmul.f32 %v5103, 2.1237322e-06
  %v5105 = vadd.f32 %v5104, 0.00028619796
  %v5106 = vmul.f32 %v5103, %v5105
  %v5107 = vadd.f32 %v5106, 0.0036580483
  %v5108 = vmul.f32 %v5103, %v5107
  %v5109 = vadd.f32 %v5108, 0.05243302
  %v5110 = vmul.f32 %v5103, %v5109
  %v5111 = vadd.f32 %v5110, 0.18741608
  %v5112 = vmul.f32 %v5103, %v5111
  %v5113 = vadd.f32 %v5112, 1.1283791
  %v5114 = vmul.f32 %v4375, %v5113
  %v5115 = vmul.f32 %v5103, 3.8918573e-05
  %v5116 = vadd.f32 %v5115, 0.001143296
  %v5117 = vmul.f32 %v5103, %v5116
  %v5118 = vadd.f32 %v5117, 0.014752088
  %v5119 = vmul.f32 %v5103, %v5118
  %v5120 = vadd.f32 %v5119, 0.112945676
  %v5121 = vmul.f32 %v5103, %v5120
  %v5122 = vadd.f32 %v5121, 0.4994258
  %v5123 = vmul.f32 %v5103, %v5122
  %v5124 = vadd.f32 %v5123, 1.0
  %v5125 = vrcp.pop %v5124
  %v5126 = vmul.f32 %v5124, %v5125
  %v5127 = vsub.f32 1.0, %v5126
  %v5128 = vmul.f32 %v5125, %v5127
  %v5129 = vadd.f32 %v5125, %v5128
  %vm5130 = vweird.f32 %v5124
  %vm5131 = vweird.f32 %v5125
  %vm5132 = vmor %vm5130, %vm5131
  %v5133 = vsel %vm5132, %v5125, %v5129
  %v5134 = vand.u32 2147483647, %v5124
  %vm5135 = vcmp.eq.f32.partialorder %v5134, 8.507059e+37
  %v5136 = vand.u32 %v5124, 2147483648
  %v5137 = vor.u32 1.1754944e-38, %v5136
  %v5138 = vsel %vm5135, %v5137, %v5133
  %v5139 = vmul.f32 %v5114, %v5138
  %v5140 = vmin.f32 %v5139, 1.0
  %v5141 = vmax.f32 %v5140, -1.0
  %v5142 = vmul.f32 %v4376, %v4376
  %v5143 = vmin.f32 16.0, %v5142
  %v5144 = vmul.f32 %v5143, 2.1237322e-06
  %v5145 = vadd.f32 %v5144, 0.00028619796
  %v5146 = vmul.f32 %v5143, %v5145
  %v5147 = vadd.f32 %v5146, 0.0036580483
  %v5148 = vmul.f32 %v5143, %v5147
  %v5149 = vadd.f32 %v5148, 0.05243302
  %v5150 = vmul.f32 %v5143, %v5149
  %v5151 = vadd.f32 %v5150, 0.18741608
  %v5152 = vmul.f32 %v5143, %v5151
  %v5153 = vadd.f32 %v5152, 1.1283791
  %v5154 = vmul.f32 %v4376, %v5153
  %v5155 = vmul.f32 %v5143, 3.8918573e-05
  %v5156 = vadd.f32 %v5155, 0.001143296
  %v5157 = vmul.f32 %v5143, %v5156
  %v5158 = vadd.f32 %v5157, 0.014752088
  %v5159 = vmul.f32 %v5143, %v5158
  %v5160 = vadd.f32 %v5159, 0.112945676
  %v5161 = vmul.f32 %v5143, %v5160
  %v5162 = vadd.f32 %v5161, 0.4994258
  %v5163 = vmul.f32 %v5143, %v5162
  %v5164 = vadd.f32 %v5163, 1.0
  %v5165 = vrcp.pop %v5164
  %v5166 = vmul.f32 %v5164, %v5165
  %v5167 = vsub.f32 1.0, %v5166
  %v5168 = vmul.f32 %v5165, %v5167
  %v5169 = vadd.f32 %v5165, %v5168
  %vm5170 = vweird.f32 %v5164
  %vm5171 = vweird.f32 %v5165
  %vm5172 = vmor %vm5170, %vm5171
  %v5173 = vsel %vm5172, %v5165, %v5169
  %v5174 = vand.u32 2147483647, %v5164
  %vm5175 = vcmp.eq.f32.partialorder %v5174, 8.507059e+37
  %v5176 = vand.u32 %v5164, 2147483648
  %v5177 = vor.u32 1.1754944e-38, %v5176
  %v5178 = vsel %vm5175, %v5177, %v5173
  %v5179 = vmul.f32 %v5154, %v5178
  %v5180 = vmin.f32 %v5179, 1.0
  %v5181 = vmax.f32 %v5180, -1.0
  %v5182 = vmul.f32 %v4377, %v4377
  %v5183 = vmin.f32 16.0, %v5182
  %v5184 = vmul.f32 %v5183, 2.1237322e-06
  %v5185 = vadd.f32 %v5184, 0.00028619796
  %v5186 = vmul.f32 %v5183, %v5185
  %v5187 = vadd.f32 %v5186, 0.0036580483
  %v5188 = vmul.f32 %v5183, %v5187
  %v5189 = vadd.f32 %v5188, 0.05243302
  %v5190 = vmul.f32 %v5183, %v5189
  %v5191 = vadd.f32 %v5190, 0.18741608
  %v5192 = vmul.f32 %v5183, %v5191
  %v5193 = vadd.f32 %v5192, 1.1283791
  %v5194 = vmul.f32 %v4377, %v5193
  %v5195 = vmul.f32 %v5183, 3.8918573e-05
  %v5196 = vadd.f32 %v5195, 0.001143296
  %v5197 = vmul.f32 %v5183, %v5196
  %v5198 = vadd.f32 %v5197, 0.014752088
  %v5199 = vmul.f32 %v5183, %v5198
  %v5200 = vadd.f32 %v5199, 0.112945676
  %v5201 = vmul.f32 %v5183, %v5200
  %v5202 = vadd.f32 %v5201, 0.4994258
  %v5203 = vmul.f32 %v5183, %v5202
  %v5204 = vadd.f32 %v5203, 1.0
  %v5205 = vrcp.pop %v5204
  %v5206 = vmul.f32 %v5204, %v5205
  %v5207 = vsub.f32 1.0, %v5206
  %v5208 = vmul.f32 %v5205, %v5207
  %v5209 = vadd.f32 %v5205, %v5208
  %vm5210 = vweird.f32 %v5204
  %vm5211 = vweird.f32 %v5205
  %vm5212 = vmor %vm5210, %vm5211
  %v5213 = vsel %vm5212, %v5205, %v5209
  %v5214 = vand.u32 2147483647, %v5204
  %vm5215 = vcmp.eq.f32.partialorder %v5214, 8.507059e+37
  %v5216 = vand.u32 %v5204, 2147483648
  %v5217 = vor.u32 1.1754944e-38, %v5216
  %v5218 = vsel %vm5215, %v5217, %v5213
  %v5219 = vmul.f32 %v5194, %v5218
  %v5220 = vmin.f32 %v5219, 1.0
  %v5221 = vmax.f32 %v5220, -1.0
  %v5222 = vmul.f32 %v4378, %v4378
  %v5223 = vmin.f32 16.0, %v5222
  %v5224 = vmul.f32 %v5223, 2.1237322e-06
  %v5225 = vadd.f32 %v5224, 0.00028619796
  %v5226 = vmul.f32 %v5223, %v5225
  %v5227 = vadd.f32 %v5226, 0.0036580483
  %v5228 = vmul.f32 %v5223, %v5227
  %v5229 = vadd.f32 %v5228, 0.05243302
  %v5230 = vmul.f32 %v5223, %v5229
  %v5231 = vadd.f32 %v5230, 0.18741608
  %v5232 = vmul.f32 %v5223, %v5231
  %v5233 = vadd.f32 %v5232, 1.1283791
  %v5234 = vmul.f32 %v4378, %v5233
  %v5235 = vmul.f32 %v5223, 3.8918573e-05
  %v5236 = vadd.f32 %v5235, 0.001143296
  %v5237 = vmul.f32 %v5223, %v5236
  %v5238 = vadd.f32 %v5237, 0.014752088
  %v5239 = vmul.f32 %v5223, %v5238
  %v5240 = vadd.f32 %v5239, 0.112945676
  %v5241 = vmul.f32 %v5223, %v5240
  %v5242 = vadd.f32 %v5241, 0.4994258
  %v5243 = vmul.f32 %v5223, %v5242
  %v5244 = vadd.f32 %v5243, 1.0
  %v5245 = vrcp.pop %v5244
  %v5246 = vmul.f32 %v5244, %v5245
  %v5247 = vsub.f32 1.0, %v5246
  %v5248 = vmul.f32 %v5245, %v5247
  %v5249 = vadd.f32 %v5245, %v5248
  %vm5250 = vweird.f32 %v5244
  %vm5251 = vweird.f32 %v5245
  %vm5252 = vmor %vm5250, %vm5251
  %v5253 = vsel %vm5252, %v5245, %v5249
  %v5254 = vand.u32 2147483647, %v5244
  %vm5255 = vcmp.eq.f32.partialorder %v5254, 8.507059e+37
  %v5256 = vand.u32 %v5244, 2147483648
  %v5257 = vor.u32 1.1754944e-38, %v5256
  %v5258 = vsel %vm5255, %v5257, %v5253
  %v5259 = vmul.f32 %v5234, %v5258
  %v5260 = vmin.f32 %v5259, 1.0
  %v5261 = vmax.f32 %v5260, -1.0
  %v5262 = vmul.f32 %v4379, %v4379
  %v5263 = vmin.f32 16.0, %v5262
  %v5264 = vmul.f32 %v5263, 2.1237322e-06
  %v5265 = vadd.f32 %v5264, 0.00028619796
  %v5266 = vmul.f32 %v5263, %v5265
  %v5267 = vadd.f32 %v5266, 0.0036580483
  %v5268 = vmul.f32 %v5263, %v5267
  %v5269 = vadd.f32 %v5268, 0.05243302
  %v5270 = vmul.f32 %v5263, %v5269
  %v5271 = vadd.f32 %v5270, 0.18741608
  %v5272 = vmul.f32 %v5263, %v5271
  %v5273 = vadd.f32 %v5272, 1.1283791
  %v5274 = vmul.f32 %v4379, %v5273
  %v5275 = vmul.f32 %v5263, 3.8918573e-05
  %v5276 = vadd.f32 %v5275, 0.001143296
  %v5277 = vmul.f32 %v5263, %v5276
  %v5278 = vadd.f32 %v5277, 0.014752088
  %v5279 = vmul.f32 %v5263, %v5278
  %v5280 = vadd.f32 %v5279, 0.112945676
  %v5281 = vmul.f32 %v5263, %v5280
  %v5282 = vadd.f32 %v5281, 0.4994258
  %v5283 = vmul.f32 %v5263, %v5282
  %v5284 = vadd.f32 %v5283, 1.0
  %v5285 = vrcp.pop %v5284
  %v5286 = vmul.f32 %v5284, %v5285
  %v5287 = vsub.f32 1.0, %v5286
  %v5288 = vmul.f32 %v5285, %v5287
  %v5289 = vadd.f32 %v5285, %v5288
  %vm5290 = vweird.f32 %v5284
  %vm5291 = vweird.f32 %v5285
  %vm5292 = vmor %vm5290, %vm5291
  %v5293 = vsel %vm5292, %v5285, %v5289
  %v5294 = vand.u32 2147483647, %v5284
  %vm5295 = vcmp.eq.f32.partialorder %v5294, 8.507059e+37
  %v5296 = vand.u32 %v5284, 2147483648
  %v5297 = vor.u32 1.1754944e-38, %v5296
  %v5298 = vsel %vm5295, %v5297, %v5293
  %v5299 = vmul.f32 %v5274, %v5298
  %v5300 = vmin.f32 %v5299, 1.0
  %v5301 = vmax.f32 %v5300, -1.0
  %v5302 = vmul.f32 %v4380, %v4380
  %v5303 = vmin.f32 16.0, %v5302
  %v5304 = vmul.f32 %v5303, 2.1237322e-06
  %v5305 = vadd.f32 %v5304, 0.00028619796
  %v5306 = vmul.f32 %v5303, %v5305
  %v5307 = vadd.f32 %v5306, 0.0036580483
  %v5308 = vmul.f32 %v5303, %v5307
  %v5309 = vadd.f32 %v5308, 0.05243302
  %v5310 = vmul.f32 %v5303, %v5309
  %v5311 = vadd.f32 %v5310, 0.18741608
  %v5312 = vmul.f32 %v5303, %v5311
  %v5313 = vadd.f32 %v5312, 1.1283791
  %v5314 = vmul.f32 %v4380, %v5313
  %v5315 = vmul.f32 %v5303, 3.8918573e-05
  %v5316 = vadd.f32 %v5315, 0.001143296
  %v5317 = vmul.f32 %v5303, %v5316
  %v5318 = vadd.f32 %v5317, 0.014752088
  %v5319 = vmul.f32 %v5303, %v5318
  %v5320 = vadd.f32 %v5319, 0.112945676
  %v5321 = vmul.f32 %v5303, %v5320
  %v5322 = vadd.f32 %v5321, 0.4994258
  %v5323 = vmul.f32 %v5303, %v5322
  %v5324 = vadd.f32 %v5323, 1.0
  %v5325 = vrcp.pop %v5324
  %v5326 = vmul.f32 %v5324, %v5325
  %v5327 = vsub.f32 1.0, %v5326
  %v5328 = vmul.f32 %v5325, %v5327
  %v5329 = vadd.f32 %v5325, %v5328
  %vm5330 = vweird.f32 %v5324
  %vm5331 = vweird.f32 %v5325
  %vm5332 = vmor %vm5330, %vm5331
  %v5333 = vsel %vm5332, %v5325, %v5329
  %v5334 = vand.u32 2147483647, %v5324
  %vm5335 = vcmp.eq.f32.partialorder %v5334, 8.507059e+37
  %v5336 = vand.u32 %v5324, 2147483648
  %v5337 = vor.u32 1.1754944e-38, %v5336
  %v5338 = vsel %vm5335, %v5337, %v5333
  %v5339 = vmul.f32 %v5314, %v5338
  %v5340 = vmin.f32 %v5339, 1.0
  %v5341 = vmax.f32 %v5340, -1.0
  %v5342 = vmul.f32 %v4381, %v4381
  %v5343 = vmin.f32 16.0, %v5342
  %v5344 = vmul.f32 %v5343, 2.1237322e-06
  %v5345 = vadd.f32 %v5344, 0.00028619796
  %v5346 = vmul.f32 %v5343, %v5345
  %v5347 = vadd.f32 %v5346, 0.0036580483
  %v5348 = vmul.f32 %v5343, %v5347
  %v5349 = vadd.f32 %v5348, 0.05243302
  %v5350 = vmul.f32 %v5343, %v5349
  %v5351 = vadd.f32 %v5350, 0.18741608
  %v5352 = vmul.f32 %v5343, %v5351
  %v5353 = vadd.f32 %v5352, 1.1283791
  %v5354 = vmul.f32 %v4381, %v5353
  %v5355 = vmul.f32 %v5343, 3.8918573e-05
  %v5356 = vadd.f32 %v5355, 0.001143296
  %v5357 = vmul.f32 %v5343, %v5356
  %v5358 = vadd.f32 %v5357, 0.014752088
  %v5359 = vmul.f32 %v5343, %v5358
  %v5360 = vadd.f32 %v5359, 0.112945676
  %v5361 = vmul.f32 %v5343, %v5360
  %v5362 = vadd.f32 %v5361, 0.4994258
  %v5363 = vmul.f32 %v5343, %v5362
  %v5364 = vadd.f32 %v5363, 1.0
  %v5365 = vrcp.pop %v5364
  %v5366 = vmul.f32 %v5364, %v5365
  %v5367 = vsub.f32 1.0, %v5366
  %v5368 = vmul.f32 %v5365, %v5367
  %v5369 = vadd.f32 %v5365, %v5368
  %vm5370 = vweird.f32 %v5364
  %vm5371 = vweird.f32 %v5365
  %vm5372 = vmor %vm5370, %vm5371
  %v5373 = vsel %vm5372, %v5365, %v5369
  %v5374 = vand.u32 2147483647, %v5364
  %vm5375 = vcmp.eq.f32.partialorder %v5374, 8.507059e+37
  %v5376 = vand.u32 %v5364, 2147483648
  %v5377 = vor.u32 1.1754944e-38, %v5376
  %v5378 = vsel %vm5375, %v5377, %v5373
  %v5379 = vmul.f32 %v5354, %v5378
  %v5380 = vmin.f32 %v5379, 1.0
  %v5381 = vmax.f32 %v5380, -1.0
  %v5382 = vmul.f32 %v4382, %v4382
  %v5383 = vmin.f32 16.0, %v5382
  %v5384 = vmul.f32 %v5383, 2.1237322e-06
  %v5385 = vadd.f32 %v5384, 0.00028619796
  %v5386 = vmul.f32 %v5383, %v5385
  %v5387 = vadd.f32 %v5386, 0.0036580483
  %v5388 = vmul.f32 %v5383, %v5387
  %v5389 = vadd.f32 %v5388, 0.05243302
  %v5390 = vmul.f32 %v5383, %v5389
  %v5391 = vadd.f32 %v5390, 0.18741608
  %v5392 = vmul.f32 %v5383, %v5391
  %v5393 = vadd.f32 %v5392, 1.1283791
  %v5394 = vmul.f32 %v4382, %v5393
  %v5395 = vmul.f32 %v5383, 3.8918573e-05
  %v5396 = vadd.f32 %v5395, 0.001143296
  %v5397 = vmul.f32 %v5383, %v5396
  %v5398 = vadd.f32 %v5397, 0.014752088
  %v5399 = vmul.f32 %v5383, %v5398
  %v5400 = vadd.f32 %v5399, 0.112945676
  %v5401 = vmul.f32 %v5383, %v5400
  %v5402 = vadd.f32 %v5401, 0.4994258
  %v5403 = vmul.f32 %v5383, %v5402
  %v5404 = vadd.f32 %v5403, 1.0
  %v5405 = vrcp.pop %v5404
  %v5406 = vmul.f32 %v5404, %v5405
  %v5407 = vsub.f32 1.0, %v5406
  %v5408 = vmul.f32 %v5405, %v5407
  %v5409 = vadd.f32 %v5405, %v5408
  %vm5410 = vweird.f32 %v5404
  %vm5411 = vweird.f32 %v5405
  %vm5412 = vmor %vm5410, %vm5411
  %v5413 = vsel %vm5412, %v5405, %v5409
  %v5414 = vand.u32 2147483647, %v5404
  %vm5415 = vcmp.eq.f32.partialorder %v5414, 8.507059e+37
  %v5416 = vand.u32 %v5404, 2147483648
  %v5417 = vor.u32 1.1754944e-38, %v5416
  %v5418 = vsel %vm5415, %v5417, %v5413
  %v5419 = vmul.f32 %v5394, %v5418
  %v5420 = vmin.f32 %v5419, 1.0
  %v5421 = vmax.f32 %v5420, -1.0
  %v5422 = vmul.f32 %v4383, %v4383
  %v5423 = vmin.f32 16.0, %v5422
  %v5424 = vmul.f32 %v5423, 2.1237322e-06
  %v5425 = vadd.f32 %v5424, 0.00028619796
  %v5426 = vmul.f32 %v5423, %v5425
  %v5427 = vadd.f32 %v5426, 0.0036580483
  %v5428 = vmul.f32 %v5423, %v5427
  %v5429 = vadd.f32 %v5428, 0.05243302
  %v5430 = vmul.f32 %v5423, %v5429
  %v5431 = vadd.f32 %v5430, 0.18741608
  %v5432 = vmul.f32 %v5423, %v5431
  %v5433 = vadd.f32 %v5432, 1.1283791
  %v5434 = vmul.f32 %v4383, %v5433
  %v5435 = vmul.f32 %v5423, 3.8918573e-05
  %v5436 = vadd.f32 %v5435, 0.001143296
  %v5437 = vmul.f32 %v5423, %v5436
  %v5438 = vadd.f32 %v5437, 0.014752088
  %v5439 = vmul.f32 %v5423, %v5438
  %v5440 = vadd.f32 %v5439, 0.112945676
  %v5441 = vmul.f32 %v5423, %v5440
  %v5442 = vadd.f32 %v5441, 0.4994258
  %v5443 = vmul.f32 %v5423, %v5442
  %v5444 = vadd.f32 %v5443, 1.0
  %v5445 = vrcp.pop %v5444
  %v5446 = vmul.f32 %v5444, %v5445
  %v5447 = vsub.f32 1.0, %v5446
  %v5448 = vmul.f32 %v5445, %v5447
  %v5449 = vadd.f32 %v5445, %v5448
  %vm5450 = vweird.f32 %v5444
  %vm5451 = vweird.f32 %v5445
  %vm5452 = vmor %vm5450, %vm5451
  %v5453 = vsel %vm5452, %v5445, %v5449
  %v5454 = vand.u32 2147483647, %v5444
  %vm5455 = vcmp.eq.f32.partialorder %v5454, 8.507059e+37
  %v5456 = vand.u32 %v5444, 2147483648
  %v5457 = vor.u32 1.1754944e-38, %v5456
  %v5458 = vsel %vm5455, %v5457, %v5453
  %v5459 = vmul.f32 %v5434, %v5458
  %v5460 = vmin.f32 %v5459, 1.0
  %v5461 = vmax.f32 %v5460, -1.0
  %v5462 = vmul.f32 %v4384, %v4384
  %v5463 = vmin.f32 16.0, %v5462
  %v5464 = vmul.f32 %v5463, 2.1237322e-06
  %v5465 = vadd.f32 %v5464, 0.00028619796
  %v5466 = vmul.f32 %v5463, %v5465
  %v5467 = vadd.f32 %v5466, 0.0036580483
  %v5468 = vmul.f32 %v5463, %v5467
  %v5469 = vadd.f32 %v5468, 0.05243302
  %v5470 = vmul.f32 %v5463, %v5469
  %v5471 = vadd.f32 %v5470, 0.18741608
  %v5472 = vmul.f32 %v5463, %v5471
  %v5473 = vadd.f32 %v5472, 1.1283791
  %v5474 = vmul.f32 %v4384, %v5473
  %v5475 = vmul.f32 %v5463, 3.8918573e-05
  %v5476 = vadd.f32 %v5475, 0.001143296
  %v5477 = vmul.f32 %v5463, %v5476
  %v5478 = vadd.f32 %v5477, 0.014752088
  %v5479 = vmul.f32 %v5463, %v5478
  %v5480 = vadd.f32 %v5479, 0.112945676
  %v5481 = vmul.f32 %v5463, %v5480
  %v5482 = vadd.f32 %v5481, 0.4994258
  %v5483 = vmul.f32 %v5463, %v5482
  %v5484 = vadd.f32 %v5483, 1.0
  %v5485 = vrcp.pop %v5484
  %v5486 = vmul.f32 %v5484, %v5485
  %v5487 = vsub.f32 1.0, %v5486
  %v5488 = vmul.f32 %v5485, %v5487
  %v5489 = vadd.f32 %v5485, %v5488
  %vm5490 = vweird.f32 %v5484
  %vm5491 = vweird.f32 %v5485
  %vm5492 = vmor %vm5490, %vm5491
  %v5493 = vsel %vm5492, %v5485, %v5489
  %v5494 = vand.u32 2147483647, %v5484
  %vm5495 = vcmp.eq.f32.partialorder %v5494, 8.507059e+37
  %v5496 = vand.u32 %v5484, 2147483648
  %v5497 = vor.u32 1.1754944e-38, %v5496
  %v5498 = vsel %vm5495, %v5497, %v5493
  %v5499 = vmul.f32 %v5474, %v5498
  %v5500 = vmin.f32 %v5499, 1.0
  %v5501 = vmax.f32 %v5500, -1.0
  %v5502 = vmul.f32 %v4385, %v4385
  %v5503 = vmin.f32 16.0, %v5502
  %v5504 = vmul.f32 %v5503, 2.1237322e-06
  %v5505 = vadd.f32 %v5504, 0.00028619796
  %v5506 = vmul.f32 %v5503, %v5505
  %v5507 = vadd.f32 %v5506, 0.0036580483
  %v5508 = vmul.f32 %v5503, %v5507
  %v5509 = vadd.f32 %v5508, 0.05243302
  %v5510 = vmul.f32 %v5503, %v5509
  %v5511 = vadd.f32 %v5510, 0.18741608
  %v5512 = vmul.f32 %v5503, %v5511
  %v5513 = vadd.f32 %v5512, 1.1283791
  %v5514 = vmul.f32 %v4385, %v5513
  %v5515 = vmul.f32 %v5503, 3.8918573e-05
  %v5516 = vadd.f32 %v5515, 0.001143296
  %v5517 = vmul.f32 %v5503, %v5516
  %v5518 = vadd.f32 %v5517, 0.014752088
  %v5519 = vmul.f32 %v5503, %v5518
  %v5520 = vadd.f32 %v5519, 0.112945676
  %v5521 = vmul.f32 %v5503, %v5520
  %v5522 = vadd.f32 %v5521, 0.4994258
  %v5523 = vmul.f32 %v5503, %v5522
  %v5524 = vadd.f32 %v5523, 1.0
  %v5525 = vrcp.pop %v5524
  %v5526 = vmul.f32 %v5524, %v5525
  %v5527 = vsub.f32 1.0, %v5526
  %v5528 = vmul.f32 %v5525, %v5527
  %v5529 = vadd.f32 %v5525, %v5528
  %vm5530 = vweird.f32 %v5524
  %vm5531 = vweird.f32 %v5525
  %vm5532 = vmor %vm5530, %vm5531
  %v5533 = vsel %vm5532, %v5525, %v5529
  %v5534 = vand.u32 2147483647, %v5524
  %vm5535 = vcmp.eq.f32.partialorder %v5534, 8.507059e+37
  %v5536 = vand.u32 %v5524, 2147483648
  %v5537 = vor.u32 1.1754944e-38, %v5536
  %v5538 = vsel %vm5535, %v5537, %v5533
  %v5539 = vmul.f32 %v5514, %v5538
  %v5540 = vmin.f32 %v5539, 1.0
  %v5541 = vmax.f32 %v5540, -1.0
  %v5542 = vmul.f32 %v4386, %v4386
  %v5543 = vmin.f32 16.0, %v5542
  %v5544 = vmul.f32 %v5543, 2.1237322e-06
  %v5545 = vadd.f32 %v5544, 0.00028619796
  %v5546 = vmul.f32 %v5543, %v5545
  %v5547 = vadd.f32 %v5546, 0.0036580483
  %v5548 = vmul.f32 %v5543, %v5547
  %v5549 = vadd.f32 %v5548, 0.05243302
  %v5550 = vmul.f32 %v5543, %v5549
  %v5551 = vadd.f32 %v5550, 0.18741608
  %v5552 = vmul.f32 %v5543, %v5551
  %v5553 = vadd.f32 %v5552, 1.1283791
  %v5554 = vmul.f32 %v4386, %v5553
  %v5555 = vmul.f32 %v5543, 3.8918573e-05
  %v5556 = vadd.f32 %v5555, 0.001143296
  %v5557 = vmul.f32 %v5543, %v5556
  %v5558 = vadd.f32 %v5557, 0.014752088
  %v5559 = vmul.f32 %v5543, %v5558
  %v5560 = vadd.f32 %v5559, 0.112945676
  %v5561 = vmul.f32 %v5543, %v5560
  %v5562 = vadd.f32 %v5561, 0.4994258
  %v5563 = vmul.f32 %v5543, %v5562
  %v5564 = vadd.f32 %v5563, 1.0
  %v5565 = vrcp.pop %v5564
  %v5566 = vmul.f32 %v5564, %v5565
  %v5567 = vsub.f32 1.0, %v5566
  %v5568 = vmul.f32 %v5565, %v5567
  %v5569 = vadd.f32 %v5565, %v5568
  %vm5570 = vweird.f32 %v5564
  %vm5571 = vweird.f32 %v5565
  %vm5572 = vmor %vm5570, %vm5571
  %v5573 = vsel %vm5572, %v5565, %v5569
  %v5574 = vand.u32 2147483647, %v5564
  %vm5575 = vcmp.eq.f32.partialorder %v5574, 8.507059e+37
  %v5576 = vand.u32 %v5564, 2147483648
  %v5577 = vor.u32 1.1754944e-38, %v5576
  %v5578 = vsel %vm5575, %v5577, %v5573
  %v5579 = vmul.f32 %v5554, %v5578
  %v5580 = vmin.f32 %v5579, 1.0
  %v5581 = vmax.f32 %v5580, -1.0
  %v5582 = vmul.f32 %v4387, %v4387
  %v5583 = vmin.f32 16.0, %v5582
  %v5584 = vmul.f32 %v5583, 2.1237322e-06
  %v5585 = vadd.f32 %v5584, 0.00028619796
  %v5586 = vmul.f32 %v5583, %v5585
  %v5587 = vadd.f32 %v5586, 0.0036580483
  %v5588 = vmul.f32 %v5583, %v5587
  %v5589 = vadd.f32 %v5588, 0.05243302
  %v5590 = vmul.f32 %v5583, %v5589
  %v5591 = vadd.f32 %v5590, 0.18741608
  %v5592 = vmul.f32 %v5583, %v5591
  %v5593 = vadd.f32 %v5592, 1.1283791
  %v5594 = vmul.f32 %v4387, %v5593
  %v5595 = vmul.f32 %v5583, 3.8918573e-05
  %v5596 = vadd.f32 %v5595, 0.001143296
  %v5597 = vmul.f32 %v5583, %v5596
  %v5598 = vadd.f32 %v5597, 0.014752088
  %v5599 = vmul.f32 %v5583, %v5598
  %v5600 = vadd.f32 %v5599, 0.112945676
  %v5601 = vmul.f32 %v5583, %v5600
  %v5602 = vadd.f32 %v5601, 0.4994258
  %v5603 = vmul.f32 %v5583, %v5602
  %v5604 = vadd.f32 %v5603, 1.0
  %v5605 = vrcp.pop %v5604
  %v5606 = vmul.f32 %v5604, %v5605
  %v5607 = vsub.f32 1.0, %v5606
  %v5608 = vmul.f32 %v5605, %v5607
  %v5609 = vadd.f32 %v5605, %v5608
  %vm5610 = vweird.f32 %v5604
  %vm5611 = vweird.f32 %v5605
  %vm5612 = vmor %vm5610, %vm5611
  %v5613 = vsel %vm5612, %v5605, %v5609
  %v5614 = vand.u32 2147483647, %v5604
  %vm5615 = vcmp.eq.f32.partialorder %v5614, 8.507059e+37
  %v5616 = vand.u32 %v5604, 2147483648
  %v5617 = vor.u32 1.1754944e-38, %v5616
  %v5618 = vsel %vm5615, %v5617, %v5613
  %v5619 = vmul.f32 %v5594, %v5618
  %v5620 = vmin.f32 %v5619, 1.0
  %v5621 = vmax.f32 %v5620, -1.0
  %v5622 = vmul.f32 %v4388, %v4388
  %v5623 = vmin.f32 16.0, %v5622
  %v5624 = vmul.f32 %v5623, 2.1237322e-06
  %v5625 = vadd.f32 %v5624, 0.00028619796
  %v5626 = vmul.f32 %v5623, %v5625
  %v5627 = vadd.f32 %v5626, 0.0036580483
  %v5628 = vmul.f32 %v5623, %v5627
  %v5629 = vadd.f32 %v5628, 0.05243302
  %v5630 = vmul.f32 %v5623, %v5629
  %v5631 = vadd.f32 %v5630, 0.18741608
  %v5632 = vmul.f32 %v5623, %v5631
  %v5633 = vadd.f32 %v5632, 1.1283791
  %v5634 = vmul.f32 %v4388, %v5633
  %v5635 = vmul.f32 %v5623, 3.8918573e-05
  %v5636 = vadd.f32 %v5635, 0.001143296
  %v5637 = vmul.f32 %v5623, %v5636
  %v5638 = vadd.f32 %v5637, 0.014752088
  %v5639 = vmul.f32 %v5623, %v5638
  %v5640 = vadd.f32 %v5639, 0.112945676
  %v5641 = vmul.f32 %v5623, %v5640
  %v5642 = vadd.f32 %v5641, 0.4994258
  %v5643 = vmul.f32 %v5623, %v5642
  %v5644 = vadd.f32 %v5643, 1.0
  %v5645 = vrcp.pop %v5644
  %v5646 = vmul.f32 %v5644, %v5645
  %v5647 = vsub.f32 1.0, %v5646
  %v5648 = vmul.f32 %v5645, %v5647
  %v5649 = vadd.f32 %v5645, %v5648
  %vm5650 = vweird.f32 %v5644
  %vm5651 = vweird.f32 %v5645
  %vm5652 = vmor %vm5650, %vm5651
  %v5653 = vsel %vm5652, %v5645, %v5649
  %v5654 = vand.u32 2147483647, %v5644
  %vm5655 = vcmp.eq.f32.partialorder %v5654, 8.507059e+37
  %v5656 = vand.u32 %v5644, 2147483648
  %v5657 = vor.u32 1.1754944e-38, %v5656
  %v5658 = vsel %vm5655, %v5657, %v5653
  %v5659 = vmul.f32 %v5634, %v5658
  %v5660 = vmin.f32 %v5659, 1.0
  %v5661 = vmax.f32 %v5660, -1.0
  %v5662 = vmul.f32 %v4389, %v4389
  %v5663 = vmin.f32 16.0, %v5662
  %v5664 = vmul.f32 %v5663, 2.1237322e-06
  %v5665 = vadd.f32 %v5664, 0.00028619796
  %v5666 = vmul.f32 %v5663, %v5665
  %v5667 = vadd.f32 %v5666, 0.0036580483
  %v5668 = vmul.f32 %v5663, %v5667
  %v5669 = vadd.f32 %v5668, 0.05243302
  %v5670 = vmul.f32 %v5663, %v5669
  %v5671 = vadd.f32 %v5670, 0.18741608
  %v5672 = vmul.f32 %v5663, %v5671
  %v5673 = vadd.f32 %v5672, 1.1283791
  %v5674 = vmul.f32 %v4389, %v5673
  %v5675 = vmul.f32 %v5663, 3.8918573e-05
  %v5676 = vadd.f32 %v5675, 0.001143296
  %v5677 = vmul.f32 %v5663, %v5676
  %v5678 = vadd.f32 %v5677, 0.014752088
  %v5679 = vmul.f32 %v5663, %v5678
  %v5680 = vadd.f32 %v5679, 0.112945676
  %v5681 = vmul.f32 %v5663, %v5680
  %v5682 = vadd.f32 %v5681, 0.4994258
  %v5683 = vmul.f32 %v5663, %v5682
  %v5684 = vadd.f32 %v5683, 1.0
  %v5685 = vrcp.pop %v5684
  %v5686 = vmul.f32 %v5684, %v5685
  %v5687 = vsub.f32 1.0, %v5686
  %v5688 = vmul.f32 %v5685, %v5687
  %v5689 = vadd.f32 %v5685, %v5688
  %vm5690 = vweird.f32 %v5684
  %vm5691 = vweird.f32 %v5685
  %vm5692 = vmor %vm5690, %vm5691
  %v5693 = vsel %vm5692, %v5685, %v5689
  %v5694 = vand.u32 2147483647, %v5684
  %vm5695 = vcmp.eq.f32.partialorder %v5694, 8.507059e+37
  %v5696 = vand.u32 %v5684, 2147483648
  %v5697 = vor.u32 1.1754944e-38, %v5696
  %v5698 = vsel %vm5695, %v5697, %v5693
  %v5699 = vmul.f32 %v5674, %v5698
  %v5700 = vmin.f32 %v5699, 1.0
  %v5701 = vmax.f32 %v5700, -1.0
  %v5702 = vmul.f32 %v4390, %v4390
  %v5703 = vmin.f32 16.0, %v5702
  %v5704 = vmul.f32 %v5703, 2.1237322e-06
  %v5705 = vadd.f32 %v5704, 0.00028619796
  %v5706 = vmul.f32 %v5703, %v5705
  %v5707 = vadd.f32 %v5706, 0.0036580483
  %v5708 = vmul.f32 %v5703, %v5707
  %v5709 = vadd.f32 %v5708, 0.05243302
  %v5710 = vmul.f32 %v5703, %v5709
  %v5711 = vadd.f32 %v5710, 0.18741608
  %v5712 = vmul.f32 %v5703, %v5711
  %v5713 = vadd.f32 %v5712, 1.1283791
  %v5714 = vmul.f32 %v4390, %v5713
  %v5715 = vmul.f32 %v5703, 3.8918573e-05
  %v5716 = vadd.f32 %v5715, 0.001143296
  %v5717 = vmul.f32 %v5703, %v5716
  %v5718 = vadd.f32 %v5717, 0.014752088
  %v5719 = vmul.f32 %v5703, %v5718
  %v5720 = vadd.f32 %v5719, 0.112945676
  %v5721 = vmul.f32 %v5703, %v5720
  %v5722 = vadd.f32 %v5721, 0.4994258
  %v5723 = vmul.f32 %v5703, %v5722
  %v5724 = vadd.f32 %v5723, 1.0
  %v5725 = vrcp.pop %v5724
  %v5726 = vmul.f32 %v5724, %v5725
  %v5727 = vsub.f32 1.0, %v5726
  %v5728 = vmul.f32 %v5725, %v5727
  %v5729 = vadd.f32 %v5725, %v5728
  %vm5730 = vweird.f32 %v5724
  %vm5731 = vweird.f32 %v5725
  %vm5732 = vmor %vm5730, %vm5731
  %v5733 = vsel %vm5732, %v5725, %v5729
  %v5734 = vand.u32 2147483647, %v5724
  %vm5735 = vcmp.eq.f32.partialorder %v5734, 8.507059e+37
  %v5736 = vand.u32 %v5724, 2147483648
  %v5737 = vor.u32 1.1754944e-38, %v5736
  %v5738 = vsel %vm5735, %v5737, %v5733
  %v5739 = vmul.f32 %v5714, %v5738
  %v5740 = vmin.f32 %v5739, 1.0
  %v5741 = vmax.f32 %v5740, -1.0
  %v5742 = vmul.f32 %v4391, %v4391
  %v5743 = vmin.f32 16.0, %v5742
  %v5744 = vmul.f32 %v5743, 2.1237322e-06
  %v5745 = vadd.f32 %v5744, 0.00028619796
  %v5746 = vmul.f32 %v5743, %v5745
  %v5747 = vadd.f32 %v5746, 0.0036580483
  %v5748 = vmul.f32 %v5743, %v5747
  %v5749 = vadd.f32 %v5748, 0.05243302
  %v5750 = vmul.f32 %v5743, %v5749
  %v5751 = vadd.f32 %v5750, 0.18741608
  %v5752 = vmul.f32 %v5743, %v5751
  %v5753 = vadd.f32 %v5752, 1.1283791
  %v5754 = vmul.f32 %v4391, %v5753
  %v5755 = vmul.f32 %v5743, 3.8918573e-05
  %v5756 = vadd.f32 %v5755, 0.001143296
  %v5757 = vmul.f32 %v5743, %v5756
  %v5758 = vadd.f32 %v5757, 0.014752088
  %v5759 = vmul.f32 %v5743, %v5758
  %v5760 = vadd.f32 %v5759, 0.112945676
  %v5761 = vmul.f32 %v5743, %v5760
  %v5762 = vadd.f32 %v5761, 0.4994258
  %v5763 = vmul.f32 %v5743, %v5762
  %v5764 = vadd.f32 %v5763, 1.0
  %v5765 = vrcp.pop %v5764
  %v5766 = vmul.f32 %v5764, %v5765
  %v5767 = vsub.f32 1.0, %v5766
  %v5768 = vmul.f32 %v5765, %v5767
  %v5769 = vadd.f32 %v5765, %v5768
  %vm5770 = vweird.f32 %v5764
  %vm5771 = vweird.f32 %v5765
  %vm5772 = vmor %vm5770, %vm5771
  %v5773 = vsel %vm5772, %v5765, %v5769
  %v5774 = vand.u32 2147483647, %v5764
  %vm5775 = vcmp.eq.f32.partialorder %v5774, 8.507059e+37
  %v5776 = vand.u32 %v5764, 2147483648
  %v5777 = vor.u32 1.1754944e-38, %v5776
  %v5778 = vsel %vm5775, %v5777, %v5773
  %v5779 = vmul.f32 %v5754, %v5778
  %v5780 = vmin.f32 %v5779, 1.0
  %v5781 = vmax.f32 %v5780, -1.0
  %v5782 = vmul.f32 %v4392, %v4392
  %v5783 = vmin.f32 16.0, %v5782
  %v5784 = vmul.f32 %v5783, 2.1237322e-06
  %v5785 = vadd.f32 %v5784, 0.00028619796
  %v5786 = vmul.f32 %v5783, %v5785
  %v5787 = vadd.f32 %v5786, 0.0036580483
  %v5788 = vmul.f32 %v5783, %v5787
  %v5789 = vadd.f32 %v5788, 0.05243302
  %v5790 = vmul.f32 %v5783, %v5789
  %v5791 = vadd.f32 %v5790, 0.18741608
  %v5792 = vmul.f32 %v5783, %v5791
  %v5793 = vadd.f32 %v5792, 1.1283791
  %v5794 = vmul.f32 %v4392, %v5793
  %v5795 = vmul.f32 %v5783, 3.8918573e-05
  %v5796 = vadd.f32 %v5795, 0.001143296
  %v5797 = vmul.f32 %v5783, %v5796
  %v5798 = vadd.f32 %v5797, 0.014752088
  %v5799 = vmul.f32 %v5783, %v5798
  %v5800 = vadd.f32 %v5799, 0.112945676
  %v5801 = vmul.f32 %v5783, %v5800
  %v5802 = vadd.f32 %v5801, 0.4994258
  %v5803 = vmul.f32 %v5783, %v5802
  %v5804 = vadd.f32 %v5803, 1.0
  %v5805 = vrcp.pop %v5804
  %v5806 = vmul.f32 %v5804, %v5805
  %v5807 = vsub.f32 1.0, %v5806
  %v5808 = vmul.f32 %v5805, %v5807
  %v5809 = vadd.f32 %v5805, %v5808
  %vm5810 = vweird.f32 %v5804
  %vm5811 = vweird.f32 %v5805
  %vm5812 = vmor %vm5810, %vm5811
  %v5813 = vsel %vm5812, %v5805, %v5809
  %v5814 = vand.u32 2147483647, %v5804
  %vm5815 = vcmp.eq.f32.partialorder %v5814, 8.507059e+37
  %v5816 = vand.u32 %v5804, 2147483648
  %v5817 = vor.u32 1.1754944e-38, %v5816
  %v5818 = vsel %vm5815, %v5817, %v5813
  %v5819 = vmul.f32 %v5794, %v5818
  %v5820 = vmin.f32 %v5819, 1.0
  %v5821 = vmax.f32 %v5820, -1.0
  %v5822 = vmul.f32 %v4393, %v4393
  %v5823 = vmin.f32 16.0, %v5822
  %v5824 = vmul.f32 %v5823, 2.1237322e-06
  %v5825 = vadd.f32 %v5824, 0.00028619796
  %v5826 = vmul.f32 %v5823, %v5825
  %v5827 = vadd.f32 %v5826, 0.0036580483
  %v5828 = vmul.f32 %v5823, %v5827
  %v5829 = vadd.f32 %v5828, 0.05243302
  %v5830 = vmul.f32 %v5823, %v5829
  %v5831 = vadd.f32 %v5830, 0.18741608
  %v5832 = vmul.f32 %v5823, %v5831
  %v5833 = vadd.f32 %v5832, 1.1283791
  %v5834 = vmul.f32 %v4393, %v5833
  %v5835 = vmul.f32 %v5823, 3.8918573e-05
  %v5836 = vadd.f32 %v5835, 0.001143296
  %v5837 = vmul.f32 %v5823, %v5836
  %v5838 = vadd.f32 %v5837, 0.014752088
  %v5839 = vmul.f32 %v5823, %v5838
  %v5840 = vadd.f32 %v5839, 0.112945676
  %v5841 = vmul.f32 %v5823, %v5840
  %v5842 = vadd.f32 %v5841, 0.4994258
  %v5843 = vmul.f32 %v5823, %v5842
  %v5844 = vadd.f32 %v5843, 1.0
  %v5845 = vrcp.pop %v5844
  %v5846 = vmul.f32 %v5844, %v5845
  %v5847 = vsub.f32 1.0, %v5846
  %v5848 = vmul.f32 %v5845, %v5847
  %v5849 = vadd.f32 %v5845, %v5848
  %vm5850 = vweird.f32 %v5844
  %vm5851 = vweird.f32 %v5845
  %vm5852 = vmor %vm5850, %vm5851
  %v5853 = vsel %vm5852, %v5845, %v5849
  %v5854 = vand.u32 2147483647, %v5844
  %vm5855 = vcmp.eq.f32.partialorder %v5854, 8.507059e+37
  %v5856 = vand.u32 %v5844, 2147483648
  %v5857 = vor.u32 1.1754944e-38, %v5856
  %v5858 = vsel %vm5855, %v5857, %v5853
  %v5859 = vmul.f32 %v5834, %v5858
  %v5860 = vmin.f32 %v5859, 1.0
  %v5861 = vmax.f32 %v5860, -1.0
  %v5862 = vmul.f32 %v4394, %v4394
  %v5863 = vmin.f32 16.0, %v5862
  %v5864 = vmul.f32 %v5863, 2.1237322e-06
  %v5865 = vadd.f32 %v5864, 0.00028619796
  %v5866 = vmul.f32 %v5863, %v5865
  %v5867 = vadd.f32 %v5866, 0.0036580483
  %v5868 = vmul.f32 %v5863, %v5867
  %v5869 = vadd.f32 %v5868, 0.05243302
  %v5870 = vmul.f32 %v5863, %v5869
  %v5871 = vadd.f32 %v5870, 0.18741608
  %v5872 = vmul.f32 %v5863, %v5871
  %v5873 = vadd.f32 %v5872, 1.1283791
  %v5874 = vmul.f32 %v4394, %v5873
  %v5875 = vmul.f32 %v5863, 3.8918573e-05
  %v5876 = vadd.f32 %v5875, 0.001143296
  %v5877 = vmul.f32 %v5863, %v5876
  %v5878 = vadd.f32 %v5877, 0.014752088
  %v5879 = vmul.f32 %v5863, %v5878
  %v5880 = vadd.f32 %v5879, 0.112945676
  %v5881 = vmul.f32 %v5863, %v5880
  %v5882 = vadd.f32 %v5881, 0.4994258
  %v5883 = vmul.f32 %v5863, %v5882
  %v5884 = vadd.f32 %v5883, 1.0
  %v5885 = vrcp.pop %v5884
  %v5886 = vmul.f32 %v5884, %v5885
  %v5887 = vsub.f32 1.0, %v5886
  %v5888 = vmul.f32 %v5885, %v5887
  %v5889 = vadd.f32 %v5885, %v5888
  %vm5890 = vweird.f32 %v5884
  %vm5891 = vweird.f32 %v5885
  %vm5892 = vmor %vm5890, %vm5891
  %v5893 = vsel %vm5892, %v5885, %v5889
  %v5894 = vand.u32 2147483647, %v5884
  %vm5895 = vcmp.eq.f32.partialorder %v5894, 8.507059e+37
  %v5896 = vand.u32 %v5884, 2147483648
  %v5897 = vor.u32 1.1754944e-38, %v5896
  %v5898 = vsel %vm5895, %v5897, %v5893
  %v5899 = vmul.f32 %v5874, %v5898
  %v5900 = vmin.f32 %v5899, 1.0
  %v5901 = vmax.f32 %v5900, -1.0
  %v5902 = vmul.f32 %v4395, %v4395
  %v5903 = vmin.f32 16.0, %v5902
  %v5904 = vmul.f32 %v5903, 2.1237322e-06
  %v5905 = vadd.f32 %v5904, 0.00028619796
  %v5906 = vmul.f32 %v5903, %v5905
  %v5907 = vadd.f32 %v5906, 0.0036580483
  %v5908 = vmul.f32 %v5903, %v5907
  %v5909 = vadd.f32 %v5908, 0.05243302
  %v5910 = vmul.f32 %v5903, %v5909
  %v5911 = vadd.f32 %v5910, 0.18741608
  %v5912 = vmul.f32 %v5903, %v5911
  %v5913 = vadd.f32 %v5912, 1.1283791
  %v5914 = vmul.f32 %v4395, %v5913
  %v5915 = vmul.f32 %v5903, 3.8918573e-05
  %v5916 = vadd.f32 %v5915, 0.001143296
  %v5917 = vmul.f32 %v5903, %v5916
  %v5918 = vadd.f32 %v5917, 0.014752088
  %v5919 = vmul.f32 %v5903, %v5918
  %v5920 = vadd.f32 %v5919, 0.112945676
  %v5921 = vmul.f32 %v5903, %v5920
  %v5922 = vadd.f32 %v5921, 0.4994258
  %v5923 = vmul.f32 %v5903, %v5922
  %v5924 = vadd.f32 %v5923, 1.0
  %v5925 = vrcp.pop %v5924
  %v5926 = vmul.f32 %v5924, %v5925
  %v5927 = vsub.f32 1.0, %v5926
  %v5928 = vmul.f32 %v5925, %v5927
  %v5929 = vadd.f32 %v5925, %v5928
  %vm5930 = vweird.f32 %v5924
  %vm5931 = vweird.f32 %v5925
  %vm5932 = vmor %vm5930, %vm5931
  %v5933 = vsel %vm5932, %v5925, %v5929
  %v5934 = vand.u32 2147483647, %v5924
  %vm5935 = vcmp.eq.f32.partialorder %v5934, 8.507059e+37
  %v5936 = vand.u32 %v5924, 2147483648
  %v5937 = vor.u32 1.1754944e-38, %v5936
  %v5938 = vsel %vm5935, %v5937, %v5933
  %v5939 = vmul.f32 %v5914, %v5938
  %v5940 = vmin.f32 %v5939, 1.0
  %v5941 = vmax.f32 %v5940, -1.0
  %v5942 = vmul.f32 %v4396, %v4396
  %v5943 = vmin.f32 16.0, %v5942
  %v5944 = vmul.f32 %v5943, 2.1237322e-06
  %v5945 = vadd.f32 %v5944, 0.00028619796
  %v5946 = vmul.f32 %v5943, %v5945
  %v5947 = vadd.f32 %v5946, 0.0036580483
  %v5948 = vmul.f32 %v5943, %v5947
  %v5949 = vadd.f32 %v5948, 0.05243302
  %v5950 = vmul.f32 %v5943, %v5949
  %v5951 = vadd.f32 %v5950, 0.18741608
  %v5952 = vmul.f32 %v5943, %v5951
  %v5953 = vadd.f32 %v5952, 1.1283791
  %v5954 = vmul.f32 %v4396, %v5953
  %v5955 = vmul.f32 %v5943, 3.8918573e-05
  %v5956 = vadd.f32 %v5955, 0.001143296
  %v5957 = vmul.f32 %v5943, %v5956
  %v5958 = vadd.f32 %v5957, 0.014752088
  %v5959 = vmul.f32 %v5943, %v5958
  %v5960 = vadd.f32 %v5959, 0.112945676
  %v5961 = vmul.f32 %v5943, %v5960
  %v5962 = vadd.f32 %v5961, 0.4994258
  %v5963 = vmul.f32 %v5943, %v5962
  %v5964 = vadd.f32 %v5963, 1.0
  %v5965 = vrcp.pop %v5964
  %v5966 = vmul.f32 %v5964, %v5965
  %v5967 = vsub.f32 1.0, %v5966
  %v5968 = vmul.f32 %v5965, %v5967
  %v5969 = vadd.f32 %v5965, %v5968
  %vm5970 = vweird.f32 %v5964
  %vm5971 = vweird.f32 %v5965
  %vm5972 = vmor %vm5970, %vm5971
  %v5973 = vsel %vm5972, %v5965, %v5969
  %v5974 = vand.u32 2147483647, %v5964
  %vm5975 = vcmp.eq.f32.partialorder %v5974, 8.507059e+37
  %v5976 = vand.u32 %v5964, 2147483648
  %v5977 = vor.u32 1.1754944e-38, %v5976
  %v5978 = vsel %vm5975, %v5977, %v5973
  %v5979 = vmul.f32 %v5954, %v5978
  %v5980 = vmin.f32 %v5979, 1.0
  %v5981 = vmax.f32 %v5980, -1.0
  %v5982 = vmul.f32 %v4397, %v4397
  %v5983 = vmin.f32 16.0, %v5982
  %v5984 = vmul.f32 %v5983, 2.1237322e-06
  %v5985 = vadd.f32 %v5984, 0.00028619796
  %v5986 = vmul.f32 %v5983, %v5985
  %v5987 = vadd.f32 %v5986, 0.0036580483
  %v5988 = vmul.f32 %v5983, %v5987
  %v5989 = vadd.f32 %v5988, 0.05243302
  %v5990 = vmul.f32 %v5983, %v5989
  %v5991 = vadd.f32 %v5990, 0.18741608
  %v5992 = vmul.f32 %v5983, %v5991
  %v5993 = vadd.f32 %v5992, 1.1283791
  %v5994 = vmul.f32 %v4397, %v5993
  %v5995 = vmul.f32 %v5983, 3.8918573e-05
  %v5996 = vadd.f32 %v5995, 0.001143296
  %v5997 = vmul.f32 %v5983, %v5996
  %v5998 = vadd.f32 %v5997, 0.014752088
  %v5999 = vmul.f32 %v5983, %v5998
  %v6000 = vadd.f32 %v5999, 0.112945676
  %v6001 = vmul.f32 %v5983, %v6000
  %v6002 = vadd.f32 %v6001, 0.4994258
  %v6003 = vmul.f32 %v5983, %v6002
  %v6004 = vadd.f32 %v6003, 1.0
  %v6005 = vrcp.pop %v6004
  %v6006 = vmul.f32 %v6004, %v6005
  %v6007 = vsub.f32 1.0, %v6006
  %v6008 = vmul.f32 %v6005, %v6007
  %v6009 = vadd.f32 %v6005, %v6008
  %vm6010 = vweird.f32 %v6004
  %vm6011 = vweird.f32 %v6005
  %vm6012 = vmor %vm6010, %vm6011
  %v6013 = vsel %vm6012, %v6005, %v6009
  %v6014 = vand.u32 2147483647, %v6004
  %vm6015 = vcmp.eq.f32.partialorder %v6014, 8.507059e+37
  %v6016 = vand.u32 %v6004, 2147483648
  %v6017 = vor.u32 1.1754944e-38, %v6016
  %v6018 = vsel %vm6015, %v6017, %v6013
  %v6019 = vmul.f32 %v5994, %v6018
  %v6020 = vmin.f32 %v6019, 1.0
  %v6021 = vmax.f32 %v6020, -1.0
  %v6022 = vmul.f32 %v4398, %v4398
  %v6023 = vmin.f32 16.0, %v6022
  %v6024 = vmul.f32 %v6023, 2.1237322e-06
  %v6025 = vadd.f32 %v6024, 0.00028619796
  %v6026 = vmul.f32 %v6023, %v6025
  %v6027 = vadd.f32 %v6026, 0.0036580483
  %v6028 = vmul.f32 %v6023, %v6027
  %v6029 = vadd.f32 %v6028, 0.05243302
  %v6030 = vmul.f32 %v6023, %v6029
  %v6031 = vadd.f32 %v6030, 0.18741608
  %v6032 = vmul.f32 %v6023, %v6031
  %v6033 = vadd.f32 %v6032, 1.1283791
  %v6034 = vmul.f32 %v4398, %v6033
  %v6035 = vmul.f32 %v6023, 3.8918573e-05
  %v6036 = vadd.f32 %v6035, 0.001143296
  %v6037 = vmul.f32 %v6023, %v6036
  %v6038 = vadd.f32 %v6037, 0.014752088
  %v6039 = vmul.f32 %v6023, %v6038
  %v6040 = vadd.f32 %v6039, 0.112945676
  %v6041 = vmul.f32 %v6023, %v6040
  %v6042 = vadd.f32 %v6041, 0.4994258
  %v6043 = vmul.f32 %v6023, %v6042
  %v6044 = vadd.f32 %v6043, 1.0
  %v6045 = vrcp.pop %v6044
  %v6046 = vmul.f32 %v6044, %v6045
  %v6047 = vsub.f32 1.0, %v6046
  %v6048 = vmul.f32 %v6045, %v6047
  %v6049 = vadd.f32 %v6045, %v6048
  %vm6050 = vweird.f32 %v6044
  %vm6051 = vweird.f32 %v6045
  %vm6052 = vmor %vm6050, %vm6051
  %v6053 = vsel %vm6052, %v6045, %v6049
  %v6054 = vand.u32 2147483647, %v6044
  %vm6055 = vcmp.eq.f32.partialorder %v6054, 8.507059e+37
  %v6056 = vand.u32 %v6044, 2147483648
  %v6057 = vor.u32 1.1754944e-38, %v6056
  %v6058 = vsel %vm6055, %v6057, %v6053
  %v6059 = vmul.f32 %v6034, %v6058
  %v6060 = vmin.f32 %v6059, 1.0
  %v6061 = vmax.f32 %v6060, -1.0
  %v6062 = vmul.f32 %v4399, %v4399
  %v6063 = vmin.f32 16.0, %v6062
  %v6064 = vmul.f32 %v6063, 2.1237322e-06
  %v6065 = vadd.f32 %v6064, 0.00028619796
  %v6066 = vmul.f32 %v6063, %v6065
  %v6067 = vadd.f32 %v6066, 0.0036580483
  %v6068 = vmul.f32 %v6063, %v6067
  %v6069 = vadd.f32 %v6068, 0.05243302
  %v6070 = vmul.f32 %v6063, %v6069
  %v6071 = vadd.f32 %v6070, 0.18741608
  %v6072 = vmul.f32 %v6063, %v6071
  %v6073 = vadd.f32 %v6072, 1.1283791
  %v6074 = vmul.f32 %v4399, %v6073
  %v6075 = vmul.f32 %v6063, 3.8918573e-05
  %v6076 = vadd.f32 %v6075, 0.001143296
  %v6077 = vmul.f32 %v6063, %v6076
  %v6078 = vadd.f32 %v6077, 0.014752088
  %v6079 = vmul.f32 %v6063, %v6078
  %v6080 = vadd.f32 %v6079, 0.112945676
  %v6081 = vmul.f32 %v6063, %v6080
  %v6082 = vadd.f32 %v6081, 0.4994258
  %v6083 = vmul.f32 %v6063, %v6082
  %v6084 = vadd.f32 %v6083, 1.0
  %v6085 = vrcp.pop %v6084
  %v6086 = vmul.f32 %v6084, %v6085
  %v6087 = vsub.f32 1.0, %v6086
  %v6088 = vmul.f32 %v6085, %v6087
  %v6089 = vadd.f32 %v6085, %v6088
  %vm6090 = vweird.f32 %v6084
  %vm6091 = vweird.f32 %v6085
  %vm6092 = vmor %vm6090, %vm6091
  %v6093 = vsel %vm6092, %v6085, %v6089
  %v6094 = vand.u32 2147483647, %v6084
  %vm6095 = vcmp.eq.f32.partialorder %v6094, 8.507059e+37
  %v6096 = vand.u32 %v6084, 2147483648
  %v6097 = vor.u32 1.1754944e-38, %v6096
  %v6098 = vsel %vm6095, %v6097, %v6093
  %v6099 = vmul.f32 %v6074, %v6098
  %v6100 = vmin.f32 %v6099, 1.0
  %v6101 = vmax.f32 %v6100, -1.0
  %v6102 = vmul.f32 %v4400, %v4400
  %v6103 = vmin.f32 16.0, %v6102
  %v6104 = vmul.f32 %v6103, 2.1237322e-06
  %v6105 = vadd.f32 %v6104, 0.00028619796
  %v6106 = vmul.f32 %v6103, %v6105
  %v6107 = vadd.f32 %v6106, 0.0036580483
  %v6108 = vmul.f32 %v6103, %v6107
  %v6109 = vadd.f32 %v6108, 0.05243302
  %v6110 = vmul.f32 %v6103, %v6109
  %v6111 = vadd.f32 %v6110, 0.18741608
  %v6112 = vmul.f32 %v6103, %v6111
  %v6113 = vadd.f32 %v6112, 1.1283791
  %v6114 = vmul.f32 %v4400, %v6113
  %v6115 = vmul.f32 %v6103, 3.8918573e-05
  %v6116 = vadd.f32 %v6115, 0.001143296
  %v6117 = vmul.f32 %v6103, %v6116
  %v6118 = vadd.f32 %v6117, 0.014752088
  %v6119 = vmul.f32 %v6103, %v6118
  %v6120 = vadd.f32 %v6119, 0.112945676
  %v6121 = vmul.f32 %v6103, %v6120
  %v6122 = vadd.f32 %v6121, 0.4994258
  %v6123 = vmul.f32 %v6103, %v6122
  %v6124 = vadd.f32 %v6123, 1.0
  %v6125 = vrcp.pop %v6124
  %v6126 = vmul.f32 %v6124, %v6125
  %v6127 = vsub.f32 1.0, %v6126
  %v6128 = vmul.f32 %v6125, %v6127
  %v6129 = vadd.f32 %v6125, %v6128
  %vm6130 = vweird.f32 %v6124
  %vm6131 = vweird.f32 %v6125
  %vm6132 = vmor %vm6130, %vm6131
  %v6133 = vsel %vm6132, %v6125, %v6129
  %v6134 = vand.u32 2147483647, %v6124
  %vm6135 = vcmp.eq.f32.partialorder %v6134, 8.507059e+37
  %v6136 = vand.u32 %v6124, 2147483648
  %v6137 = vor.u32 1.1754944e-38, %v6136
  %v6138 = vsel %vm6135, %v6137, %v6133
  %v6139 = vmul.f32 %v6114, %v6138
  %v6140 = vmin.f32 %v6139, 1.0
  %v6141 = vmax.f32 %v6140, -1.0
  %v6142 = vmul.f32 %v4401, %v4401
  %v6143 = vmin.f32 16.0, %v6142
  %v6144 = vmul.f32 %v6143, 2.1237322e-06
  %v6145 = vadd.f32 %v6144, 0.00028619796
  %v6146 = vmul.f32 %v6143, %v6145
  %v6147 = vadd.f32 %v6146, 0.0036580483
  %v6148 = vmul.f32 %v6143, %v6147
  %v6149 = vadd.f32 %v6148, 0.05243302
  %v6150 = vmul.f32 %v6143, %v6149
  %v6151 = vadd.f32 %v6150, 0.18741608
  %v6152 = vmul.f32 %v6143, %v6151
  %v6153 = vadd.f32 %v6152, 1.1283791
  %v6154 = vmul.f32 %v4401, %v6153
  %v6155 = vmul.f32 %v6143, 3.8918573e-05
  %v6156 = vadd.f32 %v6155, 0.001143296
  %v6157 = vmul.f32 %v6143, %v6156
  %v6158 = vadd.f32 %v6157, 0.014752088
  %v6159 = vmul.f32 %v6143, %v6158
  %v6160 = vadd.f32 %v6159, 0.112945676
  %v6161 = vmul.f32 %v6143, %v6160
  %v6162 = vadd.f32 %v6161, 0.4994258
  %v6163 = vmul.f32 %v6143, %v6162
  %v6164 = vadd.f32 %v6163, 1.0
  %v6165 = vrcp.pop %v6164
  %v6166 = vmul.f32 %v6164, %v6165
  %v6167 = vsub.f32 1.0, %v6166
  %v6168 = vmul.f32 %v6165, %v6167
  %v6169 = vadd.f32 %v6165, %v6168
  %vm6170 = vweird.f32 %v6164
  %vm6171 = vweird.f32 %v6165
  %vm6172 = vmor %vm6170, %vm6171
  %v6173 = vsel %vm6172, %v6165, %v6169
  %v6174 = vand.u32 2147483647, %v6164
  %vm6175 = vcmp.eq.f32.partialorder %v6174, 8.507059e+37
  %v6176 = vand.u32 %v6164, 2147483648
  %v6177 = vor.u32 1.1754944e-38, %v6176
  %v6178 = vsel %vm6175, %v6177, %v6173
  %v6179 = vmul.f32 %v6154, %v6178
  %v6180 = vmin.f32 %v6179, 1.0
  %v6181 = vmax.f32 %v6180, -1.0
  %v6182 = vmul.f32 %v4402, %v4402
  %v6183 = vmin.f32 16.0, %v6182
  %v6184 = vmul.f32 %v6183, 2.1237322e-06
  %v6185 = vadd.f32 %v6184, 0.00028619796
  %v6186 = vmul.f32 %v6183, %v6185
  %v6187 = vadd.f32 %v6186, 0.0036580483
  %v6188 = vmul.f32 %v6183, %v6187
  %v6189 = vadd.f32 %v6188, 0.05243302
  %v6190 = vmul.f32 %v6183, %v6189
  %v6191 = vadd.f32 %v6190, 0.18741608
  %v6192 = vmul.f32 %v6183, %v6191
  %v6193 = vadd.f32 %v6192, 1.1283791
  %v6194 = vmul.f32 %v4402, %v6193
  %v6195 = vmul.f32 %v6183, 3.8918573e-05
  %v6196 = vadd.f32 %v6195, 0.001143296
  %v6197 = vmul.f32 %v6183, %v6196
  %v6198 = vadd.f32 %v6197, 0.014752088
  %v6199 = vmul.f32 %v6183, %v6198
  %v6200 = vadd.f32 %v6199, 0.112945676
  %v6201 = vmul.f32 %v6183, %v6200
  %v6202 = vadd.f32 %v6201, 0.4994258
  %v6203 = vmul.f32 %v6183, %v6202
  %v6204 = vadd.f32 %v6203, 1.0
  %v6205 = vrcp.pop %v6204
  %v6206 = vmul.f32 %v6204, %v6205
  %v6207 = vsub.f32 1.0, %v6206
  %v6208 = vmul.f32 %v6205, %v6207
  %v6209 = vadd.f32 %v6205, %v6208
  %vm6210 = vweird.f32 %v6204
  %vm6211 = vweird.f32 %v6205
  %vm6212 = vmor %vm6210, %vm6211
  %v6213 = vsel %vm6212, %v6205, %v6209
  %v6214 = vand.u32 2147483647, %v6204
  %vm6215 = vcmp.eq.f32.partialorder %v6214, 8.507059e+37
  %v6216 = vand.u32 %v6204, 2147483648
  %v6217 = vor.u32 1.1754944e-38, %v6216
  %v6218 = vsel %vm6215, %v6217, %v6213
  %v6219 = vmul.f32 %v6194, %v6218
  %v6220 = vmin.f32 %v6219, 1.0
  %v6221 = vmax.f32 %v6220, -1.0
  %v6222 = vmul.f32 %v4403, %v4403
  %v6223 = vmin.f32 16.0, %v6222
  %v6224 = vmul.f32 %v6223, 2.1237322e-06
  %v6225 = vadd.f32 %v6224, 0.00028619796
  %v6226 = vmul.f32 %v6223, %v6225
  %v6227 = vadd.f32 %v6226, 0.0036580483
  %v6228 = vmul.f32 %v6223, %v6227
  %v6229 = vadd.f32 %v6228, 0.05243302
  %v6230 = vmul.f32 %v6223, %v6229
  %v6231 = vadd.f32 %v6230, 0.18741608
  %v6232 = vmul.f32 %v6223, %v6231
  %v6233 = vadd.f32 %v6232, 1.1283791
  %v6234 = vmul.f32 %v4403, %v6233
  %v6235 = vmul.f32 %v6223, 3.8918573e-05
  %v6236 = vadd.f32 %v6235, 0.001143296
  %v6237 = vmul.f32 %v6223, %v6236
  %v6238 = vadd.f32 %v6237, 0.014752088
  %v6239 = vmul.f32 %v6223, %v6238
  %v6240 = vadd.f32 %v6239, 0.112945676
  %v6241 = vmul.f32 %v6223, %v6240
  %v6242 = vadd.f32 %v6241, 0.4994258
  %v6243 = vmul.f32 %v6223, %v6242
  %v6244 = vadd.f32 %v6243, 1.0
  %v6245 = vrcp.pop %v6244
  %v6246 = vmul.f32 %v6244, %v6245
  %v6247 = vsub.f32 1.0, %v6246
  %v6248 = vmul.f32 %v6245, %v6247
  %v6249 = vadd.f32 %v6245, %v6248
  %vm6250 = vweird.f32 %v6244
  %vm6251 = vweird.f32 %v6245
  %vm6252 = vmor %vm6250, %vm6251
  %v6253 = vsel %vm6252, %v6245, %v6249
  %v6254 = vand.u32 2147483647, %v6244
  %vm6255 = vcmp.eq.f32.partialorder %v6254, 8.507059e+37
  %v6256 = vand.u32 %v6244, 2147483648
  %v6257 = vor.u32 1.1754944e-38, %v6256
  %v6258 = vsel %vm6255, %v6257, %v6253
  %v6259 = vmul.f32 %v6234, %v6258
  %v6260 = vmin.f32 %v6259, 1.0
  %v6261 = vmax.f32 %v6260, -1.0
  %v6262 = vmul.f32 %v4404, %v4404
  %v6263 = vmin.f32 16.0, %v6262
  %v6264 = vmul.f32 %v6263, 2.1237322e-06
  %v6265 = vadd.f32 %v6264, 0.00028619796
  %v6266 = vmul.f32 %v6263, %v6265
  %v6267 = vadd.f32 %v6266, 0.0036580483
  %v6268 = vmul.f32 %v6263, %v6267
  %v6269 = vadd.f32 %v6268, 0.05243302
  %v6270 = vmul.f32 %v6263, %v6269
  %v6271 = vadd.f32 %v6270, 0.18741608
  %v6272 = vmul.f32 %v6263, %v6271
  %v6273 = vadd.f32 %v6272, 1.1283791
  %v6274 = vmul.f32 %v4404, %v6273
  %v6275 = vmul.f32 %v6263, 3.8918573e-05
  %v6276 = vadd.f32 %v6275, 0.001143296
  %v6277 = vmul.f32 %v6263, %v6276
  %v6278 = vadd.f32 %v6277, 0.014752088
  %v6279 = vmul.f32 %v6263, %v6278
  %v6280 = vadd.f32 %v6279, 0.112945676
  %v6281 = vmul.f32 %v6263, %v6280
  %v6282 = vadd.f32 %v6281, 0.4994258
  %v6283 = vmul.f32 %v6263, %v6282
  %v6284 = vadd.f32 %v6283, 1.0
  %v6285 = vrcp.pop %v6284
  %v6286 = vmul.f32 %v6284, %v6285
  %v6287 = vsub.f32 1.0, %v6286
  %v6288 = vmul.f32 %v6285, %v6287
  %v6289 = vadd.f32 %v6285, %v6288
  %vm6290 = vweird.f32 %v6284
  %vm6291 = vweird.f32 %v6285
  %vm6292 = vmor %vm6290, %vm6291
  %v6293 = vsel %vm6292, %v6285, %v6289
  %v6294 = vand.u32 2147483647, %v6284
  %vm6295 = vcmp.eq.f32.partialorder %v6294, 8.507059e+37
  %v6296 = vand.u32 %v6284, 2147483648
  %v6297 = vor.u32 1.1754944e-38, %v6296
  %v6298 = vsel %vm6295, %v6297, %v6293
  %v6299 = vmul.f32 %v6274, %v6298
  %v6300 = vmin.f32 %v6299, 1.0
  %v6301 = vmax.f32 %v6300, -1.0
  %v6302 = vmul.f32 %v4405, %v4405
  %v6303 = vmin.f32 16.0, %v6302
  %v6304 = vmul.f32 %v6303, 2.1237322e-06
  %v6305 = vadd.f32 %v6304, 0.00028619796
  %v6306 = vmul.f32 %v6303, %v6305
  %v6307 = vadd.f32 %v6306, 0.0036580483
  %v6308 = vmul.f32 %v6303, %v6307
  %v6309 = vadd.f32 %v6308, 0.05243302
  %v6310 = vmul.f32 %v6303, %v6309
  %v6311 = vadd.f32 %v6310, 0.18741608
  %v6312 = vmul.f32 %v6303, %v6311
  %v6313 = vadd.f32 %v6312, 1.1283791
  %v6314 = vmul.f32 %v4405, %v6313
  %v6315 = vmul.f32 %v6303, 3.8918573e-05
  %v6316 = vadd.f32 %v6315, 0.001143296
  %v6317 = vmul.f32 %v6303, %v6316
  %v6318 = vadd.f32 %v6317, 0.014752088
  %v6319 = vmul.f32 %v6303, %v6318
  %v6320 = vadd.f32 %v6319, 0.112945676
  %v6321 = vmul.f32 %v6303, %v6320
  %v6322 = vadd.f32 %v6321, 0.4994258
  %v6323 = vmul.f32 %v6303, %v6322
  %v6324 = vadd.f32 %v6323, 1.0
  %v6325 = vrcp.pop %v6324
  %v6326 = vmul.f32 %v6324, %v6325
  %v6327 = vsub.f32 1.0, %v6326
  %v6328 = vmul.f32 %v6325, %v6327
  %v6329 = vadd.f32 %v6325, %v6328
  %vm6330 = vweird.f32 %v6324
  %vm6331 = vweird.f32 %v6325
  %vm6332 = vmor %vm6330, %vm6331
  %v6333 = vsel %vm6332, %v6325, %v6329
  %v6334 = vand.u32 2147483647, %v6324
  %vm6335 = vcmp.eq.f32.partialorder %v6334, 8.507059e+37
  %v6336 = vand.u32 %v6324, 2147483648
  %v6337 = vor.u32 1.1754944e-38, %v6336
  %v6338 = vsel %vm6335, %v6337, %v6333
  %v6339 = vmul.f32 %v6314, %v6338
  %v6340 = vmin.f32 %v6339, 1.0
  %v6341 = vmax.f32 %v6340, -1.0
  %v6342 = vmul.f32 %v4406, %v4406
  %v6343 = vmin.f32 16.0, %v6342
  %v6344 = vmul.f32 %v6343, 2.1237322e-06
  %v6345 = vadd.f32 %v6344, 0.00028619796
  %v6346 = vmul.f32 %v6343, %v6345
  %v6347 = vadd.f32 %v6346, 0.0036580483
  %v6348 = vmul.f32 %v6343, %v6347
  %v6349 = vadd.f32 %v6348, 0.05243302
  %v6350 = vmul.f32 %v6343, %v6349
  %v6351 = vadd.f32 %v6350, 0.18741608
  %v6352 = vmul.f32 %v6343, %v6351
  %v6353 = vadd.f32 %v6352, 1.1283791
  %v6354 = vmul.f32 %v4406, %v6353
  %v6355 = vmul.f32 %v6343, 3.8918573e-05
  %v6356 = vadd.f32 %v6355, 0.001143296
  %v6357 = vmul.f32 %v6343, %v6356
  %v6358 = vadd.f32 %v6357, 0.014752088
  %v6359 = vmul.f32 %v6343, %v6358
  %v6360 = vadd.f32 %v6359, 0.112945676
  %v6361 = vmul.f32 %v6343, %v6360
  %v6362 = vadd.f32 %v6361, 0.4994258
  %v6363 = vmul.f32 %v6343, %v6362
  %v6364 = vadd.f32 %v6363, 1.0
  %v6365 = vrcp.pop %v6364
  %v6366 = vmul.f32 %v6364, %v6365
  %v6367 = vsub.f32 1.0, %v6366
  %v6368 = vmul.f32 %v6365, %v6367
  %v6369 = vadd.f32 %v6365, %v6368
  %vm6370 = vweird.f32 %v6364
  %vm6371 = vweird.f32 %v6365
  %vm6372 = vmor %vm6370, %vm6371
  %v6373 = vsel %vm6372, %v6365, %v6369
  %v6374 = vand.u32 2147483647, %v6364
  %vm6375 = vcmp.eq.f32.partialorder %v6374, 8.507059e+37
  %v6376 = vand.u32 %v6364, 2147483648
  %v6377 = vor.u32 1.1754944e-38, %v6376
  %v6378 = vsel %vm6375, %v6377, %v6373
  %v6379 = vmul.f32 %v6354, %v6378
  %v6380 = vmin.f32 %v6379, 1.0
  %v6381 = vmax.f32 %v6380, -1.0
  %v6382 = vmul.f32 %v4407, %v4407
  %v6383 = vmin.f32 16.0, %v6382
  %v6384 = vmul.f32 %v6383, 2.1237322e-06
  %v6385 = vadd.f32 %v6384, 0.00028619796
  %v6386 = vmul.f32 %v6383, %v6385
  %v6387 = vadd.f32 %v6386, 0.0036580483
  %v6388 = vmul.f32 %v6383, %v6387
  %v6389 = vadd.f32 %v6388, 0.05243302
  %v6390 = vmul.f32 %v6383, %v6389
  %v6391 = vadd.f32 %v6390, 0.18741608
  %v6392 = vmul.f32 %v6383, %v6391
  %v6393 = vadd.f32 %v6392, 1.1283791
  %v6394 = vmul.f32 %v4407, %v6393
  %v6395 = vmul.f32 %v6383, 3.8918573e-05
  %v6396 = vadd.f32 %v6395, 0.001143296
  %v6397 = vmul.f32 %v6383, %v6396
  %v6398 = vadd.f32 %v6397, 0.014752088
  %v6399 = vmul.f32 %v6383, %v6398
  %v6400 = vadd.f32 %v6399, 0.112945676
  %v6401 = vmul.f32 %v6383, %v6400
  %v6402 = vadd.f32 %v6401, 0.4994258
  %v6403 = vmul.f32 %v6383, %v6402
  %v6404 = vadd.f32 %v6403, 1.0
  %v6405 = vrcp.pop %v6404
  %v6406 = vmul.f32 %v6404, %v6405
  %v6407 = vsub.f32 1.0, %v6406
  %v6408 = vmul.f32 %v6405, %v6407
  %v6409 = vadd.f32 %v6405, %v6408
  %vm6410 = vweird.f32 %v6404
  %vm6411 = vweird.f32 %v6405
  %vm6412 = vmor %vm6410, %vm6411
  %v6413 = vsel %vm6412, %v6405, %v6409
  %v6414 = vand.u32 2147483647, %v6404
  %vm6415 = vcmp.eq.f32.partialorder %v6414, 8.507059e+37
  %v6416 = vand.u32 %v6404, 2147483648
  %v6417 = vor.u32 1.1754944e-38, %v6416
  %v6418 = vsel %vm6415, %v6417, %v6413
  %v6419 = vmul.f32 %v6394, %v6418
  %v6420 = vmin.f32 %v6419, 1.0
  %v6421 = vmax.f32 %v6420, -1.0
  %v6422 = vmul.f32 %v4408, %v4408
  %v6423 = vmin.f32 16.0, %v6422
  %v6424 = vmul.f32 %v6423, 2.1237322e-06
  %v6425 = vadd.f32 %v6424, 0.00028619796
  %v6426 = vmul.f32 %v6423, %v6425
  %v6427 = vadd.f32 %v6426, 0.0036580483
  %v6428 = vmul.f32 %v6423, %v6427
  %v6429 = vadd.f32 %v6428, 0.05243302
  %v6430 = vmul.f32 %v6423, %v6429
  %v6431 = vadd.f32 %v6430, 0.18741608
  %v6432 = vmul.f32 %v6423, %v6431
  %v6433 = vadd.f32 %v6432, 1.1283791
  %v6434 = vmul.f32 %v4408, %v6433
  %v6435 = vmul.f32 %v6423, 3.8918573e-05
  %v6436 = vadd.f32 %v6435, 0.001143296
  %v6437 = vmul.f32 %v6423, %v6436
  %v6438 = vadd.f32 %v6437, 0.014752088
  %v6439 = vmul.f32 %v6423, %v6438
  %v6440 = vadd.f32 %v6439, 0.112945676
  %v6441 = vmul.f32 %v6423, %v6440
  %v6442 = vadd.f32 %v6441, 0.4994258
  %v6443 = vmul.f32 %v6423, %v6442
  %v6444 = vadd.f32 %v6443, 1.0
  %v6445 = vrcp.pop %v6444
  %v6446 = vmul.f32 %v6444, %v6445
  %v6447 = vsub.f32 1.0, %v6446
  %v6448 = vmul.f32 %v6445, %v6447
  %v6449 = vadd.f32 %v6445, %v6448
  %vm6450 = vweird.f32 %v6444
  %vm6451 = vweird.f32 %v6445
  %vm6452 = vmor %vm6450, %vm6451
  %v6453 = vsel %vm6452, %v6445, %v6449
  %v6454 = vand.u32 2147483647, %v6444
  %vm6455 = vcmp.eq.f32.partialorder %v6454, 8.507059e+37
  %v6456 = vand.u32 %v6444, 2147483648
  %v6457 = vor.u32 1.1754944e-38, %v6456
  %v6458 = vsel %vm6455, %v6457, %v6453
  %v6459 = vmul.f32 %v6434, %v6458
  %v6460 = vmin.f32 %v6459, 1.0
  %v6461 = vmax.f32 %v6460, -1.0
  %v6462 = vmul.f32 %v4409, %v4409
  %v6463 = vmin.f32 16.0, %v6462
  %v6464 = vmul.f32 %v6463, 2.1237322e-06
  %v6465 = vadd.f32 %v6464, 0.00028619796
  %v6466 = vmul.f32 %v6463, %v6465
  %v6467 = vadd.f32 %v6466, 0.0036580483
  %v6468 = vmul.f32 %v6463, %v6467
  %v6469 = vadd.f32 %v6468, 0.05243302
  %v6470 = vmul.f32 %v6463, %v6469
  %v6471 = vadd.f32 %v6470, 0.18741608
  %v6472 = vmul.f32 %v6463, %v6471
  %v6473 = vadd.f32 %v6472, 1.1283791
  %v6474 = vmul.f32 %v4409, %v6473
  %v6475 = vmul.f32 %v6463, 3.8918573e-05
  %v6476 = vadd.f32 %v6475, 0.001143296
  %v6477 = vmul.f32 %v6463, %v6476
  %v6478 = vadd.f32 %v6477, 0.014752088
  %v6479 = vmul.f32 %v6463, %v6478
  %v6480 = vadd.f32 %v6479, 0.112945676
  %v6481 = vmul.f32 %v6463, %v6480
  %v6482 = vadd.f32 %v6481, 0.4994258
  %v6483 = vmul.f32 %v6463, %v6482
  %v6484 = vadd.f32 %v6483, 1.0
  %v6485 = vrcp.pop %v6484
  %v6486 = vmul.f32 %v6484, %v6485
  %v6487 = vsub.f32 1.0, %v6486
  %v6488 = vmul.f32 %v6485, %v6487
  %v6489 = vadd.f32 %v6485, %v6488
  %vm6490 = vweird.f32 %v6484
  %vm6491 = vweird.f32 %v6485
  %vm6492 = vmor %vm6490, %vm6491
  %v6493 = vsel %vm6492, %v6485, %v6489
  %v6494 = vand.u32 2147483647, %v6484
  %vm6495 = vcmp.eq.f32.partialorder %v6494, 8.507059e+37
  %v6496 = vand.u32 %v6484, 2147483648
  %v6497 = vor.u32 1.1754944e-38, %v6496
  %v6498 = vsel %vm6495, %v6497, %v6493
  %v6499 = vmul.f32 %v6474, %v6498
  %v6500 = vmin.f32 %v6499, 1.0
  %v6501 = vmax.f32 %v6500, -1.0
  %v6502 = vmul.f32 %v4410, %v4410
  %v6503 = vmin.f32 16.0, %v6502
  %v6504 = vmul.f32 %v6503, 2.1237322e-06
  %v6505 = vadd.f32 %v6504, 0.00028619796
  %v6506 = vmul.f32 %v6503, %v6505
  %v6507 = vadd.f32 %v6506, 0.0036580483
  %v6508 = vmul.f32 %v6503, %v6507
  %v6509 = vadd.f32 %v6508, 0.05243302
  %v6510 = vmul.f32 %v6503, %v6509
  %v6511 = vadd.f32 %v6510, 0.18741608
  %v6512 = vmul.f32 %v6503, %v6511
  %v6513 = vadd.f32 %v6512, 1.1283791
  %v6514 = vmul.f32 %v4410, %v6513
  %v6515 = vmul.f32 %v6503, 3.8918573e-05
  %v6516 = vadd.f32 %v6515, 0.001143296
  %v6517 = vmul.f32 %v6503, %v6516
  %v6518 = vadd.f32 %v6517, 0.014752088
  %v6519 = vmul.f32 %v6503, %v6518
  %v6520 = vadd.f32 %v6519, 0.112945676
  %v6521 = vmul.f32 %v6503, %v6520
  %v6522 = vadd.f32 %v6521, 0.4994258
  %v6523 = vmul.f32 %v6503, %v6522
  %v6524 = vadd.f32 %v6523, 1.0
  %v6525 = vrcp.pop %v6524
  %v6526 = vmul.f32 %v6524, %v6525
  %v6527 = vsub.f32 1.0, %v6526
  %v6528 = vmul.f32 %v6525, %v6527
  %v6529 = vadd.f32 %v6525, %v6528
  %vm6530 = vweird.f32 %v6524
  %vm6531 = vweird.f32 %v6525
  %vm6532 = vmor %vm6530, %vm6531
  %v6533 = vsel %vm6532, %v6525, %v6529
  %v6534 = vand.u32 2147483647, %v6524
  %vm6535 = vcmp.eq.f32.partialorder %v6534, 8.507059e+37
  %v6536 = vand.u32 %v6524, 2147483648
  %v6537 = vor.u32 1.1754944e-38, %v6536
  %v6538 = vsel %vm6535, %v6537, %v6533
  %v6539 = vmul.f32 %v6514, %v6538
  %v6540 = vmin.f32 %v6539, 1.0
  %v6541 = vmax.f32 %v6540, -1.0
  %v6542 = vmul.f32 %v4411, %v4411
  %v6543 = vmin.f32 16.0, %v6542
  %v6544 = vmul.f32 %v6543, 2.1237322e-06
  %v6545 = vadd.f32 %v6544, 0.00028619796
  %v6546 = vmul.f32 %v6543, %v6545
  %v6547 = vadd.f32 %v6546, 0.0036580483
  %v6548 = vmul.f32 %v6543, %v6547
  %v6549 = vadd.f32 %v6548, 0.05243302
  %v6550 = vmul.f32 %v6543, %v6549
  %v6551 = vadd.f32 %v6550, 0.18741608
  %v6552 = vmul.f32 %v6543, %v6551
  %v6553 = vadd.f32 %v6552, 1.1283791
  %v6554 = vmul.f32 %v4411, %v6553
  %v6555 = vmul.f32 %v6543, 3.8918573e-05
  %v6556 = vadd.f32 %v6555, 0.001143296
  %v6557 = vmul.f32 %v6543, %v6556
  %v6558 = vadd.f32 %v6557, 0.014752088
  %v6559 = vmul.f32 %v6543, %v6558
  %v6560 = vadd.f32 %v6559, 0.112945676
  %v6561 = vmul.f32 %v6543, %v6560
  %v6562 = vadd.f32 %v6561, 0.4994258
  %v6563 = vmul.f32 %v6543, %v6562
  %v6564 = vadd.f32 %v6563, 1.0
  %v6565 = vrcp.pop %v6564
  %v6566 = vmul.f32 %v6564, %v6565
  %v6567 = vsub.f32 1.0, %v6566
  %v6568 = vmul.f32 %v6565, %v6567
  %v6569 = vadd.f32 %v6565, %v6568
  %vm6570 = vweird.f32 %v6564
  %vm6571 = vweird.f32 %v6565
  %vm6572 = vmor %vm6570, %vm6571
  %v6573 = vsel %vm6572, %v6565, %v6569
  %v6574 = vand.u32 2147483647, %v6564
  %vm6575 = vcmp.eq.f32.partialorder %v6574, 8.507059e+37
  %v6576 = vand.u32 %v6564, 2147483648
  %v6577 = vor.u32 1.1754944e-38, %v6576
  %v6578 = vsel %vm6575, %v6577, %v6573
  %v6579 = vmul.f32 %v6554, %v6578
  %v6580 = vmin.f32 %v6579, 1.0
  %v6581 = vmax.f32 %v6580, -1.0
  %v6582 = vmul.f32 %v4412, %v4412
  %v6583 = vmin.f32 16.0, %v6582
  %v6584 = vmul.f32 %v6583, 2.1237322e-06
  %v6585 = vadd.f32 %v6584, 0.00028619796
  %v6586 = vmul.f32 %v6583, %v6585
  %v6587 = vadd.f32 %v6586, 0.0036580483
  %v6588 = vmul.f32 %v6583, %v6587
  %v6589 = vadd.f32 %v6588, 0.05243302
  %v6590 = vmul.f32 %v6583, %v6589
  %v6591 = vadd.f32 %v6590, 0.18741608
  %v6592 = vmul.f32 %v6583, %v6591
  %v6593 = vadd.f32 %v6592, 1.1283791
  %v6594 = vmul.f32 %v4412, %v6593
  %v6595 = vmul.f32 %v6583, 3.8918573e-05
  %v6596 = vadd.f32 %v6595, 0.001143296
  %v6597 = vmul.f32 %v6583, %v6596
  %v6598 = vadd.f32 %v6597, 0.014752088
  %v6599 = vmul.f32 %v6583, %v6598
  %v6600 = vadd.f32 %v6599, 0.112945676
  %v6601 = vmul.f32 %v6583, %v6600
  %v6602 = vadd.f32 %v6601, 0.4994258
  %v6603 = vmul.f32 %v6583, %v6602
  %v6604 = vadd.f32 %v6603, 1.0
  %v6605 = vrcp.pop %v6604
  %v6606 = vmul.f32 %v6604, %v6605
  %v6607 = vsub.f32 1.0, %v6606
  %v6608 = vmul.f32 %v6605, %v6607
  %v6609 = vadd.f32 %v6605, %v6608
  %vm6610 = vweird.f32 %v6604
  %vm6611 = vweird.f32 %v6605
  %vm6612 = vmor %vm6610, %vm6611
  %v6613 = vsel %vm6612, %v6605, %v6609
  %v6614 = vand.u32 2147483647, %v6604
  %vm6615 = vcmp.eq.f32.partialorder %v6614, 8.507059e+37
  %v6616 = vand.u32 %v6604, 2147483648
  %v6617 = vor.u32 1.1754944e-38, %v6616
  %v6618 = vsel %vm6615, %v6617, %v6613
  %v6619 = vmul.f32 %v6594, %v6618
  %v6620 = vmin.f32 %v6619, 1.0
  %v6621 = vmax.f32 %v6620, -1.0
  %v6622 = vmul.f32 %v4413, %v4413
  %v6623 = vmin.f32 16.0, %v6622
  %v6624 = vmul.f32 %v6623, 2.1237322e-06
  %v6625 = vadd.f32 %v6624, 0.00028619796
  %v6626 = vmul.f32 %v6623, %v6625
  %v6627 = vadd.f32 %v6626, 0.0036580483
  %v6628 = vmul.f32 %v6623, %v6627
  %v6629 = vadd.f32 %v6628, 0.05243302
  %v6630 = vmul.f32 %v6623, %v6629
  %v6631 = vadd.f32 %v6630, 0.18741608
  %v6632 = vmul.f32 %v6623, %v6631
  %v6633 = vadd.f32 %v6632, 1.1283791
  %v6634 = vmul.f32 %v4413, %v6633
  %v6635 = vmul.f32 %v6623, 3.8918573e-05
  %v6636 = vadd.f32 %v6635, 0.001143296
  %v6637 = vmul.f32 %v6623, %v6636
  %v6638 = vadd.f32 %v6637, 0.014752088
  %v6639 = vmul.f32 %v6623, %v6638
  %v6640 = vadd.f32 %v6639, 0.112945676
  %v6641 = vmul.f32 %v6623, %v6640
  %v6642 = vadd.f32 %v6641, 0.4994258
  %v6643 = vmul.f32 %v6623, %v6642
  %v6644 = vadd.f32 %v6643, 1.0
  %v6645 = vrcp.pop %v6644
  %v6646 = vmul.f32 %v6644, %v6645
  %v6647 = vsub.f32 1.0, %v6646
  %v6648 = vmul.f32 %v6645, %v6647
  %v6649 = vadd.f32 %v6645, %v6648
  %vm6650 = vweird.f32 %v6644
  %vm6651 = vweird.f32 %v6645
  %vm6652 = vmor %vm6650, %vm6651
  %v6653 = vsel %vm6652, %v6645, %v6649
  %v6654 = vand.u32 2147483647, %v6644
  %vm6655 = vcmp.eq.f32.partialorder %v6654, 8.507059e+37
  %v6656 = vand.u32 %v6644, 2147483648
  %v6657 = vor.u32 1.1754944e-38, %v6656
  %v6658 = vsel %vm6655, %v6657, %v6653
  %v6659 = vmul.f32 %v6634, %v6658
  %v6660 = vmin.f32 %v6659, 1.0
  %v6661 = vmax.f32 %v6660, -1.0
  %v6662 = vmul.f32 %v4414, %v4414
  %v6663 = vmin.f32 16.0, %v6662
  %v6664 = vmul.f32 %v6663, 2.1237322e-06
  %v6665 = vadd.f32 %v6664, 0.00028619796
  %v6666 = vmul.f32 %v6663, %v6665
  %v6667 = vadd.f32 %v6666, 0.0036580483
  %v6668 = vmul.f32 %v6663, %v6667
  %v6669 = vadd.f32 %v6668, 0.05243302
  %v6670 = vmul.f32 %v6663, %v6669
  %v6671 = vadd.f32 %v6670, 0.18741608
  %v6672 = vmul.f32 %v6663, %v6671
  %v6673 = vadd.f32 %v6672, 1.1283791
  %v6674 = vmul.f32 %v4414, %v6673
  %v6675 = vmul.f32 %v6663, 3.8918573e-05
  %v6676 = vadd.f32 %v6675, 0.001143296
  %v6677 = vmul.f32 %v6663, %v6676
  %v6678 = vadd.f32 %v6677, 0.014752088
  %v6679 = vmul.f32 %v6663, %v6678
  %v6680 = vadd.f32 %v6679, 0.112945676
  %v6681 = vmul.f32 %v6663, %v6680
  %v6682 = vadd.f32 %v6681, 0.4994258
  %v6683 = vmul.f32 %v6663, %v6682
  %v6684 = vadd.f32 %v6683, 1.0
  %v6685 = vrcp.pop %v6684
  %v6686 = vmul.f32 %v6684, %v6685
  %v6687 = vsub.f32 1.0, %v6686
  %v6688 = vmul.f32 %v6685, %v6687
  %v6689 = vadd.f32 %v6685, %v6688
  %vm6690 = vweird.f32 %v6684
  %vm6691 = vweird.f32 %v6685
  %vm6692 = vmor %vm6690, %vm6691
  %v6693 = vsel %vm6692, %v6685, %v6689
  %v6694 = vand.u32 2147483647, %v6684
  %vm6695 = vcmp.eq.f32.partialorder %v6694, 8.507059e+37
  %v6696 = vand.u32 %v6684, 2147483648
  %v6697 = vor.u32 1.1754944e-38, %v6696
  %v6698 = vsel %vm6695, %v6697, %v6693
  %v6699 = vmul.f32 %v6674, %v6698
  %v6700 = vmin.f32 %v6699, 1.0
  %v6701 = vmax.f32 %v6700, -1.0
  %v6702 = vmul.f32 %v4415, %v4415
  %v6703 = vmin.f32 16.0, %v6702
  %v6704 = vmul.f32 %v6703, 2.1237322e-06
  %v6705 = vadd.f32 %v6704, 0.00028619796
  %v6706 = vmul.f32 %v6703, %v6705
  %v6707 = vadd.f32 %v6706, 0.0036580483
  %v6708 = vmul.f32 %v6703, %v6707
  %v6709 = vadd.f32 %v6708, 0.05243302
  %v6710 = vmul.f32 %v6703, %v6709
  %v6711 = vadd.f32 %v6710, 0.18741608
  %v6712 = vmul.f32 %v6703, %v6711
  %v6713 = vadd.f32 %v6712, 1.1283791
  %v6714 = vmul.f32 %v4415, %v6713
  %v6715 = vmul.f32 %v6703, 3.8918573e-05
  %v6716 = vadd.f32 %v6715, 0.001143296
  %v6717 = vmul.f32 %v6703, %v6716
  %v6718 = vadd.f32 %v6717, 0.014752088
  %v6719 = vmul.f32 %v6703, %v6718
  %v6720 = vadd.f32 %v6719, 0.112945676
  %v6721 = vmul.f32 %v6703, %v6720
  %v6722 = vadd.f32 %v6721, 0.4994258
  %v6723 = vmul.f32 %v6703, %v6722
  %v6724 = vadd.f32 %v6723, 1.0
  %v6725 = vrcp.pop %v6724
  %v6726 = vmul.f32 %v6724, %v6725
  %v6727 = vsub.f32 1.0, %v6726
  %v6728 = vmul.f32 %v6725, %v6727
  %v6729 = vadd.f32 %v6725, %v6728
  %vm6730 = vweird.f32 %v6724
  %vm6731 = vweird.f32 %v6725
  %vm6732 = vmor %vm6730, %vm6731
  %v6733 = vsel %vm6732, %v6725, %v6729
  %v6734 = vand.u32 2147483647, %v6724
  %vm6735 = vcmp.eq.f32.partialorder %v6734, 8.507059e+37
  %v6736 = vand.u32 %v6724, 2147483648
  %v6737 = vor.u32 1.1754944e-38, %v6736
  %v6738 = vsel %vm6735, %v6737, %v6733
  %v6739 = vmul.f32 %v6714, %v6738
  %v6740 = vmin.f32 %v6739, 1.0
  %v6741 = vmax.f32 %v6740, -1.0
  %v6742 = vmul.f32 %v4416, %v4416
  %v6743 = vmin.f32 16.0, %v6742
  %v6744 = vmul.f32 %v6743, 2.1237322e-06
  %v6745 = vadd.f32 %v6744, 0.00028619796
  %v6746 = vmul.f32 %v6743, %v6745
  %v6747 = vadd.f32 %v6746, 0.0036580483
  %v6748 = vmul.f32 %v6743, %v6747
  %v6749 = vadd.f32 %v6748, 0.05243302
  %v6750 = vmul.f32 %v6743, %v6749
  %v6751 = vadd.f32 %v6750, 0.18741608
  %v6752 = vmul.f32 %v6743, %v6751
  %v6753 = vadd.f32 %v6752, 1.1283791
  %v6754 = vmul.f32 %v4416, %v6753
  %v6755 = vmul.f32 %v6743, 3.8918573e-05
  %v6756 = vadd.f32 %v6755, 0.001143296
  %v6757 = vmul.f32 %v6743, %v6756
  %v6758 = vadd.f32 %v6757, 0.014752088
  %v6759 = vmul.f32 %v6743, %v6758
  %v6760 = vadd.f32 %v6759, 0.112945676
  %v6761 = vmul.f32 %v6743, %v6760
  %v6762 = vadd.f32 %v6761, 0.4994258
  %v6763 = vmul.f32 %v6743, %v6762
  %v6764 = vadd.f32 %v6763, 1.0
  %v6765 = vrcp.pop %v6764
  %v6766 = vmul.f32 %v6764, %v6765
  %v6767 = vsub.f32 1.0, %v6766
  %v6768 = vmul.f32 %v6765, %v6767
  %v6769 = vadd.f32 %v6765, %v6768
  %vm6770 = vweird.f32 %v6764
  %vm6771 = vweird.f32 %v6765
  %vm6772 = vmor %vm6770, %vm6771
  %v6773 = vsel %vm6772, %v6765, %v6769
  %v6774 = vand.u32 2147483647, %v6764
  %vm6775 = vcmp.eq.f32.partialorder %v6774, 8.507059e+37
  %v6776 = vand.u32 %v6764, 2147483648
  %v6777 = vor.u32 1.1754944e-38, %v6776
  %v6778 = vsel %vm6775, %v6777, %v6773
  %v6779 = vmul.f32 %v6754, %v6778
  %v6780 = vmin.f32 %v6779, 1.0
  %v6781 = vmax.f32 %v6780, -1.0
  %v6782 = vmul.f32 %v4417, %v4417
  %v6783 = vmin.f32 16.0, %v6782
  %v6784 = vmul.f32 %v6783, 2.1237322e-06
  %v6785 = vadd.f32 %v6784, 0.00028619796
  %v6786 = vmul.f32 %v6783, %v6785
  %v6787 = vadd.f32 %v6786, 0.0036580483
  %v6788 = vmul.f32 %v6783, %v6787
  %v6789 = vadd.f32 %v6788, 0.05243302
  %v6790 = vmul.f32 %v6783, %v6789
  %v6791 = vadd.f32 %v6790, 0.18741608
  %v6792 = vmul.f32 %v6783, %v6791
  %v6793 = vadd.f32 %v6792, 1.1283791
  %v6794 = vmul.f32 %v4417, %v6793
  %v6795 = vmul.f32 %v6783, 3.8918573e-05
  %v6796 = vadd.f32 %v6795, 0.001143296
  %v6797 = vmul.f32 %v6783, %v6796
  %v6798 = vadd.f32 %v6797, 0.014752088
  %v6799 = vmul.f32 %v6783, %v6798
  %v6800 = vadd.f32 %v6799, 0.112945676
  %v6801 = vmul.f32 %v6783, %v6800
  %v6802 = vadd.f32 %v6801, 0.4994258
  %v6803 = vmul.f32 %v6783, %v6802
  %v6804 = vadd.f32 %v6803, 1.0
  %v6805 = vrcp.pop %v6804
  %v6806 = vmul.f32 %v6804, %v6805
  %v6807 = vsub.f32 1.0, %v6806
  %v6808 = vmul.f32 %v6805, %v6807
  %v6809 = vadd.f32 %v6805, %v6808
  %vm6810 = vweird.f32 %v6804
  %vm6811 = vweird.f32 %v6805
  %vm6812 = vmor %vm6810, %vm6811
  %v6813 = vsel %vm6812, %v6805, %v6809
  %v6814 = vand.u32 2147483647, %v6804
  %vm6815 = vcmp.eq.f32.partialorder %v6814, 8.507059e+37
  %v6816 = vand.u32 %v6804, 2147483648
  %v6817 = vor.u32 1.1754944e-38, %v6816
  %v6818 = vsel %vm6815, %v6817, %v6813
  %v6819 = vmul.f32 %v6794, %v6818
  %v6820 = vmin.f32 %v6819, 1.0
  %v6821 = vmax.f32 %v6820, -1.0
  %v6822 = vmul.f32 %v4418, %v4418
  %v6823 = vmin.f32 16.0, %v6822
  %v6824 = vmul.f32 %v6823, 2.1237322e-06
  %v6825 = vadd.f32 %v6824, 0.00028619796
  %v6826 = vmul.f32 %v6823, %v6825
  %v6827 = vadd.f32 %v6826, 0.0036580483
  %v6828 = vmul.f32 %v6823, %v6827
  %v6829 = vadd.f32 %v6828, 0.05243302
  %v6830 = vmul.f32 %v6823, %v6829
  %v6831 = vadd.f32 %v6830, 0.18741608
  %v6832 = vmul.f32 %v6823, %v6831
  %v6833 = vadd.f32 %v6832, 1.1283791
  %v6834 = vmul.f32 %v4418, %v6833
  %v6835 = vmul.f32 %v6823, 3.8918573e-05
  %v6836 = vadd.f32 %v6835, 0.001143296
  %v6837 = vmul.f32 %v6823, %v6836
  %v6838 = vadd.f32 %v6837, 0.014752088
  %v6839 = vmul.f32 %v6823, %v6838
  %v6840 = vadd.f32 %v6839, 0.112945676
  %v6841 = vmul.f32 %v6823, %v6840
  %v6842 = vadd.f32 %v6841, 0.4994258
  %v6843 = vmul.f32 %v6823, %v6842
  %v6844 = vadd.f32 %v6843, 1.0
  %v6845 = vrcp.pop %v6844
  %v6846 = vmul.f32 %v6844, %v6845
  %v6847 = vsub.f32 1.0, %v6846
  %v6848 = vmul.f32 %v6845, %v6847
  %v6849 = vadd.f32 %v6845, %v6848
  %vm6850 = vweird.f32 %v6844
  %vm6851 = vweird.f32 %v6845
  %vm6852 = vmor %vm6850, %vm6851
  %v6853 = vsel %vm6852, %v6845, %v6849
  %v6854 = vand.u32 2147483647, %v6844
  %vm6855 = vcmp.eq.f32.partialorder %v6854, 8.507059e+37
  %v6856 = vand.u32 %v6844, 2147483648
  %v6857 = vor.u32 1.1754944e-38, %v6856
  %v6858 = vsel %vm6855, %v6857, %v6853
  %v6859 = vmul.f32 %v6834, %v6858
  %v6860 = vmin.f32 %v6859, 1.0
  %v6861 = vmax.f32 %v6860, -1.0
  %v6862 = vmul.f32 %v4419, %v4419
  %v6863 = vmin.f32 16.0, %v6862
  %v6864 = vmul.f32 %v6863, 2.1237322e-06
  %v6865 = vadd.f32 %v6864, 0.00028619796
  %v6866 = vmul.f32 %v6863, %v6865
  %v6867 = vadd.f32 %v6866, 0.0036580483
  %v6868 = vmul.f32 %v6863, %v6867
  %v6869 = vadd.f32 %v6868, 0.05243302
  %v6870 = vmul.f32 %v6863, %v6869
  %v6871 = vadd.f32 %v6870, 0.18741608
  %v6872 = vmul.f32 %v6863, %v6871
  %v6873 = vadd.f32 %v6872, 1.1283791
  %v6874 = vmul.f32 %v4419, %v6873
  %v6875 = vmul.f32 %v6863, 3.8918573e-05
  %v6876 = vadd.f32 %v6875, 0.001143296
  %v6877 = vmul.f32 %v6863, %v6876
  %v6878 = vadd.f32 %v6877, 0.014752088
  %v6879 = vmul.f32 %v6863, %v6878
  %v6880 = vadd.f32 %v6879, 0.112945676
  %v6881 = vmul.f32 %v6863, %v6880
  %v6882 = vadd.f32 %v6881, 0.4994258
  %v6883 = vmul.f32 %v6863, %v6882
  %v6884 = vadd.f32 %v6883, 1.0
  %v6885 = vrcp.pop %v6884
  %v6886 = vmul.f32 %v6884, %v6885
  %v6887 = vsub.f32 1.0, %v6886
  %v6888 = vmul.f32 %v6885, %v6887
  %v6889 = vadd.f32 %v6885, %v6888
  %vm6890 = vweird.f32 %v6884
  %vm6891 = vweird.f32 %v6885
  %vm6892 = vmor %vm6890, %vm6891
  %v6893 = vsel %vm6892, %v6885, %v6889
  %v6894 = vand.u32 2147483647, %v6884
  %vm6895 = vcmp.eq.f32.partialorder %v6894, 8.507059e+37
  %v6896 = vand.u32 %v6884, 2147483648
  %v6897 = vor.u32 1.1754944e-38, %v6896
  %v6898 = vsel %vm6895, %v6897, %v6893
  %v6899 = vmul.f32 %v6874, %v6898
  %v6900 = vmin.f32 %v6899, 1.0
  %v6901 = vmax.f32 %v6900, -1.0
  %v6902 = vmul.f32 %v4420, %v4420
  %v6903 = vmin.f32 16.0, %v6902
  %v6904 = vmul.f32 %v6903, 2.1237322e-06
  %v6905 = vadd.f32 %v6904, 0.00028619796
  %v6906 = vmul.f32 %v6903, %v6905
  %v6907 = vadd.f32 %v6906, 0.0036580483
  %v6908 = vmul.f32 %v6903, %v6907
  %v6909 = vadd.f32 %v6908, 0.05243302
  %v6910 = vmul.f32 %v6903, %v6909
  %v6911 = vadd.f32 %v6910, 0.18741608
  %v6912 = vmul.f32 %v6903, %v6911
  %v6913 = vadd.f32 %v6912, 1.1283791
  %v6914 = vmul.f32 %v4420, %v6913
  %v6915 = vmul.f32 %v6903, 3.8918573e-05
  %v6916 = vadd.f32 %v6915, 0.001143296
  %v6917 = vmul.f32 %v6903, %v6916
  %v6918 = vadd.f32 %v6917, 0.014752088
  %v6919 = vmul.f32 %v6903, %v6918
  %v6920 = vadd.f32 %v6919, 0.112945676
  %v6921 = vmul.f32 %v6903, %v6920
  %v6922 = vadd.f32 %v6921, 0.4994258
  %v6923 = vmul.f32 %v6903, %v6922
  %v6924 = vadd.f32 %v6923, 1.0
  %v6925 = vrcp.pop %v6924
  %v6926 = vmul.f32 %v6924, %v6925
  %v6927 = vsub.f32 1.0, %v6926
  %v6928 = vmul.f32 %v6925, %v6927
  %v6929 = vadd.f32 %v6925, %v6928
  %vm6930 = vweird.f32 %v6924
  %vm6931 = vweird.f32 %v6925
  %vm6932 = vmor %vm6930, %vm6931
  %v6933 = vsel %vm6932, %v6925, %v6929
  %v6934 = vand.u32 2147483647, %v6924
  %vm6935 = vcmp.eq.f32.partialorder %v6934, 8.507059e+37
  %v6936 = vand.u32 %v6924, 2147483648
  %v6937 = vor.u32 1.1754944e-38, %v6936
  %v6938 = vsel %vm6935, %v6937, %v6933
  %v6939 = vmul.f32 %v6914, %v6938
  %v6940 = vmin.f32 %v6939, 1.0
  %v6941 = vmax.f32 %v6940, -1.0
  %v6942 = vmul.f32 %v4421, %v4421
  %v6943 = vmin.f32 16.0, %v6942
  %v6944 = vmul.f32 %v6943, 2.1237322e-06
  %v6945 = vadd.f32 %v6944, 0.00028619796
  %v6946 = vmul.f32 %v6943, %v6945
  %v6947 = vadd.f32 %v6946, 0.0036580483
  %v6948 = vmul.f32 %v6943, %v6947
  %v6949 = vadd.f32 %v6948, 0.05243302
  %v6950 = vmul.f32 %v6943, %v6949
  %v6951 = vadd.f32 %v6950, 0.18741608
  %v6952 = vmul.f32 %v6943, %v6951
  %v6953 = vadd.f32 %v6952, 1.1283791
  %v6954 = vmul.f32 %v4421, %v6953
  %v6955 = vmul.f32 %v6943, 3.8918573e-05
  %v6956 = vadd.f32 %v6955, 0.001143296
  %v6957 = vmul.f32 %v6943, %v6956
  %v6958 = vadd.f32 %v6957, 0.014752088
  %v6959 = vmul.f32 %v6943, %v6958
  %v6960 = vadd.f32 %v6959, 0.112945676
  %v6961 = vmul.f32 %v6943, %v6960
  %v6962 = vadd.f32 %v6961, 0.4994258
  %v6963 = vmul.f32 %v6943, %v6962
  %v6964 = vadd.f32 %v6963, 1.0
  %v6965 = vrcp.pop %v6964
  %v6966 = vmul.f32 %v6964, %v6965
  %v6967 = vsub.f32 1.0, %v6966
  %v6968 = vmul.f32 %v6965, %v6967
  %v6969 = vadd.f32 %v6965, %v6968
  %vm6970 = vweird.f32 %v6964
  %vm6971 = vweird.f32 %v6965
  %vm6972 = vmor %vm6970, %vm6971
  %v6973 = vsel %vm6972, %v6965, %v6969
  %v6974 = vand.u32 2147483647, %v6964
  %vm6975 = vcmp.eq.f32.partialorder %v6974, 8.507059e+37
  %v6976 = vand.u32 %v6964, 2147483648
  %v6977 = vor.u32 1.1754944e-38, %v6976
  %v6978 = vsel %vm6975, %v6977, %v6973
  %v6979 = vmul.f32 %v6954, %v6978
  %v6980 = vmin.f32 %v6979, 1.0
  %v6981 = vmax.f32 %v6980, -1.0
  %v6982 = vadd.f32 %v4461, 1.0
  %v6983 = vadd.f32 %v4501, 1.0
  %v6984 = vadd.f32 %v4541, 1.0
  %v6985 = vadd.f32 %v4581, 1.0
  %v6986 = vadd.f32 %v4621, 1.0
  %v6987 = vadd.f32 %v4661, 1.0
  %v6988 = vadd.f32 %v4701, 1.0
  %v6989 = vadd.f32 %v4741, 1.0
  %v6990 = vadd.f32 %v4781, 1.0
  %v6991 = vadd.f32 %v4821, 1.0
  %v6992 = vadd.f32 %v4861, 1.0
  %v6993 = vadd.f32 %v4901, 1.0
  %v6994 = vadd.f32 %v4941, 1.0
  %v6995 = vadd.f32 %v4981, 1.0
  %v6996 = vadd.f32 %v5021, 1.0
  %v6997 = vadd.f32 %v5061, 1.0
  %v6998 = vadd.f32 %v5101, 1.0
  %v6999 = vadd.f32 %v5141, 1.0
  %v7000 = vadd.f32 %v5181, 1.0
  %v7001 = vadd.f32 %v5221, 1.0
  %v7002 = vadd.f32 %v5261, 1.0
  %v7003 = vadd.f32 %v5301, 1.0
  %v7004 = vadd.f32 %v5341, 1.0
  %v7005 = vadd.f32 %v5381, 1.0
  %v7006 = vadd.f32 %v5421, 1.0
  %v7007 = vadd.f32 %v5461, 1.0
  %v7008 = vadd.f32 %v5501, 1.0
  %v7009 = vadd.f32 %v5541, 1.0
  %v7010 = vadd.f32 %v5581, 1.0
  %v7011 = vadd.f32 %v5621, 1.0
  %v7012 = vadd.f32 %v5661, 1.0
  %v7013 = vadd.f32 %v5701, 1.0
  %v7014 = vadd.f32 %v5741, 1.0
  %v7015 = vadd.f32 %v5781, 1.0
  %v7016 = vadd.f32 %v5821, 1.0
  %v7017 = vadd.f32 %v5861, 1.0
  %v7018 = vadd.f32 %v5901, 1.0
  %v7019 = vadd.f32 %v5941, 1.0
  %v7020 = vadd.f32 %v5981, 1.0
  %v7021 = vadd.f32 %v6021, 1.0
  %v7022 = vadd.f32 %v6061, 1.0
  %v7023 = vadd.f32 %v6101, 1.0
  %v7024 = vadd.f32 %v6141, 1.0
  %v7025 = vadd.f32 %v6181, 1.0
  %v7026 = vadd.f32 %v6221, 1.0
  %v7027 = vadd.f32 %v6261, 1.0
  %v7028 = vadd.f32 %v6301, 1.0
  %v7029 = vadd.f32 %v6341, 1.0
  %v7030 = vadd.f32 %v6381, 1.0
  %v7031 = vadd.f32 %v6421, 1.0
  %v7032 = vadd.f32 %v6461, 1.0
  %v7033 = vadd.f32 %v6501, 1.0
  %v7034 = vadd.f32 %v6541, 1.0
  %v7035 = vadd.f32 %v6581, 1.0
  %v7036 = vadd.f32 %v6621, 1.0
  %v7037 = vadd.f32 %v6661, 1.0
  %v7038 = vadd.f32 %v6701, 1.0
  %v7039 = vadd.f32 %v6741, 1.0
  %v7040 = vadd.f32 %v6781, 1.0
  %v7041 = vadd.f32 %v6821, 1.0
  %v7042 = vadd.f32 %v6861, 1.0
  %v7043 = vadd.f32 %v6901, 1.0
  %v7044 = vadd.f32 %v6941, 1.0
  %v7045 = vadd.f32 %v6981, 1.0
  %v7046 = vmul.f32 %v4294, %v6982
  %v7047 = vmul.f32 %v4295, %v6983
  %v7048 = vmul.f32 %v4296, %v6984
  %v7049 = vmul.f32 %v4297, %v6985
  %v7050 = vmul.f32 %v4298, %v6986
  %v7051 = vmul.f32 %v4299, %v6987
  %v7052 = vmul.f32 %v4300, %v6988
  %v7053 = vmul.f32 %v4301, %v6989
  %v7054 = vmul.f32 %v4302, %v6990
  %v7055 = vmul.f32 %v4303, %v6991
  %v7056 = vmul.f32 %v4304, %v6992
  %v7057 = vmul.f32 %v4305, %v6993
  %v7058 = vmul.f32 %v4306, %v6994
  %v7059 = vmul.f32 %v4307, %v6995
  %v7060 = vmul.f32 %v4308, %v6996
  %v7061 = vmul.f32 %v4309, %v6997
  %v7062 = vmul.f32 %v4310, %v6998
  %v7063 = vmul.f32 %v4311, %v6999
  %v7064 = vmul.f32 %v4312, %v7000
  %v7065 = vmul.f32 %v4313, %v7001
  %v7066 = vmul.f32 %v4314, %v7002
  %v7067 = vmul.f32 %v4315, %v7003
  %v7068 = vmul.f32 %v4316, %v7004
  %v7069 = vmul.f32 %v4317, %v7005
  %v7070 = vmul.f32 %v4318, %v7006
  %v7071 = vmul.f32 %v4319, %v7007
  %v7072 = vmul.f32 %v4320, %v7008
  %v7073 = vmul.f32 %v4321, %v7009
  %v7074 = vmul.f32 %v4322, %v7010
  %v7075 = vmul.f32 %v4323, %v7011
  %v7076 = vmul.f32 %v4324, %v7012
  %v7077 = vmul.f32 %v4325, %v7013
  %v7078 = vmul.f32 %v4326, %v7014
  %v7079 = vmul.f32 %v4327, %v7015
  %v7080 = vmul.f32 %v4328, %v7016
  %v7081 = vmul.f32 %v4329, %v7017
  %v7082 = vmul.f32 %v4330, %v7018
  %v7083 = vmul.f32 %v4331, %v7019
  %v7084 = vmul.f32 %v4332, %v7020
  %v7085 = vmul.f32 %v4333, %v7021
  %v7086 = vmul.f32 %v4334, %v7022
  %v7087 = vmul.f32 %v4335, %v7023
  %v7088 = vmul.f32 %v4336, %v7024
  %v7089 = vmul.f32 %v4337, %v7025
  %v7090 = vmul.f32 %v4338, %v7026
  %v7091 = vmul.f32 %v4339, %v7027
  %v7092 = vmul.f32 %v4340, %v7028
  %v7093 = vmul.f32 %v4341, %v7029
  %v7094 = vmul.f32 %v4342, %v7030
  %v7095 = vmul.f32 %v4343, %v7031
  %v7096 = vmul.f32 %v4344, %v7032
  %v7097 = vmul.f32 %v4345, %v7033
  %v7098 = vmul.f32 %v4346, %v7034
  %v7099 = vmul.f32 %v4347, %v7035
  %v7100 = vmul.f32 %v4348, %v7036
  %v7101 = vmul.f32 %v4349, %v7037
  %v7102 = vmul.f32 %v4350, %v7038
  %v7103 = vmul.f32 %v4351, %v7039
  %v7104 = vmul.f32 %v4352, %v7040
  %v7105 = vmul.f32 %v4353, %v7041
  %v7106 = vmul.f32 %v4354, %v7042
  %v7107 = vmul.f32 %v4355, %v7043
  %v7108 = vmul.f32 %v4356, %v7044
  %v7109 = vmul.f32 %v4357, %v7045
  %7110 = vst [vmem:[%s4] sm:$0xff] %v7046
  %7111 = vst [vmem:[%s4 + $0x8] sm:$0xff] %v7047
  %7112 = vst [vmem:[%s4 + $0x10] sm:$0xff] %v7048
  %7113 = vst [vmem:[%s4 + $0x18] sm:$0xff] %v7049
  %7114 = vst [vmem:[%s4 + $0x20] sm:$0xff] %v7050
  %7115 = vst [vmem:[%s4 + $0x28] sm:$0xff] %v7051
  %7116 = vst [vmem:[%s4 + $0x30] sm:$0xff] %v7052
  %7117 = vst [vmem:[%s4 + $0x38] sm:$0xff] %v7053
  %7118 = vst [vmem:[%s4 + $0x40] sm:$0xff] %v7054
  %7119 = vst [vmem:[%s4 + $0x48] sm:$0xff] %v7055
  %7120 = vst [vmem:[%s4 + $0x50] sm:$0xff] %v7056
  %7121 = vst [vmem:[%s4 + $0x58] sm:$0xff] %v7057
  %7122 = vst [vmem:[%s4 + $0x60] sm:$0xff] %v7058
  %7123 = vst [vmem:[%s4 + $0x68] sm:$0xff] %v7059
  %7124 = vst [vmem:[%s4 + $0x70] sm:$0xff] %v7060
  %7125 = vst [vmem:[%s4 + $0x78] sm:$0xff] %v7061
  %7126 = vst [vmem:[%s4 + $0x80] sm:$0xff] %v7062
  %7127 = vst [vmem:[%s4 + $0x88] sm:$0xff] %v7063
  %7128 = vst [vmem:[%s4 + $0x90] sm:$0xff] %v7064
  %7129 = vst [vmem:[%s4 + $0x98] sm:$0xff] %v7065
  %7130 = vst [vmem:[%s4 + $0xa0] sm:$0xff] %v7066
  %7131 = vst [vmem:[%s4 + $0xa8] sm:$0xff] %v7067
  %7132 = vst [vmem:[%s4 + $0xb0] sm:$0xff] %v7068
  %7133 = vst [vmem:[%s4 + $0xb8] sm:$0xff] %v7069
  %7134 = vst [vmem:[%s4 + $0xc0] sm:$0xff] %v7070
  %7135 = vst [vmem:[%s4 + $0xc8] sm:$0xff] %v7071
  %7136 = vst [vmem:[%s4 + $0xd0] sm:$0xff] %v7072
  %7137 = vst [vmem:[%s4 + $0xd8] sm:$0xff] %v7073
  %7138 = vst [vmem:[%s4 + $0xe0] sm:$0xff] %v7074
  %7139 = vst [vmem:[%s4 + $0xe8] sm:$0xff] %v7075
  %7140 = vst [vmem:[%s4 + $0xf0] sm:$0xff] %v7076
  %7141 = vst [vmem:[%s4 + $0xf8] sm:$0xff] %v7077
  %7142 = vst [vmem:[%s4 + $0x100] sm:$0xff] %v7078
  %7143 = vst [vmem:[%s4 + $0x108] sm:$0xff] %v7079
  %7144 = vst [vmem:[%s4 + $0x110] sm:$0xff] %v7080
  %7145 = vst [vmem:[%s4 + $0x118] sm:$0xff] %v7081
  %7146 = vst [vmem:[%s4 + $0x120] sm:$0xff] %v7082
  %7147 = vst [vmem:[%s4 + $0x128] sm:$0xff] %v7083
  %7148 = vst [vmem:[%s4 + $0x130] sm:$0xff] %v7084
  %7149 = vst [vmem:[%s4 + $0x138] sm:$0xff] %v7085
  %7150 = vst [vmem:[%s4 + $0x140] sm:$0xff] %v7086
  %7151 = vst [vmem:[%s4 + $0x148] sm:$0xff] %v7087
  %7152 = vst [vmem:[%s4 + $0x150] sm:$0xff] %v7088
  %7153 = vst [vmem:[%s4 + $0x158] sm:$0xff] %v7089
  %7154 = vst [vmem:[%s4 + $0x160] sm:$0xff] %v7090
  %7155 = vst [vmem:[%s4 + $0x168] sm:$0xff] %v7091
  %7156 = vst [vmem:[%s4 + $0x170] sm:$0xff] %v7092
  %7157 = vst [vmem:[%s4 + $0x178] sm:$0xff] %v7093
  %7158 = vst [vmem:[%s4 + $0x180] sm:$0xff] %v7094
  %7159 = vst [vmem:[%s4 + $0x188] sm:$0xff] %v7095
  %7160 = vst [vmem:[%s4 + $0x190] sm:$0xff] %v7096
  %7161 = vst [vmem:[%s4 + $0x198] sm:$0xff] %v7097
  %7162 = vst [vmem:[%s4 + $0x1a0] sm:$0xff] %v7098
  %7163 = vst [vmem:[%s4 + $0x1a8] sm:$0xff] %v7099
  %7164 = vst [vmem:[%s4 + $0x1b0] sm:$0xff] %v7100
  %7165 = vst [vmem:[%s4 + $0x1b8] sm:$0xff] %v7101
  %7166 = vst [vmem:[%s4 + $0x1c0] sm:$0xff] %v7102
  %7167 = vst [vmem:[%s4 + $0x1c8] sm:$0xff] %v7103
  %7168 = vst [vmem:[%s4 + $0x1d0] sm:$0xff] %v7104
  %7169 = vst [vmem:[%s4 + $0x1d8] sm:$0xff] %v7105
  %7170 = vst [vmem:[%s4 + $0x1e0] sm:$0xff] %v7106
  %7171 = vst [vmem:[%s4 + $0x1e8] sm:$0xff] %v7107
  %7172 = vst [vmem:[%s4 + $0x1f0] sm:$0xff] %v7108
  %7173 = vst [vmem:[%s4 + $0x1f8] sm:$0xff] %v7109
  // Predicated region
  $region18: #{conv_bn_relu.1} parent=0 // pred_check
    _
  $region19: #{conv_bn_relu.1} parent=0 // pred_check_branch
    %7175 = sbr.rel (0) target = $region21
  $region20: #{conv_bn_relu.1} parent=0 // pred_region
    _
  $region21: #{conv_bn_relu.1} parent=0 // pred_fallthru
    _
  // Predicated region
  $region22: #{conv_bn_relu.1} parent=0 // pred_check
    _
  $region23: #{conv_bn_relu.1} parent=0 // pred_check_branch
    %7177 = sbr.rel (0) target = $region25
  $region24: #{conv_bn_relu.1} parent=0 // pred_region
    _
  $region25: #{conv_bn_relu.1} parent=0 // pred_fallthru
    _

</llo_original>
